<compile_context>
chip_gen: v7x
topology: tpu7x:2x2x1
jax: 0.10.0
libtpu: 0.0.40
codegen_flags: <defaults>
</compile_context>

<pallas_src>
import math

import numpy as np
import jax
import jax.numpy as jnp
from jax import lax
from jax.experimental import pallas as pl
from jax.experimental.pallas import tpu as pltpu

# ---------------- geometry fixed by the module --------------------------------
H0 = W0 = 28            # input image
K1, C1 = 7, 8           # localization Conv2d(1, 8, kernel_size=7)
H1 = W1 = H0 - K1 + 1   # 22
P1 = H1 // 2            # 11 after MaxPool2d(2, 2)
K2, C2 = 5, 10          # localization Conv2d(8, 10, kernel_size=5)
H2 = W2 = P1 - K2 + 1   # 7
P2 = H2 // 2            # 3  after MaxPool2d(2, 2)
FCH = 32                # fc_loc hidden width
KC = 5                  # causal conv kernel (conv_post_stn / conv_mu / conv_sigma)
CD = 10                 # c_dim

_LOG_SQRT_2PI = 0.5 * math.log(2.0 * math.pi)


def _mm(a, b):
    # default MXU precision (single-pass bf16 inputs, f32 accumulation)
    return jnp.dot(a, b, preferred_element_type=jnp.float32)


# ============================== Pallas kernels =================================
def make_theta_kernel(tb):
    """Localization conv net + fc_loc -> theta, for a block of `tb` image-views."""
    def theta_kernel(xcol_ref, w1_ref, b1_ref, s1_ref, r1_ref, t2_ref, b2_ref,
                     s2_ref, r2_ref, wfc1_ref, bfc1_ref, wfc2_ref, bfc2_ref,
                     theta_ref):
        for b in range(tb):
            xcol = xcol_ref[b]                                      # (22, 196) im2col
            a1 = _mm(xcol, w1_ref[...])                             # conv1: (22, 176)
            # MaxPool2d(2,2) via selector matmuls
            l0 = _mm(s1_ref[0], a1)
            l1 = _mm(s1_ref[1], a1)
            p1 = jnp.maximum(jnp.maximum(_mm(l0, r1_ref[0]), _mm(l0, r1_ref[1])),
                             jnp.maximum(_mm(l1, r1_ref[0]), _mm(l1, r1_ref[1])))
            act1 = jnp.maximum(p1 + b1_ref[...], 0.0)               # (11, 88)
            # conv2 as 5 channel-fused Toeplitz matmuls (no lane slicing)
            a2 = _mm(act1[0:H2, :], t2_ref[0])
            for ki in range(1, K2):
                a2 = a2 + _mm(act1[ki:ki + H2, :], t2_ref[ki])      # (7, 70)
            l0 = _mm(s2_ref[0], a2)
            l1 = _mm(s2_ref[1], a2)
            p2 = jnp.maximum(jnp.maximum(_mm(l0, r2_ref[0]), _mm(l0, r2_ref[1])),
                             jnp.maximum(_mm(l1, r2_ref[0]), _mm(l1, r2_ref[1])))
            xs = jnp.maximum(p2 + b2_ref[...], 0.0)                 # (3, 30)
            # fc_loc: Linear(90,32) (weight row-repacked to match slab layout), ReLU,
            # Linear(32,6)
            h = _mm(xs[0:1, :], wfc1_ref[0])
            for i in range(1, P2):
                h = h + _mm(xs[i:i + 1, :], wfc1_ref[i])
            h = jnp.maximum(h + bfc1_ref[...], 0.0)                 # (1, 32)
            theta_ref[b] = _mm(h, wfc2_ref[...]) + bfc2_ref[...]    # (1, 6)
    return theta_kernel


def make_head_kernel(tb, t_views):
    """conv_post_stn + mean over views + fused conv_mu/conv_sigma + softplus +
    rsample + log_prob, for a block of `tb` images."""
    def head_kernel(xstn_ref, eps_ref, tpost_ref, bpost_ref, tms_ref, bms_ref,
                    srow_ref, c_ref, score_ref):
        ones_r = jnp.ones((1, H0), jnp.float32)
        ones_c = jnp.ones((CD * W0, 1), jnp.float32)
        scores = []
        for b in range(tb):
            # conv_post_stn (causal 5x5, 1->10) + ReLU on every resampled view, averaged
            emb = None
            for t in range(t_views):
                xp = xstn_ref[b, t]                                 # (32, 28) row-padded
                acc = _mm(xp[0:H0, :], tpost_ref[0])
                for ki in range(1, KC):
                    acc = acc + _mm(xp[ki:ki + H0, :], tpost_ref[ki])
                post = jnp.maximum(acc + bpost_ref[...], 0.0)       # (28, 280)
                emb = post if emb is None else emb + post
            emb = emb * (1.0 / t_views)
            # fused conv_mu / conv_sigma (causal 5x5, 10->10 each): 5 Toeplitz matmuls,
            # row padding handled by 0/1 row-selector matmuls.
            ms = _mm(_mm(srow_ref[0], emb), tms_ref[0])
            for ki in range(1, KC):
                ms = ms + _mm(_mm(srow_ref[ki], emb), tms_ref[ki])
            ms = ms + bms_ref[...]                                  # (28, 560)
            mu = ms[:, 0:CD * W0]                                   # (28, 280)
            pre = ms[:, CD * W0:2 * CD * W0]                        # (28, 280)
            sigma = jnp.maximum(pre, 0.0) + jnp.log(1.0 + jnp.exp(-jnp.abs(pre)))  # Softplus
            e = eps_ref[b]                                          # (28, 280) std normal
            c = mu + sigma * e                                      # Normal(mu,sigma).rsample()
            c_ref[b] = c                                            # lane-dense slab store
            # log_prob(c) with (c - mu)/sigma == e
            logp = -0.5 * e * e - jnp.log(sigma) - _LOG_SQRT_2PI
            scores.append(_mm(ones_r, _mm(logp, ones_c)))           # (1, 1)
        score_ref[...] = jnp.concatenate(scores, axis=0)            # single (tb, 1) store
    return head_kernel


# ============================== wrapper ========================================
def _full_spec(a):
    nd = a.ndim

    def idx(g):
        return (0,) * nd
    return pl.BlockSpec(a.shape, idx)


def affine_grid_sample(x, theta):
    """F.grid_sample(x, F.affine_grid(theta, x.shape)): bilinear, zero padding,
    align_corners=False.  x: (B, 1, H, W), theta: (B, 2, 3)."""
    B, _, Hh, Ww = x.shape
    xn = (2.0 * jnp.arange(Ww, dtype=jnp.float32) + 1.0) / Ww - 1.0
    yn = (2.0 * jnp.arange(Hh, dtype=jnp.float32) + 1.0) / Hh - 1.0
    XN, YN = jnp.meshgrid(xn, yn)
    base = jnp.stack([XN, YN, jnp.ones_like(XN)], axis=-1)            # (H, W, 3)
    grid = jnp.einsum('hwk,bnk->bhwn', base, theta)                   # (B, H, W, 2)
    ix = ((grid[..., 0] + 1.0) * Ww - 1.0) * 0.5
    iy = ((grid[..., 1] + 1.0) * Hh - 1.0) * 0.5
    x0 = jnp.floor(ix); y0 = jnp.floor(iy)
    x1 = x0 + 1.0;      y1 = y0 + 1.0
    wx1 = ix - x0; wx0 = 1.0 - wx1
    wy1 = iy - y0; wy0 = 1.0 - wy1
    img = x[:, 0]
    bidx = jnp.arange(B)[:, None, None]

    def corner(yy, xx):
        valid = (xx >= 0) & (xx <= Ww - 1) & (yy >= 0) & (yy <= Hh - 1)
        xc = jnp.clip(xx, 0, Ww - 1).astype(jnp.int32)
        yc = jnp.clip(yy, 0, Hh - 1).astype(jnp.int32)
        return jnp.where(valid, img[bidx, yc, xc], 0.0)

    out = (wy0 * wx0 * corner(y0, x0) + wy0 * wx1 * corner(y0, x1) +
           wy1 * wx0 * corner(y1, x0) + wy1 * wx1 * corner(y1, x1))
    return out[:, None, :, :]


def qc_stn_forward(inputs, packed, eps, block_nt=8, block_n=8):
    """Qc_stn.forward with c=None: returns (c, score).  `eps` supplies rsample noise."""
    N, T = int(inputs.shape[0]), int(inputs.shape[1])
    x = inputs.reshape(N * T, H0, W0).astype(jnp.float32)
    k1w, b1rep, s1, r1, k2w, b2rep, s2, r2, wfc1, bfc1, wfc2, bfc2 = packed['k1']
    tpost, bpost, tms, bms, srow = packed['k2']

    # ---- Pallas kernel 1: localization conv net + fc_loc -> theta -------------
    nt = N * T
    tb1 = block_nt if nt >= block_nt else nt
    ntp = ((nt + tb1 - 1) // tb1) * tb1
    # conv1 im2col (layout plumbing in the wrapper)
    x_col = jnp.concatenate([x[:, ki:ki + H1, :] for ki in range(K1)], axis=2)  # (NT,22,196)
    if ntp != nt:
        x_col = jnp.concatenate(
            [x_col, jnp.zeros((ntp - nt, H1, K1 * W0), jnp.float32)], axis=0)
    w_args = (k1w, b1rep, s1, r1, k2w, b2rep, s2, r2, wfc1, bfc1, wfc2, bfc2)
    theta = pl.pallas_call(
        make_theta_kernel(tb1),
        grid=(ntp // tb1,),
        in_specs=[pl.BlockSpec((tb1, H1, K1 * W0), lambda g: (g, 0, 0))]
                 + [_full_spec(a) for a in w_args],
        out_specs=pl.BlockSpec((tb1, 1, 6), lambda g: (g, 0, 0)),
        out_shape=jax.ShapeDtypeStruct((ntp, 1, 6), jnp.float32),
        compiler_params=pltpu.CompilerParams(dimension_semantics=("parallel",)),
    )(x_col, *w_args)
    theta = theta[:nt].reshape(nt, 2, 3)

    # ---- STN resampling --------------------------------------------------------
    # TODO(synk): F.affine_grid + F.grid_sample (data-dependent bilinear gather) has no
    # clean Pallas/Mosaic equivalent, so it runs as plain JAX/XLA between the kernels.
    x_stn = affine_grid_sample(x.reshape(nt, 1, H0, W0), theta)       # (NT, 1, 28, 28)

    # ---- Pallas kernel 2: conv_post_stn -> mean -> conv_mu/sigma -> rsample ----
    tb2 = block_n if N >= block_n else N
    npad = ((N + tb2 - 1) // tb2) * tb2
    # causal top padding (4 zero rows) done in the wrapper
    xsp = jnp.concatenate(
        [jnp.zeros((nt, 1, KC - 1, W0), jnp.float32), x_stn], axis=2)
    xsp = xsp.reshape(N, T, H0 + KC - 1, W0)                          # (N, T, 32, 28)
    eps_slab = jnp.transpose(eps, (0, 2, 1, 3)).reshape(N, H0, CD * W0)  # (N, 28, 280)
    if npad != N:
        xsp = jnp.concatenate(
            [xsp, jnp.zeros((npad - N, T, H0 + KC - 1, W0), jnp.float32)], axis=0)
        eps_slab = jnp.concatenate(
            [eps_slab, jnp.zeros((npad - N, H0, CD * W0), jnp.float32)], axis=0)
    h_args = (tpost, bpost, tms, bms, srow)
    c_slab, score = pl.pallas_call(
        make_head_kernel(tb2, T),
        grid=(npad // tb2,),
        in_specs=[pl.BlockSpec((tb2, T, H0 + KC - 1, W0), lambda g: (g, 0, 0, 0)),
                  pl.BlockSpec((tb2, H0, CD * W0), lambda g: (g, 0, 0))]
                 + [_full_spec(a) for a in h_args],
        out_specs=[pl.BlockSpec((tb2, H0, CD * W0), lambda g: (g, 0, 0)),
                   pl.BlockSpec((tb2, 1), lambda g: (g, 0))],
        out_shape=[jax.ShapeDtypeStruct((npad, H0, CD * W0), jnp.float32),
                   jax.ShapeDtypeStruct((npad, 1), jnp.float32)],
        compiler_params=pltpu.CompilerParams(dimension_semantics=("parallel",)),
    )(xsp, eps_slab, *h_args)
    c = c_slab[:N].reshape(N, H0, CD, W0).transpose(0, 2, 1, 3)        # (N, 10, 28, 28)
    return c, score[:N, 0]


# ===================== weight repacking (host-side glue) =======================
def conv1_im2col_weights(w):                 # (8,1,7,7) -> (196, 176)
    t = np.zeros((K1 * W0, C1 * W1), np.float32)
    for ki in range(K1):
        for oc in range(C1):
            for oj in range(W1):
                t[ki * W0 + oj: ki * W0 + oj + K1, oc * W1 + oj] = w[oc, 0, ki, :]
    return jnp.asarray(t)


def conv2_loc_weights(w):                    # (10,8,5,5) -> (5, 88, 70)
    t = np.zeros((K2, C1 * P1, C2 * W2), np.float32)
    for ki in range(K2):
        for ic in range(C1):
            for oc in range(C2):
                for oj in range(W2):
                    t[ki, ic * P1 + oj: ic * P1 + oj + K2, oc * W2 + oj] = w[oc, ic, ki, :]
    return jnp.asarray(t)


def pool_selectors(out_size, in_size, n_ch):
    s = np.zeros((2, out_size, in_size), np.float32)                  # row selector
    r = np.zeros((2, n_ch * in_size, n_ch * out_size), np.float32)    # block-diag col selector
    for p in range(2):
        for i in range(out_size):
            s[p, i, 2 * i + p] = 1.0
            for ch in range(n_ch):
                r[p, ch * in_size + 2 * i + p, ch * out_size + i] = 1.0
    return jnp.asarray(s), jnp.asarray(r)


def fc1_repack(w):                           # torch fc_loc[0] weight (32, 90) -> (3, 30, 32)
    t = np.zeros((P2, C2 * P2, FCH), np.float32)
    for i in range(P2):
        for c in range(C2):
            for j in range(P2):
                t[i, c * P2 + j, :] = w[:, c * P2 * P2 + i * P2 + j]
    return jnp.asarray(t)


def causal_conv_weights(w, c_in, c_out):     # (c_out,c_in,5,5) -> (5, c_in*28, c_out*28)
    t = np.zeros((KC, c_in * W0, c_out * W0), np.float32)
    for ki in range(KC):
        for ic in range(c_in):
            for oc in range(c_out):
                for j in range(W0):
                    for kj in range(KC):
                        q = j + kj - (KC - 1)
                        if 0 <= q < W0:
                            t[ki, ic * W0 + q, oc * W0 + j] = w[oc, ic, ki, kj]
    return t


def causal_row_selectors():                  # (5, 28, 28) row shift/zero-pad selectors
    s = np.zeros((KC, W0, W0), np.float32)
    for ki in range(KC):
        for i in range(W0):
            r = i + ki - (KC - 1)
            if 0 <= r < W0:
                s[ki, i, r] = 1.0
    return jnp.asarray(s)


def pack_params(raw):
    f = lambda k: np.asarray(raw[k], np.float32)
    s1, r1 = pool_selectors(P1, W1, C1)
    s2, r2 = pool_selectors(P2, W2, C2)
    k1 = (conv1_im2col_weights(f('w1loc')),
          jnp.asarray(np.repeat(f('b1loc'), P1)[None, :]),
          s1, r1,
          conv2_loc_weights(f('w2loc')),
          jnp.asarray(np.repeat(f('b2loc'), P2)[None, :]),
          s2, r2,
          fc1_repack(f('wfc1')),
          jnp.asarray(f('bfc1')[None, :]),
          jnp.asarray(f('wfc2').T.copy()),
          jnp.asarray(f('bfc2')[None, :]))
    # conv_mu / conv_sigma fused along the output-lane axis
    tms = np.concatenate([causal_conv_weights(f('wmu'), CD, CD),
                          causal_conv_weights(f('wsig'), CD, CD)], axis=2)
    bms = np.concatenate([np.repeat(f('bmu'), W0), np.repeat(f('bsig'), W0)])[None, :]
    k2 = (jnp.asarray(causal_conv_weights(f('wpost'), 1, CD)),
          jnp.asarray(np.repeat(f('bpost'), W0)[None, :]),
          jnp.asarray(tms),
          jnp.asarray(bms),
          causal_row_selectors())
    return {'k1': k1, 'k2': k2}


def init_params(key):
    ks = jax.random.split(key, 13)

    def uinit(k, shape, fan_in):
        bound = 1.0 / math.sqrt(fan_in)
        return jax.random.uniform(k, shape, jnp.float32, -bound, bound)

    raw = dict(
        w1loc=uinit(ks[0], (C1, 1, K1, K1), K1 * K1),
        b1loc=uinit(ks[1], (C1,), K1 * K1),
        w2loc=uinit(ks[2], (C2, C1, K2, K2), C1 * K2 * K2),
        b2loc=uinit(ks[3], (C2,), C1 * K2 * K2),
        wfc1=uinit(ks[4], (FCH, C2 * P2 * P2), C2 * P2 * P2),
        bfc1=uinit(ks[5], (FCH,), C2 * P2 * P2),
        # Qc_stn.__init__ zeroes fc_loc[2].weight (identity STN at init). A small nonzero
        # weight is used here so the affine-warp path is actually exercised by the test.
        wfc2=0.02 * jax.random.normal(ks[6], (6, FCH), jnp.float32),
        bfc2=jnp.asarray([1.0, 0.0, 0.0, 0.0, 1.0, 0.0], jnp.float32),
        wpost=uinit(ks[7], (CD, 1, KC, KC), KC * KC),
        bpost=uinit(ks[8], (CD,), KC * KC),
        wmu=uinit(ks[9], (CD, CD, KC, KC), CD * KC * KC),
        bmu=uinit(ks[10], (CD,), CD * KC * KC),
        wsig=uinit(ks[11], (CD, CD, KC, KC), CD * KC * KC),
        bsig=uinit(ks[12], (CD,), CD * KC * KC),
    )
    return raw, pack_params(raw)


# ============================ pure-JAX reference ===============================
def reference_forward(inputs, eps, raw):
    N, T = int(inputs.shape[0]), int(inputs.shape[1])
    x = inputs.astype(jnp.float32)

    def conv(a, w, b, causal):
        if causal:
            a = jnp.pad(a, ((0, 0), (0, 0), (KC - 1, 0), (KC - 1, 0)))
        y = lax.conv_general_dilated(a, w, (1, 1), 'VALID',
                                     dimension_numbers=('NCHW', 'OIHW', 'NCHW'),
                                     precision=lax.Precision.HIGHEST)
        return y + b[None, :, None, None]

    def maxpool(a):
        return lax.reduce_window(a, -jnp.inf, lax.max, (1, 1, 2, 2), (1, 1, 2, 2), 'VALID')

    def stn(a):                                           # a: (N, 1, 28, 28)
        y = jnp.maximum(maxpool(conv(a, raw['w1loc'], raw['b1loc'], False)), 0.0)
        y = jnp.maximum(maxpool(conv(y, raw['w2loc'], raw['b2loc'], False)), 0.0)
        xs = y.reshape(a.shape[0], C2 * P2 * P2)
        h = jnp.maximum(xs @ raw['wfc1'].T + raw['bfc1'], 0.0)
        theta = (h @ raw['wfc2'].T + raw['bfc2']).reshape(-1, 2, 3)
        return affine_grid_sample(a, theta)

    embs = [jnp.maximum(conv(stn(x[:, t]), raw['wpost'], raw['bpost'], True), 0.0)
            for t in range(T)]
    emb = sum(embs) / float(T)
    mu = conv(emb, raw['wmu'], raw['bmu'], True)
    sigma = jax.nn.softplus(conv(emb, raw['wsig'], raw['bsig'], True))
    c = mu + sigma * eps
    logp = -(c - mu) ** 2 / (2.0 * sigma ** 2) - jnp.log(sigma) - _LOG_SQRT_2PI
    return c, logp.sum(axis=(1, 2, 3))


# =================================== main ======================================
if __name__ == "__main__":
    key = jax.random.PRNGKey(0)
    k_x, k_eps, k_p = jax.random.split(key, 3)
    N, T = 2, 2
    inputs = jax.random.uniform(k_x, (N, T, 1, H0, W0), jnp.float32)   # (N, views, 1, 28, 28)
    eps = jax.random.normal(k_eps, (N, CD, H0, W0), jnp.float32)       # rsample noise
    raw, packed = init_params(k_p)

    c, score = qc_stn_forward(inputs, packed, eps)
    jax.block_until_ready((c, score))

    c_ref, score_ref = reference_forward(inputs, eps, raw)
    np.testing.assert_allclose(np.asarray(c), np.asarray(c_ref), rtol=2e-2, atol=2e-2)
    np.testing.assert_allclose(np.asarray(score), np.asarray(score_ref), rtol=2e-2, atol=5e-1)
    print("KERNEL_OK")
</pallas_src>

<mosaic_0001>
module attributes {stable_mosaic.version = 11 : i64} {
  func.func @theta_kernel(%arg0: i32, %arg1: memref<4x22x196xf32, #tpu.memory_space<vmem>>, %arg2: memref<196x176xf32, #tpu.memory_space<vmem>>, %arg3: memref<1x88xf32, #tpu.memory_space<vmem>>, %arg4: memref<2x11x22xf32, #tpu.memory_space<vmem>>, %arg5: memref<2x176x88xf32, #tpu.memory_space<vmem>>, %arg6: memref<5x88x70xf32, #tpu.memory_space<vmem>>, %arg7: memref<1x30xf32, #tpu.memory_space<vmem>>, %arg8: memref<2x3x7xf32, #tpu.memory_space<vmem>>, %arg9: memref<2x70x30xf32, #tpu.memory_space<vmem>>, %arg10: memref<3x30x32xf32, #tpu.memory_space<vmem>>, %arg11: memref<1x32xf32, #tpu.memory_space<vmem>>, %arg12: memref<32x6xf32, #tpu.memory_space<vmem>>, %arg13: memref<1x6xf32, #tpu.memory_space<vmem>>, %arg14: memref<4x1x6xf32, #tpu.memory_space<vmem>>) attributes {dimension_semantics = [#tpu.dimension_semantics<parallel>], iteration_bounds = array<i64: 1>, scalar_prefetch = 0 : i64, scratch_operands = 0 : i64, tpu.core_type = #tpu.core_type<tc>, window_params = [{transform_indices = @transform_0, window_bounds = array<i64: 4, 22, 196>}, {pipeline_mode = #tpu.pipeline_mode<synchronous>, transform_indices = @transform_1, window_bounds = array<i64: 196, 176>}, {pipeline_mode = #tpu.pipeline_mode<synchronous>, transform_indices = @transform_2, window_bounds = array<i64: 1, 88>}, {pipeline_mode = #tpu.pipeline_mode<synchronous>, transform_indices = @transform_3, window_bounds = array<i64: 2, 11, 22>}, {pipeline_mode = #tpu.pipeline_mode<synchronous>, transform_indices = @transform_4, window_bounds = array<i64: 2, 176, 88>}, {pipeline_mode = #tpu.pipeline_mode<synchronous>, transform_indices = @transform_5, window_bounds = array<i64: 5, 88, 70>}, {pipeline_mode = #tpu.pipeline_mode<synchronous>, transform_indices = @transform_6, window_bounds = array<i64: 1, 30>}, {pipeline_mode = #tpu.pipeline_mode<synchronous>, transform_indices = @transform_7, window_bounds = array<i64: 2, 3, 7>}, {pipeline_mode = #tpu.pipeline_mode<synchronous>, transform_indices = @transform_8, window_bounds = array<i64: 2, 70, 30>}, {pipeline_mode = #tpu.pipeline_mode<synchronous>, transform_indices = @transform_9, window_bounds = array<i64: 3, 30, 32>}, {pipeline_mode = #tpu.pipeline_mode<synchronous>, transform_indices = @transform_10, window_bounds = array<i64: 1, 32>}, {pipeline_mode = #tpu.pipeline_mode<synchronous>, transform_indices = @transform_11, window_bounds = array<i64: 32, 6>}, {pipeline_mode = #tpu.pipeline_mode<synchronous>, transform_indices = @transform_12, window_bounds = array<i64: 1, 6>}, {transform_indices = @transform_13, window_bounds = array<i64: 4, 1, 6>}]} {
    %c0 = arith.constant 0 : index
    %c0_0 = arith.constant 0 : index
    %c0_1 = arith.constant 0 : index
    %0 = vector.load %arg1[%c0, %c0_0, %c0_1] : memref<4x22x196xf32, #tpu.memory_space<vmem>>, vector<1x22x196xf32>
    %1 = vector.shape_cast %0 : vector<1x22x196xf32> to vector<22x196xf32>
    %c0_2 = arith.constant 0 : index
    %c0_3 = arith.constant 0 : index
    %2 = vector.load %arg2[%c0_2, %c0_3] : memref<196x176xf32, #tpu.memory_space<vmem>>, vector<196x176xf32>
    %cst = arith.constant dense<0.000000e+00> : vector<22x176xf32>
    %3 = tpu.matmul %1, %2, %cst {dimension_numbers = #tpu.dot_dimension_numbers<[1], [0], [0], [1], [0, 0, 1, 1], [], []>} : vector<22x196xf32>, vector<196x176xf32>, vector<22x176xf32> -> vector<22x176xf32>
    %c0_4 = arith.constant 0 : index
    %c0_5 = arith.constant 0 : index
    %c0_6 = arith.constant 0 : index
    %4 = vector.load %arg4[%c0_4, %c0_5, %c0_6] : memref<2x11x22xf32, #tpu.memory_space<vmem>>, vector<1x11x22xf32>
    %5 = vector.shape_cast %4 : vector<1x11x22xf32> to vector<11x22xf32>
    %cst_7 = arith.constant dense<0.000000e+00> : vector<11x176xf32>
    %6 = tpu.matmul %5, %3, %cst_7 {dimension_numbers = #tpu.dot_dimension_numbers<[1], [0], [0], [1], [0, 0, 1, 1], [], []>} : vector<11x22xf32>, vector<22x176xf32>, vector<11x176xf32> -> vector<11x176xf32>
    %c1 = arith.constant 1 : index
    %c0_8 = arith.constant 0 : index
    %c0_9 = arith.constant 0 : index
    %7 = vector.load %arg4[%c1, %c0_8, %c0_9] : memref<2x11x22xf32, #tpu.memory_space<vmem>>, vector<1x11x22xf32>
    %8 = vector.shape_cast %7 : vector<1x11x22xf32> to vector<11x22xf32>
    %cst_10 = arith.constant dense<0.000000e+00> : vector<11x176xf32>
    %9 = tpu.matmul %8, %3, %cst_10 {dimension_numbers = #tpu.dot_dimension_numbers<[1], [0], [0], [1], [0, 0, 1, 1], [], []>} : vector<11x22xf32>, vector<22x176xf32>, vector<11x176xf32> -> vector<11x176xf32>
    %c0_11 = arith.constant 0 : index
    %c0_12 = arith.constant 0 : index
    %c0_13 = arith.constant 0 : index
    %10 = vector.load %arg5[%c0_11, %c0_12, %c0_13] : memref<2x176x88xf32, #tpu.memory_space<vmem>>, vector<1x176x88xf32>
    %11 = vector.shape_cast %10 : vector<1x176x88xf32> to vector<176x88xf32>
    %cst_14 = arith.constant dense<0.000000e+00> : vector<11x88xf32>
    %12 = tpu.matmul %6, %11, %cst_14 {dimension_numbers = #tpu.dot_dimension_numbers<[1], [0], [0], [1], [0, 0, 1, 1], [], []>} : vector<11x176xf32>, vector<176x88xf32>, vector<11x88xf32> -> vector<11x88xf32>
    %c1_15 = arith.constant 1 : index
    %c0_16 = arith.constant 0 : index
    %c0_17 = arith.constant 0 : index
    %13 = vector.load %arg5[%c1_15, %c0_16, %c0_17] : memref<2x176x88xf32, #tpu.memory_space<vmem>>, vector<1x176x88xf32>
    %14 = vector.shape_cast %13 : vector<1x176x88xf32> to vector<176x88xf32>
    %cst_18 = arith.constant dense<0.000000e+00> : vector<11x88xf32>
    %15 = tpu.matmul %6, %14, %cst_18 {dimension_numbers = #tpu.dot_dimension_numbers<[1], [0], [0], [1], [0, 0, 1, 1], [], []>} : vector<11x176xf32>, vector<176x88xf32>, vector<11x88xf32> -> vector<11x88xf32>
    %16 = arith.maximumf %12, %15 : vector<11x88xf32>
    %c0_19 = arith.constant 0 : index
    %c0_20 = arith.constant 0 : index
    %c0_21 = arith.constant 0 : index
    %17 = vector.load %arg5[%c0_19, %c0_20, %c0_21] : memref<2x176x88xf32, #tpu.memory_space<vmem>>, vector<1x176x88xf32>
    %18 = vector.shape_cast %17 : vector<1x176x88xf32> to vector<176x88xf32>
    %cst_22 = arith.constant dense<0.000000e+00> : vector<11x88xf32>
    %19 = tpu.matmul %9, %18, %cst_22 {dimension_numbers = #tpu.dot_dimension_numbers<[1], [0], [0], [1], [0, 0, 1, 1], [], []>} : vector<11x176xf32>, vector<176x88xf32>, vector<11x88xf32> -> vector<11x88xf32>
    %c1_23 = arith.constant 1 : index
    %c0_24 = arith.constant 0 : index
    %c0_25 = arith.constant 0 : index
    %20 = vector.load %arg5[%c1_23, %c0_24, %c0_25] : memref<2x176x88xf32, #tpu.memory_space<vmem>>, vector<1x176x88xf32>
    %21 = vector.shape_cast %20 : vector<1x176x88xf32> to vector<176x88xf32>
    %cst_26 = arith.constant dense<0.000000e+00> : vector<11x88xf32>
    %22 = tpu.matmul %9, %21, %cst_26 {dimension_numbers = #tpu.dot_dimension_numbers<[1], [0], [0], [1], [0, 0, 1, 1], [], []>} : vector<11x176xf32>, vector<176x88xf32>, vector<11x88xf32> -> vector<11x88xf32>
    %23 = arith.maximumf %19, %22 : vector<11x88xf32>
    %24 = arith.maximumf %16, %23 : vector<11x88xf32>
    %c0_27 = arith.constant 0 : index
    %c0_28 = arith.constant 0 : index
    %25 = vector.load %arg3[%c0_27, %c0_28] : memref<1x88xf32, #tpu.memory_space<vmem>>, vector<1x88xf32>
    %26 = vector.broadcast %25 : vector<1x88xf32> to vector<11x88xf32>
    %27 = arith.addf %24, %26 : vector<11x88xf32>
    %cst_29 = arith.constant 0.000000e+00 : f32
    %28 = vector.broadcast %cst_29 : f32 to vector<11x88xf32>
    %29 = arith.maximumf %27, %28 : vector<11x88xf32>
    %30 = vector.extract_strided_slice %29 {offsets = [0, 0], sizes = [7, 88], strides = [1, 1]} : vector<11x88xf32> to vector<7x88xf32>
    %c0_30 = arith.constant 0 : index
    %c0_31 = arith.constant 0 : index
    %c0_32 = arith.constant 0 : index
    %31 = vector.load %arg6[%c0_30, %c0_31, %c0_32] : memref<5x88x70xf32, #tpu.memory_space<vmem>>, vector<1x88x70xf32>
    %32 = vector.shape_cast %31 : vector<1x88x70xf32> to vector<88x70xf32>
    %cst_33 = arith.constant dense<0.000000e+00> : vector<7x70xf32>
    %33 = tpu.matmul %30, %32, %cst_33 {dimension_numbers = #tpu.dot_dimension_numbers<[1], [0], [0], [1], [0, 0, 1, 1], [], []>} : vector<7x88xf32>, vector<88x70xf32>, vector<7x70xf32> -> vector<7x70xf32>
    %34 = vector.extract_strided_slice %29 {offsets = [1, 0], sizes = [7, 88], strides = [1, 1]} : vector<11x88xf32> to vector<7x88xf32>
    %c1_34 = arith.constant 1 : index
    %c0_35 = arith.constant 0 : index
    %c0_36 = arith.constant 0 : index
    %35 = vector.load %arg6[%c1_34, %c0_35, %c0_36] : memref<5x88x70xf32, #tpu.memory_space<vmem>>, vector<1x88x70xf32>
    %36 = vector.shape_cast %35 : vector<1x88x70xf32> to vector<88x70xf32>
    %cst_37 = arith.constant dense<0.000000e+00> : vector<7x70xf32>
    %37 = tpu.matmul %34, %36, %cst_37 {dimension_numbers = #tpu.dot_dimension_numbers<[1], [0], [0], [1], [0, 0, 1, 1], [], []>} : vector<7x88xf32>, vector<88x70xf32>, vector<7x70xf32> -> vector<7x70xf32>
    %38 = arith.addf %33, %37 : vector<7x70xf32>
    %39 = vector.extract_strided_slice %29 {offsets = [2, 0], sizes = [7, 88], strides = [1, 1]} : vector<11x88xf32> to vector<7x88xf32>
    %c2 = arith.constant 2 : index
    %c0_38 = arith.constant 0 : index
    %c0_39 = arith.constant 0 : index
    %40 = vector.load %arg6[%c2, %c0_38, %c0_39] : memref<5x88x70xf32, #tpu.memory_space<vmem>>, vector<1x88x70xf32>
    %41 = vector.shape_cast %40 : vector<1x88x70xf32> to vector<88x70xf32>
    %cst_40 = arith.constant dense<0.000000e+00> : vector<7x70xf32>
    %42 = tpu.matmul %39, %41, %cst_40 {dimension_numbers = #tpu.dot_dimension_numbers<[1], [0], [0], [1], [0, 0, 1, 1], [], []>} : vector<7x88xf32>, vector<88x70xf32>, vector<7x70xf32> -> vector<7x70xf32>
    %43 = arith.addf %38, %42 : vector<7x70xf32>
    %44 = vector.extract_strided_slice %29 {offsets = [3, 0], sizes = [7, 88], strides = [1, 1]} : vector<11x88xf32> to vector<7x88xf32>
    %c3 = arith.constant 3 : index
    %c0_41 = arith.constant 0 : index
    %c0_42 = arith.constant 0 : index
    %45 = vector.load %arg6[%c3, %c0_41, %c0_42] : memref<5x88x70xf32, #tpu.memory_space<vmem>>, vector<1x88x70xf32>
    %46 = vector.shape_cast %45 : vector<1x88x70xf32> to vector<88x70xf32>
    %cst_43 = arith.constant dense<0.000000e+00> : vector<7x70xf32>
    %47 = tpu.matmul %44, %46, %cst_43 {dimension_numbers = #tpu.dot_dimension_numbers<[1], [0], [0], [1], [0, 0, 1, 1], [], []>} : vector<7x88xf32>, vector<88x70xf32>, vector<7x70xf32> -> vector<7x70xf32>
    %48 = arith.addf %43, %47 : vector<7x70xf32>
    %49 = vector.extract_strided_slice %29 {offsets = [4, 0], sizes = [7, 88], strides = [1, 1]} : vector<11x88xf32> to vector<7x88xf32>
    %c4 = arith.constant 4 : index
    %c0_44 = arith.constant 0 : index
    %c0_45 = arith.constant 0 : index
    %50 = vector.load %arg6[%c4, %c0_44, %c0_45] : memref<5x88x70xf32, #tpu.memory_space<vmem>>, vector<1x88x70xf32>
    %51 = vector.shape_cast %50 : vector<1x88x70xf32> to vector<88x70xf32>
    %cst_46 = arith.constant dense<0.000000e+00> : vector<7x70xf32>
    %52 = tpu.matmul %49, %51, %cst_46 {dimension_numbers = #tpu.dot_dimension_numbers<[1], [0], [0], [1], [0, 0, 1, 1], [], []>} : vector<7x88xf32>, vector<88x70xf32>, vector<7x70xf32> -> vector<7x70xf32>
    %53 = arith.addf %48, %52 : vector<7x70xf32>
    %c0_47 = arith.constant 0 : index
    %c0_48 = arith.constant 0 : index
    %c0_49 = arith.constant 0 : index
    %54 = vector.load %arg8[%c0_47, %c0_48, %c0_49] : memref<2x3x7xf32, #tpu.memory_space<vmem>>, vector<1x3x7xf32>
    %55 = vector.shape_cast %54 : vector<1x3x7xf32> to vector<3x7xf32>
    %cst_50 = arith.constant dense<0.000000e+00> : vector<3x70xf32>
    %56 = tpu.matmul %55, %53, %cst_50 {dimension_numbers = #tpu.dot_dimension_numbers<[1], [0], [0], [1], [0, 0, 1, 1], [], []>} : vector<3x7xf32>, vector<7x70xf32>, vector<3x70xf32> -> vector<3x70xf32>
    %c1_51 = arith.constant 1 : index
    %c0_52 = arith.constant 0 : index
    %c0_53 = arith.constant 0 : index
    %57 = vector.load %arg8[%c1_51, %c0_52, %c0_53] : memref<2x3x7xf32, #tpu.memory_space<vmem>>, vector<1x3x7xf32>
    %58 = vector.shape_cast %57 : vector<1x3x7xf32> to vector<3x7xf32>
    %cst_54 = arith.constant dense<0.000000e+00> : vector<3x70xf32>
    %59 = tpu.matmul %58, %53, %cst_54 {dimension_numbers = #tpu.dot_dimension_numbers<[1], [0], [0], [1], [0, 0, 1, 1], [], []>} : vector<3x7xf32>, vector<7x70xf32>, vector<3x70xf32> -> vector<3x70xf32>
    %c0_55 = arith.constant 0 : index
    %c0_56 = arith.constant 0 : index
    %c0_57 = arith.constant 0 : index
    %60 = vector.load %arg9[%c0_55, %c0_56, %c0_57] : memref<2x70x30xf32, #tpu.memory_space<vmem>>, vector<1x70x30xf32>
    %61 = vector.shape_cast %60 : vector<1x70x30xf32> to vector<70x30xf32>
    %cst_58 = arith.constant dense<0.000000e+00> : vector<3x30xf32>
    %62 = tpu.matmul %56, %61, %cst_58 {dimension_numbers = #tpu.dot_dimension_numbers<[1], [0], [0], [1], [0, 0, 1, 1], [], []>} : vector<3x70xf32>, vector<70x30xf32>, vector<3x30xf32> -> vector<3x30xf32>
    %c1_59 = arith.constant 1 : index
    %c0_60 = arith.constant 0 : index
    %c0_61 = arith.constant 0 : index
    %63 = vector.load %arg9[%c1_59, %c0_60, %c0_61] : memref<2x70x30xf32, #tpu.memory_space<vmem>>, vector<1x70x30xf32>
    %64 = vector.shape_cast %63 : vector<1x70x30xf32> to vector<70x30xf32>
    %cst_62 = arith.constant dense<0.000000e+00> : vector<3x30xf32>
    %65 = tpu.matmul %56, %64, %cst_62 {dimension_numbers = #tpu.dot_dimension_numbers<[1], [0], [0], [1], [0, 0, 1, 1], [], []>} : vector<3x70xf32>, vector<70x30xf32>, vector<3x30xf32> -> vector<3x30xf32>
    %66 = arith.maximumf %62, %65 : vector<3x30xf32>
    %c0_63 = arith.constant 0 : index
    %c0_64 = arith.constant 0 : index
    %c0_65 = arith.constant 0 : index
    %67 = vector.load %arg9[%c0_63, %c0_64, %c0_65] : memref<2x70x30xf32, #tpu.memory_space<vmem>>, vector<1x70x30xf32>
    %68 = vector.shape_cast %67 : vector<1x70x30xf32> to vector<70x30xf32>
    %cst_66 = arith.constant dense<0.000000e+00> : vector<3x30xf32>
    %69 = tpu.matmul %59, %68, %cst_66 {dimension_numbers = #tpu.dot_dimension_numbers<[1], [0], [0], [1], [0, 0, 1, 1], [], []>} : vector<3x70xf32>, vector<70x30xf32>, vector<3x30xf32> -> vector<3x30xf32>
    %c1_67 = arith.constant 1 : index
    %c0_68 = arith.constant 0 : index
    %c0_69 = arith.constant 0 : index
    %70 = vector.load %arg9[%c1_67, %c0_68, %c0_69] : memref<2x70x30xf32, #tpu.memory_space<vmem>>, vector<1x70x30xf32>
    %71 = vector.shape_cast %70 : vector<1x70x30xf32> to vector<70x30xf32>
    %cst_70 = arith.constant dense<0.000000e+00> : vector<3x30xf32>
    %72 = tpu.matmul %59, %71, %cst_70 {dimension_numbers = #tpu.dot_dimension_numbers<[1], [0], [0], [1], [0, 0, 1, 1], [], []>} : vector<3x70xf32>, vector<70x30xf32>, vector<3x30xf32> -> vector<3x30xf32>
    %73 = arith.maximumf %69, %72 : vector<3x30xf32>
    %74 = arith.maximumf %66, %73 : vector<3x30xf32>
    %c0_71 = arith.constant 0 : index
    %c0_72 = arith.constant 0 : index
    %75 = vector.load %arg7[%c0_71, %c0_72] : memref<1x30xf32, #tpu.memory_space<vmem>>, vector<1x30xf32>
    %76 = vector.broadcast %75 : vector<1x30xf32> to vector<3x30xf32>
    %77 = arith.addf %74, %76 : vector<3x30xf32>
    %cst_73 = arith.constant 0.000000e+00 : f32
    %78 = vector.broadcast %cst_73 : f32 to vector<3x30xf32>
    %79 = arith.maximumf %77, %78 : vector<3x30xf32>
    %80 = vector.extract_strided_slice %79 {offsets = [0, 0], sizes = [1, 30], strides = [1, 1]} : vector<3x30xf32> to vector<1x30xf32>
    %c0_74 = arith.constant 0 : index
    %c0_75 = arith.constant 0 : index
    %c0_76 = arith.constant 0 : index
    %81 = vector.load %arg10[%c0_74, %c0_75, %c0_76] : memref<3x30x32xf32, #tpu.memory_space<vmem>>, vector<1x30x32xf32>
    %82 = vector.shape_cast %81 : vector<1x30x32xf32> to vector<30x32xf32>
    %cst_77 = arith.constant dense<0.000000e+00> : vector<1x32xf32>
    %83 = tpu.matmul %80, %82, %cst_77 {dimension_numbers = #tpu.dot_dimension_numbers<[1], [0], [0], [1], [0, 0, 1, 1], [], []>} : vector<1x30xf32>, vector<30x32xf32>, vector<1x32xf32> -> vector<1x32xf32>
    %84 = vector.extract_strided_slice %79 {offsets = [1, 0], sizes = [1, 30], strides = [1, 1]} : vector<3x30xf32> to vector<1x30xf32>
    %c1_78 = arith.constant 1 : index
    %c0_79 = arith.constant 0 : index
    %c0_80 = arith.constant 0 : index
    %85 = vector.load %arg10[%c1_78, %c0_79, %c0_80] : memref<3x30x32xf32, #tpu.memory_space<vmem>>, vector<1x30x32xf32>
    %86 = vector.shape_cast %85 : vector<1x30x32xf32> to vector<30x32xf32>
    %cst_81 = arith.constant dense<0.000000e+00> : vector<1x32xf32>
    %87 = tpu.matmul %84, %86, %cst_81 {dimension_numbers = #tpu.dot_dimension_numbers<[1], [0], [0], [1], [0, 0, 1, 1], [], []>} : vector<1x30xf32>, vector<30x32xf32>, vector<1x32xf32> -> vector<1x32xf32>
    %88 = arith.addf %83, %87 : vector<1x32xf32>
    %89 = vector.extract_strided_slice %79 {offsets = [2, 0], sizes = [1, 30], strides = [1, 1]} : vector<3x30xf32> to vector<1x30xf32>
    %c2_82 = arith.constant 2 : index
    %c0_83 = arith.constant 0 : index
    %c0_84 = arith.constant 0 : index
    %90 = vector.load %arg10[%c2_82, %c0_83, %c0_84] : memref<3x30x32xf32, #tpu.memory_space<vmem>>, vector<1x30x32xf32>
    %91 = vector.shape_cast %90 : vector<1x30x32xf32> to vector<30x32xf32>
    %cst_85 = arith.constant dense<0.000000e+00> : vector<1x32xf32>
    %92 = tpu.matmul %89, %91, %cst_85 {dimension_numbers = #tpu.dot_dimension_numbers<[1], [0], [0], [1], [0, 0, 1, 1], [], []>} : vector<1x30xf32>, vector<30x32xf32>, vector<1x32xf32> -> vector<1x32xf32>
    %93 = arith.addf %88, %92 : vector<1x32xf32>
    %c0_86 = arith.constant 0 : index
    %c0_87 = arith.constant 0 : index
    %94 = vector.load %arg11[%c0_86, %c0_87] : memref<1x32xf32, #tpu.memory_space<vmem>>, vector<1x32xf32>
    %95 = arith.addf %93, %94 : vector<1x32xf32>
    %cst_88 = arith.constant 0.000000e+00 : f32
    %96 = vector.broadcast %cst_88 : f32 to vector<1x32xf32>
    %97 = arith.maximumf %95, %96 : vector<1x32xf32>
    %c0_89 = arith.constant 0 : index
    %c0_90 = arith.constant 0 : index
    %98 = vector.load %arg12[%c0_89, %c0_90] : memref<32x6xf32, #tpu.memory_space<vmem>>, vector<32x6xf32>
    %cst_91 = arith.constant dense<0.000000e+00> : vector<1x6xf32>
    %99 = tpu.matmul %97, %98, %cst_91 {dimension_numbers = #tpu.dot_dimension_numbers<[1], [0], [0], [1], [0, 0, 1, 1], [], []>} : vector<1x32xf32>, vector<32x6xf32>, vector<1x6xf32> -> vector<1x6xf32>
    %c0_92 = arith.constant 0 : index
    %c0_93 = arith.constant 0 : index
    %100 = vector.load %arg13[%c0_92, %c0_93] : memref<1x6xf32, #tpu.memory_space<vmem>>, vector<1x6xf32>
    %101 = arith.addf %99, %100 : vector<1x6xf32>
    %c0_94 = arith.constant 0 : index
    %c0_95 = arith.constant 0 : index
    %c0_96 = arith.constant 0 : index
    %102 = vector.load %arg14[%c0_94, %c0_95, %c0_96] : memref<4x1x6xf32, #tpu.memory_space<vmem>>, vector<1x1x6xf32>
    %103 = vector.shape_cast %102 : vector<1x1x6xf32> to vector<1x6xf32>
    %104 = vector.shape_cast %101 : vector<1x6xf32> to vector<1x1x6xf32>
    tpu.vector_store %arg14[%c0_94, %c0_95, %c0_96], %104 {strides = array<i32>} : memref<4x1x6xf32, #tpu.memory_space<vmem>>, vector<1x1x6xf32>,
    %c1_97 = arith.constant 1 : index
    %c0_98 = arith.constant 0 : index
    %c0_99 = arith.constant 0 : index
    %105 = vector.load %arg1[%c1_97, %c0_98, %c0_99] : memref<4x22x196xf32, #tpu.memory_space<vmem>>, vector<1x22x196xf32>
    %106 = vector.shape_cast %105 : vector<1x22x196xf32> to vector<22x196xf32>
    %c0_100 = arith.constant 0 : index
    %c0_101 = arith.constant 0 : index
    %107 = vector.load %arg2[%c0_100, %c0_101] : memref<196x176xf32, #tpu.memory_space<vmem>>, vector<196x176xf32>
    %cst_102 = arith.constant dense<0.000000e+00> : vector<22x176xf32>
    %108 = tpu.matmul %106, %107, %cst_102 {dimension_numbers = #tpu.dot_dimension_numbers<[1], [0], [0], [1], [0, 0, 1, 1], [], []>} : vector<22x196xf32>, vector<196x176xf32>, vector<22x176xf32> -> vector<22x176xf32>
    %c0_103 = arith.constant 0 : index
    %c0_104 = arith.constant 0 : index
    %c0_105 = arith.constant 0 : index
    %109 = vector.load %arg4[%c0_103, %c0_104, %c0_105] : memref<2x11x22xf32, #tpu.memory_space<vmem>>, vector<1x11x22xf32>
    %110 = vector.shape_cast %109 : vector<1x11x22xf32> to vector<11x22xf32>
    %cst_106 = arith.constant dense<0.000000e+00> : vector<11x176xf32>
    %111 = tpu.matmul %110, %108, %cst_106 {dimension_numbers = #tpu.dot_dimension_numbers<[1], [0], [0], [1], [0, 0, 1, 1], [], []>} : vector<11x22xf32>, vector<22x176xf32>, vector<11x176xf32> -> vector<11x176xf32>
    %c1_107 = arith.constant 1 : index
    %c0_108 = arith.constant 0 : index
    %c0_109 = arith.constant 0 : index
    %112 = vector.load %arg4[%c1_107, %c0_108, %c0_109] : memref<2x11x22xf32, #tpu.memory_space<vmem>>, vector<1x11x22xf32>
    %113 = vector.shape_cast %112 : vector<1x11x22xf32> to vector<11x22xf32>
    %cst_110 = arith.constant dense<0.000000e+00> : vector<11x176xf32>
    %114 = tpu.matmul %113, %108, %cst_110 {dimension_numbers = #tpu.dot_dimension_numbers<[1], [0], [0], [1], [0, 0, 1, 1], [], []>} : vector<11x22xf32>, vector<22x176xf32>, vector<11x176xf32> -> vector<11x176xf32>
    %c0_111 = arith.constant 0 : index
    %c0_112 = arith.constant 0 : index
    %c0_113 = arith.constant 0 : index
    %115 = vector.load %arg5[%c0_111, %c0_112, %c0_113] : memref<2x176x88xf32, #tpu.memory_space<vmem>>, vector<1x176x88xf32>
    %116 = vector.shape_cast %115 : vector<1x176x88xf32> to vector<176x88xf32>
    %cst_114 = arith.constant dense<0.000000e+00> : vector<11x88xf32>
    %117 = tpu.matmul %111, %116, %cst_114 {dimension_numbers = #tpu.dot_dimension_numbers<[1], [0], [0], [1], [0, 0, 1, 1], [], []>} : vector<11x176xf32>, vector<176x88xf32>, vector<11x88xf32> -> vector<11x88xf32>
    %c1_115 = arith.constant 1 : index
    %c0_116 = arith.constant 0 : index
    %c0_117 = arith.constant 0 : index
    %118 = vector.load %arg5[%c1_115, %c0_116, %c0_117] : memref<2x176x88xf32, #tpu.memory_space<vmem>>, vector<1x176x88xf32>
    %119 = vector.shape_cast %118 : vector<1x176x88xf32> to vector<176x88xf32>
    %cst_118 = arith.constant dense<0.000000e+00> : vector<11x88xf32>
    %120 = tpu.matmul %111, %119, %cst_118 {dimension_numbers = #tpu.dot_dimension_numbers<[1], [0], [0], [1], [0, 0, 1, 1], [], []>} : vector<11x176xf32>, vector<176x88xf32>, vector<11x88xf32> -> vector<11x88xf32>
    %121 = arith.maximumf %117, %120 : vector<11x88xf32>
    %c0_119 = arith.constant 0 : index
    %c0_120 = arith.constant 0 : index
    %c0_121 = arith.constant 0 : index
    %122 = vector.load %arg5[%c0_119, %c0_120, %c0_121] : memref<2x176x88xf32, #tpu.memory_space<vmem>>, vector<1x176x88xf32>
    %123 = vector.shape_cast %122 : vector<1x176x88xf32> to vector<176x88xf32>
    %cst_122 = arith.constant dense<0.000000e+00> : vector<11x88xf32>
    %124 = tpu.matmul %114, %123, %cst_122 {dimension_numbers = #tpu.dot_dimension_numbers<[1], [0], [0], [1], [0, 0, 1, 1], [], []>} : vector<11x176xf32>, vector<176x88xf32>, vector<11x88xf32> -> vector<11x88xf32>
    %c1_123 = arith.constant 1 : index
    %c0_124 = arith.constant 0 : index
    %c0_125 = arith.constant 0 : index
    %125 = vector.load %arg5[%c1_123, %c0_124, %c0_125] : memref<2x176x88xf32, #tpu.memory_space<vmem>>, vector<1x176x88xf32>
    %126 = vector.shape_cast %125 : vector<1x176x88xf32> to vector<176x88xf32>
    %cst_126 = arith.constant dense<0.000000e+00> : vector<11x88xf32>
    %127 = tpu.matmul %114, %126, %cst_126 {dimension_numbers = #tpu.dot_dimension_numbers<[1], [0], [0], [1], [0, 0, 1, 1], [], []>} : vector<11x176xf32>, vector<176x88xf32>, vector<11x88xf32> -> vector<11x88xf32>
    %128 = arith.maximumf %124, %127 : vector<11x88xf32>
    %129 = arith.maximumf %121, %128 : vector<11x88xf32>
    %c0_127 = arith.constant 0 : index
    %c0_128 = arith.constant 0 : index
    %130 = vector.load %arg3[%c0_127, %c0_128] : memref<1x88xf32, #tpu.memory_space<vmem>>, vector<1x88xf32>
    %131 = vector.broadcast %130 : vector<1x88xf32> to vector<11x88xf32>
    %132 = arith.addf %129, %131 : vector<11x88xf32>
    %cst_129 = arith.constant 0.000000e+00 : f32
    %133 = vector.broadcast %cst_129 : f32 to vector<11x88xf32>
    %134 = arith.maximumf %132, %133 : vector<11x88xf32>
    %135 = vector.extract_strided_slice %134 {offsets = [0, 0], sizes = [7, 88], strides = [1, 1]} : vector<11x88xf32> to vector<7x88xf32>
    %c0_130 = arith.constant 0 : index
    %c0_131 = arith.constant 0 : index
    %c0_132 = arith.constant 0 : index
    %136 = vector.load %arg6[%c0_130, %c0_131, %c0_132] : memref<5x88x70xf32, #tpu.memory_space<vmem>>, vector<1x88x70xf32>
    %137 = vector.shape_cast %136 : vector<1x88x70xf32> to vector<88x70xf32>
    %cst_133 = arith.constant dense<0.000000e+00> : vector<7x70xf32>
    %138 = tpu.matmul %135, %137, %cst_133 {dimension_numbers = #tpu.dot_dimension_numbers<[1], [0], [0], [1], [0, 0, 1, 1], [], []>} : vector<7x88xf32>, vector<88x70xf32>, vector<7x70xf32> -> vector<7x70xf32>
    %139 = vector.extract_strided_slice %134 {offsets = [1, 0], sizes = [7, 88], strides = [1, 1]} : vector<11x88xf32> to vector<7x88xf32>
    %c1_134 = arith.constant 1 : index
    %c0_135 = arith.constant 0 : index
    %c0_136 = arith.constant 0 : index
    %140 = vector.load %arg6[%c1_134, %c0_135, %c0_136] : memref<5x88x70xf32, #tpu.memory_space<vmem>>, vector<1x88x70xf32>
    %141 = vector.shape_cast %140 : vector<1x88x70xf32> to vector<88x70xf32>
    %cst_137 = arith.constant dense<0.000000e+00> : vector<7x70xf32>
    %142 = tpu.matmul %139, %141, %cst_137 {dimension_numbers = #tpu.dot_dimension_numbers<[1], [0], [0], [1], [0, 0, 1, 1], [], []>} : vector<7x88xf32>, vector<88x70xf32>, vector<7x70xf32> -> vector<7x70xf32>
    %143 = arith.addf %138, %142 : vector<7x70xf32>
    %144 = vector.extract_strided_slice %134 {offsets = [2, 0], sizes = [7, 88], strides = [1, 1]} : vector<11x88xf32> to vector<7x88xf32>
    %c2_138 = arith.constant 2 : index
    %c0_139 = arith.constant 0 : index
    %c0_140 = arith.constant 0 : index
    %145 = vector.load %arg6[%c2_138, %c0_139, %c0_140] : memref<5x88x70xf32, #tpu.memory_space<vmem>>, vector<1x88x70xf32>
    %146 = vector.shape_cast %145 : vector<1x88x70xf32> to vector<88x70xf32>
    %cst_141 = arith.constant dense<0.000000e+00> : vector<7x70xf32>
    %147 = tpu.matmul %144, %146, %cst_141 {dimension_numbers = #tpu.dot_dimension_numbers<[1], [0], [0], [1], [0, 0, 1, 1], [], []>} : vector<7x88xf32>, vector<88x70xf32>, vector<7x70xf32> -> vector<7x70xf32>
    %148 = arith.addf %143, %147 : vector<7x70xf32>
    %149 = vector.extract_strided_slice %134 {offsets = [3, 0], sizes = [7, 88], strides = [1, 1]} : vector<11x88xf32> to vector<7x88xf32>
    %c3_142 = arith.constant 3 : index
    %c0_143 = arith.constant 0 : index
    %c0_144 = arith.constant 0 : index
    %150 = vector.load %arg6[%c3_142, %c0_143, %c0_144] : memref<5x88x70xf32, #tpu.memory_space<vmem>>, vector<1x88x70xf32>
    %151 = vector.shape_cast %150 : vector<1x88x70xf32> to vector<88x70xf32>
    %cst_145 = arith.constant dense<0.000000e+00> : vector<7x70xf32>
    %152 = tpu.matmul %149, %151, %cst_145 {dimension_numbers = #tpu.dot_dimension_numbers<[1], [0], [0], [1], [0, 0, 1, 1], [], []>} : vector<7x88xf32>, vector<88x70xf32>, vector<7x70xf32> -> vector<7x70xf32>
    %153 = arith.addf %148, %152 : vector<7x70xf32>
    %154 = vector.extract_strided_slice %134 {offsets = [4, 0], sizes = [7, 88], strides = [1, 1]} : vector<11x88xf32> to vector<7x88xf32>
    %c4_146 = arith.constant 4 : index
    %c0_147 = arith.constant 0 : index
    %c0_148 = arith.constant 0 : index
    %155 = vector.load %arg6[%c4_146, %c0_147, %c0_148] : memref<5x88x70xf32, #tpu.memory_space<vmem>>, vector<1x88x70xf32>
    %156 = vector.shape_cast %155 : vector<1x88x70xf32> to vector<88x70xf32>
    %cst_149 = arith.constant dense<0.000000e+00> : vector<7x70xf32>
    %157 = tpu.matmul %154, %156, %cst_149 {dimension_numbers = #tpu.dot_dimension_numbers<[1], [0], [0], [1], [0, 0, 1, 1], [], []>} : vector<7x88xf32>, vector<88x70xf32>, vector<7x70xf32> -> vector<7x70xf32>
    %158 = arith.addf %153, %157 : vector<7x70xf32>
    %c0_150 = arith.constant 0 : index
    %c0_151 = arith.constant 0 : index
    %c0_152 = arith.constant 0 : index
    %159 = vector.load %arg8[%c0_150, %c0_151, %c0_152] : memref<2x3x7xf32, #tpu.memory_space<vmem>>, vector<1x3x7xf32>
    %160 = vector.shape_cast %159 : vector<1x3x7xf32> to vector<3x7xf32>
    %cst_153 = arith.constant dense<0.000000e+00> : vector<3x70xf32>
    %161 = tpu.matmul %160, %158, %cst_153 {dimension_numbers = #tpu.dot_dimension_numbers<[1], [0], [0], [1], [0, 0, 1, 1], [], []>} : vector<3x7xf32>, vector<7x70xf32>, vector<3x70xf32> -> vector<3x70xf32>
    %c1_154 = arith.constant 1 : index
    %c0_155 = arith.constant 0 : index
    %c0_156 = arith.constant 0 : index
    %162 = vector.load %arg8[%c1_154, %c0_155, %c0_156] : memref<2x3x7xf32, #tpu.memory_space<vmem>>, vector<1x3x7xf32>
    %163 = vector.shape_cast %162 : vector<1x3x7xf32> to vector<3x7xf32>
    %cst_157 = arith.constant dense<0.000000e+00> : vector<3x70xf32>
    %164 = tpu.matmul %163, %158, %cst_157 {dimension_numbers = #tpu.dot_dimension_numbers<[1], [0], [0], [1], [0, 0, 1, 1], [], []>} : vector<3x7xf32>, vector<7x70xf32>, vector<3x70xf32> -> vector<3x70xf32>
    %c0_158 = arith.constant 0 : index
    %c0_159 = arith.constant 0 : index
    %c0_160 = arith.constant 0 : index
    %165 = vector.load %arg9[%c0_158, %c0_159, %c0_160] : memref<2x70x30xf32, #tpu.memory_space<vmem>>, vector<1x70x30xf32>
    %166 = vector.shape_cast %165 : vector<1x70x30xf32> to vector<70x30xf32>
    %cst_161 = arith.constant dense<0.000000e+00> : vector<3x30xf32>
    %167 = tpu.matmul %161, %166, %cst_161 {dimension_numbers = #tpu.dot_dimension_numbers<[1], [0], [0], [1], [0, 0, 1, 1], [], []>} : vector<3x70xf32>, vector<70x30xf32>, vector<3x30xf32> -> vector<3x30xf32>
    %c1_162 = arith.constant 1 : index
    %c0_163 = arith.constant 0 : index
    %c0_164 = arith.constant 0 : index
    %168 = vector.load %arg9[%c1_162, %c0_163, %c0_164] : memref<2x70x30xf32, #tpu.memory_space<vmem>>, vector<1x70x30xf32>
    %169 = vector.shape_cast %168 : vector<1x70x30xf32> to vector<70x30xf32>
    %cst_165 = arith.constant dense<0.000000e+00> : vector<3x30xf32>
    %170 = tpu.matmul %161, %169, %cst_165 {dimension_numbers = #tpu.dot_dimension_numbers<[1], [0], [0], [1], [0, 0, 1, 1], [], []>} : vector<3x70xf32>, vector<70x30xf32>, vector<3x30xf32> -> vector<3x30xf32>
    %171 = arith.maximumf %167, %170 : vector<3x30xf32>
    %c0_166 = arith.constant 0 : index
    %c0_167 = arith.constant 0 : index
    %c0_168 = arith.constant 0 : index
    %172 = vector.load %arg9[%c0_166, %c0_167, %c0_168] : memref<2x70x30xf32, #tpu.memory_space<vmem>>, vector<1x70x30xf32>
    %173 = vector.shape_cast %172 : vector<1x70x30xf32> to vector<70x30xf32>
    %cst_169 = arith.constant dense<0.000000e+00> : vector<3x30xf32>
    %174 = tpu.matmul %164, %173, %cst_169 {dimension_numbers = #tpu.dot_dimension_numbers<[1], [0], [0], [1], [0, 0, 1, 1], [], []>} : vector<3x70xf32>, vector<70x30xf32>, vector<3x30xf32> -> vector<3x30xf32>
    %c1_170 = arith.constant 1 : index
    %c0_171 = arith.constant 0 : index
    %c0_172 = arith.constant 0 : index
    %175 = vector.load %arg9[%c1_170, %c0_171, %c0_172] : memref<2x70x30xf32, #tpu.memory_space<vmem>>, vector<1x70x30xf32>
    %176 = vector.shape_cast %175 : vector<1x70x30xf32> to vector<70x30xf32>
    %cst_173 = arith.constant dense<0.000000e+00> : vector<3x30xf32>
    %177 = tpu.matmul %164, %176, %cst_173 {dimension_numbers = #tpu.dot_dimension_numbers<[1], [0], [0], [1], [0, 0, 1, 1], [], []>} : vector<3x70xf32>, vector<70x30xf32>, vector<3x30xf32> -> vector<3x30xf32>
    %178 = arith.maximumf %174, %177 : vector<3x30xf32>
    %179 = arith.maximumf %171, %178 : vector<3x30xf32>
    %c0_174 = arith.constant 0 : index
    %c0_175 = arith.constant 0 : index
    %180 = vector.load %arg7[%c0_174, %c0_175] : memref<1x30xf32, #tpu.memory_space<vmem>>, vector<1x30xf32>
    %181 = vector.broadcast %180 : vector<1x30xf32> to vector<3x30xf32>
    %182 = arith.addf %179, %181 : vector<3x30xf32>
    %cst_176 = arith.constant 0.000000e+00 : f32
    %183 = vector.broadcast %cst_176 : f32 to vector<3x30xf32>
    %184 = arith.maximumf %182, %183 : vector<3x30xf32>
    %185 = vector.extract_strided_slice %184 {offsets = [0, 0], sizes = [1, 30], strides = [1, 1]} : vector<3x30xf32> to vector<1x30xf32>
    %c0_177 = arith.constant 0 : index
    %c0_178 = arith.constant 0 : index
    %c0_179 = arith.constant 0 : index
    %186 = vector.load %arg10[%c0_177, %c0_178, %c0_179] : memref<3x30x32xf32, #tpu.memory_space<vmem>>, vector<1x30x32xf32>
    %187 = vector.shape_cast %186 : vector<1x30x32xf32> to vector<30x32xf32>
    %cst_180 = arith.constant dense<0.000000e+00> : vector<1x32xf32>
    %188 = tpu.matmul %185, %187, %cst_180 {dimension_numbers = #tpu.dot_dimension_numbers<[1], [0], [0], [1], [0, 0, 1, 1], [], []>} : vector<1x30xf32>, vector<30x32xf32>, vector<1x32xf32> -> vector<1x32xf32>
    %189 = vector.extract_strided_slice %184 {offsets = [1, 0], sizes = [1, 30], strides = [1, 1]} : vector<3x30xf32> to vector<1x30xf32>
    %c1_181 = arith.constant 1 : index
    %c0_182 = arith.constant 0 : index
    %c0_183 = arith.constant 0 : index
    %190 = vector.load %arg10[%c1_181, %c0_182, %c0_183] : memref<3x30x32xf32, #tpu.memory_space<vmem>>, vector<1x30x32xf32>
    %191 = vector.shape_cast %190 : vector<1x30x32xf32> to vector<30x32xf32>
    %cst_184 = arith.constant dense<0.000000e+00> : vector<1x32xf32>
    %192 = tpu.matmul %189, %191, %cst_184 {dimension_numbers = #tpu.dot_dimension_numbers<[1], [0], [0], [1], [0, 0, 1, 1], [], []>} : vector<1x30xf32>, vector<30x32xf32>, vector<1x32xf32> -> vector<1x32xf32>
    %193 = arith.addf %188, %192 : vector<1x32xf32>
    %194 = vector.extract_strided_slice %184 {offsets = [2, 0], sizes = [1, 30], strides = [1, 1]} : vector<3x30xf32> to vector<1x30xf32>
    %c2_185 = arith.constant 2 : index
    %c0_186 = arith.constant 0 : index
    %c0_187 = arith.constant 0 : index
    %195 = vector.load %arg10[%c2_185, %c0_186, %c0_187] : memref<3x30x32xf32, #tpu.memory_space<vmem>>, vector<1x30x32xf32>
    %196 = vector.shape_cast %195 : vector<1x30x32xf32> to vector<30x32xf32>
    %cst_188 = arith.constant dense<0.000000e+00> : vector<1x32xf32>
    %197 = tpu.matmul %194, %196, %cst_188 {dimension_numbers = #tpu.dot_dimension_numbers<[1], [0], [0], [1], [0, 0, 1, 1], [], []>} : vector<1x30xf32>, vector<30x32xf32>, vector<1x32xf32> -> vector<1x32xf32>
    %198 = arith.addf %193, %197 : vector<1x32xf32>
    %c0_189 = arith.constant 0 : index
    %c0_190 = arith.constant 0 : index
    %199 = vector.load %arg11[%c0_189, %c0_190] : memref<1x32xf32, #tpu.memory_space<vmem>>, vector<1x32xf32>
    %200 = arith.addf %198, %199 : vector<1x32xf32>
    %cst_191 = arith.constant 0.000000e+00 : f32
    %201 = vector.broadcast %cst_191 : f32 to vector<1x32xf32>
    %202 = arith.maximumf %200, %201 : vector<1x32xf32>
    %c0_192 = arith.constant 0 : index
    %c0_193 = arith.constant 0 : index
    %203 = vector.load %arg12[%c0_192, %c0_193] : memref<32x6xf32, #tpu.memory_space<vmem>>, vector<32x6xf32>
    %cst_194 = arith.constant dense<0.000000e+00> : vector<1x6xf32>
    %204 = tpu.matmul %202, %203, %cst_194 {dimension_numbers = #tpu.dot_dimension_numbers<[1], [0], [0], [1], [0, 0, 1, 1], [], []>} : vector<1x32xf32>, vector<32x6xf32>, vector<1x6xf32> -> vector<1x6xf32>
    %c0_195 = arith.constant 0 : index
    %c0_196 = arith.constant 0 : index
    %205 = vector.load %arg13[%c0_195, %c0_196] : memref<1x6xf32, #tpu.memory_space<vmem>>, vector<1x6xf32>
    %206 = arith.addf %204, %205 : vector<1x6xf32>
    %c1_197 = arith.constant 1 : index
    %c0_198 = arith.constant 0 : index
    %c0_199 = arith.constant 0 : index
    %207 = vector.load %arg14[%c1_197, %c0_198, %c0_199] : memref<4x1x6xf32, #tpu.memory_space<vmem>>, vector<1x1x6xf32>
    %208 = vector.shape_cast %207 : vector<1x1x6xf32> to vector<1x6xf32>
    %209 = vector.shape_cast %206 : vector<1x6xf32> to vector<1x1x6xf32>
    tpu.vector_store %arg14[%c1_197, %c0_198, %c0_199], %209 {strides = array<i32>} : memref<4x1x6xf32, #tpu.memory_space<vmem>>, vector<1x1x6xf32>,
    %c2_200 = arith.constant 2 : index
    %c0_201 = arith.constant 0 : index
    %c0_202 = arith.constant 0 : index
    %210 = vector.load %arg1[%c2_200, %c0_201, %c0_202] : memref<4x22x196xf32, #tpu.memory_space<vmem>>, vector<1x22x196xf32>
    %211 = vector.shape_cast %210 : vector<1x22x196xf32> to vector<22x196xf32>
    %c0_203 = arith.constant 0 : index
    %c0_204 = arith.constant 0 : index
    %212 = vector.load %arg2[%c0_203, %c0_204] : memref<196x176xf32, #tpu.memory_space<vmem>>, vector<196x176xf32>
    %cst_205 = arith.constant dense<0.000000e+00> : vector<22x176xf32>
    %213 = tpu.matmul %211, %212, %cst_205 {dimension_numbers = #tpu.dot_dimension_numbers<[1], [0], [0], [1], [0, 0, 1, 1], [], []>} : vector<22x196xf32>, vector<196x176xf32>, vector<22x176xf32> -> vector<22x176xf32>
    %c0_206 = arith.constant 0 : index
    %c0_207 = arith.constant 0 : index
    %c0_208 = arith.constant 0 : index
    %214 = vector.load %arg4[%c0_206, %c0_207, %c0_208] : memref<2x11x22xf32, #tpu.memory_space<vmem>>, vector<1x11x22xf32>
    %215 = vector.shape_cast %214 : vector<1x11x22xf32> to vector<11x22xf32>
    %cst_209 = arith.constant dense<0.000000e+00> : vector<11x176xf32>
    %216 = tpu.matmul %215, %213, %cst_209 {dimension_numbers = #tpu.dot_dimension_numbers<[1], [0], [0], [1], [0, 0, 1, 1], [], []>} : vector<11x22xf32>, vector<22x176xf32>, vector<11x176xf32> -> vector<11x176xf32>
    %c1_210 = arith.constant 1 : index
    %c0_211 = arith.constant 0 : index
    %c0_212 = arith.constant 0 : index
    %217 = vector.load %arg4[%c1_210, %c0_211, %c0_212] : memref<2x11x22xf32, #tpu.memory_space<vmem>>, vector<1x11x22xf32>
    %218 = vector.shape_cast %217 : vector<1x11x22xf32> to vector<11x22xf32>
    %cst_213 = arith.constant dense<0.000000e+00> : vector<11x176xf32>
    %219 = tpu.matmul %218, %213, %cst_213 {dimension_numbers = #tpu.dot_dimension_numbers<[1], [0], [0], [1], [0, 0, 1, 1], [], []>} : vector<11x22xf32>, vector<22x176xf32>, vector<11x176xf32> -> vector<11x176xf32>
    %c0_214 = arith.constant 0 : index
    %c0_215 = arith.constant 0 : index
    %c0_216 = arith.constant 0 : index
    %220 = vector.load %arg5[%c0_214, %c0_215, %c0_216] : memref<2x176x88xf32, #tpu.memory_space<vmem>>, vector<1x176x88xf32>
    %221 = vector.shape_cast %220 : vector<1x176x88xf32> to vector<176x88xf32>
    %cst_217 = arith.constant dense<0.000000e+00> : vector<11x88xf32>
    %222 = tpu.matmul %216, %221, %cst_217 {dimension_numbers = #tpu.dot_dimension_numbers<[1], [0], [0], [1], [0, 0, 1, 1], [], []>} : vector<11x176xf32>, vector<176x88xf32>, vector<11x88xf32> -> vector<11x88xf32>
    %c1_218 = arith.constant 1 : index
    %c0_219 = arith.constant 0 : index
    %c0_220 = arith.constant 0 : index
    %223 = vector.load %arg5[%c1_218, %c0_219, %c0_220] : memref<2x176x88xf32, #tpu.memory_space<vmem>>, vector<1x176x88xf32>
    %224 = vector.shape_cast %223 : vector<1x176x88xf32> to vector<176x88xf32>
    %cst_221 = arith.constant dense<0.000000e+00> : vector<11x88xf32>
    %225 = tpu.matmul %216, %224, %cst_221 {dimension_numbers = #tpu.dot_dimension_numbers<[1], [0], [0], [1], [0, 0, 1, 1], [], []>} : vector<11x176xf32>, vector<176x88xf32>, vector<11x88xf32> -> vector<11x88xf32>
    %226 = arith.maximumf %222, %225 : vector<11x88xf32>
    %c0_222 = arith.constant 0 : index
    %c0_223 = arith.constant 0 : index
    %c0_224 = arith.constant 0 : index
    %227 = vector.load %arg5[%c0_222, %c0_223, %c0_224] : memref<2x176x88xf32, #tpu.memory_space<vmem>>, vector<1x176x88xf32>
    %228 = vector.shape_cast %227 : vector<1x176x88xf32> to vector<176x88xf32>
    %cst_225 = arith.constant dense<0.000000e+00> : vector<11x88xf32>
    %229 = tpu.matmul %219, %228, %cst_225 {dimension_numbers = #tpu.dot_dimension_numbers<[1], [0], [0], [1], [0, 0, 1, 1], [], []>} : vector<11x176xf32>, vector<176x88xf32>, vector<11x88xf32> -> vector<11x88xf32>
    %c1_226 = arith.constant 1 : index
    %c0_227 = arith.constant 0 : index
    %c0_228 = arith.constant 0 : index
    %230 = vector.load %arg5[%c1_226, %c0_227, %c0_228] : memref<2x176x88xf32, #tpu.memory_space<vmem>>, vector<1x176x88xf32>
    %231 = vector.shape_cast %230 : vector<1x176x88xf32> to vector<176x88xf32>
    %cst_229 = arith.constant dense<0.000000e+00> : vector<11x88xf32>
    %232 = tpu.matmul %219, %231, %cst_229 {dimension_numbers = #tpu.dot_dimension_numbers<[1], [0], [0], [1], [0, 0, 1, 1], [], []>} : vector<11x176xf32>, vector<176x88xf32>, vector<11x88xf32> -> vector<11x88xf32>
    %233 = arith.maximumf %229, %232 : vector<11x88xf32>
    %234 = arith.maximumf %226, %233 : vector<11x88xf32>
    %c0_230 = arith.constant 0 : index
    %c0_231 = arith.constant 0 : index
    %235 = vector.load %arg3[%c0_230, %c0_231] : memref<1x88xf32, #tpu.memory_space<vmem>>, vector<1x88xf32>
    %236 = vector.broadcast %235 : vector<1x88xf32> to vector<11x88xf32>
    %237 = arith.addf %234, %236 : vector<11x88xf32>
    %cst_232 = arith.constant 0.000000e+00 : f32
    %238 = vector.broadcast %cst_232 : f32 to vector<11x88xf32>
    %239 = arith.maximumf %237, %238 : vector<11x88xf32>
    %240 = vector.extract_strided_slice %239 {offsets = [0, 0], sizes = [7, 88], strides = [1, 1]} : vector<11x88xf32> to vector<7x88xf32>
    %c0_233 = arith.constant 0 : index
    %c0_234 = arith.constant 0 : index
    %c0_235 = arith.constant 0 : index
    %241 = vector.load %arg6[%c0_233, %c0_234, %c0_235] : memref<5x88x70xf32, #tpu.memory_space<vmem>>, vector<1x88x70xf32>
    %242 = vector.shape_cast %241 : vector<1x88x70xf32> to vector<88x70xf32>
    %cst_236 = arith.constant dense<0.000000e+00> : vector<7x70xf32>
    %243 = tpu.matmul %240, %242, %cst_236 {dimension_numbers = #tpu.dot_dimension_numbers<[1], [0], [0], [1], [0, 0, 1, 1], [], []>} : vector<7x88xf32>, vector<88x70xf32>, vector<7x70xf32> -> vector<7x70xf32>
    %244 = vector.extract_strided_slice %239 {offsets = [1, 0], sizes = [7, 88], strides = [1, 1]} : vector<11x88xf32> to vector<7x88xf32>
    %c1_237 = arith.constant 1 : index
    %c0_238 = arith.constant 0 : index
    %c0_239 = arith.constant 0 : index
    %245 = vector.load %arg6[%c1_237, %c0_238, %c0_239] : memref<5x88x70xf32, #tpu.memory_space<vmem>>, vector<1x88x70xf32>
    %246 = vector.shape_cast %245 : vector<1x88x70xf32> to vector<88x70xf32>
    %cst_240 = arith.constant dense<0.000000e+00> : vector<7x70xf32>
    %247 = tpu.matmul %244, %246, %cst_240 {dimension_numbers = #tpu.dot_dimension_numbers<[1], [0], [0], [1], [0, 0, 1, 1], [], []>} : vector<7x88xf32>, vector<88x70xf32>, vector<7x70xf32> -> vector<7x70xf32>
    %248 = arith.addf %243, %247 : vector<7x70xf32>
    %249 = vector.extract_strided_slice %239 {offsets = [2, 0], sizes = [7, 88], strides = [1, 1]} : vector<11x88xf32> to vector<7x88xf32>
    %c2_241 = arith.constant 2 : index
    %c0_242 = arith.constant 0 : index
    %c0_243 = arith.constant 0 : index
    %250 = vector.load %arg6[%c2_241, %c0_242, %c0_243] : memref<5x88x70xf32, #tpu.memory_space<vmem>>, vector<1x88x70xf32>
    %251 = vector.shape_cast %250 : vector<1x88x70xf32> to vector<88x70xf32>
    %cst_244 = arith.constant dense<0.000000e+00> : vector<7x70xf32>
    %252 = tpu.matmul %249, %251, %cst_244 {dimension_numbers = #tpu.dot_dimension_numbers<[1], [0], [0], [1], [0, 0, 1, 1], [], []>} : vector<7x88xf32>, vector<88x70xf32>, vector<7x70xf32> -> vector<7x70xf32>
    %253 = arith.addf %248, %252 : vector<7x70xf32>
    %254 = vector.extract_strided_slice %239 {offsets = [3, 0], sizes = [7, 88], strides = [1, 1]} : vector<11x88xf32> to vector<7x88xf32>
    %c3_245 = arith.constant 3 : index
    %c0_246 = arith.constant 0 : index
    %c0_247 = arith.constant 0 : index
    %255 = vector.load %arg6[%c3_245, %c0_246, %c0_247] : memref<5x88x70xf32, #tpu.memory_space<vmem>>, vector<1x88x70xf32>
    %256 = vector.shape_cast %255 : vector<1x88x70xf32> to vector<88x70xf32>
    %cst_248 = arith.constant dense<0.000000e+00> : vector<7x70xf32>
    %257 = tpu.matmul %254, %256, %cst_248 {dimension_numbers = #tpu.dot_dimension_numbers<[1], [0], [0], [1], [0, 0, 1, 1], [], []>} : vector<7x88xf32>, vector<88x70xf32>, vector<7x70xf32> -> vector<7x70xf32>
    %258 = arith.addf %253, %257 : vector<7x70xf32>
    %259 = vector.extract_strided_slice %239 {offsets = [4, 0], sizes = [7, 88], strides = [1, 1]} : vector<11x88xf32> to vector<7x88xf32>
    %c4_249 = arith.constant 4 : index
    %c0_250 = arith.constant 0 : index
    %c0_251 = arith.constant 0 : index
    %260 = vector.load %arg6[%c4_249, %c0_250, %c0_251] : memref<5x88x70xf32, #tpu.memory_space<vmem>>, vector<1x88x70xf32>
    %261 = vector.shape_cast %260 : vector<1x88x70xf32> to vector<88x70xf32>
    %cst_252 = arith.constant dense<0.000000e+00> : vector<7x70xf32>
    %262 = tpu.matmul %259, %261, %cst_252 {dimension_numbers = #tpu.dot_dimension_numbers<[1], [0], [0], [1], [0, 0, 1, 1], [], []>} : vector<7x88xf32>, vector<88x70xf32>, vector<7x70xf32> -> vector<7x70xf32>
    %263 = arith.addf %258, %262 : vector<7x70xf32>
    %c0_253 = arith.constant 0 : index
    %c0_254 = arith.constant 0 : index
    %c0_255 = arith.constant 0 : index
    %264 = vector.load %arg8[%c0_253, %c0_254, %c0_255] : memref<2x3x7xf32, #tpu.memory_space<vmem>>, vector<1x3x7xf32>
    %265 = vector.shape_cast %264 : vector<1x3x7xf32> to vector<3x7xf32>
    %cst_256 = arith.constant dense<0.000000e+00> : vector<3x70xf32>
    %266 = tpu.matmul %265, %263, %cst_256 {dimension_numbers = #tpu.dot_dimension_numbers<[1], [0], [0], [1], [0, 0, 1, 1], [], []>} : vector<3x7xf32>, vector<7x70xf32>, vector<3x70xf32> -> vector<3x70xf32>
    %c1_257 = arith.constant 1 : index
    %c0_258 = arith.constant 0 : index
    %c0_259 = arith.constant 0 : index
    %267 = vector.load %arg8[%c1_257, %c0_258, %c0_259] : memref<2x3x7xf32, #tpu.memory_space<vmem>>, vector<1x3x7xf32>
    %268 = vector.shape_cast %267 : vector<1x3x7xf32> to vector<3x7xf32>
    %cst_260 = arith.constant dense<0.000000e+00> : vector<3x70xf32>
    %269 = tpu.matmul %268, %263, %cst_260 {dimension_numbers = #tpu.dot_dimension_numbers<[1], [0], [0], [1], [0, 0, 1, 1], [], []>} : vector<3x7xf32>, vector<7x70xf32>, vector<3x70xf32> -> vector<3x70xf32>
    %c0_261 = arith.constant 0 : index
    %c0_262 = arith.constant 0 : index
    %c0_263 = arith.constant 0 : index
    %270 = vector.load %arg9[%c0_261, %c0_262, %c0_263] : memref<2x70x30xf32, #tpu.memory_space<vmem>>, vector<1x70x30xf32>
    %271 = vector.shape_cast %270 : vector<1x70x30xf32> to vector<70x30xf32>
    %cst_264 = arith.constant dense<0.000000e+00> : vector<3x30xf32>
    %272 = tpu.matmul %266, %271, %cst_264 {dimension_numbers = #tpu.dot_dimension_numbers<[1], [0], [0], [1], [0, 0, 1, 1], [], []>} : vector<3x70xf32>, vector<70x30xf32>, vector<3x30xf32> -> vector<3x30xf32>
    %c1_265 = arith.constant 1 : index
    %c0_266 = arith.constant 0 : index
    %c0_267 = arith.constant 0 : index
    %273 = vector.load %arg9[%c1_265, %c0_266, %c0_267] : memref<2x70x30xf32, #tpu.memory_space<vmem>>, vector<1x70x30xf32>
    %274 = vector.shape_cast %273 : vector<1x70x30xf32> to vector<70x30xf32>
    %cst_268 = arith.constant dense<0.000000e+00> : vector<3x30xf32>
    %275 = tpu.matmul %266, %274, %cst_268 {dimension_numbers = #tpu.dot_dimension_numbers<[1], [0], [0], [1], [0, 0, 1, 1], [], []>} : vector<3x70xf32>, vector<70x30xf32>, vector<3x30xf32> -> vector<3x30xf32>
    %276 = arith.maximumf %272, %275 : vector<3x30xf32>
    %c0_269 = arith.constant 0 : index
    %c0_270 = arith.constant 0 : index
    %c0_271 = arith.constant 0 : index
    %277 = vector.load %arg9[%c0_269, %c0_270, %c0_271] : memref<2x70x30xf32, #tpu.memory_space<vmem>>, vector<1x70x30xf32>
    %278 = vector.shape_cast %277 : vector<1x70x30xf32> to vector<70x30xf32>
    %cst_272 = arith.constant dense<0.000000e+00> : vector<3x30xf32>
    %279 = tpu.matmul %269, %278, %cst_272 {dimension_numbers = #tpu.dot_dimension_numbers<[1], [0], [0], [1], [0, 0, 1, 1], [], []>} : vector<3x70xf32>, vector<70x30xf32>, vector<3x30xf32> -> vector<3x30xf32>
    %c1_273 = arith.constant 1 : index
    %c0_274 = arith.constant 0 : index
    %c0_275 = arith.constant 0 : index
    %280 = vector.load %arg9[%c1_273, %c0_274, %c0_275] : memref<2x70x30xf32, #tpu.memory_space<vmem>>, vector<1x70x30xf32>
    %281 = vector.shape_cast %280 : vector<1x70x30xf32> to vector<70x30xf32>
    %cst_276 = arith.constant dense<0.000000e+00> : vector<3x30xf32>
    %282 = tpu.matmul %269, %281, %cst_276 {dimension_numbers = #tpu.dot_dimension_numbers<[1], [0], [0], [1], [0, 0, 1, 1], [], []>} : vector<3x70xf32>, vector<70x30xf32>, vector<3x30xf32> -> vector<3x30xf32>
    %283 = arith.maximumf %279, %282 : vector<3x30xf32>
    %284 = arith.maximumf %276, %283 : vector<3x30xf32>
    %c0_277 = arith.constant 0 : index
    %c0_278 = arith.constant 0 : index
    %285 = vector.load %arg7[%c0_277, %c0_278] : memref<1x30xf32, #tpu.memory_space<vmem>>, vector<1x30xf32>
    %286 = vector.broadcast %285 : vector<1x30xf32> to vector<3x30xf32>
    %287 = arith.addf %284, %286 : vector<3x30xf32>
    %cst_279 = arith.constant 0.000000e+00 : f32
    %288 = vector.broadcast %cst_279 : f32 to vector<3x30xf32>
    %289 = arith.maximumf %287, %288 : vector<3x30xf32>
    %290 = vector.extract_strided_slice %289 {offsets = [0, 0], sizes = [1, 30], strides = [1, 1]} : vector<3x30xf32> to vector<1x30xf32>
    %c0_280 = arith.constant 0 : index
    %c0_281 = arith.constant 0 : index
    %c0_282 = arith.constant 0 : index
    %291 = vector.load %arg10[%c0_280, %c0_281, %c0_282] : memref<3x30x32xf32, #tpu.memory_space<vmem>>, vector<1x30x32xf32>
    %292 = vector.shape_cast %291 : vector<1x30x32xf32> to vector<30x32xf32>
    %cst_283 = arith.constant dense<0.000000e+00> : vector<1x32xf32>
    %293 = tpu.matmul %290, %292, %cst_283 {dimension_numbers = #tpu.dot_dimension_numbers<[1], [0], [0], [1], [0, 0, 1, 1], [], []>} : vector<1x30xf32>, vector<30x32xf32>, vector<1x32xf32> -> vector<1x32xf32>
    %294 = vector.extract_strided_slice %289 {offsets = [1, 0], sizes = [1, 30], strides = [1, 1]} : vector<3x30xf32> to vector<1x30xf32>
    %c1_284 = arith.constant 1 : index
    %c0_285 = arith.constant 0 : index
    %c0_286 = arith.constant 0 : index
    %295 = vector.load %arg10[%c1_284, %c0_285, %c0_286] : memref<3x30x32xf32, #tpu.memory_space<vmem>>, vector<1x30x32xf32>
    %296 = vector.shape_cast %295 : vector<1x30x32xf32> to vector<30x32xf32>
    %cst_287 = arith.constant dense<0.000000e+00> : vector<1x32xf32>
    %297 = tpu.matmul %294, %296, %cst_287 {dimension_numbers = #tpu.dot_dimension_numbers<[1], [0], [0], [1], [0, 0, 1, 1], [], []>} : vector<1x30xf32>, vector<30x32xf32>, vector<1x32xf32> -> vector<1x32xf32>
    %298 = arith.addf %293, %297 : vector<1x32xf32>
    %299 = vector.extract_strided_slice %289 {offsets = [2, 0], sizes = [1, 30], strides = [1, 1]} : vector<3x30xf32> to vector<1x30xf32>
    %c2_288 = arith.constant 2 : index
    %c0_289 = arith.constant 0 : index
    %c0_290 = arith.constant 0 : index
    %300 = vector.load %arg10[%c2_288, %c0_289, %c0_290] : memref<3x30x32xf32, #tpu.memory_space<vmem>>, vector<1x30x32xf32>
    %301 = vector.shape_cast %300 : vector<1x30x32xf32> to vector<30x32xf32>
    %cst_291 = arith.constant dense<0.000000e+00> : vector<1x32xf32>
    %302 = tpu.matmul %299, %301, %cst_291 {dimension_numbers = #tpu.dot_dimension_numbers<[1], [0], [0], [1], [0, 0, 1, 1], [], []>} : vector<1x30xf32>, vector<30x32xf32>, vector<1x32xf32> -> vector<1x32xf32>
    %303 = arith.addf %298, %302 : vector<1x32xf32>
    %c0_292 = arith.constant 0 : index
    %c0_293 = arith.constant 0 : index
    %304 = vector.load %arg11[%c0_292, %c0_293] : memref<1x32xf32, #tpu.memory_space<vmem>>, vector<1x32xf32>
    %305 = arith.addf %303, %304 : vector<1x32xf32>
    %cst_294 = arith.constant 0.000000e+00 : f32
    %306 = vector.broadcast %cst_294 : f32 to vector<1x32xf32>
    %307 = arith.maximumf %305, %306 : vector<1x32xf32>
    %c0_295 = arith.constant 0 : index
    %c0_296 = arith.constant 0 : index
    %308 = vector.load %arg12[%c0_295, %c0_296] : memref<32x6xf32, #tpu.memory_space<vmem>>, vector<32x6xf32>
    %cst_297 = arith.constant dense<0.000000e+00> : vector<1x6xf32>
    %309 = tpu.matmul %307, %308, %cst_297 {dimension_numbers = #tpu.dot_dimension_numbers<[1], [0], [0], [1], [0, 0, 1, 1], [], []>} : vector<1x32xf32>, vector<32x6xf32>, vector<1x6xf32> -> vector<1x6xf32>
    %c0_298 = arith.constant 0 : index
    %c0_299 = arith.constant 0 : index
    %310 = vector.load %arg13[%c0_298, %c0_299] : memref<1x6xf32, #tpu.memory_space<vmem>>, vector<1x6xf32>
    %311 = arith.addf %309, %310 : vector<1x6xf32>
    %c2_300 = arith.constant 2 : index
    %c0_301 = arith.constant 0 : index
    %c0_302 = arith.constant 0 : index
    %312 = vector.load %arg14[%c2_300, %c0_301, %c0_302] : memref<4x1x6xf32, #tpu.memory_space<vmem>>, vector<1x1x6xf32>
    %313 = vector.shape_cast %312 : vector<1x1x6xf32> to vector<1x6xf32>
    %314 = vector.shape_cast %311 : vector<1x6xf32> to vector<1x1x6xf32>
    tpu.vector_store %arg14[%c2_300, %c0_301, %c0_302], %314 {strides = array<i32>} : memref<4x1x6xf32, #tpu.memory_space<vmem>>, vector<1x1x6xf32>,
    %c3_303 = arith.constant 3 : index
    %c0_304 = arith.constant 0 : index
    %c0_305 = arith.constant 0 : index
    %315 = vector.load %arg1[%c3_303, %c0_304, %c0_305] : memref<4x22x196xf32, #tpu.memory_space<vmem>>, vector<1x22x196xf32>
    %316 = vector.shape_cast %315 : vector<1x22x196xf32> to vector<22x196xf32>
    %c0_306 = arith.constant 0 : index
    %c0_307 = arith.constant 0 : index
    %317 = vector.load %arg2[%c0_306, %c0_307] : memref<196x176xf32, #tpu.memory_space<vmem>>, vector<196x176xf32>
    %cst_308 = arith.constant dense<0.000000e+00> : vector<22x176xf32>
    %318 = tpu.matmul %316, %317, %cst_308 {dimension_numbers = #tpu.dot_dimension_numbers<[1], [0], [0], [1], [0, 0, 1, 1], [], []>} : vector<22x196xf32>, vector<196x176xf32>, vector<22x176xf32> -> vector<22x176xf32>
    %c0_309 = arith.constant 0 : index
    %c0_310 = arith.constant 0 : index
    %c0_311 = arith.constant 0 : index
    %319 = vector.load %arg4[%c0_309, %c0_310, %c0_311] : memref<2x11x22xf32, #tpu.memory_space<vmem>>, vector<1x11x22xf32>
    %320 = vector.shape_cast %319 : vector<1x11x22xf32> to vector<11x22xf32>
    %cst_312 = arith.constant dense<0.000000e+00> : vector<11x176xf32>
    %321 = tpu.matmul %320, %318, %cst_312 {dimension_numbers = #tpu.dot_dimension_numbers<[1], [0], [0], [1], [0, 0, 1, 1], [], []>} : vector<11x22xf32>, vector<22x176xf32>, vector<11x176xf32> -> vector<11x176xf32>
    %c1_313 = arith.constant 1 : index
    %c0_314 = arith.constant 0 : index
    %c0_315 = arith.constant 0 : index
    %322 = vector.load %arg4[%c1_313, %c0_314, %c0_315] : memref<2x11x22xf32, #tpu.memory_space<vmem>>, vector<1x11x22xf32>
    %323 = vector.shape_cast %322 : vector<1x11x22xf32> to vector<11x22xf32>
    %cst_316 = arith.constant dense<0.000000e+00> : vector<11x176xf32>
    %324 = tpu.matmul %323, %318, %cst_316 {dimension_numbers = #tpu.dot_dimension_numbers<[1], [0], [0], [1], [0, 0, 1, 1], [], []>} : vector<11x22xf32>, vector<22x176xf32>, vector<11x176xf32> -> vector<11x176xf32>
    %c0_317 = arith.constant 0 : index
    %c0_318 = arith.constant 0 : index
    %c0_319 = arith.constant 0 : index
    %325 = vector.load %arg5[%c0_317, %c0_318, %c0_319] : memref<2x176x88xf32, #tpu.memory_space<vmem>>, vector<1x176x88xf32>
    %326 = vector.shape_cast %325 : vector<1x176x88xf32> to vector<176x88xf32>
    %cst_320 = arith.constant dense<0.000000e+00> : vector<11x88xf32>
    %327 = tpu.matmul %321, %326, %cst_320 {dimension_numbers = #tpu.dot_dimension_numbers<[1], [0], [0], [1], [0, 0, 1, 1], [], []>} : vector<11x176xf32>, vector<176x88xf32>, vector<11x88xf32> -> vector<11x88xf32>
    %c1_321 = arith.constant 1 : index
    %c0_322 = arith.constant 0 : index
    %c0_323 = arith.constant 0 : index
    %328 = vector.load %arg5[%c1_321, %c0_322, %c0_323] : memref<2x176x88xf32, #tpu.memory_space<vmem>>, vector<1x176x88xf32>
    %329 = vector.shape_cast %328 : vector<1x176x88xf32> to vector<176x88xf32>
    %cst_324 = arith.constant dense<0.000000e+00> : vector<11x88xf32>
    %330 = tpu.matmul %321, %329, %cst_324 {dimension_numbers = #tpu.dot_dimension_numbers<[1], [0], [0], [1], [0, 0, 1, 1], [], []>} : vector<11x176xf32>, vector<176x88xf32>, vector<11x88xf32> -> vector<11x88xf32>
    %331 = arith.maximumf %327, %330 : vector<11x88xf32>
    %c0_325 = arith.constant 0 : index
    %c0_326 = arith.constant 0 : index
    %c0_327 = arith.constant 0 : index
    %332 = vector.load %arg5[%c0_325, %c0_326, %c0_327] : memref<2x176x88xf32, #tpu.memory_space<vmem>>, vector<1x176x88xf32>
    %333 = vector.shape_cast %332 : vector<1x176x88xf32> to vector<176x88xf32>
    %cst_328 = arith.constant dense<0.000000e+00> : vector<11x88xf32>
    %334 = tpu.matmul %324, %333, %cst_328 {dimension_numbers = #tpu.dot_dimension_numbers<[1], [0], [0], [1], [0, 0, 1, 1], [], []>} : vector<11x176xf32>, vector<176x88xf32>, vector<11x88xf32> -> vector<11x88xf32>
    %c1_329 = arith.constant 1 : index
    %c0_330 = arith.constant 0 : index
    %c0_331 = arith.constant 0 : index
    %335 = vector.load %arg5[%c1_329, %c0_330, %c0_331] : memref<2x176x88xf32, #tpu.memory_space<vmem>>, vector<1x176x88xf32>
    %336 = vector.shape_cast %335 : vector<1x176x88xf32> to vector<176x88xf32>
    %cst_332 = arith.constant dense<0.000000e+00> : vector<11x88xf32>
    %337 = tpu.matmul %324, %336, %cst_332 {dimension_numbers = #tpu.dot_dimension_numbers<[1], [0], [0], [1], [0, 0, 1, 1], [], []>} : vector<11x176xf32>, vector<176x88xf32>, vector<11x88xf32> -> vector<11x88xf32>
    %338 = arith.maximumf %334, %337 : vector<11x88xf32>
    %339 = arith.maximumf %331, %338 : vector<11x88xf32>
    %c0_333 = arith.constant 0 : index
    %c0_334 = arith.constant 0 : index
    %340 = vector.load %arg3[%c0_333, %c0_334] : memref<1x88xf32, #tpu.memory_space<vmem>>, vector<1x88xf32>
    %341 = vector.broadcast %340 : vector<1x88xf32> to vector<11x88xf32>
    %342 = arith.addf %339, %341 : vector<11x88xf32>
    %cst_335 = arith.constant 0.000000e+00 : f32
    %343 = vector.broadcast %cst_335 : f32 to vector<11x88xf32>
    %344 = arith.maximumf %342, %343 : vector<11x88xf32>
    %345 = vector.extract_strided_slice %344 {offsets = [0, 0], sizes = [7, 88], strides = [1, 1]} : vector<11x88xf32> to vector<7x88xf32>
    %c0_336 = arith.constant 0 : index
    %c0_337 = arith.constant 0 : index
    %c0_338 = arith.constant 0 : index
    %346 = vector.load %arg6[%c0_336, %c0_337, %c0_338] : memref<5x88x70xf32, #tpu.memory_space<vmem>>, vector<1x88x70xf32>
    %347 = vector.shape_cast %346 : vector<1x88x70xf32> to vector<88x70xf32>
    %cst_339 = arith.constant dense<0.000000e+00> : vector<7x70xf32>
    %348 = tpu.matmul %345, %347, %cst_339 {dimension_numbers = #tpu.dot_dimension_numbers<[1], [0], [0], [1], [0, 0, 1, 1], [], []>} : vector<7x88xf32>, vector<88x70xf32>, vector<7x70xf32> -> vector<7x70xf32>
    %349 = vector.extract_strided_slice %344 {offsets = [1, 0], sizes = [7, 88], strides = [1, 1]} : vector<11x88xf32> to vector<7x88xf32>
    %c1_340 = arith.constant 1 : index
    %c0_341 = arith.constant 0 : index
    %c0_342 = arith.constant 0 : index
    %350 = vector.load %arg6[%c1_340, %c0_341, %c0_342] : memref<5x88x70xf32, #tpu.memory_space<vmem>>, vector<1x88x70xf32>
    %351 = vector.shape_cast %350 : vector<1x88x70xf32> to vector<88x70xf32>
    %cst_343 = arith.constant dense<0.000000e+00> : vector<7x70xf32>
    %352 = tpu.matmul %349, %351, %cst_343 {dimension_numbers = #tpu.dot_dimension_numbers<[1], [0], [0], [1], [0, 0, 1, 1], [], []>} : vector<7x88xf32>, vector<88x70xf32>, vector<7x70xf32> -> vector<7x70xf32>
    %353 = arith.addf %348, %352 : vector<7x70xf32>
    %354 = vector.extract_strided_slice %344 {offsets = [2, 0], sizes = [7, 88], strides = [1, 1]} : vector<11x88xf32> to vector<7x88xf32>
    %c2_344 = arith.constant 2 : index
    %c0_345 = arith.constant 0 : index
    %c0_346 = arith.constant 0 : index
    %355 = vector.load %arg6[%c2_344, %c0_345, %c0_346] : memref<5x88x70xf32, #tpu.memory_space<vmem>>, vector<1x88x70xf32>
    %356 = vector.shape_cast %355 : vector<1x88x70xf32> to vector<88x70xf32>
    %cst_347 = arith.constant dense<0.000000e+00> : vector<7x70xf32>
    %357 = tpu.matmul %354, %356, %cst_347 {dimension_numbers = #tpu.dot_dimension_numbers<[1], [0], [0], [1], [0, 0, 1, 1], [], []>} : vector<7x88xf32>, vector<88x70xf32>, vector<7x70xf32> -> vector<7x70xf32>
    %358 = arith.addf %353, %357 : vector<7x70xf32>
    %359 = vector.extract_strided_slice %344 {offsets = [3, 0], sizes = [7, 88], strides = [1, 1]} : vector<11x88xf32> to vector<7x88xf32>
    %c3_348 = arith.constant 3 : index
    %c0_349 = arith.constant 0 : index
    %c0_350 = arith.constant 0 : index
    %360 = vector.load %arg6[%c3_348, %c0_349, %c0_350] : memref<5x88x70xf32, #tpu.memory_space<vmem>>, vector<1x88x70xf32>
    %361 = vector.shape_cast %360 : vector<1x88x70xf32> to vector<88x70xf32>
    %cst_351 = arith.constant dense<0.000000e+00> : vector<7x70xf32>
    %362 = tpu.matmul %359, %361, %cst_351 {dimension_numbers = #tpu.dot_dimension_numbers<[1], [0], [0], [1], [0, 0, 1, 1], [], []>} : vector<7x88xf32>, vector<88x70xf32>, vector<7x70xf32> -> vector<7x70xf32>
    %363 = arith.addf %358, %362 : vector<7x70xf32>
    %364 = vector.extract_strided_slice %344 {offsets = [4, 0], sizes = [7, 88], strides = [1, 1]} : vector<11x88xf32> to vector<7x88xf32>
    %c4_352 = arith.constant 4 : index
    %c0_353 = arith.constant 0 : index
    %c0_354 = arith.constant 0 : index
    %365 = vector.load %arg6[%c4_352, %c0_353, %c0_354] : memref<5x88x70xf32, #tpu.memory_space<vmem>>, vector<1x88x70xf32>
    %366 = vector.shape_cast %365 : vector<1x88x70xf32> to vector<88x70xf32>
    %cst_355 = arith.constant dense<0.000000e+00> : vector<7x70xf32>
    %367 = tpu.matmul %364, %366, %cst_355 {dimension_numbers = #tpu.dot_dimension_numbers<[1], [0], [0], [1], [0, 0, 1, 1], [], []>} : vector<7x88xf32>, vector<88x70xf32>, vector<7x70xf32> -> vector<7x70xf32>
    %368 = arith.addf %363, %367 : vector<7x70xf32>
    %c0_356 = arith.constant 0 : index
    %c0_357 = arith.constant 0 : index
    %c0_358 = arith.constant 0 : index
    %369 = vector.load %arg8[%c0_356, %c0_357, %c0_358] : memref<2x3x7xf32, #tpu.memory_space<vmem>>, vector<1x3x7xf32>
    %370 = vector.shape_cast %369 : vector<1x3x7xf32> to vector<3x7xf32>
    %cst_359 = arith.constant dense<0.000000e+00> : vector<3x70xf32>
    %371 = tpu.matmul %370, %368, %cst_359 {dimension_numbers = #tpu.dot_dimension_numbers<[1], [0], [0], [1], [0, 0, 1, 1], [], []>} : vector<3x7xf32>, vector<7x70xf32>, vector<3x70xf32> -> vector<3x70xf32>
    %c1_360 = arith.constant 1 : index
    %c0_361 = arith.constant 0 : index
    %c0_362 = arith.constant 0 : index
    %372 = vector.load %arg8[%c1_360, %c0_361, %c0_362] : memref<2x3x7xf32, #tpu.memory_space<vmem>>, vector<1x3x7xf32>
    %373 = vector.shape_cast %372 : vector<1x3x7xf32> to vector<3x7xf32>
    %cst_363 = arith.constant dense<0.000000e+00> : vector<3x70xf32>
    %374 = tpu.matmul %373, %368, %cst_363 {dimension_numbers = #tpu.dot_dimension_numbers<[1], [0], [0], [1], [0, 0, 1, 1], [], []>} : vector<3x7xf32>, vector<7x70xf32>, vector<3x70xf32> -> vector<3x70xf32>
    %c0_364 = arith.constant 0 : index
    %c0_365 = arith.constant 0 : index
    %c0_366 = arith.constant 0 : index
    %375 = vector.load %arg9[%c0_364, %c0_365, %c0_366] : memref<2x70x30xf32, #tpu.memory_space<vmem>>, vector<1x70x30xf32>
    %376 = vector.shape_cast %375 : vector<1x70x30xf32> to vector<70x30xf32>
    %cst_367 = arith.constant dense<0.000000e+00> : vector<3x30xf32>
    %377 = tpu.matmul %371, %376, %cst_367 {dimension_numbers = #tpu.dot_dimension_numbers<[1], [0], [0], [1], [0, 0, 1, 1], [], []>} : vector<3x70xf32>, vector<70x30xf32>, vector<3x30xf32> -> vector<3x30xf32>
    %c1_368 = arith.constant 1 : index
    %c0_369 = arith.constant 0 : index
    %c0_370 = arith.constant 0 : index
    %378 = vector.load %arg9[%c1_368, %c0_369, %c0_370] : memref<2x70x30xf32, #tpu.memory_space<vmem>>, vector<1x70x30xf32>
    %379 = vector.shape_cast %378 : vector<1x70x30xf32> to vector<70x30xf32>
    %cst_371 = arith.constant dense<0.000000e+00> : vector<3x30xf32>
    %380 = tpu.matmul %371, %379, %cst_371 {dimension_numbers = #tpu.dot_dimension_numbers<[1], [0], [0], [1], [0, 0, 1, 1], [], []>} : vector<3x70xf32>, vector<70x30xf32>, vector<3x30xf32> -> vector<3x30xf32>
    %381 = arith.maximumf %377, %380 : vector<3x30xf32>
    %c0_372 = arith.constant 0 : index
    %c0_373 = arith.constant 0 : index
    %c0_374 = arith.constant 0 : index
    %382 = vector.load %arg9[%c0_372, %c0_373, %c0_374] : memref<2x70x30xf32, #tpu.memory_space<vmem>>, vector<1x70x30xf32>
    %383 = vector.shape_cast %382 : vector<1x70x30xf32> to vector<70x30xf32>
    %cst_375 = arith.constant dense<0.000000e+00> : vector<3x30xf32>
    %384 = tpu.matmul %374, %383, %cst_375 {dimension_numbers = #tpu.dot_dimension_numbers<[1], [0], [0], [1], [0, 0, 1, 1], [], []>} : vector<3x70xf32>, vector<70x30xf32>, vector<3x30xf32> -> vector<3x30xf32>
    %c1_376 = arith.constant 1 : index
    %c0_377 = arith.constant 0 : index
    %c0_378 = arith.constant 0 : index
    %385 = vector.load %arg9[%c1_376, %c0_377, %c0_378] : memref<2x70x30xf32, #tpu.memory_space<vmem>>, vector<1x70x30xf32>
    %386 = vector.shape_cast %385 : vector<1x70x30xf32> to vector<70x30xf32>
    %cst_379 = arith.constant dense<0.000000e+00> : vector<3x30xf32>
    %387 = tpu.matmul %374, %386, %cst_379 {dimension_numbers = #tpu.dot_dimension_numbers<[1], [0], [0], [1], [0, 0, 1, 1], [], []>} : vector<3x70xf32>, vector<70x30xf32>, vector<3x30xf32> -> vector<3x30xf32>
    %388 = arith.maximumf %384, %387 : vector<3x30xf32>
    %389 = arith.maximumf %381, %388 : vector<3x30xf32>
    %c0_380 = arith.constant 0 : index
    %c0_381 = arith.constant 0 : index
    %390 = vector.load %arg7[%c0_380, %c0_381] : memref<1x30xf32, #tpu.memory_space<vmem>>, vector<1x30xf32>
    %391 = vector.broadcast %390 : vector<1x30xf32> to vector<3x30xf32>
    %392 = arith.addf %389, %391 : vector<3x30xf32>
    %cst_382 = arith.constant 0.000000e+00 : f32
    %393 = vector.broadcast %cst_382 : f32 to vector<3x30xf32>
    %394 = arith.maximumf %392, %393 : vector<3x30xf32>
    %395 = vector.extract_strided_slice %394 {offsets = [0, 0], sizes = [1, 30], strides = [1, 1]} : vector<3x30xf32> to vector<1x30xf32>
    %c0_383 = arith.constant 0 : index
    %c0_384 = arith.constant 0 : index
    %c0_385 = arith.constant 0 : index
    %396 = vector.load %arg10[%c0_383, %c0_384, %c0_385] : memref<3x30x32xf32, #tpu.memory_space<vmem>>, vector<1x30x32xf32>
    %397 = vector.shape_cast %396 : vector<1x30x32xf32> to vector<30x32xf32>
    %cst_386 = arith.constant dense<0.000000e+00> : vector<1x32xf32>
    %398 = tpu.matmul %395, %397, %cst_386 {dimension_numbers = #tpu.dot_dimension_numbers<[1], [0], [0], [1], [0, 0, 1, 1], [], []>} : vector<1x30xf32>, vector<30x32xf32>, vector<1x32xf32> -> vector<1x32xf32>
    %399 = vector.extract_strided_slice %394 {offsets = [1, 0], sizes = [1, 30], strides = [1, 1]} : vector<3x30xf32> to vector<1x30xf32>
    %c1_387 = arith.constant 1 : index
    %c0_388 = arith.constant 0 : index
    %c0_389 = arith.constant 0 : index
    %400 = vector.load %arg10[%c1_387, %c0_388, %c0_389] : memref<3x30x32xf32, #tpu.memory_space<vmem>>, vector<1x30x32xf32>
    %401 = vector.shape_cast %400 : vector<1x30x32xf32> to vector<30x32xf32>
    %cst_390 = arith.constant dense<0.000000e+00> : vector<1x32xf32>
    %402 = tpu.matmul %399, %401, %cst_390 {dimension_numbers = #tpu.dot_dimension_numbers<[1], [0], [0], [1], [0, 0, 1, 1], [], []>} : vector<1x30xf32>, vector<30x32xf32>, vector<1x32xf32> -> vector<1x32xf32>
    %403 = arith.addf %398, %402 : vector<1x32xf32>
    %404 = vector.extract_strided_slice %394 {offsets = [2, 0], sizes = [1, 30], strides = [1, 1]} : vector<3x30xf32> to vector<1x30xf32>
    %c2_391 = arith.constant 2 : index
    %c0_392 = arith.constant 0 : index
    %c0_393 = arith.constant 0 : index
    %405 = vector.load %arg10[%c2_391, %c0_392, %c0_393] : memref<3x30x32xf32, #tpu.memory_space<vmem>>, vector<1x30x32xf32>
    %406 = vector.shape_cast %405 : vector<1x30x32xf32> to vector<30x32xf32>
    %cst_394 = arith.constant dense<0.000000e+00> : vector<1x32xf32>
    %407 = tpu.matmul %404, %406, %cst_394 {dimension_numbers = #tpu.dot_dimension_numbers<[1], [0], [0], [1], [0, 0, 1, 1], [], []>} : vector<1x30xf32>, vector<30x32xf32>, vector<1x32xf32> -> vector<1x32xf32>
    %408 = arith.addf %403, %407 : vector<1x32xf32>
    %c0_395 = arith.constant 0 : index
    %c0_396 = arith.constant 0 : index
    %409 = vector.load %arg11[%c0_395, %c0_396] : memref<1x32xf32, #tpu.memory_space<vmem>>, vector<1x32xf32>
    %410 = arith.addf %408, %409 : vector<1x32xf32>
    %cst_397 = arith.constant 0.000000e+00 : f32
    %411 = vector.broadcast %cst_397 : f32 to vector<1x32xf32>
    %412 = arith.maximumf %410, %411 : vector<1x32xf32>
    %c0_398 = arith.constant 0 : index
    %c0_399 = arith.constant 0 : index
    %413 = vector.load %arg12[%c0_398, %c0_399] : memref<32x6xf32, #tpu.memory_space<vmem>>, vector<32x6xf32>
    %cst_400 = arith.constant dense<0.000000e+00> : vector<1x6xf32>
    %414 = tpu.matmul %412, %413, %cst_400 {dimension_numbers = #tpu.dot_dimension_numbers<[1], [0], [0], [1], [0, 0, 1, 1], [], []>} : vector<1x32xf32>, vector<32x6xf32>, vector<1x6xf32> -> vector<1x6xf32>
    %c0_401 = arith.constant 0 : index
    %c0_402 = arith.constant 0 : index
    %415 = vector.load %arg13[%c0_401, %c0_402] : memref<1x6xf32, #tpu.memory_space<vmem>>, vector<1x6xf32>
    %416 = arith.addf %414, %415 : vector<1x6xf32>
    %c3_403 = arith.constant 3 : index
    %c0_404 = arith.constant 0 : index
    %c0_405 = arith.constant 0 : index
    %417 = vector.load %arg14[%c3_403, %c0_404, %c0_405] : memref<4x1x6xf32, #tpu.memory_space<vmem>>, vector<1x1x6xf32>
    %418 = vector.shape_cast %417 : vector<1x1x6xf32> to vector<1x6xf32>
    %419 = vector.shape_cast %416 : vector<1x6xf32> to vector<1x1x6xf32>
    tpu.vector_store %arg14[%c3_403, %c0_404, %c0_405], %419 {strides = array<i32>} : memref<4x1x6xf32, #tpu.memory_space<vmem>>, vector<1x1x6xf32>,
    return
  }
  func.func @transform_0(%arg0: i32) -> (i32, i32, i32) {
    %c0_i32 = arith.constant 0 : i32
    %c0_i32_0 = arith.constant 0 : i32
    %c0_i32_1 = arith.constant 0 : i32
    return %arg0, %c0_i32, %c0_i32_0 : i32, i32, i32
  }
  func.func @transform_1(%arg0: i32) -> (i32, i32) {
    %c0_i32 = arith.constant 0 : i32
    %c0_i32_0 = arith.constant 0 : i32
    %c0_i32_1 = arith.constant 0 : i32
    return %c0_i32, %c0_i32_0 : i32, i32
  }
  func.func @transform_2(%arg0: i32) -> (i32, i32) {
    %c0_i32 = arith.constant 0 : i32
    %c0_i32_0 = arith.constant 0 : i32
    %c0_i32_1 = arith.constant 0 : i32
    return %c0_i32, %c0_i32_0 : i32, i32
  }
  func.func @transform_3(%arg0: i32) -> (i32, i32, i32) {
    %c0_i32 = arith.constant 0 : i32
    %c0_i32_0 = arith.constant 0 : i32
    %c0_i32_1 = arith.constant 0 : i32
    %c0_i32_2 = arith.constant 0 : i32
    return %c0_i32, %c0_i32_0, %c0_i32_1 : i32, i32, i32
  }
  func.func @transform_4(%arg0: i32) -> (i32, i32, i32) {
    %c0_i32 = arith.constant 0 : i32
    %c0_i32_0 = arith.constant 0 : i32
    %c0_i32_1 = arith.constant 0 : i32
    %c0_i32_2 = arith.constant 0 : i32
    return %c0_i32, %c0_i32_0, %c0_i32_1 : i32, i32, i32
  }
  func.func @transform_5(%arg0: i32) -> (i32, i32, i32) {
    %c0_i32 = arith.constant 0 : i32
    %c0_i32_0 = arith.constant 0 : i32
    %c0_i32_1 = arith.constant 0 : i32
    %c0_i32_2 = arith.constant 0 : i32
    return %c0_i32, %c0_i32_0, %c0_i32_1 : i32, i32, i32
  }
  func.func @transform_6(%arg0: i32) -> (i32, i32) {
    %c0_i32 = arith.constant 0 : i32
    %c0_i32_0 = arith.constant 0 : i32
    %c0_i32_1 = arith.constant 0 : i32
    return %c0_i32, %c0_i32_0 : i32, i32
  }
  func.func @transform_7(%arg0: i32) -> (i32, i32, i32) {
    %c0_i32 = arith.constant 0 : i32
    %c0_i32_0 = arith.constant 0 : i32
    %c0_i32_1 = arith.constant 0 : i32
    %c0_i32_2 = arith.constant 0 : i32
    return %c0_i32, %c0_i32_0, %c0_i32_1 : i32, i32, i32
  }
  func.func @transform_8(%arg0: i32) -> (i32, i32, i32) {
    %c0_i32 = arith.constant 0 : i32
    %c0_i32_0 = arith.constant 0 : i32
    %c0_i32_1 = arith.constant 0 : i32
    %c0_i32_2 = arith.constant 0 : i32
    return %c0_i32, %c0_i32_0, %c0_i32_1 : i32, i32, i32
  }
  func.func @transform_9(%arg0: i32) -> (i32, i32, i32) {
    %c0_i32 = arith.constant 0 : i32
    %c0_i32_0 = arith.constant 0 : i32
    %c0_i32_1 = arith.constant 0 : i32
    %c0_i32_2 = arith.constant 0 : i32
    return %c0_i32, %c0_i32_0, %c0_i32_1 : i32, i32, i32
  }
  func.func @transform_10(%arg0: i32) -> (i32, i32) {
    %c0_i32 = arith.constant 0 : i32
    %c0_i32_0 = arith.constant 0 : i32
    %c0_i32_1 = arith.constant 0 : i32
    return %c0_i32, %c0_i32_0 : i32, i32
  }
  func.func @transform_11(%arg0: i32) -> (i32, i32) {
    %c0_i32 = arith.constant 0 : i32
    %c0_i32_0 = arith.constant 0 : i32
    %c0_i32_1 = arith.constant 0 : i32
    return %c0_i32, %c0_i32_0 : i32, i32
  }
  func.func @transform_12(%arg0: i32) -> (i32, i32) {
    %c0_i32 = arith.constant 0 : i32
    %c0_i32_0 = arith.constant 0 : i32
    %c0_i32_1 = arith.constant 0 : i32
    return %c0_i32, %c0_i32_0 : i32, i32
  }
  func.func @transform_13(%arg0: i32) -> (i32, i32, i32) {
    %c0_i32 = arith.constant 0 : i32
    %c0_i32_0 = arith.constant 0 : i32
    %c0_i32_1 = arith.constant 0 : i32
    return %arg0, %c0_i32, %c0_i32_0 : i32, i32, i32
  }
}

</mosaic_0001>

<llo_original>
// kernel: tpu_custom_call.1
$region0: #{tpu_custom_call.1}
  #allocation0 [shape = 'u32[]', space=smem, size = 0x4, offset = 0x4, fixed_abs, tag = 'smem constant byte address 0x4 - core index']
  #allocation1 [shape = 'u32[144,128]{1,0:T(1,128)}', space=vmem, size = 0x12000, scoped, tag = 'internal scratch']
  %s0 = inlined_call_operand.vmem [shape: f32[4,22,196], index: 0, kind: input, shape index: {}]
  %s1 = inlined_call_operand.vmem [shape: f32[196,176], index: 1, kind: input, shape index: {}]
  %s2 = inlined_call_operand.vmem [shape: f32[1,88], index: 2, kind: input, shape index: {}]
  %s3 = inlined_call_operand.vmem [shape: f32[2,11,22], index: 3, kind: input, shape index: {}]
  %s4 = inlined_call_operand.vmem [shape: f32[2,176,88], index: 4, kind: input, shape index: {}]
  %s5 = inlined_call_operand.vmem [shape: f32[5,88,70], index: 5, kind: input, shape index: {}]
  %s6 = inlined_call_operand.vmem [shape: f32[1,30], index: 6, kind: input, shape index: {}]
  %s7 = inlined_call_operand.vmem [shape: f32[2,3,7], index: 7, kind: input, shape index: {}]
  %s8 = inlined_call_operand.vmem [shape: f32[2,70,30], index: 8, kind: input, shape index: {}]
  %s9 = inlined_call_operand.vmem [shape: f32[3,30,32], index: 9, kind: input, shape index: {}]
  %s10 = inlined_call_operand.vmem [shape: f32[1,32], index: 10, kind: input, shape index: {}]
  %s11 = inlined_call_operand.vmem [shape: f32[32,6], index: 11, kind: input, shape index: {}]
  %s12 = inlined_call_operand.vmem [shape: f32[1,6], index: 12, kind: input, shape index: {}]
  %s13 = inlined_call_operand.hbm [shape: f32[4,1,6], index: 13, kind: output, shape index: {}]
  %s14 = sld [smem:[#allocation0]]
  $region62: #{tpu_custom_call.1} parent=0
    _
  %s16 = ssub.s32 1, %s14
  %s17 = scalar_select 0, %s16, %s14
  $region1: #{tpu_custom_call.1} parent=0
    #allocation2 [shape = 'u8[2048]{0}', space=vmem, size = 0x800, scoped, tag = 'output window, operand 0, single buffered']
    #allocation3 [shape = 's32[1]{0}', space=sflag, size = 0x4, scoped, tag = 'scoped memory for tpu_custom_call.1']
    %18 = vsyncpa [#allocation3], 0
    // Predicated region
    $region2: #{tpu_custom_call.1} parent=1 // pred_check
      _
    $region3: #{tpu_custom_call.1} parent=1 // pred_check_branch
      %20 = sbr.rel (0) target = $region5
    $region4: #{tpu_custom_call.1} parent=1 // pred_region
      _
    $region5: #{tpu_custom_call.1} parent=1 // pred_fallthru
      _
    // Predicated region
    $region6: #{tpu_custom_call.1} parent=1 // pred_check
      _
    $region7: #{tpu_custom_call.1} parent=1 // pred_check_branch
      %22 = sbr.rel (0) target = $region9
    $region8: #{tpu_custom_call.1} parent=1 // pred_region
      _
    $region9: #{tpu_custom_call.1} parent=1 // pred_fallthru
      _
    // Predicated region
    $region10: #{tpu_custom_call.1} parent=1 // pred_check
      _
    $region11: #{tpu_custom_call.1} parent=1 // pred_check_branch
      %24 = sbr.rel (0) target = $region13
    $region12: #{tpu_custom_call.1} parent=1 // pred_region
      _
    $region13: #{tpu_custom_call.1} parent=1 // pred_fallthru
      _
    // Predicated region
    $region14: #{tpu_custom_call.1} parent=1 // pred_check
      _
    $region15: #{tpu_custom_call.1} parent=1 // pred_check_branch
      %26 = sbr.rel (0) target = $region17
    $region16: #{tpu_custom_call.1} parent=1 // pred_region
      _
    $region17: #{tpu_custom_call.1} parent=1 // pred_fallthru
      _
    // Predicated region
    $region18: #{tpu_custom_call.1} parent=1 // pred_check
      _
    $region19: #{tpu_custom_call.1} parent=1 // pred_check_branch
      %28 = sbr.rel (0) target = $region21
    $region20: #{tpu_custom_call.1} parent=1 // pred_region
      _
    $region21: #{tpu_custom_call.1} parent=1 // pred_fallthru
      _
    // Predicated region
    $region22: #{tpu_custom_call.1} parent=1 // pred_check
      _
    $region23: #{tpu_custom_call.1} parent=1 // pred_check_branch
      %30 = sbr.rel (0) target = $region25
    $region24: #{tpu_custom_call.1} parent=1 // pred_region
      _
    $region25: #{tpu_custom_call.1} parent=1 // pred_fallthru
      _
    // Predicated region
    $region26: #{tpu_custom_call.1} parent=1 // pred_check
      _
    $region27: #{tpu_custom_call.1} parent=1 // pred_check_branch
      %32 = sbr.rel (0) target = $region29
    $region28: #{tpu_custom_call.1} parent=1 // pred_region
      _
    $region29: #{tpu_custom_call.1} parent=1 // pred_fallthru
      _
    // Predicated region
    $region30: #{tpu_custom_call.1} parent=1 // pred_check
      _
    $region31: #{tpu_custom_call.1} parent=1 // pred_check_branch
      %34 = sbr.rel (0) target = $region33
    $region32: #{tpu_custom_call.1} parent=1 // pred_region
      _
    $region33: #{tpu_custom_call.1} parent=1 // pred_fallthru
      _
    // Predicated region
    $region34: #{tpu_custom_call.1} parent=1 // pred_check
      _
    $region35: #{tpu_custom_call.1} parent=1 // pred_check_branch
      %36 = sbr.rel (0) target = $region37
    $region36: #{tpu_custom_call.1} parent=1 // pred_region
      _
    $region37: #{tpu_custom_call.1} parent=1 // pred_fallthru
      _
    // Predicated region
    $region38: #{tpu_custom_call.1} parent=1 // pred_check
      _
    $region39: #{tpu_custom_call.1} parent=1 // pred_check_branch
      %38 = sbr.rel (0) target = $region41
    $region40: #{tpu_custom_call.1} parent=1 // pred_region
      _
    $region41: #{tpu_custom_call.1} parent=1 // pred_fallthru
      _
    // Predicated region
    $region42: #{tpu_custom_call.1} parent=1 // pred_check
      _
    $region43: #{tpu_custom_call.1} parent=1 // pred_check_branch
      %40 = sbr.rel (0) target = $region45
    $region44: #{tpu_custom_call.1} parent=1 // pred_region
      _
    $region45: #{tpu_custom_call.1} parent=1 // pred_fallthru
      _
    // Predicated region
    $region46: #{tpu_custom_call.1} parent=1 // pred_check
      _
    $region47: #{tpu_custom_call.1} parent=1 // pred_check_branch
      %42 = sbr.rel (0) target = $region49
    $region48: #{tpu_custom_call.1} parent=1 // pred_region
      _
    $region49: #{tpu_custom_call.1} parent=1 // pred_fallthru
      _
    // Predicated region
    $region50: #{tpu_custom_call.1} parent=1 // pred_check
      _
    $region51: #{tpu_custom_call.1} parent=1 // pred_check_branch
      %44 = sbr.rel (0) target = $region53
    $region52: #{tpu_custom_call.1} parent=1 // pred_region
      _
    $region53: #{tpu_custom_call.1} parent=1 // pred_fallthru
      _
    %v45 = vld [vmem:[%s0] sm:$0xff]
    %v46 = vld [vmem:[%s0 + $0x8] sm:$0xff]
    %v47 = vld [vmem:[%s0 + $0x10] sm:$0xff]
    %v48 = vld [vmem:[%s0 + $0x18] sm:$0xff]
    %v49 = vld [vmem:[%s0 + $0x20] sm:$0x3f]
    %v50 = vld [vmem:[%s0 + $0x28] sm:$0x3f]
    %v51 = vld [vmem:[%s1] sm:$0xff]
    %v52 = vld [vmem:[%s1 + $0x8] sm:$0xff]
    %v53 = vld [vmem:[%s1 + $0x10] sm:$0xff]
    %v54 = vld [vmem:[%s1 + $0x18] sm:$0xff]
    %v55 = vld [vmem:[%s1 + $0x20] sm:$0xff]
    %v56 = vld [vmem:[%s1 + $0x28] sm:$0xff]
    %v57 = vld [vmem:[%s1 + $0x30] sm:$0xff]
    %v58 = vld [vmem:[%s1 + $0x38] sm:$0xff]
    %v59 = vld [vmem:[%s1 + $0x40] sm:$0xff]
    %v60 = vld [vmem:[%s1 + $0x48] sm:$0xff]
    %v61 = vld [vmem:[%s1 + $0x50] sm:$0xff]
    %v62 = vld [vmem:[%s1 + $0x58] sm:$0xff]
    %v63 = vld [vmem:[%s1 + $0x60] sm:$0xff]
    %v64 = vld [vmem:[%s1 + $0x68] sm:$0xff]
    %v65 = vld [vmem:[%s1 + $0x70] sm:$0xff]
    %v66 = vld [vmem:[%s1 + $0x78] sm:$0xff]
    %v67 = vld [vmem:[%s1 + $0x80] sm:$0xff]
    %v68 = vld [vmem:[%s1 + $0x88] sm:$0xff]
    %v69 = vld [vmem:[%s1 + $0x90] sm:$0xff]
    %v70 = vld [vmem:[%s1 + $0x98] sm:$0xff]
    %v71 = vld [vmem:[%s1 + $0xa0] sm:$0xff]
    %v72 = vld [vmem:[%s1 + $0xa8] sm:$0xff]
    %v73 = vld [vmem:[%s1 + $0xb0] sm:$0xff]
    %v74 = vld [vmem:[%s1 + $0xb8] sm:$0xff]
    %v75 = vld [vmem:[%s1 + $0xc0] sm:$0xff]
    %v76 = vld [vmem:[%s1 + $0xc8] sm:$0xff]
    %v77 = vld [vmem:[%s1 + $0xd0] sm:$0xff]
    %v78 = vld [vmem:[%s1 + $0xd8] sm:$0xff]
    %v79 = vld [vmem:[%s1 + $0xe0] sm:$0xff]
    %v80 = vld [vmem:[%s1 + $0xe8] sm:$0xff]
    %v81 = vld [vmem:[%s1 + $0xf0] sm:$0xff]
    %v82 = vld [vmem:[%s1 + $0xf8] sm:$0xff]
    %v83 = vld [vmem:[%s1 + $0x100] sm:$0xff]
    %v84 = vld [vmem:[%s1 + $0x108] sm:$0xff]
    %v85 = vld [vmem:[%s1 + $0x110] sm:$0xff]
    %v86 = vld [vmem:[%s1 + $0x118] sm:$0xff]
    %v87 = vld [vmem:[%s1 + $0x120] sm:$0xff]
    %v88 = vld [vmem:[%s1 + $0x128] sm:$0xff]
    %v89 = vld [vmem:[%s1 + $0x130] sm:$0xff]
    %v90 = vld [vmem:[%s1 + $0x138] sm:$0xff]
    %v91 = vld [vmem:[%s1 + $0x140] sm:$0xff]
    %v92 = vld [vmem:[%s1 + $0x148] sm:$0xff]
    %v93 = vld [vmem:[%s1 + $0x150] sm:$0xff]
    %v94 = vld [vmem:[%s1 + $0x158] sm:$0xff]
    %v95 = vld [vmem:[%s1 + $0x160] sm:$0xff]
    %v96 = vld [vmem:[%s1 + $0x168] sm:$0xff]
    %v97 = vld [vmem:[%s1 + $0x170] sm:$0xff]
    %v98 = vld [vmem:[%s1 + $0x178] sm:$0xff]
    %v99 = vld [vmem:[%s1 + $0x180] sm:$0xf]
    %v100 = vld [vmem:[%s1 + $0x188] sm:$0xf]
    %vm101 = vcmask 556032
    %v103 = vsel %vm101, %v46, 0
    %v106 = vsel %vm101, %v48, 0
    %v109 = vsel %vm101, %v50, 0
    %vm111 = vcmask 1043456
    %v113 = vsel %vm111, %v99, 0
    %v116 = vsel %vm111, %v100, 0
    %118 = vmatprep.subr.mxu0 %v52
    %119 = vmatpush1.msra.mxu0 %v51
    %120 = vmatprep.subr.mxu0 %v54
    %121 = vmatpush1.msra.mxu0 %v53
    %122 = vmatprep.subr.mxu0 %v56
    %123 = vmatpush1.msra.mxu0 %v55
    %124 = vmatprep.subr.mxu0 %v58
    %125 = vmatpush1.msra.mxu0 %v57
    %126 = vmatprep.subr.mxu0 %v60
    %127 = vmatpush1.msra.mxu0 %v59
    %128 = vmatprep.subr.mxu0 %v62
    %129 = vmatpush1.msra.mxu0 %v61
    %130 = vmatprep.subr.mxu0 %v64
    %131 = vmatpush1.msra.mxu0 %v63
    %132 = vmatprep.subr.mxu0 %v66
    %133 = vmatpush1.msra.mxu0 %v65
    %134 = vmatprep.subr.mxu0 %v68
    %135 = vmatpush1.msra.mxu0 %v67
    %136 = vmatprep.subr.mxu0 %v70
    %137 = vmatpush1.msra.mxu0 %v69
    %138 = vmatprep.subr.mxu0 %v72
    %139 = vmatpush1.msra.mxu0 %v71
    %140 = vmatprep.subr.mxu0 %v74
    %141 = vmatpush1.msra.mxu0 %v73
    %142 = vmatprep.subr.mxu0 %v76
    %143 = vmatpush1.msra.mxu0 %v75
    %144 = vmatprep.subr.mxu0 %v78
    %145 = vmatpush1.msra.mxu0 %v77
    %146 = vmatprep.subr.mxu0 %v80
    %147 = vmatpush1.msra.mxu0 %v79
    %148 = vmatprep.subr.mxu0 %v82
    %149 = vmatpush1.msra.mxu0 %v81
    %150 = vmatprep.subr.mxu0 %v84
    %151 = vmatpush1.msra.mxu0 %v83
    %152 = vmatprep.subr.mxu0 %v86
    %153 = vmatpush1.msra.mxu0 %v85
    %154 = vmatprep.subr.mxu0 %v88
    %155 = vmatpush1.msra.mxu0 %v87
    %156 = vmatprep.subr.mxu0 %v90
    %157 = vmatpush1.msra.mxu0 %v89
    %158 = vmatprep.subr.mxu0 %v92
    %159 = vmatpush1.msra.mxu0 %v91
    %160 = vmatprep.subr.mxu0 %v94
    %161 = vmatpush1.msra.mxu0 %v93
    %162 = vmatprep.subr.mxu0 %v96
    %163 = vmatpush1.msra.mxu0 %v95
    %164 = vmatprep.subr.mxu0 %v98
    %165 = vmatpush1.msra.mxu0 %v97
    %166 = vmatprep.subr.mxu0 %v116
    %167 = vmatpush1.msra.mxu0 %v113
    %168 = vmatprep.subr.mxu0 0.0
    %169 = vmatpush1.msra.mxu0 0.0
    %170 = vmatprep.subr.mxu0 0.0
    %171 = vmatpush1.msra.mxu0 0.0
    %172 = vmatprep.subr.mxu0 0.0
    %173 = vmatpush1.msra.mxu0 0.0
    %174 = vmatprep.subr.mxu0 0.0
    %175 = vmatpush1.msra.mxu0 0.0
    %176 = vmatprep.subr.mxu0 0.0
    %177 = vmatpush1.msra.mxu0 0.0
    %178 = vmatprep.subr.mxu0 0.0
    %179 = vmatpush1.msra.mxu0 0.0
    %180 = vmatprep.subr.mxu0 0.0
    %181 = vmatpush1.msra.mxu0 0.0
    %182 = vmatprep.mubr.f32.mxu0 %v103
    %183 = vmatmul.mubr.f32.gmra.mrb[0].mxu0 %v45
    %v184 = vpop.f32.mrb[0].mxu0
    %v185 = vadd.f32 0.0, %v184
    %v186 = vpop.f32.mrb[0].mxu0
    %v187 = vadd.f32 0.0, %v186
    %188 = vmatprep.mubr.f32.mxu0 %v106
    %189 = vmatmul.mubr.f32.gmra.mrb[0].mxu0 %v47
    %v190 = vpop.f32.mrb[0].mxu0
    %v191 = vadd.f32 0.0, %v190
    %v192 = vpop.f32.mrb[0].mxu0
    %v193 = vadd.f32 0.0, %v192
    %194 = vmatprep.mubr.f32.mxu0 %v109
    %195 = vmatmul.mubr.f32.gmra.mrb[0].mxu0 %v49
    %v196 = vpop.f32.mrb[0].mxu0
    %v197 = vadd.f32 0.0, %v196
    %v198 = vpop.f32.mrb[0].mxu0
    %v199 = vadd.f32 0.0, %v198
    %200 = vdwg.mxu0
    %v201 = vld [vmem:[%s3] sm:$0xff]
    %v202 = vld [vmem:[%s3 + $0x8] sm:$0x7]
    %vm203 = vcmask 179200
    %v205 = vsel %vm203, %v201, 0
    %v208 = vsel %vm203, %v202, 0
    %vm210 = vcmask 1045504
    %v212 = vsel %vm210, %v197, 0
    %v215 = vsel %vm210, %v199, 0
    %217 = vmatprep.subr.mxu0 %v187
    %218 = vmatpush1.msra.mxu0 %v185
    %219 = vmatprep.subr.mxu0 %v193
    %220 = vmatpush1.msra.mxu0 %v191
    %221 = vmatprep.subr.mxu0 %v215
    %222 = vmatpush1.msra.mxu0 %v212
    %223 = vmatprep.subr.mxu0 0.0
    %224 = vmatpush1.msra.mxu0 0.0
    %225 = vmatprep.subr.mxu0 0.0
    %226 = vmatpush1.msra.mxu0 0.0
    %227 = vmatprep.subr.mxu0 0.0
    %228 = vmatpush1.msra.mxu0 0.0
    %229 = vmatprep.subr.mxu0 0.0
    %230 = vmatpush1.msra.mxu0 0.0
    %231 = vmatprep.subr.mxu0 0.0
    %232 = vmatpush1.msra.mxu0 0.0
    %233 = vmatprep.subr.mxu0 0.0
    %234 = vmatpush1.msra.mxu0 0.0
    %235 = vmatprep.subr.mxu0 0.0
    %236 = vmatpush1.msra.mxu0 0.0
    %237 = vmatprep.subr.mxu0 0.0
    %238 = vmatpush1.msra.mxu0 0.0
    %239 = vmatprep.subr.mxu0 0.0
    %240 = vmatpush1.msra.mxu0 0.0
    %241 = vmatprep.subr.mxu0 0.0
    %242 = vmatpush1.msra.mxu0 0.0
    %243 = vmatprep.subr.mxu0 0.0
    %244 = vmatpush1.msra.mxu0 0.0
    %245 = vmatprep.subr.mxu0 0.0
    %246 = vmatpush1.msra.mxu0 0.0
    %247 = vmatprep.subr.mxu0 0.0
    %248 = vmatpush1.msra.mxu0 0.0
    %249 = vmatprep.subr.mxu0 0.0
    %250 = vmatpush1.msra.mxu0 0.0
    %251 = vmatprep.subr.mxu0 0.0
    %252 = vmatpush1.msra.mxu0 0.0
    %253 = vmatprep.subr.mxu0 0.0
    %254 = vmatpush1.msra.mxu0 0.0
    %255 = vmatprep.subr.mxu0 0.0
    %256 = vmatpush1.msra.mxu0 0.0
    %257 = vmatprep.subr.mxu0 0.0
    %258 = vmatpush1.msra.mxu0 0.0
    %259 = vmatprep.subr.mxu0 0.0
    %260 = vmatpush1.msra.mxu0 0.0
    %261 = vmatprep.subr.mxu0 0.0
    %262 = vmatpush1.msra.mxu0 0.0
    %263 = vmatprep.subr.mxu0 0.0
    %264 = vmatpush1.msra.mxu0 0.0
    %265 = vmatprep.subr.mxu0 0.0
    %266 = vmatpush1.msra.mxu0 0.0
    %267 = vmatprep.subr.mxu0 0.0
    %268 = vmatpush1.msra.mxu0 0.0
    %269 = vmatprep.subr.mxu0 0.0
    %270 = vmatpush1.msra.mxu0 0.0
    %271 = vmatprep.subr.mxu0 0.0
    %272 = vmatpush1.msra.mxu0 0.0
    %273 = vmatprep.subr.mxu0 0.0
    %274 = vmatpush1.msra.mxu0 0.0
    %275 = vmatprep.subr.mxu0 0.0
    %276 = vmatpush1.msra.mxu0 0.0
    %277 = vmatprep.subr.mxu0 0.0
    %278 = vmatpush1.msra.mxu0 0.0
    %279 = vmatprep.subr.mxu0 0.0
    %280 = vmatpush1.msra.mxu0 0.0
    %281 = vmatprep.mubr.f32.mxu0 0.0
    %282 = vmatmul.mubr.f32.gmra.mrb[0].mxu0 %v205
    %v283 = vpop.f32.mrb[0].mxu0
    %v284 = vadd.f32 0.0, %v283
    %v285 = vpop.f32.mrb[0].mxu0
    %v286 = vadd.f32 0.0, %v285
    %287 = vmatprep.mubr.f32.mxu0 0.0
    %288 = vmatmul.mubr.f32.gmra.mrb[0].mxu0 %v208
    %v289 = vpop.f32.mrb[0].mxu0
    %v290 = vadd.f32 0.0, %v289
    %v291 = vpop.f32.mrb[0].mxu0
    %v292 = vadd.f32 0.0, %v291
    %293 = vdwg.mxu0
    %s294 = scalar_lea.vmem %s3, 16
    %v295 = vld [vmem:[%s294] sm:$0xff]
    %v296 = vld [vmem:[%s294 + $0x8] sm:$0x7]
    %v298 = vsel %vm203, %v295, 0
    %v301 = vsel %vm203, %v296, 0
    %303 = vmatprep.subr.mxu0 %v187
    %304 = vmatpush1.msra.mxu0 %v185
    %305 = vmatprep.subr.mxu0 %v193
    %306 = vmatpush1.msra.mxu0 %v191
    %307 = vmatprep.subr.mxu0 %v215
    %308 = vmatpush1.msra.mxu0 %v212
    %309 = vmatprep.subr.mxu0 0.0
    %310 = vmatpush1.msra.mxu0 0.0
    %311 = vmatprep.subr.mxu0 0.0
    %312 = vmatpush1.msra.mxu0 0.0
    %313 = vmatprep.subr.mxu0 0.0
    %314 = vmatpush1.msra.mxu0 0.0
    %315 = vmatprep.subr.mxu0 0.0
    %316 = vmatpush1.msra.mxu0 0.0
    %317 = vmatprep.subr.mxu0 0.0
    %318 = vmatpush1.msra.mxu0 0.0
    %319 = vmatprep.subr.mxu0 0.0
    %320 = vmatpush1.msra.mxu0 0.0
    %321 = vmatprep.subr.mxu0 0.0
    %322 = vmatpush1.msra.mxu0 0.0
    %323 = vmatprep.subr.mxu0 0.0
    %324 = vmatpush1.msra.mxu0 0.0
    %325 = vmatprep.subr.mxu0 0.0
    %326 = vmatpush1.msra.mxu0 0.0
    %327 = vmatprep.subr.mxu0 0.0
    %328 = vmatpush1.msra.mxu0 0.0
    %329 = vmatprep.subr.mxu0 0.0
    %330 = vmatpush1.msra.mxu0 0.0
    %331 = vmatprep.subr.mxu0 0.0
    %332 = vmatpush1.msra.mxu0 0.0
    %333 = vmatprep.subr.mxu0 0.0
    %334 = vmatpush1.msra.mxu0 0.0
    %335 = vmatprep.subr.mxu0 0.0
    %336 = vmatpush1.msra.mxu0 0.0
    %337 = vmatprep.subr.mxu0 0.0
    %338 = vmatpush1.msra.mxu0 0.0
    %339 = vmatprep.subr.mxu0 0.0
    %340 = vmatpush1.msra.mxu0 0.0
    %341 = vmatprep.subr.mxu0 0.0
    %342 = vmatpush1.msra.mxu0 0.0
    %343 = vmatprep.subr.mxu0 0.0
    %344 = vmatpush1.msra.mxu0 0.0
    %345 = vmatprep.subr.mxu0 0.0
    %346 = vmatpush1.msra.mxu0 0.0
    %347 = vmatprep.subr.mxu0 0.0
    %348 = vmatpush1.msra.mxu0 0.0
    %349 = vmatprep.subr.mxu0 0.0
    %350 = vmatpush1.msra.mxu0 0.0
    %351 = vmatprep.subr.mxu0 0.0
    %352 = vmatpush1.msra.mxu0 0.0
    %353 = vmatprep.subr.mxu0 0.0
    %354 = vmatpush1.msra.mxu0 0.0
    %355 = vmatprep.subr.mxu0 0.0
    %356 = vmatpush1.msra.mxu0 0.0
    %357 = vmatprep.subr.mxu0 0.0
    %358 = vmatpush1.msra.mxu0 0.0
    %359 = vmatprep.subr.mxu0 0.0
    %360 = vmatpush1.msra.mxu0 0.0
    %361 = vmatprep.subr.mxu0 0.0
    %362 = vmatpush1.msra.mxu0 0.0
    %363 = vmatprep.subr.mxu0 0.0
    %364 = vmatpush1.msra.mxu0 0.0
    %365 = vmatprep.subr.mxu0 0.0
    %366 = vmatpush1.msra.mxu0 0.0
    %367 = vmatprep.mubr.f32.mxu0 0.0
    %368 = vmatmul.mubr.f32.gmra.mrb[0].mxu0 %v298
    %v369 = vpop.f32.mrb[0].mxu0
    %v370 = vadd.f32 0.0, %v369
    %v371 = vpop.f32.mrb[0].mxu0
    %v372 = vadd.f32 0.0, %v371
    %373 = vmatprep.mubr.f32.mxu0 0.0
    %374 = vmatmul.mubr.f32.gmra.mrb[0].mxu0 %v301
    %v375 = vpop.f32.mrb[0].mxu0
    %v376 = vadd.f32 0.0, %v375
    %v377 = vpop.f32.mrb[0].mxu0
    %v378 = vadd.f32 0.0, %v377
    %379 = vdwg.mxu0
    %v380 = vld [vmem:[%s4] sm:$0xff]
    %v381 = vld [vmem:[%s4 + $0x8] sm:$0xff]
    %v382 = vld [vmem:[%s4 + $0x10] sm:$0xff]
    %v383 = vld [vmem:[%s4 + $0x18] sm:$0xff]
    %v384 = vld [vmem:[%s4 + $0x20] sm:$0xff]
    %v385 = vld [vmem:[%s4 + $0x28] sm:$0xff]
    %v386 = vld [vmem:[%s4 + $0x30] sm:$0xff]
    %v387 = vld [vmem:[%s4 + $0x38] sm:$0xff]
    %v388 = vld [vmem:[%s4 + $0x40] sm:$0xff]
    %v389 = vld [vmem:[%s4 + $0x48] sm:$0xff]
    %v390 = vld [vmem:[%s4 + $0x50] sm:$0xff]
    %v391 = vld [vmem:[%s4 + $0x58] sm:$0xff]
    %v392 = vld [vmem:[%s4 + $0x60] sm:$0xff]
    %v393 = vld [vmem:[%s4 + $0x68] sm:$0xff]
    %v394 = vld [vmem:[%s4 + $0x70] sm:$0xff]
    %v395 = vld [vmem:[%s4 + $0x78] sm:$0xff]
    %v396 = vld [vmem:[%s4 + $0x80] sm:$0xff]
    %v397 = vld [vmem:[%s4 + $0x88] sm:$0xff]
    %v398 = vld [vmem:[%s4 + $0x90] sm:$0xff]
    %v399 = vld [vmem:[%s4 + $0x98] sm:$0xff]
    %v400 = vld [vmem:[%s4 + $0xa0] sm:$0xff]
    %v401 = vld [vmem:[%s4 + $0xa8] sm:$0xff]
    %vm402 = vcmask 392192
    %v404 = vsel %vm402, %v286, 0
    %v407 = vsel %vm402, %v292, 0
    %409 = vmatprep.subr.mxu0 0.0
    %410 = vmatpush1.msra.mxu0 %v380
    %411 = vmatprep.subr.mxu0 0.0
    %412 = vmatpush1.msra.mxu0 %v381
    %413 = vmatprep.subr.mxu0 0.0
    %414 = vmatpush1.msra.mxu0 %v382
    %415 = vmatprep.subr.mxu0 0.0
    %416 = vmatpush1.msra.mxu0 %v383
    %417 = vmatprep.subr.mxu0 0.0
    %418 = vmatpush1.msra.mxu0 %v384
    %419 = vmatprep.subr.mxu0 0.0
    %420 = vmatpush1.msra.mxu0 %v385
    %421 = vmatprep.subr.mxu0 0.0
    %422 = vmatpush1.msra.mxu0 %v386
    %423 = vmatprep.subr.mxu0 0.0
    %424 = vmatpush1.msra.mxu0 %v387
    %425 = vmatprep.subr.mxu0 0.0
    %426 = vmatpush1.msra.mxu0 %v388
    %427 = vmatprep.subr.mxu0 0.0
    %428 = vmatpush1.msra.mxu0 %v389
    %429 = vmatprep.subr.mxu0 0.0
    %430 = vmatpush1.msra.mxu0 %v390
    %431 = vmatprep.subr.mxu0 0.0
    %432 = vmatpush1.msra.mxu0 %v391
    %433 = vmatprep.subr.mxu0 0.0
    %434 = vmatpush1.msra.mxu0 %v392
    %435 = vmatprep.subr.mxu0 0.0
    %436 = vmatpush1.msra.mxu0 %v393
    %437 = vmatprep.subr.mxu0 0.0
    %438 = vmatpush1.msra.mxu0 %v394
    %439 = vmatprep.subr.mxu0 0.0
    %440 = vmatpush1.msra.mxu0 %v395
    %441 = vmatprep.subr.mxu0 0.0
    %442 = vmatpush1.msra.mxu0 %v396
    %443 = vmatprep.subr.mxu0 0.0
    %444 = vmatpush1.msra.mxu0 %v397
    %445 = vmatprep.subr.mxu0 0.0
    %446 = vmatpush1.msra.mxu0 %v398
    %447 = vmatprep.subr.mxu0 0.0
    %448 = vmatpush1.msra.mxu0 %v399
    %449 = vmatprep.subr.mxu0 0.0
    %450 = vmatpush1.msra.mxu0 %v400
    %451 = vmatprep.subr.mxu0 0.0
    %452 = vmatpush1.msra.mxu0 %v401
    %453 = vmatprep.subr.mxu0 0.0
    %454 = vmatpush1.msra.mxu0 0.0
    %455 = vmatprep.subr.mxu0 0.0
    %456 = vmatpush1.msra.mxu0 0.0
    %457 = vmatprep.subr.mxu0 0.0
    %458 = vmatpush1.msra.mxu0 0.0
    %459 = vmatprep.subr.mxu0 0.0
    %460 = vmatpush1.msra.mxu0 0.0
    %461 = vmatprep.subr.mxu0 0.0
    %462 = vmatpush1.msra.mxu0 0.0
    %463 = vmatprep.subr.mxu0 0.0
    %464 = vmatpush1.msra.mxu0 0.0
    %465 = vmatprep.subr.mxu0 0.0
    %466 = vmatpush1.msra.mxu0 0.0
    %467 = vmatprep.subr.mxu0 0.0
    %468 = vmatpush1.msra.mxu0 0.0
    %469 = vmatprep.subr.mxu0 0.0
    %470 = vmatpush1.msra.mxu0 0.0
    %471 = vmatprep.subr.mxu0 0.0
    %472 = vmatpush1.msra.mxu0 0.0
    %473 = vmatprep.mubr.f32.mxu0 %v404
    %474 = vmatmul.mubr.f32.gmra.mrb[0].mxu0 %v284
    %v475 = vpop.f32.mrb[0].mxu0
    %v476 = vadd.f32 0.0, %v475
    %v477 = vpop.f32.mrb[0].mxu0
    %478 = vmatprep.mubr.f32.mxu0 %v407
    %479 = vmatmul.mubr.f32.gmra.mrb[0].mxu0 %v290
    %v480 = vpop.f32.mrb[0].mxu0
    %v481 = vadd.f32 0.0, %v480
    %v482 = vpop.f32.mrb[0].mxu0
    %483 = vdwg.mxu0
    %s484 = scalar_lea.vmem %s4, 176
    %v485 = vld [vmem:[%s484] sm:$0xff]
    %v486 = vld [vmem:[%s484 + $0x8] sm:$0xff]
    %v487 = vld [vmem:[%s484 + $0x10] sm:$0xff]
    %v488 = vld [vmem:[%s484 + $0x18] sm:$0xff]
    %v489 = vld [vmem:[%s484 + $0x20] sm:$0xff]
    %v490 = vld [vmem:[%s484 + $0x28] sm:$0xff]
    %v491 = vld [vmem:[%s484 + $0x30] sm:$0xff]
    %v492 = vld [vmem:[%s484 + $0x38] sm:$0xff]
    %v493 = vld [vmem:[%s484 + $0x40] sm:$0xff]
    %v494 = vld [vmem:[%s484 + $0x48] sm:$0xff]
    %v495 = vld [vmem:[%s484 + $0x50] sm:$0xff]
    %v496 = vld [vmem:[%s484 + $0x58] sm:$0xff]
    %v497 = vld [vmem:[%s484 + $0x60] sm:$0xff]
    %v498 = vld [vmem:[%s484 + $0x68] sm:$0xff]
    %v499 = vld [vmem:[%s484 + $0x70] sm:$0xff]
    %v500 = vld [vmem:[%s484 + $0x78] sm:$0xff]
    %v501 = vld [vmem:[%s484 + $0x80] sm:$0xff]
    %v502 = vld [vmem:[%s484 + $0x88] sm:$0xff]
    %v503 = vld [vmem:[%s484 + $0x90] sm:$0xff]
    %v504 = vld [vmem:[%s484 + $0x98] sm:$0xff]
    %v505 = vld [vmem:[%s484 + $0xa0] sm:$0xff]
    %v506 = vld [vmem:[%s484 + $0xa8] sm:$0xff]
    %507 = vmatprep.subr.mxu0 0.0
    %508 = vmatpush1.msra.mxu0 %v485
    %509 = vmatprep.subr.mxu0 0.0
    %510 = vmatpush1.msra.mxu0 %v486
    %511 = vmatprep.subr.mxu0 0.0
    %512 = vmatpush1.msra.mxu0 %v487
    %513 = vmatprep.subr.mxu0 0.0
    %514 = vmatpush1.msra.mxu0 %v488
    %515 = vmatprep.subr.mxu0 0.0
    %516 = vmatpush1.msra.mxu0 %v489
    %517 = vmatprep.subr.mxu0 0.0
    %518 = vmatpush1.msra.mxu0 %v490
    %519 = vmatprep.subr.mxu0 0.0
    %520 = vmatpush1.msra.mxu0 %v491
    %521 = vmatprep.subr.mxu0 0.0
    %522 = vmatpush1.msra.mxu0 %v492
    %523 = vmatprep.subr.mxu0 0.0
    %524 = vmatpush1.msra.mxu0 %v493
    %525 = vmatprep.subr.mxu0 0.0
    %526 = vmatpush1.msra.mxu0 %v494
    %527 = vmatprep.subr.mxu0 0.0
    %528 = vmatpush1.msra.mxu0 %v495
    %529 = vmatprep.subr.mxu0 0.0
    %530 = vmatpush1.msra.mxu0 %v496
    %531 = vmatprep.subr.mxu0 0.0
    %532 = vmatpush1.msra.mxu0 %v497
    %533 = vmatprep.subr.mxu0 0.0
    %534 = vmatpush1.msra.mxu0 %v498
    %535 = vmatprep.subr.mxu0 0.0
    %536 = vmatpush1.msra.mxu0 %v499
    %537 = vmatprep.subr.mxu0 0.0
    %538 = vmatpush1.msra.mxu0 %v500
    %539 = vmatprep.subr.mxu0 0.0
    %540 = vmatpush1.msra.mxu0 %v501
    %541 = vmatprep.subr.mxu0 0.0
    %542 = vmatpush1.msra.mxu0 %v502
    %543 = vmatprep.subr.mxu0 0.0
    %544 = vmatpush1.msra.mxu0 %v503
    %545 = vmatprep.subr.mxu0 0.0
    %546 = vmatpush1.msra.mxu0 %v504
    %547 = vmatprep.subr.mxu0 0.0
    %548 = vmatpush1.msra.mxu0 %v505
    %549 = vmatprep.subr.mxu0 0.0
    %550 = vmatpush1.msra.mxu0 %v506
    %551 = vmatprep.subr.mxu0 0.0
    %552 = vmatpush1.msra.mxu0 0.0
    %553 = vmatprep.subr.mxu0 0.0
    %554 = vmatpush1.msra.mxu0 0.0
    %555 = vmatprep.subr.mxu0 0.0
    %556 = vmatpush1.msra.mxu0 0.0
    %557 = vmatprep.subr.mxu0 0.0
    %558 = vmatpush1.msra.mxu0 0.0
    %559 = vmatprep.subr.mxu0 0.0
    %560 = vmatpush1.msra.mxu0 0.0
    %561 = vmatprep.subr.mxu0 0.0
    %562 = vmatpush1.msra.mxu0 0.0
    %563 = vmatprep.subr.mxu0 0.0
    %564 = vmatpush1.msra.mxu0 0.0
    %565 = vmatprep.subr.mxu0 0.0
    %566 = vmatpush1.msra.mxu0 0.0
    %567 = vmatprep.subr.mxu0 0.0
    %568 = vmatpush1.msra.mxu0 0.0
    %569 = vmatprep.subr.mxu0 0.0
    %570 = vmatpush1.msra.mxu0 0.0
    %571 = vmatprep.mubr.f32.mxu0 %v404
    %572 = vmatmul.mubr.f32.gmra.mrb[0].mxu0 %v284
    %v573 = vpop.f32.mrb[0].mxu0
    %v574 = vadd.f32 0.0, %v573
    %v575 = vpop.f32.mrb[0].mxu0
    %576 = vmatprep.mubr.f32.mxu0 %v407
    %577 = vmatmul.mubr.f32.gmra.mrb[0].mxu0 %v290
    %v578 = vpop.f32.mrb[0].mxu0
    %v579 = vadd.f32 0.0, %v578
    %v580 = vpop.f32.mrb[0].mxu0
    %581 = vdwg.mxu0
    %v582 = vmax.f32 %v476, %v574
    %v583 = vmax.f32 %v481, %v579
    %v585 = vsel %vm402, %v372, 0
    %v588 = vsel %vm402, %v378, 0
    %590 = vmatprep.subr.mxu0 0.0
    %591 = vmatpush1.msra.mxu0 %v380
    %592 = vmatprep.subr.mxu0 0.0
    %593 = vmatpush1.msra.mxu0 %v381
    %594 = vmatprep.subr.mxu0 0.0
    %595 = vmatpush1.msra.mxu0 %v382
    %596 = vmatprep.subr.mxu0 0.0
    %597 = vmatpush1.msra.mxu0 %v383
    %598 = vmatprep.subr.mxu0 0.0
    %599 = vmatpush1.msra.mxu0 %v384
    %600 = vmatprep.subr.mxu0 0.0
    %601 = vmatpush1.msra.mxu0 %v385
    %602 = vmatprep.subr.mxu0 0.0
    %603 = vmatpush1.msra.mxu0 %v386
    %604 = vmatprep.subr.mxu0 0.0
    %605 = vmatpush1.msra.mxu0 %v387
    %606 = vmatprep.subr.mxu0 0.0
    %607 = vmatpush1.msra.mxu0 %v388
    %608 = vmatprep.subr.mxu0 0.0
    %609 = vmatpush1.msra.mxu0 %v389
    %610 = vmatprep.subr.mxu0 0.0
    %611 = vmatpush1.msra.mxu0 %v390
    %612 = vmatprep.subr.mxu0 0.0
    %613 = vmatpush1.msra.mxu0 %v391
    %614 = vmatprep.subr.mxu0 0.0
    %615 = vmatpush1.msra.mxu0 %v392
    %616 = vmatprep.subr.mxu0 0.0
    %617 = vmatpush1.msra.mxu0 %v393
    %618 = vmatprep.subr.mxu0 0.0
    %619 = vmatpush1.msra.mxu0 %v394
    %620 = vmatprep.subr.mxu0 0.0
    %621 = vmatpush1.msra.mxu0 %v395
    %622 = vmatprep.subr.mxu0 0.0
    %623 = vmatpush1.msra.mxu0 %v396
    %624 = vmatprep.subr.mxu0 0.0
    %625 = vmatpush1.msra.mxu0 %v397
    %626 = vmatprep.subr.mxu0 0.0
    %627 = vmatpush1.msra.mxu0 %v398
    %628 = vmatprep.subr.mxu0 0.0
    %629 = vmatpush1.msra.mxu0 %v399
    %630 = vmatprep.subr.mxu0 0.0
    %631 = vmatpush1.msra.mxu0 %v400
    %632 = vmatprep.subr.mxu0 0.0
    %633 = vmatpush1.msra.mxu0 %v401
    %634 = vmatprep.subr.mxu0 0.0
    %635 = vmatpush1.msra.mxu0 0.0
    %636 = vmatprep.subr.mxu0 0.0
    %637 = vmatpush1.msra.mxu0 0.0
    %638 = vmatprep.subr.mxu0 0.0
    %639 = vmatpush1.msra.mxu0 0.0
    %640 = vmatprep.subr.mxu0 0.0
    %641 = vmatpush1.msra.mxu0 0.0
    %642 = vmatprep.subr.mxu0 0.0
    %643 = vmatpush1.msra.mxu0 0.0
    %644 = vmatprep.subr.mxu0 0.0
    %645 = vmatpush1.msra.mxu0 0.0
    %646 = vmatprep.subr.mxu0 0.0
    %647 = vmatpush1.msra.mxu0 0.0
    %648 = vmatprep.subr.mxu0 0.0
    %649 = vmatpush1.msra.mxu0 0.0
    %650 = vmatprep.subr.mxu0 0.0
    %651 = vmatpush1.msra.mxu0 0.0
    %652 = vmatprep.subr.mxu0 0.0
    %653 = vmatpush1.msra.mxu0 0.0
    %654 = vmatprep.mubr.f32.mxu0 %v585
    %655 = vmatmul.mubr.f32.gmra.mrb[0].mxu0 %v370
    %v656 = vpop.f32.mrb[0].mxu0
    %v657 = vadd.f32 0.0, %v656
    %v658 = vpop.f32.mrb[0].mxu0
    %659 = vmatprep.mubr.f32.mxu0 %v588
    %660 = vmatmul.mubr.f32.gmra.mrb[0].mxu0 %v376
    %v661 = vpop.f32.mrb[0].mxu0
    %v662 = vadd.f32 0.0, %v661
    %v663 = vpop.f32.mrb[0].mxu0
    %664 = vdwg.mxu0
    %665 = vmatprep.subr.mxu0 0.0
    %666 = vmatpush1.msra.mxu0 %v485
    %667 = vmatprep.subr.mxu0 0.0
    %668 = vmatpush1.msra.mxu0 %v486
    %669 = vmatprep.subr.mxu0 0.0
    %670 = vmatpush1.msra.mxu0 %v487
    %671 = vmatprep.subr.mxu0 0.0
    %672 = vmatpush1.msra.mxu0 %v488
    %673 = vmatprep.subr.mxu0 0.0
    %674 = vmatpush1.msra.mxu0 %v489
    %675 = vmatprep.subr.mxu0 0.0
    %676 = vmatpush1.msra.mxu0 %v490
    %677 = vmatprep.subr.mxu0 0.0
    %678 = vmatpush1.msra.mxu0 %v491
    %679 = vmatprep.subr.mxu0 0.0
    %680 = vmatpush1.msra.mxu0 %v492
    %681 = vmatprep.subr.mxu0 0.0
    %682 = vmatpush1.msra.mxu0 %v493
    %683 = vmatprep.subr.mxu0 0.0
    %684 = vmatpush1.msra.mxu0 %v494
    %685 = vmatprep.subr.mxu0 0.0
    %686 = vmatpush1.msra.mxu0 %v495
    %687 = vmatprep.subr.mxu0 0.0
    %688 = vmatpush1.msra.mxu0 %v496
    %689 = vmatprep.subr.mxu0 0.0
    %690 = vmatpush1.msra.mxu0 %v497
    %691 = vmatprep.subr.mxu0 0.0
    %692 = vmatpush1.msra.mxu0 %v498
    %693 = vmatprep.subr.mxu0 0.0
    %694 = vmatpush1.msra.mxu0 %v499
    %695 = vmatprep.subr.mxu0 0.0
    %696 = vmatpush1.msra.mxu0 %v500
    %697 = vmatprep.subr.mxu0 0.0
    %698 = vmatpush1.msra.mxu0 %v501
    %699 = vmatprep.subr.mxu0 0.0
    %700 = vmatpush1.msra.mxu0 %v502
    %701 = vmatprep.subr.mxu0 0.0
    %702 = vmatpush1.msra.mxu0 %v503
    %703 = vmatprep.subr.mxu0 0.0
    %704 = vmatpush1.msra.mxu0 %v504
    %705 = vmatprep.subr.mxu0 0.0
    %706 = vmatpush1.msra.mxu0 %v505
    %707 = vmatprep.subr.mxu0 0.0
    %708 = vmatpush1.msra.mxu0 %v506
    %709 = vmatprep.subr.mxu0 0.0
    %710 = vmatpush1.msra.mxu0 0.0
    %711 = vmatprep.subr.mxu0 0.0
    %712 = vmatpush1.msra.mxu0 0.0
    %713 = vmatprep.subr.mxu0 0.0
    %714 = vmatpush1.msra.mxu0 0.0
    %715 = vmatprep.subr.mxu0 0.0
    %716 = vmatpush1.msra.mxu0 0.0
    %717 = vmatprep.subr.mxu0 0.0
    %718 = vmatpush1.msra.mxu0 0.0
    %719 = vmatprep.subr.mxu0 0.0
    %720 = vmatpush1.msra.mxu0 0.0
    %721 = vmatprep.subr.mxu0 0.0
    %722 = vmatpush1.msra.mxu0 0.0
    %723 = vmatprep.subr.mxu0 0.0
    %724 = vmatpush1.msra.mxu0 0.0
    %725 = vmatprep.subr.mxu0 0.0
    %726 = vmatpush1.msra.mxu0 0.0
    %727 = vmatprep.subr.mxu0 0.0
    %728 = vmatpush1.msra.mxu0 0.0
    %729 = vmatprep.mubr.f32.mxu0 %v585
    %730 = vmatmul.mubr.f32.gmra.mrb[0].mxu0 %v370
    %v731 = vpop.f32.mrb[0].mxu0
    %v732 = vadd.f32 0.0, %v731
    %v733 = vpop.f32.mrb[0].mxu0
    %734 = vmatprep.mubr.f32.mxu0 %v588
    %735 = vmatmul.mubr.f32.gmra.mrb[0].mxu0 %v376
    %v736 = vpop.f32.mrb[0].mxu0
    %v737 = vadd.f32 0.0, %v736
    %v738 = vpop.f32.mrb[0].mxu0
    %739 = vdwg.mxu0
    %v740 = vmax.f32 %v657, %v732
    %v741 = vmax.f32 %v662, %v737
    %v742 = vmax.f32 %v582, %v740
    %v743 = vmax.f32 %v583, %v741
    %v744 = vld [vmem:[%s2] sm:$0x1]
    %v746 = vlaneseq
    %v747 = vshrl.u32 %v746, 7
    %v748 = vsub.s32 0, %v747
    %v749 = vrot.slane %v744, %v748
    %v751 = vadd.f32 %v742, %v749
    %v752 = vadd.f32 %v743, %v749
    %v753 = vmax.f32 %v751, 0.0
    %v754 = vmax.f32 %v752, 0.0
    %v755 = vld [vmem:[%s5] sm:$0xff]
    %v756 = vld [vmem:[%s5 + $0x8] sm:$0xff]
    %v757 = vld [vmem:[%s5 + $0x10] sm:$0xff]
    %v758 = vld [vmem:[%s5 + $0x18] sm:$0xff]
    %v759 = vld [vmem:[%s5 + $0x20] sm:$0xff]
    %v760 = vld [vmem:[%s5 + $0x28] sm:$0xff]
    %v761 = vld [vmem:[%s5 + $0x30] sm:$0xff]
    %v762 = vld [vmem:[%s5 + $0x38] sm:$0xff]
    %v763 = vld [vmem:[%s5 + $0x40] sm:$0xff]
    %v764 = vld [vmem:[%s5 + $0x48] sm:$0xff]
    %v765 = vld [vmem:[%s5 + $0x50] sm:$0xff]
    %s766 = scalar_lea.vmem %s5, 88
    %v767 = vld [vmem:[%s766] sm:$0xff]
    %v768 = vld [vmem:[%s766 + $0x8] sm:$0xff]
    %v769 = vld [vmem:[%s766 + $0x10] sm:$0xff]
    %v770 = vld [vmem:[%s766 + $0x18] sm:$0xff]
    %v771 = vld [vmem:[%s766 + $0x20] sm:$0xff]
    %v772 = vld [vmem:[%s766 + $0x28] sm:$0xff]
    %v773 = vld [vmem:[%s766 + $0x30] sm:$0xff]
    %v774 = vld [vmem:[%s766 + $0x38] sm:$0xff]
    %v775 = vld [vmem:[%s766 + $0x40] sm:$0xff]
    %v776 = vld [vmem:[%s766 + $0x48] sm:$0xff]
    %v777 = vld [vmem:[%s766 + $0x50] sm:$0xff]
    %v779 = vrot.slane %v753, 1
    %vm780 = vcmask 719872
    %v781 = vsel %vm780, %v779, 0
    %783 = vmatprep.subr.mxu0 0.0
    %784 = vmatpush1.msra.mxu0 %v767
    %785 = vmatprep.subr.mxu0 0.0
    %786 = vmatpush1.msra.mxu0 %v768
    %787 = vmatprep.subr.mxu0 0.0
    %788 = vmatpush1.msra.mxu0 %v769
    %789 = vmatprep.subr.mxu0 0.0
    %790 = vmatpush1.msra.mxu0 %v770
    %791 = vmatprep.subr.mxu0 0.0
    %792 = vmatpush1.msra.mxu0 %v771
    %793 = vmatprep.subr.mxu0 0.0
    %794 = vmatpush1.msra.mxu0 %v772
    %795 = vmatprep.subr.mxu0 0.0
    %796 = vmatpush1.msra.mxu0 %v773
    %797 = vmatprep.subr.mxu0 0.0
    %798 = vmatpush1.msra.mxu0 %v774
    %799 = vmatprep.subr.mxu0 0.0
    %800 = vmatpush1.msra.mxu0 %v775
    %801 = vmatprep.subr.mxu0 0.0
    %802 = vmatpush1.msra.mxu0 %v776
    %803 = vmatprep.subr.mxu0 0.0
    %804 = vmatpush1.msra.mxu0 %v777
    %805 = vmatprep.subr.mxu0 0.0
    %806 = vmatpush1.msra.mxu0 0.0
    %807 = vmatprep.subr.mxu0 0.0
    %808 = vmatpush1.msra.mxu0 0.0
    %809 = vmatprep.subr.mxu0 0.0
    %810 = vmatpush1.msra.mxu0 0.0
    %811 = vmatprep.subr.mxu0 0.0
    %812 = vmatpush1.msra.mxu0 0.0
    %813 = vmatprep.subr.mxu0 0.0
    %814 = vmatpush1.msra.mxu0 0.0
    %815 = vmatprep.subr.mxu0 0.0
    %816 = vmatpush1.msra.mxu0 0.0
    %817 = vmatprep.subr.mxu0 0.0
    %818 = vmatpush1.msra.mxu0 0.0
    %819 = vmatprep.subr.mxu0 0.0
    %820 = vmatpush1.msra.mxu0 0.0
    %821 = vmatprep.subr.mxu0 0.0
    %822 = vmatpush1.msra.mxu0 0.0
    %823 = vmatprep.subr.mxu0 0.0
    %824 = vmatpush1.msra.mxu0 0.0
    %825 = vmatprep.subr.mxu0 0.0
    %826 = vmatpush1.msra.mxu0 0.0
    %827 = vmatprep.subr.mxu0 0.0
    %828 = vmatpush1.msra.mxu0 0.0
    %829 = vmatprep.subr.mxu0 0.0
    %830 = vmatpush1.msra.mxu0 0.0
    %831 = vmatprep.subr.mxu0 0.0
    %832 = vmatpush1.msra.mxu0 0.0
    %833 = vmatprep.subr.mxu0 0.0
    %834 = vmatpush1.msra.mxu0 0.0
    %835 = vmatprep.subr.mxu0 0.0
    %836 = vmatpush1.msra.mxu0 0.0
    %837 = vmatprep.subr.mxu0 0.0
    %838 = vmatpush1.msra.mxu0 0.0
    %839 = vmatprep.subr.mxu0 0.0
    %840 = vmatpush1.msra.mxu0 0.0
    %841 = vmatprep.subr.mxu0 0.0
    %842 = vmatpush1.msra.mxu0 0.0
    %843 = vmatprep.subr.mxu0 0.0
    %844 = vmatpush1.msra.mxu0 0.0
    %845 = vmatprep.subr.mxu0 0.0
    %846 = vmatpush1.msra.mxu0 0.0
    %847 = vmatprep.mubr.f32.mxu0 0.0
    %848 = vmatmul.mubr.f32.gmra.mrb[0].mxu0 %v781
    %v849 = vpop.f32.mrb[0].mxu0
    %v850 = vadd.f32 0.0, %v849
    %v851 = vpop.f32.mrb[0].mxu0
    %852 = vdwg.mxu0
    %v853 = vsel %vm780, %v753, 0
    %855 = vmatprep.subr.mxu0 0.0
    %856 = vmatpush1.msra.mxu0 %v755
    %857 = vmatprep.subr.mxu0 0.0
    %858 = vmatpush1.msra.mxu0 %v756
    %859 = vmatprep.subr.mxu0 0.0
    %860 = vmatpush1.msra.mxu0 %v757
    %861 = vmatprep.subr.mxu0 0.0
    %862 = vmatpush1.msra.mxu0 %v758
    %863 = vmatprep.subr.mxu0 0.0
    %864 = vmatpush1.msra.mxu0 %v759
    %865 = vmatprep.subr.mxu0 0.0
    %866 = vmatpush1.msra.mxu0 %v760
    %867 = vmatprep.subr.mxu0 0.0
    %868 = vmatpush1.msra.mxu0 %v761
    %869 = vmatprep.subr.mxu0 0.0
    %870 = vmatpush1.msra.mxu0 %v762
    %871 = vmatprep.subr.mxu0 0.0
    %872 = vmatpush1.msra.mxu0 %v763
    %873 = vmatprep.subr.mxu0 0.0
    %874 = vmatpush1.msra.mxu0 %v764
    %875 = vmatprep.subr.mxu0 0.0
    %876 = vmatpush1.msra.mxu0 %v765
    %877 = vmatprep.subr.mxu0 0.0
    %878 = vmatpush1.msra.mxu0 0.0
    %879 = vmatprep.subr.mxu0 0.0
    %880 = vmatpush1.msra.mxu0 0.0
    %881 = vmatprep.subr.mxu0 0.0
    %882 = vmatpush1.msra.mxu0 0.0
    %883 = vmatprep.subr.mxu0 0.0
    %884 = vmatpush1.msra.mxu0 0.0
    %885 = vmatprep.subr.mxu0 0.0
    %886 = vmatpush1.msra.mxu0 0.0
    %887 = vmatprep.subr.mxu0 0.0
    %888 = vmatpush1.msra.mxu0 0.0
    %889 = vmatprep.subr.mxu0 0.0
    %890 = vmatpush1.msra.mxu0 0.0
    %891 = vmatprep.subr.mxu0 0.0
    %892 = vmatpush1.msra.mxu0 0.0
    %893 = vmatprep.subr.mxu0 0.0
    %894 = vmatpush1.msra.mxu0 0.0
    %895 = vmatprep.subr.mxu0 0.0
    %896 = vmatpush1.msra.mxu0 0.0
    %897 = vmatprep.subr.mxu0 0.0
    %898 = vmatpush1.msra.mxu0 0.0
    %899 = vmatprep.subr.mxu0 0.0
    %900 = vmatpush1.msra.mxu0 0.0
    %901 = vmatprep.subr.mxu0 0.0
    %902 = vmatpush1.msra.mxu0 0.0
    %903 = vmatprep.subr.mxu0 0.0
    %904 = vmatpush1.msra.mxu0 0.0
    %905 = vmatprep.subr.mxu0 0.0
    %906 = vmatpush1.msra.mxu0 0.0
    %907 = vmatprep.subr.mxu0 0.0
    %908 = vmatpush1.msra.mxu0 0.0
    %909 = vmatprep.subr.mxu0 0.0
    %910 = vmatpush1.msra.mxu0 0.0
    %911 = vmatprep.subr.mxu0 0.0
    %912 = vmatpush1.msra.mxu0 0.0
    %913 = vmatprep.subr.mxu0 0.0
    %914 = vmatpush1.msra.mxu0 0.0
    %915 = vmatprep.subr.mxu0 0.0
    %916 = vmatpush1.msra.mxu0 0.0
    %917 = vmatprep.subr.mxu0 0.0
    %918 = vmatpush1.msra.mxu0 0.0
    %919 = vmatprep.mubr.f32.mxu0 0.0
    %920 = vmatmul.mubr.f32.gmra.mrb[0].mxu0 %v853
    %v921 = vpop.f32.mrb[0].mxu0
    %v922 = vadd.f32 %v850, %v921
    %v923 = vpop.f32.mrb[0].mxu0
    %924 = vdwg.mxu0
    %s925 = scalar_lea.vmem %s5, 176
    %v926 = vld [vmem:[%s925] sm:$0xff]
    %v927 = vld [vmem:[%s925 + $0x8] sm:$0xff]
    %v928 = vld [vmem:[%s925 + $0x10] sm:$0xff]
    %v929 = vld [vmem:[%s925 + $0x18] sm:$0xff]
    %v930 = vld [vmem:[%s925 + $0x20] sm:$0xff]
    %v931 = vld [vmem:[%s925 + $0x28] sm:$0xff]
    %v932 = vld [vmem:[%s925 + $0x30] sm:$0xff]
    %v933 = vld [vmem:[%s925 + $0x38] sm:$0xff]
    %v934 = vld [vmem:[%s925 + $0x40] sm:$0xff]
    %v935 = vld [vmem:[%s925 + $0x48] sm:$0xff]
    %v936 = vld [vmem:[%s925 + $0x50] sm:$0xff]
    %v938 = vrot.slane %v753, 2
    %v939 = vrot.slane %v754, 2
    %v940 = vsel %vm210, %v938, %v939
    %v941 = vsel %vm780, %v940, 0
    %943 = vmatprep.subr.mxu0 0.0
    %944 = vmatpush1.msra.mxu0 %v926
    %945 = vmatprep.subr.mxu0 0.0
    %946 = vmatpush1.msra.mxu0 %v927
    %947 = vmatprep.subr.mxu0 0.0
    %948 = vmatpush1.msra.mxu0 %v928
    %949 = vmatprep.subr.mxu0 0.0
    %950 = vmatpush1.msra.mxu0 %v929
    %951 = vmatprep.subr.mxu0 0.0
    %952 = vmatpush1.msra.mxu0 %v930
    %953 = vmatprep.subr.mxu0 0.0
    %954 = vmatpush1.msra.mxu0 %v931
    %955 = vmatprep.subr.mxu0 0.0
    %956 = vmatpush1.msra.mxu0 %v932
    %957 = vmatprep.subr.mxu0 0.0
    %958 = vmatpush1.msra.mxu0 %v933
    %959 = vmatprep.subr.mxu0 0.0
    %960 = vmatpush1.msra.mxu0 %v934
    %961 = vmatprep.subr.mxu0 0.0
    %962 = vmatpush1.msra.mxu0 %v935
    %963 = vmatprep.subr.mxu0 0.0
    %964 = vmatpush1.msra.mxu0 %v936
    %965 = vmatprep.subr.mxu0 0.0
    %966 = vmatpush1.msra.mxu0 0.0
    %967 = vmatprep.subr.mxu0 0.0
    %968 = vmatpush1.msra.mxu0 0.0
    %969 = vmatprep.subr.mxu0 0.0
    %970 = vmatpush1.msra.mxu0 0.0
    %971 = vmatprep.subr.mxu0 0.0
    %972 = vmatpush1.msra.mxu0 0.0
    %973 = vmatprep.subr.mxu0 0.0
    %974 = vmatpush1.msra.mxu0 0.0
    %975 = vmatprep.subr.mxu0 0.0
    %976 = vmatpush1.msra.mxu0 0.0
    %977 = vmatprep.subr.mxu0 0.0
    %978 = vmatpush1.msra.mxu0 0.0
    %979 = vmatprep.subr.mxu0 0.0
    %980 = vmatpush1.msra.mxu0 0.0
    %981 = vmatprep.subr.mxu0 0.0
    %982 = vmatpush1.msra.mxu0 0.0
    %983 = vmatprep.subr.mxu0 0.0
    %984 = vmatpush1.msra.mxu0 0.0
    %985 = vmatprep.subr.mxu0 0.0
    %986 = vmatpush1.msra.mxu0 0.0
    %987 = vmatprep.subr.mxu0 0.0
    %988 = vmatpush1.msra.mxu0 0.0
    %989 = vmatprep.subr.mxu0 0.0
    %990 = vmatpush1.msra.mxu0 0.0
    %991 = vmatprep.subr.mxu0 0.0
    %992 = vmatpush1.msra.mxu0 0.0
    %993 = vmatprep.subr.mxu0 0.0
    %994 = vmatpush1.msra.mxu0 0.0
    %995 = vmatprep.subr.mxu0 0.0
    %996 = vmatpush1.msra.mxu0 0.0
    %997 = vmatprep.subr.mxu0 0.0
    %998 = vmatpush1.msra.mxu0 0.0
    %999 = vmatprep.subr.mxu0 0.0
    %1000 = vmatpush1.msra.mxu0 0.0
    %1001 = vmatprep.subr.mxu0 0.0
    %1002 = vmatpush1.msra.mxu0 0.0
    %1003 = vmatprep.subr.mxu0 0.0
    %1004 = vmatpush1.msra.mxu0 0.0
    %1005 = vmatprep.subr.mxu0 0.0
    %1006 = vmatpush1.msra.mxu0 0.0
    %1007 = vmatprep.mubr.f32.mxu0 0.0
    %1008 = vmatmul.mubr.f32.gmra.mrb[0].mxu0 %v941
    %v1009 = vpop.f32.mrb[0].mxu0
    %v1010 = vadd.f32 0.0, %v1009
    %v1011 = vpop.f32.mrb[0].mxu0
    %1012 = vdwg.mxu0
    %v1013 = vadd.f32 %v922, %v1010
    %s1014 = scalar_lea.vmem %s5, 264
    %v1015 = vld [vmem:[%s1014] sm:$0xff]
    %v1016 = vld [vmem:[%s1014 + $0x8] sm:$0xff]
    %v1017 = vld [vmem:[%s1014 + $0x10] sm:$0xff]
    %v1018 = vld [vmem:[%s1014 + $0x18] sm:$0xff]
    %v1019 = vld [vmem:[%s1014 + $0x20] sm:$0xff]
    %v1020 = vld [vmem:[%s1014 + $0x28] sm:$0xff]
    %v1021 = vld [vmem:[%s1014 + $0x30] sm:$0xff]
    %v1022 = vld [vmem:[%s1014 + $0x38] sm:$0xff]
    %v1023 = vld [vmem:[%s1014 + $0x40] sm:$0xff]
    %v1024 = vld [vmem:[%s1014 + $0x48] sm:$0xff]
    %v1025 = vld [vmem:[%s1014 + $0x50] sm:$0xff]
    %vm1026 = vcmask 1044480
    %v1027 = vrot.slane %v753, 3
    %v1028 = vrot.slane %v754, 3
    %v1029 = vsel %vm1026, %v1027, %v1028
    %v1030 = vsel %vm780, %v1029, 0
    %1032 = vmatprep.subr.mxu0 0.0
    %1033 = vmatpush1.msra.mxu0 %v1015
    %1034 = vmatprep.subr.mxu0 0.0
    %1035 = vmatpush1.msra.mxu0 %v1016
    %1036 = vmatprep.subr.mxu0 0.0
    %1037 = vmatpush1.msra.mxu0 %v1017
    %1038 = vmatprep.subr.mxu0 0.0
    %1039 = vmatpush1.msra.mxu0 %v1018
    %1040 = vmatprep.subr.mxu0 0.0
    %1041 = vmatpush1.msra.mxu0 %v1019
    %1042 = vmatprep.subr.mxu0 0.0
    %1043 = vmatpush1.msra.mxu0 %v1020
    %1044 = vmatprep.subr.mxu0 0.0
    %1045 = vmatpush1.msra.mxu0 %v1021
    %1046 = vmatprep.subr.mxu0 0.0
    %1047 = vmatpush1.msra.mxu0 %v1022
    %1048 = vmatprep.subr.mxu0 0.0
    %1049 = vmatpush1.msra.mxu0 %v1023
    %1050 = vmatprep.subr.mxu0 0.0
    %1051 = vmatpush1.msra.mxu0 %v1024
    %1052 = vmatprep.subr.mxu0 0.0
    %1053 = vmatpush1.msra.mxu0 %v1025
    %1054 = vmatprep.subr.mxu0 0.0
    %1055 = vmatpush1.msra.mxu0 0.0
    %1056 = vmatprep.subr.mxu0 0.0
    %1057 = vmatpush1.msra.mxu0 0.0
    %1058 = vmatprep.subr.mxu0 0.0
    %1059 = vmatpush1.msra.mxu0 0.0
    %1060 = vmatprep.subr.mxu0 0.0
    %1061 = vmatpush1.msra.mxu0 0.0
    %1062 = vmatprep.subr.mxu0 0.0
    %1063 = vmatpush1.msra.mxu0 0.0
    %1064 = vmatprep.subr.mxu0 0.0
    %1065 = vmatpush1.msra.mxu0 0.0
    %1066 = vmatprep.subr.mxu0 0.0
    %1067 = vmatpush1.msra.mxu0 0.0
    %1068 = vmatprep.subr.mxu0 0.0
    %1069 = vmatpush1.msra.mxu0 0.0
    %1070 = vmatprep.subr.mxu0 0.0
    %1071 = vmatpush1.msra.mxu0 0.0
    %1072 = vmatprep.subr.mxu0 0.0
    %1073 = vmatpush1.msra.mxu0 0.0
    %1074 = vmatprep.subr.mxu0 0.0
    %1075 = vmatpush1.msra.mxu0 0.0
    %1076 = vmatprep.subr.mxu0 0.0
    %1077 = vmatpush1.msra.mxu0 0.0
    %1078 = vmatprep.subr.mxu0 0.0
    %1079 = vmatpush1.msra.mxu0 0.0
    %1080 = vmatprep.subr.mxu0 0.0
    %1081 = vmatpush1.msra.mxu0 0.0
    %1082 = vmatprep.subr.mxu0 0.0
    %1083 = vmatpush1.msra.mxu0 0.0
    %1084 = vmatprep.subr.mxu0 0.0
    %1085 = vmatpush1.msra.mxu0 0.0
    %1086 = vmatprep.subr.mxu0 0.0
    %1087 = vmatpush1.msra.mxu0 0.0
    %1088 = vmatprep.subr.mxu0 0.0
    %1089 = vmatpush1.msra.mxu0 0.0
    %1090 = vmatprep.subr.mxu0 0.0
    %1091 = vmatpush1.msra.mxu0 0.0
    %1092 = vmatprep.subr.mxu0 0.0
    %1093 = vmatpush1.msra.mxu0 0.0
    %1094 = vmatprep.subr.mxu0 0.0
    %1095 = vmatpush1.msra.mxu0 0.0
    %1096 = vmatprep.mubr.f32.mxu0 0.0
    %1097 = vmatmul.mubr.f32.gmra.mrb[0].mxu0 %v1030
    %v1098 = vpop.f32.mrb[0].mxu0
    %v1099 = vadd.f32 0.0, %v1098
    %v1100 = vpop.f32.mrb[0].mxu0
    %1101 = vdwg.mxu0
    %v1102 = vadd.f32 %v1013, %v1099
    %s1103 = scalar_lea.vmem %s5, 352
    %v1104 = vld [vmem:[%s1103] sm:$0xff]
    %v1105 = vld [vmem:[%s1103 + $0x8] sm:$0xff]
    %v1106 = vld [vmem:[%s1103 + $0x10] sm:$0xff]
    %v1107 = vld [vmem:[%s1103 + $0x18] sm:$0xff]
    %v1108 = vld [vmem:[%s1103 + $0x20] sm:$0xff]
    %v1109 = vld [vmem:[%s1103 + $0x28] sm:$0xff]
    %v1110 = vld [vmem:[%s1103 + $0x30] sm:$0xff]
    %v1111 = vld [vmem:[%s1103 + $0x38] sm:$0xff]
    %v1112 = vld [vmem:[%s1103 + $0x40] sm:$0xff]
    %v1113 = vld [vmem:[%s1103 + $0x48] sm:$0xff]
    %v1114 = vld [vmem:[%s1103 + $0x50] sm:$0xff]
    %v1115 = vrot.slane %v753, 4
    %v1116 = vrot.slane %v754, 4
    %v1117 = vsel %vm111, %v1115, %v1116
    %v1118 = vsel %vm780, %v1117, 0
    %1120 = vmatprep.subr.mxu0 0.0
    %1121 = vmatpush1.msra.mxu0 %v1104
    %1122 = vmatprep.subr.mxu0 0.0
    %1123 = vmatpush1.msra.mxu0 %v1105
    %1124 = vmatprep.subr.mxu0 0.0
    %1125 = vmatpush1.msra.mxu0 %v1106
    %1126 = vmatprep.subr.mxu0 0.0
    %1127 = vmatpush1.msra.mxu0 %v1107
    %1128 = vmatprep.subr.mxu0 0.0
    %1129 = vmatpush1.msra.mxu0 %v1108
    %1130 = vmatprep.subr.mxu0 0.0
    %1131 = vmatpush1.msra.mxu0 %v1109
    %1132 = vmatprep.subr.mxu0 0.0
    %1133 = vmatpush1.msra.mxu0 %v1110
    %1134 = vmatprep.subr.mxu0 0.0
    %1135 = vmatpush1.msra.mxu0 %v1111
    %1136 = vmatprep.subr.mxu0 0.0
    %1137 = vmatpush1.msra.mxu0 %v1112
    %1138 = vmatprep.subr.mxu0 0.0
    %1139 = vmatpush1.msra.mxu0 %v1113
    %1140 = vmatprep.subr.mxu0 0.0
    %1141 = vmatpush1.msra.mxu0 %v1114
    %1142 = vmatprep.subr.mxu0 0.0
    %1143 = vmatpush1.msra.mxu0 0.0
    %1144 = vmatprep.subr.mxu0 0.0
    %1145 = vmatpush1.msra.mxu0 0.0
    %1146 = vmatprep.subr.mxu0 0.0
    %1147 = vmatpush1.msra.mxu0 0.0
    %1148 = vmatprep.subr.mxu0 0.0
    %1149 = vmatpush1.msra.mxu0 0.0
    %1150 = vmatprep.subr.mxu0 0.0
    %1151 = vmatpush1.msra.mxu0 0.0
    %1152 = vmatprep.subr.mxu0 0.0
    %1153 = vmatpush1.msra.mxu0 0.0
    %1154 = vmatprep.subr.mxu0 0.0
    %1155 = vmatpush1.msra.mxu0 0.0
    %1156 = vmatprep.subr.mxu0 0.0
    %1157 = vmatpush1.msra.mxu0 0.0
    %1158 = vmatprep.subr.mxu0 0.0
    %1159 = vmatpush1.msra.mxu0 0.0
    %1160 = vmatprep.subr.mxu0 0.0
    %1161 = vmatpush1.msra.mxu0 0.0
    %1162 = vmatprep.subr.mxu0 0.0
    %1163 = vmatpush1.msra.mxu0 0.0
    %1164 = vmatprep.subr.mxu0 0.0
    %1165 = vmatpush1.msra.mxu0 0.0
    %1166 = vmatprep.subr.mxu0 0.0
    %1167 = vmatpush1.msra.mxu0 0.0
    %1168 = vmatprep.subr.mxu0 0.0
    %1169 = vmatpush1.msra.mxu0 0.0
    %1170 = vmatprep.subr.mxu0 0.0
    %1171 = vmatpush1.msra.mxu0 0.0
    %1172 = vmatprep.subr.mxu0 0.0
    %1173 = vmatpush1.msra.mxu0 0.0
    %1174 = vmatprep.subr.mxu0 0.0
    %1175 = vmatpush1.msra.mxu0 0.0
    %1176 = vmatprep.subr.mxu0 0.0
    %1177 = vmatpush1.msra.mxu0 0.0
    %1178 = vmatprep.subr.mxu0 0.0
    %1179 = vmatpush1.msra.mxu0 0.0
    %1180 = vmatprep.subr.mxu0 0.0
    %1181 = vmatpush1.msra.mxu0 0.0
    %1182 = vmatprep.subr.mxu0 0.0
    %1183 = vmatpush1.msra.mxu0 0.0
    %1184 = vmatprep.mubr.f32.mxu0 0.0
    %1185 = vmatmul.mubr.f32.gmra.mrb[0].mxu0 %v1118
    %v1186 = vpop.f32.mrb[0].mxu0
    %v1187 = vadd.f32 0.0, %v1186
    %v1188 = vpop.f32.mrb[0].mxu0
    %1189 = vdwg.mxu0
    %v1190 = vadd.f32 %v1102, %v1187
    %v1191 = vld [vmem:[%s7] sm:$0x7]
    %vm1192 = vcmask 56320
    %v1194 = vsel %vm1192, %v1191, 0
    %vm1196 = vcmask 1046528
    %v1198 = vsel %vm1196, %v1190, 0
    %1200 = vmatprep.subr.mxu0 0.0
    %1201 = vmatpush1.msra.mxu0 %v1198
    %1202 = vmatprep.subr.mxu0 0.0
    %1203 = vmatpush1.msra.mxu0 0.0
    %1204 = vmatprep.subr.mxu0 0.0
    %1205 = vmatpush1.msra.mxu0 0.0
    %1206 = vmatprep.subr.mxu0 0.0
    %1207 = vmatpush1.msra.mxu0 0.0
    %1208 = vmatprep.subr.mxu0 0.0
    %1209 = vmatpush1.msra.mxu0 0.0
    %1210 = vmatprep.subr.mxu0 0.0
    %1211 = vmatpush1.msra.mxu0 0.0
    %1212 = vmatprep.subr.mxu0 0.0
    %1213 = vmatpush1.msra.mxu0 0.0
    %1214 = vmatprep.subr.mxu0 0.0
    %1215 = vmatpush1.msra.mxu0 0.0
    %1216 = vmatprep.subr.mxu0 0.0
    %1217 = vmatpush1.msra.mxu0 0.0
    %1218 = vmatprep.subr.mxu0 0.0
    %1219 = vmatpush1.msra.mxu0 0.0
    %1220 = vmatprep.subr.mxu0 0.0
    %1221 = vmatpush1.msra.mxu0 0.0
    %1222 = vmatprep.subr.mxu0 0.0
    %1223 = vmatpush1.msra.mxu0 0.0
    %1224 = vmatprep.subr.mxu0 0.0
    %1225 = vmatpush1.msra.mxu0 0.0
    %1226 = vmatprep.subr.mxu0 0.0
    %1227 = vmatpush1.msra.mxu0 0.0
    %1228 = vmatprep.subr.mxu0 0.0
    %1229 = vmatpush1.msra.mxu0 0.0
    %1230 = vmatprep.subr.mxu0 0.0
    %1231 = vmatpush1.msra.mxu0 0.0
    %1232 = vmatprep.subr.mxu0 0.0
    %1233 = vmatpush1.msra.mxu0 0.0
    %1234 = vmatprep.subr.mxu0 0.0
    %1235 = vmatpush1.msra.mxu0 0.0
    %1236 = vmatprep.subr.mxu0 0.0
    %1237 = vmatpush1.msra.mxu0 0.0
    %1238 = vmatprep.subr.mxu0 0.0
    %1239 = vmatpush1.msra.mxu0 0.0
    %1240 = vmatprep.subr.mxu0 0.0
    %1241 = vmatpush1.msra.mxu0 0.0
    %1242 = vmatprep.subr.mxu0 0.0
    %1243 = vmatpush1.msra.mxu0 0.0
    %1244 = vmatprep.subr.mxu0 0.0
    %1245 = vmatpush1.msra.mxu0 0.0
    %1246 = vmatprep.subr.mxu0 0.0
    %1247 = vmatpush1.msra.mxu0 0.0
    %1248 = vmatprep.subr.mxu0 0.0
    %1249 = vmatpush1.msra.mxu0 0.0
    %1250 = vmatprep.subr.mxu0 0.0
    %1251 = vmatpush1.msra.mxu0 0.0
    %1252 = vmatprep.subr.mxu0 0.0
    %1253 = vmatpush1.msra.mxu0 0.0
    %1254 = vmatprep.subr.mxu0 0.0
    %1255 = vmatpush1.msra.mxu0 0.0
    %1256 = vmatprep.subr.mxu0 0.0
    %1257 = vmatpush1.msra.mxu0 0.0
    %1258 = vmatprep.subr.mxu0 0.0
    %1259 = vmatpush1.msra.mxu0 0.0
    %1260 = vmatprep.subr.mxu0 0.0
    %1261 = vmatpush1.msra.mxu0 0.0
    %1262 = vmatprep.subr.mxu0 0.0
    %1263 = vmatpush1.msra.mxu0 0.0
    %1264 = vmatprep.mubr.f32.mxu0 0.0
    %1265 = vmatmul.mubr.f32.gmra.mrb[0].mxu0 %v1194
    %v1266 = vpop.f32.mrb[0].mxu0
    %v1267 = vadd.f32 0.0, %v1266
    %v1268 = vpop.f32.mrb[0].mxu0
    %1269 = vdwg.mxu0
    %s1270 = scalar_lea.vmem %s7, 4
    %v1271 = vld [vmem:[%s1270] sm:$0x7]
    %v1273 = vsel %vm1192, %v1271, 0
    %1275 = vmatprep.subr.mxu0 0.0
    %1276 = vmatpush1.msra.mxu0 %v1198
    %1277 = vmatprep.subr.mxu0 0.0
    %1278 = vmatpush1.msra.mxu0 0.0
    %1279 = vmatprep.subr.mxu0 0.0
    %1280 = vmatpush1.msra.mxu0 0.0
    %1281 = vmatprep.subr.mxu0 0.0
    %1282 = vmatpush1.msra.mxu0 0.0
    %1283 = vmatprep.subr.mxu0 0.0
    %1284 = vmatpush1.msra.mxu0 0.0
    %1285 = vmatprep.subr.mxu0 0.0
    %1286 = vmatpush1.msra.mxu0 0.0
    %1287 = vmatprep.subr.mxu0 0.0
    %1288 = vmatpush1.msra.mxu0 0.0
    %1289 = vmatprep.subr.mxu0 0.0
    %1290 = vmatpush1.msra.mxu0 0.0
    %1291 = vmatprep.subr.mxu0 0.0
    %1292 = vmatpush1.msra.mxu0 0.0
    %1293 = vmatprep.subr.mxu0 0.0
    %1294 = vmatpush1.msra.mxu0 0.0
    %1295 = vmatprep.subr.mxu0 0.0
    %1296 = vmatpush1.msra.mxu0 0.0
    %1297 = vmatprep.subr.mxu0 0.0
    %1298 = vmatpush1.msra.mxu0 0.0
    %1299 = vmatprep.subr.mxu0 0.0
    %1300 = vmatpush1.msra.mxu0 0.0
    %1301 = vmatprep.subr.mxu0 0.0
    %1302 = vmatpush1.msra.mxu0 0.0
    %1303 = vmatprep.subr.mxu0 0.0
    %1304 = vmatpush1.msra.mxu0 0.0
    %1305 = vmatprep.subr.mxu0 0.0
    %1306 = vmatpush1.msra.mxu0 0.0
    %1307 = vmatprep.subr.mxu0 0.0
    %1308 = vmatpush1.msra.mxu0 0.0
    %1309 = vmatprep.subr.mxu0 0.0
    %1310 = vmatpush1.msra.mxu0 0.0
    %1311 = vmatprep.subr.mxu0 0.0
    %1312 = vmatpush1.msra.mxu0 0.0
    %1313 = vmatprep.subr.mxu0 0.0
    %1314 = vmatpush1.msra.mxu0 0.0
    %1315 = vmatprep.subr.mxu0 0.0
    %1316 = vmatpush1.msra.mxu0 0.0
    %1317 = vmatprep.subr.mxu0 0.0
    %1318 = vmatpush1.msra.mxu0 0.0
    %1319 = vmatprep.subr.mxu0 0.0
    %1320 = vmatpush1.msra.mxu0 0.0
    %1321 = vmatprep.subr.mxu0 0.0
    %1322 = vmatpush1.msra.mxu0 0.0
    %1323 = vmatprep.subr.mxu0 0.0
    %1324 = vmatpush1.msra.mxu0 0.0
    %1325 = vmatprep.subr.mxu0 0.0
    %1326 = vmatpush1.msra.mxu0 0.0
    %1327 = vmatprep.subr.mxu0 0.0
    %1328 = vmatpush1.msra.mxu0 0.0
    %1329 = vmatprep.subr.mxu0 0.0
    %1330 = vmatpush1.msra.mxu0 0.0
    %1331 = vmatprep.subr.mxu0 0.0
    %1332 = vmatpush1.msra.mxu0 0.0
    %1333 = vmatprep.subr.mxu0 0.0
    %1334 = vmatpush1.msra.mxu0 0.0
    %1335 = vmatprep.subr.mxu0 0.0
    %1336 = vmatpush1.msra.mxu0 0.0
    %1337 = vmatprep.subr.mxu0 0.0
    %1338 = vmatpush1.msra.mxu0 0.0
    %1339 = vmatprep.mubr.f32.mxu0 0.0
    %1340 = vmatmul.mubr.f32.gmra.mrb[0].mxu0 %v1273
    %v1341 = vpop.f32.mrb[0].mxu0
    %v1342 = vadd.f32 0.0, %v1341
    %v1343 = vpop.f32.mrb[0].mxu0
    %1344 = vdwg.mxu0
    %v1345 = vld [vmem:[%s8] sm:$0xff]
    %v1346 = vld [vmem:[%s8 + $0x8] sm:$0xff]
    %v1347 = vld [vmem:[%s8 + $0x10] sm:$0xff]
    %v1348 = vld [vmem:[%s8 + $0x18] sm:$0xff]
    %v1349 = vld [vmem:[%s8 + $0x20] sm:$0xff]
    %v1350 = vld [vmem:[%s8 + $0x28] sm:$0xff]
    %v1351 = vld [vmem:[%s8 + $0x30] sm:$0xff]
    %v1352 = vld [vmem:[%s8 + $0x38] sm:$0xff]
    %v1353 = vld [vmem:[%s8 + $0x40] sm:$0x3f]
    %vm1354 = vcmask 572416
    %v1356 = vsel %vm1354, %v1267, 0
    %v1359 = vsel %vm210, %v1353, 0
    %1361 = vmatprep.subr.mxu0 0.0
    %1362 = vmatpush1.msra.mxu0 %v1345
    %1363 = vmatprep.subr.mxu0 0.0
    %1364 = vmatpush1.msra.mxu0 %v1346
    %1365 = vmatprep.subr.mxu0 0.0
    %1366 = vmatpush1.msra.mxu0 %v1347
    %1367 = vmatprep.subr.mxu0 0.0
    %1368 = vmatpush1.msra.mxu0 %v1348
    %1369 = vmatprep.subr.mxu0 0.0
    %1370 = vmatpush1.msra.mxu0 %v1349
    %1371 = vmatprep.subr.mxu0 0.0
    %1372 = vmatpush1.msra.mxu0 %v1350
    %1373 = vmatprep.subr.mxu0 0.0
    %1374 = vmatpush1.msra.mxu0 %v1351
    %1375 = vmatprep.subr.mxu0 0.0
    %1376 = vmatpush1.msra.mxu0 %v1352
    %1377 = vmatprep.subr.mxu0 0.0
    %1378 = vmatpush1.msra.mxu0 %v1359
    %1379 = vmatprep.subr.mxu0 0.0
    %1380 = vmatpush1.msra.mxu0 0.0
    %1381 = vmatprep.subr.mxu0 0.0
    %1382 = vmatpush1.msra.mxu0 0.0
    %1383 = vmatprep.subr.mxu0 0.0
    %1384 = vmatpush1.msra.mxu0 0.0
    %1385 = vmatprep.subr.mxu0 0.0
    %1386 = vmatpush1.msra.mxu0 0.0
    %1387 = vmatprep.subr.mxu0 0.0
    %1388 = vmatpush1.msra.mxu0 0.0
    %1389 = vmatprep.subr.mxu0 0.0
    %1390 = vmatpush1.msra.mxu0 0.0
    %1391 = vmatprep.subr.mxu0 0.0
    %1392 = vmatpush1.msra.mxu0 0.0
    %1393 = vmatprep.subr.mxu0 0.0
    %1394 = vmatpush1.msra.mxu0 0.0
    %1395 = vmatprep.subr.mxu0 0.0
    %1396 = vmatpush1.msra.mxu0 0.0
    %1397 = vmatprep.subr.mxu0 0.0
    %1398 = vmatpush1.msra.mxu0 0.0
    %1399 = vmatprep.subr.mxu0 0.0
    %1400 = vmatpush1.msra.mxu0 0.0
    %1401 = vmatprep.subr.mxu0 0.0
    %1402 = vmatpush1.msra.mxu0 0.0
    %1403 = vmatprep.subr.mxu0 0.0
    %1404 = vmatpush1.msra.mxu0 0.0
    %1405 = vmatprep.subr.mxu0 0.0
    %1406 = vmatpush1.msra.mxu0 0.0
    %1407 = vmatprep.subr.mxu0 0.0
    %1408 = vmatpush1.msra.mxu0 0.0
    %1409 = vmatprep.subr.mxu0 0.0
    %1410 = vmatpush1.msra.mxu0 0.0
    %1411 = vmatprep.subr.mxu0 0.0
    %1412 = vmatpush1.msra.mxu0 0.0
    %1413 = vmatprep.subr.mxu0 0.0
    %1414 = vmatpush1.msra.mxu0 0.0
    %1415 = vmatprep.subr.mxu0 0.0
    %1416 = vmatpush1.msra.mxu0 0.0
    %1417 = vmatprep.subr.mxu0 0.0
    %1418 = vmatpush1.msra.mxu0 0.0
    %1419 = vmatprep.subr.mxu0 0.0
    %1420 = vmatpush1.msra.mxu0 0.0
    %1421 = vmatprep.subr.mxu0 0.0
    %1422 = vmatpush1.msra.mxu0 0.0
    %1423 = vmatprep.subr.mxu0 0.0
    %1424 = vmatpush1.msra.mxu0 0.0
    %1425 = vmatprep.mubr.f32.mxu0 0.0
    %1426 = vmatmul.mubr.f32.gmra.mrb[0].mxu0 %v1356
    %v1427 = vpop.f32.mrb[0].mxu0
    %v1428 = vadd.f32 0.0, %v1427
    %v1429 = vpop.f32.mrb[0].mxu0
    %1430 = vdwg.mxu0
    %s1431 = scalar_lea.vmem %s8, 72
    %v1432 = vld [vmem:[%s1431] sm:$0xff]
    %v1433 = vld [vmem:[%s1431 + $0x8] sm:$0xff]
    %v1434 = vld [vmem:[%s1431 + $0x10] sm:$0xff]
    %v1435 = vld [vmem:[%s1431 + $0x18] sm:$0xff]
    %v1436 = vld [vmem:[%s1431 + $0x20] sm:$0xff]
    %v1437 = vld [vmem:[%s1431 + $0x28] sm:$0xff]
    %v1438 = vld [vmem:[%s1431 + $0x30] sm:$0xff]
    %v1439 = vld [vmem:[%s1431 + $0x38] sm:$0xff]
    %v1440 = vld [vmem:[%s1431 + $0x40] sm:$0x3f]
    %v1442 = vsel %vm210, %v1440, 0
    %1444 = vmatprep.subr.mxu0 0.0
    %1445 = vmatpush1.msra.mxu0 %v1432
    %1446 = vmatprep.subr.mxu0 0.0
    %1447 = vmatpush1.msra.mxu0 %v1433
    %1448 = vmatprep.subr.mxu0 0.0
    %1449 = vmatpush1.msra.mxu0 %v1434
    %1450 = vmatprep.subr.mxu0 0.0
    %1451 = vmatpush1.msra.mxu0 %v1435
    %1452 = vmatprep.subr.mxu0 0.0
    %1453 = vmatpush1.msra.mxu0 %v1436
    %1454 = vmatprep.subr.mxu0 0.0
    %1455 = vmatpush1.msra.mxu0 %v1437
    %1456 = vmatprep.subr.mxu0 0.0
    %1457 = vmatpush1.msra.mxu0 %v1438
    %1458 = vmatprep.subr.mxu0 0.0
    %1459 = vmatpush1.msra.mxu0 %v1439
    %1460 = vmatprep.subr.mxu0 0.0
    %1461 = vmatpush1.msra.mxu0 %v1442
    %1462 = vmatprep.subr.mxu0 0.0
    %1463 = vmatpush1.msra.mxu0 0.0
    %1464 = vmatprep.subr.mxu0 0.0
    %1465 = vmatpush1.msra.mxu0 0.0
    %1466 = vmatprep.subr.mxu0 0.0
    %1467 = vmatpush1.msra.mxu0 0.0
    %1468 = vmatprep.subr.mxu0 0.0
    %1469 = vmatpush1.msra.mxu0 0.0
    %1470 = vmatprep.subr.mxu0 0.0
    %1471 = vmatpush1.msra.mxu0 0.0
    %1472 = vmatprep.subr.mxu0 0.0
    %1473 = vmatpush1.msra.mxu0 0.0
    %1474 = vmatprep.subr.mxu0 0.0
    %1475 = vmatpush1.msra.mxu0 0.0
    %1476 = vmatprep.subr.mxu0 0.0
    %1477 = vmatpush1.msra.mxu0 0.0
    %1478 = vmatprep.subr.mxu0 0.0
    %1479 = vmatpush1.msra.mxu0 0.0
    %1480 = vmatprep.subr.mxu0 0.0
    %1481 = vmatpush1.msra.mxu0 0.0
    %1482 = vmatprep.subr.mxu0 0.0
    %1483 = vmatpush1.msra.mxu0 0.0
    %1484 = vmatprep.subr.mxu0 0.0
    %1485 = vmatpush1.msra.mxu0 0.0
    %1486 = vmatprep.subr.mxu0 0.0
    %1487 = vmatpush1.msra.mxu0 0.0
    %1488 = vmatprep.subr.mxu0 0.0
    %1489 = vmatpush1.msra.mxu0 0.0
    %1490 = vmatprep.subr.mxu0 0.0
    %1491 = vmatpush1.msra.mxu0 0.0
    %1492 = vmatprep.subr.mxu0 0.0
    %1493 = vmatpush1.msra.mxu0 0.0
    %1494 = vmatprep.subr.mxu0 0.0
    %1495 = vmatpush1.msra.mxu0 0.0
    %1496 = vmatprep.subr.mxu0 0.0
    %1497 = vmatpush1.msra.mxu0 0.0
    %1498 = vmatprep.subr.mxu0 0.0
    %1499 = vmatpush1.msra.mxu0 0.0
    %1500 = vmatprep.subr.mxu0 0.0
    %1501 = vmatpush1.msra.mxu0 0.0
    %1502 = vmatprep.subr.mxu0 0.0
    %1503 = vmatpush1.msra.mxu0 0.0
    %1504 = vmatprep.subr.mxu0 0.0
    %1505 = vmatpush1.msra.mxu0 0.0
    %1506 = vmatprep.subr.mxu0 0.0
    %1507 = vmatpush1.msra.mxu0 0.0
    %1508 = vmatprep.mubr.f32.mxu0 0.0
    %1509 = vmatmul.mubr.f32.gmra.mrb[0].mxu0 %v1356
    %v1510 = vpop.f32.mrb[0].mxu0
    %v1511 = vadd.f32 0.0, %v1510
    %v1512 = vpop.f32.mrb[0].mxu0
    %1513 = vdwg.mxu0
    %v1514 = vmax.f32 %v1428, %v1511
    %v1516 = vsel %vm1354, %v1342, 0
    %1518 = vmatprep.subr.mxu0 0.0
    %1519 = vmatpush1.msra.mxu0 %v1345
    %1520 = vmatprep.subr.mxu0 0.0
    %1521 = vmatpush1.msra.mxu0 %v1346
    %1522 = vmatprep.subr.mxu0 0.0
    %1523 = vmatpush1.msra.mxu0 %v1347
    %1524 = vmatprep.subr.mxu0 0.0
    %1525 = vmatpush1.msra.mxu0 %v1348
    %1526 = vmatprep.subr.mxu0 0.0
    %1527 = vmatpush1.msra.mxu0 %v1349
    %1528 = vmatprep.subr.mxu0 0.0
    %1529 = vmatpush1.msra.mxu0 %v1350
    %1530 = vmatprep.subr.mxu0 0.0
    %1531 = vmatpush1.msra.mxu0 %v1351
    %1532 = vmatprep.subr.mxu0 0.0
    %1533 = vmatpush1.msra.mxu0 %v1352
    %1534 = vmatprep.subr.mxu0 0.0
    %1535 = vmatpush1.msra.mxu0 %v1359
    %1536 = vmatprep.subr.mxu0 0.0
    %1537 = vmatpush1.msra.mxu0 0.0
    %1538 = vmatprep.subr.mxu0 0.0
    %1539 = vmatpush1.msra.mxu0 0.0
    %1540 = vmatprep.subr.mxu0 0.0
    %1541 = vmatpush1.msra.mxu0 0.0
    %1542 = vmatprep.subr.mxu0 0.0
    %1543 = vmatpush1.msra.mxu0 0.0
    %1544 = vmatprep.subr.mxu0 0.0
    %1545 = vmatpush1.msra.mxu0 0.0
    %1546 = vmatprep.subr.mxu0 0.0
    %1547 = vmatpush1.msra.mxu0 0.0
    %1548 = vmatprep.subr.mxu0 0.0
    %1549 = vmatpush1.msra.mxu0 0.0
    %1550 = vmatprep.subr.mxu0 0.0
    %1551 = vmatpush1.msra.mxu0 0.0
    %1552 = vmatprep.subr.mxu0 0.0
    %1553 = vmatpush1.msra.mxu0 0.0
    %1554 = vmatprep.subr.mxu0 0.0
    %1555 = vmatpush1.msra.mxu0 0.0
    %1556 = vmatprep.subr.mxu0 0.0
    %1557 = vmatpush1.msra.mxu0 0.0
    %1558 = vmatprep.subr.mxu0 0.0
    %1559 = vmatpush1.msra.mxu0 0.0
    %1560 = vmatprep.subr.mxu0 0.0
    %1561 = vmatpush1.msra.mxu0 0.0
    %1562 = vmatprep.subr.mxu0 0.0
    %1563 = vmatpush1.msra.mxu0 0.0
    %1564 = vmatprep.subr.mxu0 0.0
    %1565 = vmatpush1.msra.mxu0 0.0
    %1566 = vmatprep.subr.mxu0 0.0
    %1567 = vmatpush1.msra.mxu0 0.0
    %1568 = vmatprep.subr.mxu0 0.0
    %1569 = vmatpush1.msra.mxu0 0.0
    %1570 = vmatprep.subr.mxu0 0.0
    %1571 = vmatpush1.msra.mxu0 0.0
    %1572 = vmatprep.subr.mxu0 0.0
    %1573 = vmatpush1.msra.mxu0 0.0
    %1574 = vmatprep.subr.mxu0 0.0
    %1575 = vmatpush1.msra.mxu0 0.0
    %1576 = vmatprep.subr.mxu0 0.0
    %1577 = vmatpush1.msra.mxu0 0.0
    %1578 = vmatprep.subr.mxu0 0.0
    %1579 = vmatpush1.msra.mxu0 0.0
    %1580 = vmatprep.subr.mxu0 0.0
    %1581 = vmatpush1.msra.mxu0 0.0
    %1582 = vmatprep.mubr.f32.mxu0 0.0
    %1583 = vmatmul.mubr.f32.gmra.mrb[0].mxu0 %v1516
    %v1584 = vpop.f32.mrb[0].mxu0
    %v1585 = vadd.f32 0.0, %v1584
    %v1586 = vpop.f32.mrb[0].mxu0
    %1587 = vdwg.mxu0
    %1588 = vmatprep.subr.mxu0 0.0
    %1589 = vmatpush1.msra.mxu0 %v1432
    %1590 = vmatprep.subr.mxu0 0.0
    %1591 = vmatpush1.msra.mxu0 %v1433
    %1592 = vmatprep.subr.mxu0 0.0
    %1593 = vmatpush1.msra.mxu0 %v1434
    %1594 = vmatprep.subr.mxu0 0.0
    %1595 = vmatpush1.msra.mxu0 %v1435
    %1596 = vmatprep.subr.mxu0 0.0
    %1597 = vmatpush1.msra.mxu0 %v1436
    %1598 = vmatprep.subr.mxu0 0.0
    %1599 = vmatpush1.msra.mxu0 %v1437
    %1600 = vmatprep.subr.mxu0 0.0
    %1601 = vmatpush1.msra.mxu0 %v1438
    %1602 = vmatprep.subr.mxu0 0.0
    %1603 = vmatpush1.msra.mxu0 %v1439
    %1604 = vmatprep.subr.mxu0 0.0
    %1605 = vmatpush1.msra.mxu0 %v1442
    %1606 = vmatprep.subr.mxu0 0.0
    %1607 = vmatpush1.msra.mxu0 0.0
    %1608 = vmatprep.subr.mxu0 0.0
    %1609 = vmatpush1.msra.mxu0 0.0
    %1610 = vmatprep.subr.mxu0 0.0
    %1611 = vmatpush1.msra.mxu0 0.0
    %1612 = vmatprep.subr.mxu0 0.0
    %1613 = vmatpush1.msra.mxu0 0.0
    %1614 = vmatprep.subr.mxu0 0.0
    %1615 = vmatpush1.msra.mxu0 0.0
    %1616 = vmatprep.subr.mxu0 0.0
    %1617 = vmatpush1.msra.mxu0 0.0
    %1618 = vmatprep.subr.mxu0 0.0
    %1619 = vmatpush1.msra.mxu0 0.0
    %1620 = vmatprep.subr.mxu0 0.0
    %1621 = vmatpush1.msra.mxu0 0.0
    %1622 = vmatprep.subr.mxu0 0.0
    %1623 = vmatpush1.msra.mxu0 0.0
    %1624 = vmatprep.subr.mxu0 0.0
    %1625 = vmatpush1.msra.mxu0 0.0
    %1626 = vmatprep.subr.mxu0 0.0
    %1627 = vmatpush1.msra.mxu0 0.0
    %1628 = vmatprep.subr.mxu0 0.0
    %1629 = vmatpush1.msra.mxu0 0.0
    %1630 = vmatprep.subr.mxu0 0.0
    %1631 = vmatpush1.msra.mxu0 0.0
    %1632 = vmatprep.subr.mxu0 0.0
    %1633 = vmatpush1.msra.mxu0 0.0
    %1634 = vmatprep.subr.mxu0 0.0
    %1635 = vmatpush1.msra.mxu0 0.0
    %1636 = vmatprep.subr.mxu0 0.0
    %1637 = vmatpush1.msra.mxu0 0.0
    %1638 = vmatprep.subr.mxu0 0.0
    %1639 = vmatpush1.msra.mxu0 0.0
    %1640 = vmatprep.subr.mxu0 0.0
    %1641 = vmatpush1.msra.mxu0 0.0
    %1642 = vmatprep.subr.mxu0 0.0
    %1643 = vmatpush1.msra.mxu0 0.0
    %1644 = vmatprep.subr.mxu0 0.0
    %1645 = vmatpush1.msra.mxu0 0.0
    %1646 = vmatprep.subr.mxu0 0.0
    %1647 = vmatpush1.msra.mxu0 0.0
    %1648 = vmatprep.subr.mxu0 0.0
    %1649 = vmatpush1.msra.mxu0 0.0
    %1650 = vmatprep.subr.mxu0 0.0
    %1651 = vmatpush1.msra.mxu0 0.0
    %1652 = vmatprep.mubr.f32.mxu0 0.0
    %1653 = vmatmul.mubr.f32.gmra.mrb[0].mxu0 %v1516
    %v1654 = vpop.f32.mrb[0].mxu0
    %v1655 = vadd.f32 0.0, %v1654
    %v1656 = vpop.f32.mrb[0].mxu0
    %1657 = vdwg.mxu0
    %v1658 = vmax.f32 %v1585, %v1655
    %v1659 = vmax.f32 %v1514, %v1658
    %v1660 = vld [vmem:[%s6] sm:$0x1]
    %v1662 = vlaneseq
    %v1663 = vshrl.u32 %v1662, 7
    %v1664 = vsub.s32 0, %v1663
    %v1665 = vrot.slane %v1660, %v1664
    %v1667 = vadd.f32 %v1659, %v1665
    %v1668 = vmax.f32 %v1667, 0.0
    %v1669 = vld [vmem:[%s9] sm:$0xff]
    %v1670 = vld [vmem:[%s9 + $0x8] sm:$0xff]
    %v1671 = vld [vmem:[%s9 + $0x10] sm:$0xff]
    %v1672 = vld [vmem:[%s9 + $0x18] sm:$0x3f]
    %s1673 = scalar_lea.vmem %s9, 32
    %v1674 = vld [vmem:[%s1673] sm:$0xff]
    %v1675 = vld [vmem:[%s1673 + $0x8] sm:$0xff]
    %v1676 = vld [vmem:[%s1673 + $0x10] sm:$0xff]
    %v1677 = vld [vmem:[%s1673 + $0x18] sm:$0x3f]
    %v1679 = vrot.slane %v1668, 1
    %vm1680 = vcmask 244736
    %v1681 = vsel %vm1680, %v1679, 0
    %v1684 = vsel %vm210, %v1677, 0
    %1686 = vmatprep.subr.mxu0 0.0
    %1687 = vmatpush1.msra.mxu0 %v1674
    %1688 = vmatprep.subr.mxu0 0.0
    %1689 = vmatpush1.msra.mxu0 %v1675
    %1690 = vmatprep.subr.mxu0 0.0
    %1691 = vmatpush1.msra.mxu0 %v1676
    %1692 = vmatprep.subr.mxu0 0.0
    %1693 = vmatpush1.msra.mxu0 %v1684
    %1694 = vmatprep.subr.mxu0 0.0
    %1695 = vmatpush1.msra.mxu0 0.0
    %1696 = vmatprep.subr.mxu0 0.0
    %1697 = vmatpush1.msra.mxu0 0.0
    %1698 = vmatprep.subr.mxu0 0.0
    %1699 = vmatpush1.msra.mxu0 0.0
    %1700 = vmatprep.subr.mxu0 0.0
    %1701 = vmatpush1.msra.mxu0 0.0
    %1702 = vmatprep.subr.mxu0 0.0
    %1703 = vmatpush1.msra.mxu0 0.0
    %1704 = vmatprep.subr.mxu0 0.0
    %1705 = vmatpush1.msra.mxu0 0.0
    %1706 = vmatprep.subr.mxu0 0.0
    %1707 = vmatpush1.msra.mxu0 0.0
    %1708 = vmatprep.subr.mxu0 0.0
    %1709 = vmatpush1.msra.mxu0 0.0
    %1710 = vmatprep.subr.mxu0 0.0
    %1711 = vmatpush1.msra.mxu0 0.0
    %1712 = vmatprep.subr.mxu0 0.0
    %1713 = vmatpush1.msra.mxu0 0.0
    %1714 = vmatprep.subr.mxu0 0.0
    %1715 = vmatpush1.msra.mxu0 0.0
    %1716 = vmatprep.subr.mxu0 0.0
    %1717 = vmatpush1.msra.mxu0 0.0
    %1718 = vmatprep.subr.mxu0 0.0
    %1719 = vmatpush1.msra.mxu0 0.0
    %1720 = vmatprep.subr.mxu0 0.0
    %1721 = vmatpush1.msra.mxu0 0.0
    %1722 = vmatprep.subr.mxu0 0.0
    %1723 = vmatpush1.msra.mxu0 0.0
    %1724 = vmatprep.subr.mxu0 0.0
    %1725 = vmatpush1.msra.mxu0 0.0
    %1726 = vmatprep.subr.mxu0 0.0
    %1727 = vmatpush1.msra.mxu0 0.0
    %1728 = vmatprep.subr.mxu0 0.0
    %1729 = vmatpush1.msra.mxu0 0.0
    %1730 = vmatprep.subr.mxu0 0.0
    %1731 = vmatpush1.msra.mxu0 0.0
    %1732 = vmatprep.subr.mxu0 0.0
    %1733 = vmatpush1.msra.mxu0 0.0
    %1734 = vmatprep.subr.mxu0 0.0
    %1735 = vmatpush1.msra.mxu0 0.0
    %1736 = vmatprep.subr.mxu0 0.0
    %1737 = vmatpush1.msra.mxu0 0.0
    %1738 = vmatprep.subr.mxu0 0.0
    %1739 = vmatpush1.msra.mxu0 0.0
    %1740 = vmatprep.subr.mxu0 0.0
    %1741 = vmatpush1.msra.mxu0 0.0
    %1742 = vmatprep.subr.mxu0 0.0
    %1743 = vmatpush1.msra.mxu0 0.0
    %1744 = vmatprep.subr.mxu0 0.0
    %1745 = vmatpush1.msra.mxu0 0.0
    %1746 = vmatprep.subr.mxu0 0.0
    %1747 = vmatpush1.msra.mxu0 0.0
    %1748 = vmatprep.subr.mxu0 0.0
    %1749 = vmatpush1.msra.mxu0 0.0
    %1750 = vmatprep.mubr.f32.mxu0 0.0
    %1751 = vmatmul.mubr.f32.gmra.mrb[0].mxu0 %v1681
    %v1752 = vpop.f32.mrb[0].mxu0
    %v1753 = vadd.f32 0.0, %v1752
    %v1754 = vpop.f32.mrb[0].mxu0
    %1755 = vdwg.mxu0
    %v1756 = vsel %vm1680, %v1668, 0
    %v1759 = vsel %vm210, %v1672, 0
    %1761 = vmatprep.subr.mxu0 0.0
    %1762 = vmatpush1.msra.mxu0 %v1669
    %1763 = vmatprep.subr.mxu0 0.0
    %1764 = vmatpush1.msra.mxu0 %v1670
    %1765 = vmatprep.subr.mxu0 0.0
    %1766 = vmatpush1.msra.mxu0 %v1671
    %1767 = vmatprep.subr.mxu0 0.0
    %1768 = vmatpush1.msra.mxu0 %v1759
    %1769 = vmatprep.subr.mxu0 0.0
    %1770 = vmatpush1.msra.mxu0 0.0
    %1771 = vmatprep.subr.mxu0 0.0
    %1772 = vmatpush1.msra.mxu0 0.0
    %1773 = vmatprep.subr.mxu0 0.0
    %1774 = vmatpush1.msra.mxu0 0.0
    %1775 = vmatprep.subr.mxu0 0.0
    %1776 = vmatpush1.msra.mxu0 0.0
    %1777 = vmatprep.subr.mxu0 0.0
    %1778 = vmatpush1.msra.mxu0 0.0
    %1779 = vmatprep.subr.mxu0 0.0
    %1780 = vmatpush1.msra.mxu0 0.0
    %1781 = vmatprep.subr.mxu0 0.0
    %1782 = vmatpush1.msra.mxu0 0.0
    %1783 = vmatprep.subr.mxu0 0.0
    %1784 = vmatpush1.msra.mxu0 0.0
    %1785 = vmatprep.subr.mxu0 0.0
    %1786 = vmatpush1.msra.mxu0 0.0
    %1787 = vmatprep.subr.mxu0 0.0
    %1788 = vmatpush1.msra.mxu0 0.0
    %1789 = vmatprep.subr.mxu0 0.0
    %1790 = vmatpush1.msra.mxu0 0.0
    %1791 = vmatprep.subr.mxu0 0.0
    %1792 = vmatpush1.msra.mxu0 0.0
    %1793 = vmatprep.subr.mxu0 0.0
    %1794 = vmatpush1.msra.mxu0 0.0
    %1795 = vmatprep.subr.mxu0 0.0
    %1796 = vmatpush1.msra.mxu0 0.0
    %1797 = vmatprep.subr.mxu0 0.0
    %1798 = vmatpush1.msra.mxu0 0.0
    %1799 = vmatprep.subr.mxu0 0.0
    %1800 = vmatpush1.msra.mxu0 0.0
    %1801 = vmatprep.subr.mxu0 0.0
    %1802 = vmatpush1.msra.mxu0 0.0
    %1803 = vmatprep.subr.mxu0 0.0
    %1804 = vmatpush1.msra.mxu0 0.0
    %1805 = vmatprep.subr.mxu0 0.0
    %1806 = vmatpush1.msra.mxu0 0.0
    %1807 = vmatprep.subr.mxu0 0.0
    %1808 = vmatpush1.msra.mxu0 0.0
    %1809 = vmatprep.subr.mxu0 0.0
    %1810 = vmatpush1.msra.mxu0 0.0
    %1811 = vmatprep.subr.mxu0 0.0
    %1812 = vmatpush1.msra.mxu0 0.0
    %1813 = vmatprep.subr.mxu0 0.0
    %1814 = vmatpush1.msra.mxu0 0.0
    %1815 = vmatprep.subr.mxu0 0.0
    %1816 = vmatpush1.msra.mxu0 0.0
    %1817 = vmatprep.subr.mxu0 0.0
    %1818 = vmatpush1.msra.mxu0 0.0
    %1819 = vmatprep.subr.mxu0 0.0
    %1820 = vmatpush1.msra.mxu0 0.0
    %1821 = vmatprep.subr.mxu0 0.0
    %1822 = vmatpush1.msra.mxu0 0.0
    %1823 = vmatprep.subr.mxu0 0.0
    %1824 = vmatpush1.msra.mxu0 0.0
    %1825 = vmatprep.mubr.f32.mxu0 0.0
    %1826 = vmatmul.mubr.f32.gmra.mrb[0].mxu0 %v1756
    %v1827 = vpop.f32.mrb[0].mxu0
    %v1828 = vadd.f32 %v1753, %v1827
    %v1829 = vpop.f32.mrb[0].mxu0
    %1830 = vdwg.mxu0
    %s1831 = scalar_lea.vmem %s9, 64
    %v1832 = vld [vmem:[%s1831] sm:$0xff]
    %v1833 = vld [vmem:[%s1831 + $0x8] sm:$0xff]
    %v1834 = vld [vmem:[%s1831 + $0x10] sm:$0xff]
    %v1835 = vld [vmem:[%s1831 + $0x18] sm:$0x3f]
    %v1836 = vrot.slane %v1668, 2
    %v1837 = vsel %vm1680, %v1836, 0
    %v1840 = vsel %vm210, %v1835, 0
    %1842 = vmatprep.subr.mxu0 0.0
    %1843 = vmatpush1.msra.mxu0 %v1832
    %1844 = vmatprep.subr.mxu0 0.0
    %1845 = vmatpush1.msra.mxu0 %v1833
    %1846 = vmatprep.subr.mxu0 0.0
    %1847 = vmatpush1.msra.mxu0 %v1834
    %1848 = vmatprep.subr.mxu0 0.0
    %1849 = vmatpush1.msra.mxu0 %v1840
    %1850 = vmatprep.subr.mxu0 0.0
    %1851 = vmatpush1.msra.mxu0 0.0
    %1852 = vmatprep.subr.mxu0 0.0
    %1853 = vmatpush1.msra.mxu0 0.0
    %1854 = vmatprep.subr.mxu0 0.0
    %1855 = vmatpush1.msra.mxu0 0.0
    %1856 = vmatprep.subr.mxu0 0.0
    %1857 = vmatpush1.msra.mxu0 0.0
    %1858 = vmatprep.subr.mxu0 0.0
    %1859 = vmatpush1.msra.mxu0 0.0
    %1860 = vmatprep.subr.mxu0 0.0
    %1861 = vmatpush1.msra.mxu0 0.0
    %1862 = vmatprep.subr.mxu0 0.0
    %1863 = vmatpush1.msra.mxu0 0.0
    %1864 = vmatprep.subr.mxu0 0.0
    %1865 = vmatpush1.msra.mxu0 0.0
    %1866 = vmatprep.subr.mxu0 0.0
    %1867 = vmatpush1.msra.mxu0 0.0
    %1868 = vmatprep.subr.mxu0 0.0
    %1869 = vmatpush1.msra.mxu0 0.0
    %1870 = vmatprep.subr.mxu0 0.0
    %1871 = vmatpush1.msra.mxu0 0.0
    %1872 = vmatprep.subr.mxu0 0.0
    %1873 = vmatpush1.msra.mxu0 0.0
    %1874 = vmatprep.subr.mxu0 0.0
    %1875 = vmatpush1.msra.mxu0 0.0
    %1876 = vmatprep.subr.mxu0 0.0
    %1877 = vmatpush1.msra.mxu0 0.0
    %1878 = vmatprep.subr.mxu0 0.0
    %1879 = vmatpush1.msra.mxu0 0.0
    %1880 = vmatprep.subr.mxu0 0.0
    %1881 = vmatpush1.msra.mxu0 0.0
    %1882 = vmatprep.subr.mxu0 0.0
    %1883 = vmatpush1.msra.mxu0 0.0
    %1884 = vmatprep.subr.mxu0 0.0
    %1885 = vmatpush1.msra.mxu0 0.0
    %1886 = vmatprep.subr.mxu0 0.0
    %1887 = vmatpush1.msra.mxu0 0.0
    %1888 = vmatprep.subr.mxu0 0.0
    %1889 = vmatpush1.msra.mxu0 0.0
    %1890 = vmatprep.subr.mxu0 0.0
    %1891 = vmatpush1.msra.mxu0 0.0
    %1892 = vmatprep.subr.mxu0 0.0
    %1893 = vmatpush1.msra.mxu0 0.0
    %1894 = vmatprep.subr.mxu0 0.0
    %1895 = vmatpush1.msra.mxu0 0.0
    %1896 = vmatprep.subr.mxu0 0.0
    %1897 = vmatpush1.msra.mxu0 0.0
    %1898 = vmatprep.subr.mxu0 0.0
    %1899 = vmatpush1.msra.mxu0 0.0
    %1900 = vmatprep.subr.mxu0 0.0
    %1901 = vmatpush1.msra.mxu0 0.0
    %1902 = vmatprep.subr.mxu0 0.0
    %1903 = vmatpush1.msra.mxu0 0.0
    %1904 = vmatprep.subr.mxu0 0.0
    %1905 = vmatpush1.msra.mxu0 0.0
    %1906 = vmatprep.mubr.f32.mxu0 0.0
    %1907 = vmatmul.mubr.f32.gmra.mrb[0].mxu0 %v1837
    %v1908 = vpop.f32.mrb[0].mxu0
    %v1909 = vadd.f32 0.0, %v1908
    %v1910 = vpop.f32.mrb[0].mxu0
    %1911 = vdwg.mxu0
    %v1912 = vadd.f32 %v1828, %v1909
    %v1913 = vld [vmem:[%s10] sm:$0x1]
    %v1914 = vadd.f32 %v1912, %v1913
    %v1915 = vmax.f32 %v1914, 0.0
    %v1916 = vld [vmem:[%s11] sm:$0xff]
    %v1917 = vld [vmem:[%s11 + $0x8] sm:$0xff]
    %v1918 = vld [vmem:[%s11 + $0x10] sm:$0xff]
    %v1919 = vld [vmem:[%s11 + $0x18] sm:$0xff]
    %v1920 = vld [vmem:[%s12] sm:$0x1]
    %vm1921 = vcmask 261120
    %v1923 = vsel %vm1921, %v1915, 0
    %1925 = vmatprep.subr.mxu0 0.0
    %1926 = vmatpush1.msra.mxu0 %v1916
    %1927 = vmatprep.subr.mxu0 0.0
    %1928 = vmatpush1.msra.mxu0 %v1917
    %1929 = vmatprep.subr.mxu0 0.0
    %1930 = vmatpush1.msra.mxu0 %v1918
    %1931 = vmatprep.subr.mxu0 0.0
    %1932 = vmatpush1.msra.mxu0 %v1919
    %1933 = vmatprep.subr.mxu0 0.0
    %1934 = vmatpush1.msra.mxu0 0.0
    %1935 = vmatprep.subr.mxu0 0.0
    %1936 = vmatpush1.msra.mxu0 0.0
    %1937 = vmatprep.subr.mxu0 0.0
    %1938 = vmatpush1.msra.mxu0 0.0
    %1939 = vmatprep.subr.mxu0 0.0
    %1940 = vmatpush1.msra.mxu0 0.0
    %1941 = vmatprep.subr.mxu0 0.0
    %1942 = vmatpush1.msra.mxu0 0.0
    %1943 = vmatprep.subr.mxu0 0.0
    %1944 = vmatpush1.msra.mxu0 0.0
    %1945 = vmatprep.subr.mxu0 0.0
    %1946 = vmatpush1.msra.mxu0 0.0
    %1947 = vmatprep.subr.mxu0 0.0
    %1948 = vmatpush1.msra.mxu0 0.0
    %1949 = vmatprep.subr.mxu0 0.0
    %1950 = vmatpush1.msra.mxu0 0.0
    %1951 = vmatprep.subr.mxu0 0.0
    %1952 = vmatpush1.msra.mxu0 0.0
    %1953 = vmatprep.subr.mxu0 0.0
    %1954 = vmatpush1.msra.mxu0 0.0
    %1955 = vmatprep.subr.mxu0 0.0
    %1956 = vmatpush1.msra.mxu0 0.0
    %1957 = vmatprep.subr.mxu0 0.0
    %1958 = vmatpush1.msra.mxu0 0.0
    %1959 = vmatprep.subr.mxu0 0.0
    %1960 = vmatpush1.msra.mxu0 0.0
    %1961 = vmatprep.subr.mxu0 0.0
    %1962 = vmatpush1.msra.mxu0 0.0
    %1963 = vmatprep.subr.mxu0 0.0
    %1964 = vmatpush1.msra.mxu0 0.0
    %1965 = vmatprep.subr.mxu0 0.0
    %1966 = vmatpush1.msra.mxu0 0.0
    %1967 = vmatprep.subr.mxu0 0.0
    %1968 = vmatpush1.msra.mxu0 0.0
    %1969 = vmatprep.subr.mxu0 0.0
    %1970 = vmatpush1.msra.mxu0 0.0
    %1971 = vmatprep.subr.mxu0 0.0
    %1972 = vmatpush1.msra.mxu0 0.0
    %1973 = vmatprep.subr.mxu0 0.0
    %1974 = vmatpush1.msra.mxu0 0.0
    %1975 = vmatprep.subr.mxu0 0.0
    %1976 = vmatpush1.msra.mxu0 0.0
    %1977 = vmatprep.subr.mxu0 0.0
    %1978 = vmatpush1.msra.mxu0 0.0
    %1979 = vmatprep.subr.mxu0 0.0
    %1980 = vmatpush1.msra.mxu0 0.0
    %1981 = vmatprep.subr.mxu0 0.0
    %1982 = vmatpush1.msra.mxu0 0.0
    %1983 = vmatprep.subr.mxu0 0.0
    %1984 = vmatpush1.msra.mxu0 0.0
    %1985 = vmatprep.subr.mxu0 0.0
    %1986 = vmatpush1.msra.mxu0 0.0
    %1987 = vmatprep.subr.mxu0 0.0
    %1988 = vmatpush1.msra.mxu0 0.0
    %1989 = vmatprep.mubr.f32.mxu0 0.0
    %1990 = vmatmul.mubr.f32.gmra.mrb[0].mxu0 %v1923
    %v1991 = vpop.f32.mrb[0].mxu0
    %v1992 = vadd.f32 %v1920, %v1991
    %v1993 = vpop.f32.mrb[0].mxu0
    %1994 = vdwg.mxu0
    %vm1995 = vcmask 40960
    %1996 = vst.msk [vmem:[#allocation2] sm:$0x1] %vm1995, %v1992
    %s1997 = scalar_lea.vmem %s0, 48
    %v1998 = vld [vmem:[%s1997] sm:$0xff]
    %v1999 = vld [vmem:[%s1997 + $0x8] sm:$0xff]
    %v2000 = vld [vmem:[%s1997 + $0x10] sm:$0xff]
    %v2001 = vld [vmem:[%s1997 + $0x18] sm:$0xff]
    %v2002 = vld [vmem:[%s1997 + $0x20] sm:$0x3f]
    %v2003 = vld [vmem:[%s1997 + $0x28] sm:$0x3f]
    %v2004 = vld [vmem:[%s1] sm:$0xff]
    %v2005 = vld [vmem:[%s1 + $0x8] sm:$0xff]
    %v2006 = vld [vmem:[%s1 + $0x10] sm:$0xff]
    %v2007 = vld [vmem:[%s1 + $0x18] sm:$0xff]
    %v2008 = vld [vmem:[%s1 + $0x20] sm:$0xff]
    %v2009 = vld [vmem:[%s1 + $0x28] sm:$0xff]
    %v2010 = vld [vmem:[%s1 + $0x30] sm:$0xff]
    %v2011 = vld [vmem:[%s1 + $0x38] sm:$0xff]
    %v2012 = vld [vmem:[%s1 + $0x40] sm:$0xff]
    %v2013 = vld [vmem:[%s1 + $0x48] sm:$0xff]
    %v2014 = vld [vmem:[%s1 + $0x50] sm:$0xff]
    %v2015 = vld [vmem:[%s1 + $0x58] sm:$0xff]
    %v2016 = vld [vmem:[%s1 + $0x60] sm:$0xff]
    %v2017 = vld [vmem:[%s1 + $0x68] sm:$0xff]
    %v2018 = vld [vmem:[%s1 + $0x70] sm:$0xff]
    %v2019 = vld [vmem:[%s1 + $0x78] sm:$0xff]
    %v2020 = vld [vmem:[%s1 + $0x80] sm:$0xff]
    %v2021 = vld [vmem:[%s1 + $0x88] sm:$0xff]
    %v2022 = vld [vmem:[%s1 + $0x90] sm:$0xff]
    %v2023 = vld [vmem:[%s1 + $0x98] sm:$0xff]
    %v2024 = vld [vmem:[%s1 + $0xa0] sm:$0xff]
    %v2025 = vld [vmem:[%s1 + $0xa8] sm:$0xff]
    %v2026 = vld [vmem:[%s1 + $0xb0] sm:$0xff]
    %v2027 = vld [vmem:[%s1 + $0xb8] sm:$0xff]
    %v2028 = vld [vmem:[%s1 + $0xc0] sm:$0xff]
    %v2029 = vld [vmem:[%s1 + $0xc8] sm:$0xff]
    %v2030 = vld [vmem:[%s1 + $0xd0] sm:$0xff]
    %v2031 = vld [vmem:[%s1 + $0xd8] sm:$0xff]
    %v2032 = vld [vmem:[%s1 + $0xe0] sm:$0xff]
    %v2033 = vld [vmem:[%s1 + $0xe8] sm:$0xff]
    %v2034 = vld [vmem:[%s1 + $0xf0] sm:$0xff]
    %v2035 = vld [vmem:[%s1 + $0xf8] sm:$0xff]
    %v2036 = vld [vmem:[%s1 + $0x100] sm:$0xff]
    %v2037 = vld [vmem:[%s1 + $0x108] sm:$0xff]
    %v2038 = vld [vmem:[%s1 + $0x110] sm:$0xff]
    %v2039 = vld [vmem:[%s1 + $0x118] sm:$0xff]
    %v2040 = vld [vmem:[%s1 + $0x120] sm:$0xff]
    %v2041 = vld [vmem:[%s1 + $0x128] sm:$0xff]
    %v2042 = vld [vmem:[%s1 + $0x130] sm:$0xff]
    %v2043 = vld [vmem:[%s1 + $0x138] sm:$0xff]
    %v2044 = vld [vmem:[%s1 + $0x140] sm:$0xff]
    %v2045 = vld [vmem:[%s1 + $0x148] sm:$0xff]
    %v2046 = vld [vmem:[%s1 + $0x150] sm:$0xff]
    %v2047 = vld [vmem:[%s1 + $0x158] sm:$0xff]
    %v2048 = vld [vmem:[%s1 + $0x160] sm:$0xff]
    %v2049 = vld [vmem:[%s1 + $0x168] sm:$0xff]
    %v2050 = vld [vmem:[%s1 + $0x170] sm:$0xff]
    %v2051 = vld [vmem:[%s1 + $0x178] sm:$0xff]
    %v2052 = vld [vmem:[%s1 + $0x180] sm:$0xf]
    %v2053 = vld [vmem:[%s1 + $0x188] sm:$0xf]
    %v2055 = vsel %vm101, %v1999, 0
    %v2058 = vsel %vm101, %v2001, 0
    %v2061 = vsel %vm101, %v2003, 0
    %v2064 = vsel %vm111, %v2052, 0
    %v2067 = vsel %vm111, %v2053, 0
    %2069 = vmatprep.subr.mxu0 %v2005
    %2070 = vmatpush1.msra.mxu0 %v2004
    %2071 = vmatprep.subr.mxu0 %v2007
    %2072 = vmatpush1.msra.mxu0 %v2006
    %2073 = vmatprep.subr.mxu0 %v2009
    %2074 = vmatpush1.msra.mxu0 %v2008
    %2075 = vmatprep.subr.mxu0 %v2011
    %2076 = vmatpush1.msra.mxu0 %v2010
    %2077 = vmatprep.subr.mxu0 %v2013
    %2078 = vmatpush1.msra.mxu0 %v2012
    %2079 = vmatprep.subr.mxu0 %v2015
    %2080 = vmatpush1.msra.mxu0 %v2014
    %2081 = vmatprep.subr.mxu0 %v2017
    %2082 = vmatpush1.msra.mxu0 %v2016
    %2083 = vmatprep.subr.mxu0 %v2019
    %2084 = vmatpush1.msra.mxu0 %v2018
    %2085 = vmatprep.subr.mxu0 %v2021
    %2086 = vmatpush1.msra.mxu0 %v2020
    %2087 = vmatprep.subr.mxu0 %v2023
    %2088 = vmatpush1.msra.mxu0 %v2022
    %2089 = vmatprep.subr.mxu0 %v2025
    %2090 = vmatpush1.msra.mxu0 %v2024
    %2091 = vmatprep.subr.mxu0 %v2027
    %2092 = vmatpush1.msra.mxu0 %v2026
    %2093 = vmatprep.subr.mxu0 %v2029
    %2094 = vmatpush1.msra.mxu0 %v2028
    %2095 = vmatprep.subr.mxu0 %v2031
    %2096 = vmatpush1.msra.mxu0 %v2030
    %2097 = vmatprep.subr.mxu0 %v2033
    %2098 = vmatpush1.msra.mxu0 %v2032
    %2099 = vmatprep.subr.mxu0 %v2035
    %2100 = vmatpush1.msra.mxu0 %v2034
    %2101 = vmatprep.subr.mxu0 %v2037
    %2102 = vmatpush1.msra.mxu0 %v2036
    %2103 = vmatprep.subr.mxu0 %v2039
    %2104 = vmatpush1.msra.mxu0 %v2038
    %2105 = vmatprep.subr.mxu0 %v2041
    %2106 = vmatpush1.msra.mxu0 %v2040
    %2107 = vmatprep.subr.mxu0 %v2043
    %2108 = vmatpush1.msra.mxu0 %v2042
    %2109 = vmatprep.subr.mxu0 %v2045
    %2110 = vmatpush1.msra.mxu0 %v2044
    %2111 = vmatprep.subr.mxu0 %v2047
    %2112 = vmatpush1.msra.mxu0 %v2046
    %2113 = vmatprep.subr.mxu0 %v2049
    %2114 = vmatpush1.msra.mxu0 %v2048
    %2115 = vmatprep.subr.mxu0 %v2051
    %2116 = vmatpush1.msra.mxu0 %v2050
    %2117 = vmatprep.subr.mxu0 %v2067
    %2118 = vmatpush1.msra.mxu0 %v2064
    %2119 = vmatprep.subr.mxu0 0.0
    %2120 = vmatpush1.msra.mxu0 0.0
    %2121 = vmatprep.subr.mxu0 0.0
    %2122 = vmatpush1.msra.mxu0 0.0
    %2123 = vmatprep.subr.mxu0 0.0
    %2124 = vmatpush1.msra.mxu0 0.0
    %2125 = vmatprep.subr.mxu0 0.0
    %2126 = vmatpush1.msra.mxu0 0.0
    %2127 = vmatprep.subr.mxu0 0.0
    %2128 = vmatpush1.msra.mxu0 0.0
    %2129 = vmatprep.subr.mxu0 0.0
    %2130 = vmatpush1.msra.mxu0 0.0
    %2131 = vmatprep.subr.mxu0 0.0
    %2132 = vmatpush1.msra.mxu0 0.0
    %2133 = vmatprep.mubr.f32.mxu0 %v2055
    %2134 = vmatmul.mubr.f32.gmra.mrb[0].mxu0 %v1998
    %v2135 = vpop.f32.mrb[0].mxu0
    %v2136 = vadd.f32 0.0, %v2135
    %v2137 = vpop.f32.mrb[0].mxu0
    %v2138 = vadd.f32 0.0, %v2137
    %2139 = vmatprep.mubr.f32.mxu0 %v2058
    %2140 = vmatmul.mubr.f32.gmra.mrb[0].mxu0 %v2000
    %v2141 = vpop.f32.mrb[0].mxu0
    %v2142 = vadd.f32 0.0, %v2141
    %v2143 = vpop.f32.mrb[0].mxu0
    %v2144 = vadd.f32 0.0, %v2143
    %2145 = vmatprep.mubr.f32.mxu0 %v2061
    %2146 = vmatmul.mubr.f32.gmra.mrb[0].mxu0 %v2002
    %v2147 = vpop.f32.mrb[0].mxu0
    %v2148 = vadd.f32 0.0, %v2147
    %v2149 = vpop.f32.mrb[0].mxu0
    %v2150 = vadd.f32 0.0, %v2149
    %2151 = vdwg.mxu0
    %v2152 = vld [vmem:[%s3] sm:$0xff]
    %v2153 = vld [vmem:[%s3 + $0x8] sm:$0x7]
    %v2155 = vsel %vm203, %v2152, 0
    %v2158 = vsel %vm203, %v2153, 0
    %v2161 = vsel %vm210, %v2148, 0
    %v2164 = vsel %vm210, %v2150, 0
    %2166 = vmatprep.subr.mxu0 %v2138
    %2167 = vmatpush1.msra.mxu0 %v2136
    %2168 = vmatprep.subr.mxu0 %v2144
    %2169 = vmatpush1.msra.mxu0 %v2142
    %2170 = vmatprep.subr.mxu0 %v2164
    %2171 = vmatpush1.msra.mxu0 %v2161
    %2172 = vmatprep.subr.mxu0 0.0
    %2173 = vmatpush1.msra.mxu0 0.0
    %2174 = vmatprep.subr.mxu0 0.0
    %2175 = vmatpush1.msra.mxu0 0.0
    %2176 = vmatprep.subr.mxu0 0.0
    %2177 = vmatpush1.msra.mxu0 0.0
    %2178 = vmatprep.subr.mxu0 0.0
    %2179 = vmatpush1.msra.mxu0 0.0
    %2180 = vmatprep.subr.mxu0 0.0
    %2181 = vmatpush1.msra.mxu0 0.0
    %2182 = vmatprep.subr.mxu0 0.0
    %2183 = vmatpush1.msra.mxu0 0.0
    %2184 = vmatprep.subr.mxu0 0.0
    %2185 = vmatpush1.msra.mxu0 0.0
    %2186 = vmatprep.subr.mxu0 0.0
    %2187 = vmatpush1.msra.mxu0 0.0
    %2188 = vmatprep.subr.mxu0 0.0
    %2189 = vmatpush1.msra.mxu0 0.0
    %2190 = vmatprep.subr.mxu0 0.0
    %2191 = vmatpush1.msra.mxu0 0.0
    %2192 = vmatprep.subr.mxu0 0.0
    %2193 = vmatpush1.msra.mxu0 0.0
    %2194 = vmatprep.subr.mxu0 0.0
    %2195 = vmatpush1.msra.mxu0 0.0
    %2196 = vmatprep.subr.mxu0 0.0
    %2197 = vmatpush1.msra.mxu0 0.0
    %2198 = vmatprep.subr.mxu0 0.0
    %2199 = vmatpush1.msra.mxu0 0.0
    %2200 = vmatprep.subr.mxu0 0.0
    %2201 = vmatpush1.msra.mxu0 0.0
    %2202 = vmatprep.subr.mxu0 0.0
    %2203 = vmatpush1.msra.mxu0 0.0
    %2204 = vmatprep.subr.mxu0 0.0
    %2205 = vmatpush1.msra.mxu0 0.0
    %2206 = vmatprep.subr.mxu0 0.0
    %2207 = vmatpush1.msra.mxu0 0.0
    %2208 = vmatprep.subr.mxu0 0.0
    %2209 = vmatpush1.msra.mxu0 0.0
    %2210 = vmatprep.subr.mxu0 0.0
    %2211 = vmatpush1.msra.mxu0 0.0
    %2212 = vmatprep.subr.mxu0 0.0
    %2213 = vmatpush1.msra.mxu0 0.0
    %2214 = vmatprep.subr.mxu0 0.0
    %2215 = vmatpush1.msra.mxu0 0.0
    %2216 = vmatprep.subr.mxu0 0.0
    %2217 = vmatpush1.msra.mxu0 0.0
    %2218 = vmatprep.subr.mxu0 0.0
    %2219 = vmatpush1.msra.mxu0 0.0
    %2220 = vmatprep.subr.mxu0 0.0
    %2221 = vmatpush1.msra.mxu0 0.0
    %2222 = vmatprep.subr.mxu0 0.0
    %2223 = vmatpush1.msra.mxu0 0.0
    %2224 = vmatprep.subr.mxu0 0.0
    %2225 = vmatpush1.msra.mxu0 0.0
    %2226 = vmatprep.subr.mxu0 0.0
    %2227 = vmatpush1.msra.mxu0 0.0
    %2228 = vmatprep.subr.mxu0 0.0
    %2229 = vmatpush1.msra.mxu0 0.0
    %2230 = vmatprep.mubr.f32.mxu0 0.0
    %2231 = vmatmul.mubr.f32.gmra.mrb[0].mxu0 %v2155
    %v2232 = vpop.f32.mrb[0].mxu0
    %v2233 = vadd.f32 0.0, %v2232
    %v2234 = vpop.f32.mrb[0].mxu0
    %v2235 = vadd.f32 0.0, %v2234
    %2236 = vmatprep.mubr.f32.mxu0 0.0
    %2237 = vmatmul.mubr.f32.gmra.mrb[0].mxu0 %v2158
    %v2238 = vpop.f32.mrb[0].mxu0
    %v2239 = vadd.f32 0.0, %v2238
    %v2240 = vpop.f32.mrb[0].mxu0
    %v2241 = vadd.f32 0.0, %v2240
    %2242 = vdwg.mxu0
    %v2243 = vld [vmem:[%s294] sm:$0xff]
    %v2244 = vld [vmem:[%s294 + $0x8] sm:$0x7]
    %v2246 = vsel %vm203, %v2243, 0
    %v2249 = vsel %vm203, %v2244, 0
    %2251 = vmatprep.subr.mxu0 %v2138
    %2252 = vmatpush1.msra.mxu0 %v2136
    %2253 = vmatprep.subr.mxu0 %v2144
    %2254 = vmatpush1.msra.mxu0 %v2142
    %2255 = vmatprep.subr.mxu0 %v2164
    %2256 = vmatpush1.msra.mxu0 %v2161
    %2257 = vmatprep.subr.mxu0 0.0
    %2258 = vmatpush1.msra.mxu0 0.0
    %2259 = vmatprep.subr.mxu0 0.0
    %2260 = vmatpush1.msra.mxu0 0.0
    %2261 = vmatprep.subr.mxu0 0.0
    %2262 = vmatpush1.msra.mxu0 0.0
    %2263 = vmatprep.subr.mxu0 0.0
    %2264 = vmatpush1.msra.mxu0 0.0
    %2265 = vmatprep.subr.mxu0 0.0
    %2266 = vmatpush1.msra.mxu0 0.0
    %2267 = vmatprep.subr.mxu0 0.0
    %2268 = vmatpush1.msra.mxu0 0.0
    %2269 = vmatprep.subr.mxu0 0.0
    %2270 = vmatpush1.msra.mxu0 0.0
    %2271 = vmatprep.subr.mxu0 0.0
    %2272 = vmatpush1.msra.mxu0 0.0
    %2273 = vmatprep.subr.mxu0 0.0
    %2274 = vmatpush1.msra.mxu0 0.0
    %2275 = vmatprep.subr.mxu0 0.0
    %2276 = vmatpush1.msra.mxu0 0.0
    %2277 = vmatprep.subr.mxu0 0.0
    %2278 = vmatpush1.msra.mxu0 0.0
    %2279 = vmatprep.subr.mxu0 0.0
    %2280 = vmatpush1.msra.mxu0 0.0
    %2281 = vmatprep.subr.mxu0 0.0
    %2282 = vmatpush1.msra.mxu0 0.0
    %2283 = vmatprep.subr.mxu0 0.0
    %2284 = vmatpush1.msra.mxu0 0.0
    %2285 = vmatprep.subr.mxu0 0.0
    %2286 = vmatpush1.msra.mxu0 0.0
    %2287 = vmatprep.subr.mxu0 0.0
    %2288 = vmatpush1.msra.mxu0 0.0
    %2289 = vmatprep.subr.mxu0 0.0
    %2290 = vmatpush1.msra.mxu0 0.0
    %2291 = vmatprep.subr.mxu0 0.0
    %2292 = vmatpush1.msra.mxu0 0.0
    %2293 = vmatprep.subr.mxu0 0.0
    %2294 = vmatpush1.msra.mxu0 0.0
    %2295 = vmatprep.subr.mxu0 0.0
    %2296 = vmatpush1.msra.mxu0 0.0
    %2297 = vmatprep.subr.mxu0 0.0
    %2298 = vmatpush1.msra.mxu0 0.0
    %2299 = vmatprep.subr.mxu0 0.0
    %2300 = vmatpush1.msra.mxu0 0.0
    %2301 = vmatprep.subr.mxu0 0.0
    %2302 = vmatpush1.msra.mxu0 0.0
    %2303 = vmatprep.subr.mxu0 0.0
    %2304 = vmatpush1.msra.mxu0 0.0
    %2305 = vmatprep.subr.mxu0 0.0
    %2306 = vmatpush1.msra.mxu0 0.0
    %2307 = vmatprep.subr.mxu0 0.0
    %2308 = vmatpush1.msra.mxu0 0.0
    %2309 = vmatprep.subr.mxu0 0.0
    %2310 = vmatpush1.msra.mxu0 0.0
    %2311 = vmatprep.subr.mxu0 0.0
    %2312 = vmatpush1.msra.mxu0 0.0
    %2313 = vmatprep.subr.mxu0 0.0
    %2314 = vmatpush1.msra.mxu0 0.0
    %2315 = vmatprep.mubr.f32.mxu0 0.0
    %2316 = vmatmul.mubr.f32.gmra.mrb[0].mxu0 %v2246
    %v2317 = vpop.f32.mrb[0].mxu0
    %v2318 = vadd.f32 0.0, %v2317
    %v2319 = vpop.f32.mrb[0].mxu0
    %v2320 = vadd.f32 0.0, %v2319
    %2321 = vmatprep.mubr.f32.mxu0 0.0
    %2322 = vmatmul.mubr.f32.gmra.mrb[0].mxu0 %v2249
    %v2323 = vpop.f32.mrb[0].mxu0
    %v2324 = vadd.f32 0.0, %v2323
    %v2325 = vpop.f32.mrb[0].mxu0
    %v2326 = vadd.f32 0.0, %v2325
    %2327 = vdwg.mxu0
    %v2328 = vld [vmem:[%s4] sm:$0xff]
    %v2329 = vld [vmem:[%s4 + $0x8] sm:$0xff]
    %v2330 = vld [vmem:[%s4 + $0x10] sm:$0xff]
    %v2331 = vld [vmem:[%s4 + $0x18] sm:$0xff]
    %v2332 = vld [vmem:[%s4 + $0x20] sm:$0xff]
    %v2333 = vld [vmem:[%s4 + $0x28] sm:$0xff]
    %v2334 = vld [vmem:[%s4 + $0x30] sm:$0xff]
    %v2335 = vld [vmem:[%s4 + $0x38] sm:$0xff]
    %v2336 = vld [vmem:[%s4 + $0x40] sm:$0xff]
    %v2337 = vld [vmem:[%s4 + $0x48] sm:$0xff]
    %v2338 = vld [vmem:[%s4 + $0x50] sm:$0xff]
    %v2339 = vld [vmem:[%s4 + $0x58] sm:$0xff]
    %v2340 = vld [vmem:[%s4 + $0x60] sm:$0xff]
    %v2341 = vld [vmem:[%s4 + $0x68] sm:$0xff]
    %v2342 = vld [vmem:[%s4 + $0x70] sm:$0xff]
    %v2343 = vld [vmem:[%s4 + $0x78] sm:$0xff]
    %v2344 = vld [vmem:[%s4 + $0x80] sm:$0xff]
    %v2345 = vld [vmem:[%s4 + $0x88] sm:$0xff]
    %v2346 = vld [vmem:[%s4 + $0x90] sm:$0xff]
    %v2347 = vld [vmem:[%s4 + $0x98] sm:$0xff]
    %v2348 = vld [vmem:[%s4 + $0xa0] sm:$0xff]
    %v2349 = vld [vmem:[%s4 + $0xa8] sm:$0xff]
    %v2351 = vsel %vm402, %v2235, 0
    %v2354 = vsel %vm402, %v2241, 0
    %2356 = vmatprep.subr.mxu0 0.0
    %2357 = vmatpush1.msra.mxu0 %v2328
    %2358 = vmatprep.subr.mxu0 0.0
    %2359 = vmatpush1.msra.mxu0 %v2329
    %2360 = vmatprep.subr.mxu0 0.0
    %2361 = vmatpush1.msra.mxu0 %v2330
    %2362 = vmatprep.subr.mxu0 0.0
    %2363 = vmatpush1.msra.mxu0 %v2331
    %2364 = vmatprep.subr.mxu0 0.0
    %2365 = vmatpush1.msra.mxu0 %v2332
    %2366 = vmatprep.subr.mxu0 0.0
    %2367 = vmatpush1.msra.mxu0 %v2333
    %2368 = vmatprep.subr.mxu0 0.0
    %2369 = vmatpush1.msra.mxu0 %v2334
    %2370 = vmatprep.subr.mxu0 0.0
    %2371 = vmatpush1.msra.mxu0 %v2335
    %2372 = vmatprep.subr.mxu0 0.0
    %2373 = vmatpush1.msra.mxu0 %v2336
    %2374 = vmatprep.subr.mxu0 0.0
    %2375 = vmatpush1.msra.mxu0 %v2337
    %2376 = vmatprep.subr.mxu0 0.0
    %2377 = vmatpush1.msra.mxu0 %v2338
    %2378 = vmatprep.subr.mxu0 0.0
    %2379 = vmatpush1.msra.mxu0 %v2339
    %2380 = vmatprep.subr.mxu0 0.0
    %2381 = vmatpush1.msra.mxu0 %v2340
    %2382 = vmatprep.subr.mxu0 0.0
    %2383 = vmatpush1.msra.mxu0 %v2341
    %2384 = vmatprep.subr.mxu0 0.0
    %2385 = vmatpush1.msra.mxu0 %v2342
    %2386 = vmatprep.subr.mxu0 0.0
    %2387 = vmatpush1.msra.mxu0 %v2343
    %2388 = vmatprep.subr.mxu0 0.0
    %2389 = vmatpush1.msra.mxu0 %v2344
    %2390 = vmatprep.subr.mxu0 0.0
    %2391 = vmatpush1.msra.mxu0 %v2345
    %2392 = vmatprep.subr.mxu0 0.0
    %2393 = vmatpush1.msra.mxu0 %v2346
    %2394 = vmatprep.subr.mxu0 0.0
    %2395 = vmatpush1.msra.mxu0 %v2347
    %2396 = vmatprep.subr.mxu0 0.0
    %2397 = vmatpush1.msra.mxu0 %v2348
    %2398 = vmatprep.subr.mxu0 0.0
    %2399 = vmatpush1.msra.mxu0 %v2349
    %2400 = vmatprep.subr.mxu0 0.0
    %2401 = vmatpush1.msra.mxu0 0.0
    %2402 = vmatprep.subr.mxu0 0.0
    %2403 = vmatpush1.msra.mxu0 0.0
    %2404 = vmatprep.subr.mxu0 0.0
    %2405 = vmatpush1.msra.mxu0 0.0
    %2406 = vmatprep.subr.mxu0 0.0
    %2407 = vmatpush1.msra.mxu0 0.0
    %2408 = vmatprep.subr.mxu0 0.0
    %2409 = vmatpush1.msra.mxu0 0.0
    %2410 = vmatprep.subr.mxu0 0.0
    %2411 = vmatpush1.msra.mxu0 0.0
    %2412 = vmatprep.subr.mxu0 0.0
    %2413 = vmatpush1.msra.mxu0 0.0
    %2414 = vmatprep.subr.mxu0 0.0
    %2415 = vmatpush1.msra.mxu0 0.0
    %2416 = vmatprep.subr.mxu0 0.0
    %2417 = vmatpush1.msra.mxu0 0.0
    %2418 = vmatprep.subr.mxu0 0.0
    %2419 = vmatpush1.msra.mxu0 0.0
    %2420 = vmatprep.mubr.f32.mxu0 %v2351
    %2421 = vmatmul.mubr.f32.gmra.mrb[0].mxu0 %v2233
    %v2422 = vpop.f32.mrb[0].mxu0
    %v2423 = vadd.f32 0.0, %v2422
    %v2424 = vpop.f32.mrb[0].mxu0
    %2425 = vmatprep.mubr.f32.mxu0 %v2354
    %2426 = vmatmul.mubr.f32.gmra.mrb[0].mxu0 %v2239
    %v2427 = vpop.f32.mrb[0].mxu0
    %v2428 = vadd.f32 0.0, %v2427
    %v2429 = vpop.f32.mrb[0].mxu0
    %2430 = vdwg.mxu0
    %v2431 = vld [vmem:[%s484] sm:$0xff]
    %v2432 = vld [vmem:[%s484 + $0x8] sm:$0xff]
    %v2433 = vld [vmem:[%s484 + $0x10] sm:$0xff]
    %v2434 = vld [vmem:[%s484 + $0x18] sm:$0xff]
    %v2435 = vld [vmem:[%s484 + $0x20] sm:$0xff]
    %v2436 = vld [vmem:[%s484 + $0x28] sm:$0xff]
    %v2437 = vld [vmem:[%s484 + $0x30] sm:$0xff]
    %v2438 = vld [vmem:[%s484 + $0x38] sm:$0xff]
    %v2439 = vld [vmem:[%s484 + $0x40] sm:$0xff]
    %v2440 = vld [vmem:[%s484 + $0x48] sm:$0xff]
    %v2441 = vld [vmem:[%s484 + $0x50] sm:$0xff]
    %v2442 = vld [vmem:[%s484 + $0x58] sm:$0xff]
    %v2443 = vld [vmem:[%s484 + $0x60] sm:$0xff]
    %v2444 = vld [vmem:[%s484 + $0x68] sm:$0xff]
    %v2445 = vld [vmem:[%s484 + $0x70] sm:$0xff]
    %v2446 = vld [vmem:[%s484 + $0x78] sm:$0xff]
    %v2447 = vld [vmem:[%s484 + $0x80] sm:$0xff]
    %v2448 = vld [vmem:[%s484 + $0x88] sm:$0xff]
    %v2449 = vld [vmem:[%s484 + $0x90] sm:$0xff]
    %v2450 = vld [vmem:[%s484 + $0x98] sm:$0xff]
    %v2451 = vld [vmem:[%s484 + $0xa0] sm:$0xff]
    %v2452 = vld [vmem:[%s484 + $0xa8] sm:$0xff]
    %2453 = vmatprep.subr.mxu0 0.0
    %2454 = vmatpush1.msra.mxu0 %v2431
    %2455 = vmatprep.subr.mxu0 0.0
    %2456 = vmatpush1.msra.mxu0 %v2432
    %2457 = vmatprep.subr.mxu0 0.0
    %2458 = vmatpush1.msra.mxu0 %v2433
    %2459 = vmatprep.subr.mxu0 0.0
    %2460 = vmatpush1.msra.mxu0 %v2434
    %2461 = vmatprep.subr.mxu0 0.0
    %2462 = vmatpush1.msra.mxu0 %v2435
    %2463 = vmatprep.subr.mxu0 0.0
    %2464 = vmatpush1.msra.mxu0 %v2436
    %2465 = vmatprep.subr.mxu0 0.0
    %2466 = vmatpush1.msra.mxu0 %v2437
    %2467 = vmatprep.subr.mxu0 0.0
    %2468 = vmatpush1.msra.mxu0 %v2438
    %2469 = vmatprep.subr.mxu0 0.0
    %2470 = vmatpush1.msra.mxu0 %v2439
    %2471 = vmatprep.subr.mxu0 0.0
    %2472 = vmatpush1.msra.mxu0 %v2440
    %2473 = vmatprep.subr.mxu0 0.0
    %2474 = vmatpush1.msra.mxu0 %v2441
    %2475 = vmatprep.subr.mxu0 0.0
    %2476 = vmatpush1.msra.mxu0 %v2442
    %2477 = vmatprep.subr.mxu0 0.0
    %2478 = vmatpush1.msra.mxu0 %v2443
    %2479 = vmatprep.subr.mxu0 0.0
    %2480 = vmatpush1.msra.mxu0 %v2444
    %2481 = vmatprep.subr.mxu0 0.0
    %2482 = vmatpush1.msra.mxu0 %v2445
    %2483 = vmatprep.subr.mxu0 0.0
    %2484 = vmatpush1.msra.mxu0 %v2446
    %2485 = vmatprep.subr.mxu0 0.0
    %2486 = vmatpush1.msra.mxu0 %v2447
    %2487 = vmatprep.subr.mxu0 0.0
    %2488 = vmatpush1.msra.mxu0 %v2448
    %2489 = vmatprep.subr.mxu0 0.0
    %2490 = vmatpush1.msra.mxu0 %v2449
    %2491 = vmatprep.subr.mxu0 0.0
    %2492 = vmatpush1.msra.mxu0 %v2450
    %2493 = vmatprep.subr.mxu0 0.0
    %2494 = vmatpush1.msra.mxu0 %v2451
    %2495 = vmatprep.subr.mxu0 0.0
    %2496 = vmatpush1.msra.mxu0 %v2452
    %2497 = vmatprep.subr.mxu0 0.0
    %2498 = vmatpush1.msra.mxu0 0.0
    %2499 = vmatprep.subr.mxu0 0.0
    %2500 = vmatpush1.msra.mxu0 0.0
    %2501 = vmatprep.subr.mxu0 0.0
    %2502 = vmatpush1.msra.mxu0 0.0
    %2503 = vmatprep.subr.mxu0 0.0
    %2504 = vmatpush1.msra.mxu0 0.0
    %2505 = vmatprep.subr.mxu0 0.0
    %2506 = vmatpush1.msra.mxu0 0.0
    %2507 = vmatprep.subr.mxu0 0.0
    %2508 = vmatpush1.msra.mxu0 0.0
    %2509 = vmatprep.subr.mxu0 0.0
    %2510 = vmatpush1.msra.mxu0 0.0
    %2511 = vmatprep.subr.mxu0 0.0
    %2512 = vmatpush1.msra.mxu0 0.0
    %2513 = vmatprep.subr.mxu0 0.0
    %2514 = vmatpush1.msra.mxu0 0.0
    %2515 = vmatprep.subr.mxu0 0.0
    %2516 = vmatpush1.msra.mxu0 0.0
    %2517 = vmatprep.mubr.f32.mxu0 %v2351
    %2518 = vmatmul.mubr.f32.gmra.mrb[0].mxu0 %v2233
    %v2519 = vpop.f32.mrb[0].mxu0
    %v2520 = vadd.f32 0.0, %v2519
    %v2521 = vpop.f32.mrb[0].mxu0
    %2522 = vmatprep.mubr.f32.mxu0 %v2354
    %2523 = vmatmul.mubr.f32.gmra.mrb[0].mxu0 %v2239
    %v2524 = vpop.f32.mrb[0].mxu0
    %v2525 = vadd.f32 0.0, %v2524
    %v2526 = vpop.f32.mrb[0].mxu0
    %2527 = vdwg.mxu0
    %v2528 = vmax.f32 %v2423, %v2520
    %v2529 = vmax.f32 %v2428, %v2525
    %v2531 = vsel %vm402, %v2320, 0
    %v2534 = vsel %vm402, %v2326, 0
    %2536 = vmatprep.subr.mxu0 0.0
    %2537 = vmatpush1.msra.mxu0 %v2328
    %2538 = vmatprep.subr.mxu0 0.0
    %2539 = vmatpush1.msra.mxu0 %v2329
    %2540 = vmatprep.subr.mxu0 0.0
    %2541 = vmatpush1.msra.mxu0 %v2330
    %2542 = vmatprep.subr.mxu0 0.0
    %2543 = vmatpush1.msra.mxu0 %v2331
    %2544 = vmatprep.subr.mxu0 0.0
    %2545 = vmatpush1.msra.mxu0 %v2332
    %2546 = vmatprep.subr.mxu0 0.0
    %2547 = vmatpush1.msra.mxu0 %v2333
    %2548 = vmatprep.subr.mxu0 0.0
    %2549 = vmatpush1.msra.mxu0 %v2334
    %2550 = vmatprep.subr.mxu0 0.0
    %2551 = vmatpush1.msra.mxu0 %v2335
    %2552 = vmatprep.subr.mxu0 0.0
    %2553 = vmatpush1.msra.mxu0 %v2336
    %2554 = vmatprep.subr.mxu0 0.0
    %2555 = vmatpush1.msra.mxu0 %v2337
    %2556 = vmatprep.subr.mxu0 0.0
    %2557 = vmatpush1.msra.mxu0 %v2338
    %2558 = vmatprep.subr.mxu0 0.0
    %2559 = vmatpush1.msra.mxu0 %v2339
    %2560 = vmatprep.subr.mxu0 0.0
    %2561 = vmatpush1.msra.mxu0 %v2340
    %2562 = vmatprep.subr.mxu0 0.0
    %2563 = vmatpush1.msra.mxu0 %v2341
    %2564 = vmatprep.subr.mxu0 0.0
    %2565 = vmatpush1.msra.mxu0 %v2342
    %2566 = vmatprep.subr.mxu0 0.0
    %2567 = vmatpush1.msra.mxu0 %v2343
    %2568 = vmatprep.subr.mxu0 0.0
    %2569 = vmatpush1.msra.mxu0 %v2344
    %2570 = vmatprep.subr.mxu0 0.0
    %2571 = vmatpush1.msra.mxu0 %v2345
    %2572 = vmatprep.subr.mxu0 0.0
    %2573 = vmatpush1.msra.mxu0 %v2346
    %2574 = vmatprep.subr.mxu0 0.0
    %2575 = vmatpush1.msra.mxu0 %v2347
    %2576 = vmatprep.subr.mxu0 0.0
    %2577 = vmatpush1.msra.mxu0 %v2348
    %2578 = vmatprep.subr.mxu0 0.0
    %2579 = vmatpush1.msra.mxu0 %v2349
    %2580 = vmatprep.subr.mxu0 0.0
    %2581 = vmatpush1.msra.mxu0 0.0
    %2582 = vmatprep.subr.mxu0 0.0
    %2583 = vmatpush1.msra.mxu0 0.0
    %2584 = vmatprep.subr.mxu0 0.0
    %2585 = vmatpush1.msra.mxu0 0.0
    %2586 = vmatprep.subr.mxu0 0.0
    %2587 = vmatpush1.msra.mxu0 0.0
    %2588 = vmatprep.subr.mxu0 0.0
    %2589 = vmatpush1.msra.mxu0 0.0
    %2590 = vmatprep.subr.mxu0 0.0
    %2591 = vmatpush1.msra.mxu0 0.0
    %2592 = vmatprep.subr.mxu0 0.0
    %2593 = vmatpush1.msra.mxu0 0.0
    %2594 = vmatprep.subr.mxu0 0.0
    %2595 = vmatpush1.msra.mxu0 0.0
    %2596 = vmatprep.subr.mxu0 0.0
    %2597 = vmatpush1.msra.mxu0 0.0
    %2598 = vmatprep.subr.mxu0 0.0
    %2599 = vmatpush1.msra.mxu0 0.0
    %2600 = vmatprep.mubr.f32.mxu0 %v2531
    %2601 = vmatmul.mubr.f32.gmra.mrb[0].mxu0 %v2318
    %v2602 = vpop.f32.mrb[0].mxu0
    %v2603 = vadd.f32 0.0, %v2602
    %v2604 = vpop.f32.mrb[0].mxu0
    %2605 = vmatprep.mubr.f32.mxu0 %v2534
    %2606 = vmatmul.mubr.f32.gmra.mrb[0].mxu0 %v2324
    %v2607 = vpop.f32.mrb[0].mxu0
    %v2608 = vadd.f32 0.0, %v2607
    %v2609 = vpop.f32.mrb[0].mxu0
    %2610 = vdwg.mxu0
    %2611 = vmatprep.subr.mxu0 0.0
    %2612 = vmatpush1.msra.mxu0 %v2431
    %2613 = vmatprep.subr.mxu0 0.0
    %2614 = vmatpush1.msra.mxu0 %v2432
    %2615 = vmatprep.subr.mxu0 0.0
    %2616 = vmatpush1.msra.mxu0 %v2433
    %2617 = vmatprep.subr.mxu0 0.0
    %2618 = vmatpush1.msra.mxu0 %v2434
    %2619 = vmatprep.subr.mxu0 0.0
    %2620 = vmatpush1.msra.mxu0 %v2435
    %2621 = vmatprep.subr.mxu0 0.0
    %2622 = vmatpush1.msra.mxu0 %v2436
    %2623 = vmatprep.subr.mxu0 0.0
    %2624 = vmatpush1.msra.mxu0 %v2437
    %2625 = vmatprep.subr.mxu0 0.0
    %2626 = vmatpush1.msra.mxu0 %v2438
    %2627 = vmatprep.subr.mxu0 0.0
    %2628 = vmatpush1.msra.mxu0 %v2439
    %2629 = vmatprep.subr.mxu0 0.0
    %2630 = vmatpush1.msra.mxu0 %v2440
    %2631 = vmatprep.subr.mxu0 0.0
    %2632 = vmatpush1.msra.mxu0 %v2441
    %2633 = vmatprep.subr.mxu0 0.0
    %2634 = vmatpush1.msra.mxu0 %v2442
    %2635 = vmatprep.subr.mxu0 0.0
    %2636 = vmatpush1.msra.mxu0 %v2443
    %2637 = vmatprep.subr.mxu0 0.0
    %2638 = vmatpush1.msra.mxu0 %v2444
    %2639 = vmatprep.subr.mxu0 0.0
    %2640 = vmatpush1.msra.mxu0 %v2445
    %2641 = vmatprep.subr.mxu0 0.0
    %2642 = vmatpush1.msra.mxu0 %v2446
    %2643 = vmatprep.subr.mxu0 0.0
    %2644 = vmatpush1.msra.mxu0 %v2447
    %2645 = vmatprep.subr.mxu0 0.0
    %2646 = vmatpush1.msra.mxu0 %v2448
    %2647 = vmatprep.subr.mxu0 0.0
    %2648 = vmatpush1.msra.mxu0 %v2449
    %2649 = vmatprep.subr.mxu0 0.0
    %2650 = vmatpush1.msra.mxu0 %v2450
    %2651 = vmatprep.subr.mxu0 0.0
    %2652 = vmatpush1.msra.mxu0 %v2451
    %2653 = vmatprep.subr.mxu0 0.0
    %2654 = vmatpush1.msra.mxu0 %v2452
    %2655 = vmatprep.subr.mxu0 0.0
    %2656 = vmatpush1.msra.mxu0 0.0
    %2657 = vmatprep.subr.mxu0 0.0
    %2658 = vmatpush1.msra.mxu0 0.0
    %2659 = vmatprep.subr.mxu0 0.0
    %2660 = vmatpush1.msra.mxu0 0.0
    %2661 = vmatprep.subr.mxu0 0.0
    %2662 = vmatpush1.msra.mxu0 0.0
    %2663 = vmatprep.subr.mxu0 0.0
    %2664 = vmatpush1.msra.mxu0 0.0
    %2665 = vmatprep.subr.mxu0 0.0
    %2666 = vmatpush1.msra.mxu0 0.0
    %2667 = vmatprep.subr.mxu0 0.0
    %2668 = vmatpush1.msra.mxu0 0.0
    %2669 = vmatprep.subr.mxu0 0.0
    %2670 = vmatpush1.msra.mxu0 0.0
    %2671 = vmatprep.subr.mxu0 0.0
    %2672 = vmatpush1.msra.mxu0 0.0
    %2673 = vmatprep.subr.mxu0 0.0
    %2674 = vmatpush1.msra.mxu0 0.0
    %2675 = vmatprep.mubr.f32.mxu0 %v2531
    %2676 = vmatmul.mubr.f32.gmra.mrb[0].mxu0 %v2318
    %v2677 = vpop.f32.mrb[0].mxu0
    %v2678 = vadd.f32 0.0, %v2677
    %v2679 = vpop.f32.mrb[0].mxu0
    %2680 = vmatprep.mubr.f32.mxu0 %v2534
    %2681 = vmatmul.mubr.f32.gmra.mrb[0].mxu0 %v2324
    %v2682 = vpop.f32.mrb[0].mxu0
    %v2683 = vadd.f32 0.0, %v2682
    %v2684 = vpop.f32.mrb[0].mxu0
    %2685 = vdwg.mxu0
    %v2686 = vmax.f32 %v2603, %v2678
    %v2687 = vmax.f32 %v2608, %v2683
    %v2688 = vmax.f32 %v2528, %v2686
    %v2689 = vmax.f32 %v2529, %v2687
    %v2690 = vld [vmem:[%s2] sm:$0x1]
    %v2692 = vlaneseq
    %v2693 = vshrl.u32 %v2692, 7
    %v2694 = vsub.s32 0, %v2693
    %v2695 = vrot.slane %v2690, %v2694
    %v2697 = vadd.f32 %v2688, %v2695
    %v2698 = vadd.f32 %v2689, %v2695
    %v2699 = vmax.f32 %v2697, 0.0
    %v2700 = vmax.f32 %v2698, 0.0
    %v2701 = vld [vmem:[%s5] sm:$0xff]
    %v2702 = vld [vmem:[%s5 + $0x8] sm:$0xff]
    %v2703 = vld [vmem:[%s5 + $0x10] sm:$0xff]
    %v2704 = vld [vmem:[%s5 + $0x18] sm:$0xff]
    %v2705 = vld [vmem:[%s5 + $0x20] sm:$0xff]
    %v2706 = vld [vmem:[%s5 + $0x28] sm:$0xff]
    %v2707 = vld [vmem:[%s5 + $0x30] sm:$0xff]
    %v2708 = vld [vmem:[%s5 + $0x38] sm:$0xff]
    %v2709 = vld [vmem:[%s5 + $0x40] sm:$0xff]
    %v2710 = vld [vmem:[%s5 + $0x48] sm:$0xff]
    %v2711 = vld [vmem:[%s5 + $0x50] sm:$0xff]
    %v2712 = vld [vmem:[%s766] sm:$0xff]
    %v2713 = vld [vmem:[%s766 + $0x8] sm:$0xff]
    %v2714 = vld [vmem:[%s766 + $0x10] sm:$0xff]
    %v2715 = vld [vmem:[%s766 + $0x18] sm:$0xff]
    %v2716 = vld [vmem:[%s766 + $0x20] sm:$0xff]
    %v2717 = vld [vmem:[%s766 + $0x28] sm:$0xff]
    %v2718 = vld [vmem:[%s766 + $0x30] sm:$0xff]
    %v2719 = vld [vmem:[%s766 + $0x38] sm:$0xff]
    %v2720 = vld [vmem:[%s766 + $0x40] sm:$0xff]
    %v2721 = vld [vmem:[%s766 + $0x48] sm:$0xff]
    %v2722 = vld [vmem:[%s766 + $0x50] sm:$0xff]
    %v2724 = vrot.slane %v2699, 1
    %v2725 = vsel %vm780, %v2724, 0
    %2727 = vmatprep.subr.mxu0 0.0
    %2728 = vmatpush1.msra.mxu0 %v2712
    %2729 = vmatprep.subr.mxu0 0.0
    %2730 = vmatpush1.msra.mxu0 %v2713
    %2731 = vmatprep.subr.mxu0 0.0
    %2732 = vmatpush1.msra.mxu0 %v2714
    %2733 = vmatprep.subr.mxu0 0.0
    %2734 = vmatpush1.msra.mxu0 %v2715
    %2735 = vmatprep.subr.mxu0 0.0
    %2736 = vmatpush1.msra.mxu0 %v2716
    %2737 = vmatprep.subr.mxu0 0.0
    %2738 = vmatpush1.msra.mxu0 %v2717
    %2739 = vmatprep.subr.mxu0 0.0
    %2740 = vmatpush1.msra.mxu0 %v2718
    %2741 = vmatprep.subr.mxu0 0.0
    %2742 = vmatpush1.msra.mxu0 %v2719
    %2743 = vmatprep.subr.mxu0 0.0
    %2744 = vmatpush1.msra.mxu0 %v2720
    %2745 = vmatprep.subr.mxu0 0.0
    %2746 = vmatpush1.msra.mxu0 %v2721
    %2747 = vmatprep.subr.mxu0 0.0
    %2748 = vmatpush1.msra.mxu0 %v2722
    %2749 = vmatprep.subr.mxu0 0.0
    %2750 = vmatpush1.msra.mxu0 0.0
    %2751 = vmatprep.subr.mxu0 0.0
    %2752 = vmatpush1.msra.mxu0 0.0
    %2753 = vmatprep.subr.mxu0 0.0
    %2754 = vmatpush1.msra.mxu0 0.0
    %2755 = vmatprep.subr.mxu0 0.0
    %2756 = vmatpush1.msra.mxu0 0.0
    %2757 = vmatprep.subr.mxu0 0.0
    %2758 = vmatpush1.msra.mxu0 0.0
    %2759 = vmatprep.subr.mxu0 0.0
    %2760 = vmatpush1.msra.mxu0 0.0
    %2761 = vmatprep.subr.mxu0 0.0
    %2762 = vmatpush1.msra.mxu0 0.0
    %2763 = vmatprep.subr.mxu0 0.0
    %2764 = vmatpush1.msra.mxu0 0.0
    %2765 = vmatprep.subr.mxu0 0.0
    %2766 = vmatpush1.msra.mxu0 0.0
    %2767 = vmatprep.subr.mxu0 0.0
    %2768 = vmatpush1.msra.mxu0 0.0
    %2769 = vmatprep.subr.mxu0 0.0
    %2770 = vmatpush1.msra.mxu0 0.0
    %2771 = vmatprep.subr.mxu0 0.0
    %2772 = vmatpush1.msra.mxu0 0.0
    %2773 = vmatprep.subr.mxu0 0.0
    %2774 = vmatpush1.msra.mxu0 0.0
    %2775 = vmatprep.subr.mxu0 0.0
    %2776 = vmatpush1.msra.mxu0 0.0
    %2777 = vmatprep.subr.mxu0 0.0
    %2778 = vmatpush1.msra.mxu0 0.0
    %2779 = vmatprep.subr.mxu0 0.0
    %2780 = vmatpush1.msra.mxu0 0.0
    %2781 = vmatprep.subr.mxu0 0.0
    %2782 = vmatpush1.msra.mxu0 0.0
    %2783 = vmatprep.subr.mxu0 0.0
    %2784 = vmatpush1.msra.mxu0 0.0
    %2785 = vmatprep.subr.mxu0 0.0
    %2786 = vmatpush1.msra.mxu0 0.0
    %2787 = vmatprep.subr.mxu0 0.0
    %2788 = vmatpush1.msra.mxu0 0.0
    %2789 = vmatprep.subr.mxu0 0.0
    %2790 = vmatpush1.msra.mxu0 0.0
    %2791 = vmatprep.mubr.f32.mxu0 0.0
    %2792 = vmatmul.mubr.f32.gmra.mrb[0].mxu0 %v2725
    %v2793 = vpop.f32.mrb[0].mxu0
    %v2794 = vadd.f32 0.0, %v2793
    %v2795 = vpop.f32.mrb[0].mxu0
    %2796 = vdwg.mxu0
    %v2797 = vsel %vm780, %v2699, 0
    %2799 = vmatprep.subr.mxu0 0.0
    %2800 = vmatpush1.msra.mxu0 %v2701
    %2801 = vmatprep.subr.mxu0 0.0
    %2802 = vmatpush1.msra.mxu0 %v2702
    %2803 = vmatprep.subr.mxu0 0.0
    %2804 = vmatpush1.msra.mxu0 %v2703
    %2805 = vmatprep.subr.mxu0 0.0
    %2806 = vmatpush1.msra.mxu0 %v2704
    %2807 = vmatprep.subr.mxu0 0.0
    %2808 = vmatpush1.msra.mxu0 %v2705
    %2809 = vmatprep.subr.mxu0 0.0
    %2810 = vmatpush1.msra.mxu0 %v2706
    %2811 = vmatprep.subr.mxu0 0.0
    %2812 = vmatpush1.msra.mxu0 %v2707
    %2813 = vmatprep.subr.mxu0 0.0
    %2814 = vmatpush1.msra.mxu0 %v2708
    %2815 = vmatprep.subr.mxu0 0.0
    %2816 = vmatpush1.msra.mxu0 %v2709
    %2817 = vmatprep.subr.mxu0 0.0
    %2818 = vmatpush1.msra.mxu0 %v2710
    %2819 = vmatprep.subr.mxu0 0.0
    %2820 = vmatpush1.msra.mxu0 %v2711
    %2821 = vmatprep.subr.mxu0 0.0
    %2822 = vmatpush1.msra.mxu0 0.0
    %2823 = vmatprep.subr.mxu0 0.0
    %2824 = vmatpush1.msra.mxu0 0.0
    %2825 = vmatprep.subr.mxu0 0.0
    %2826 = vmatpush1.msra.mxu0 0.0
    %2827 = vmatprep.subr.mxu0 0.0
    %2828 = vmatpush1.msra.mxu0 0.0
    %2829 = vmatprep.subr.mxu0 0.0
    %2830 = vmatpush1.msra.mxu0 0.0
    %2831 = vmatprep.subr.mxu0 0.0
    %2832 = vmatpush1.msra.mxu0 0.0
    %2833 = vmatprep.subr.mxu0 0.0
    %2834 = vmatpush1.msra.mxu0 0.0
    %2835 = vmatprep.subr.mxu0 0.0
    %2836 = vmatpush1.msra.mxu0 0.0
    %2837 = vmatprep.subr.mxu0 0.0
    %2838 = vmatpush1.msra.mxu0 0.0
    %2839 = vmatprep.subr.mxu0 0.0
    %2840 = vmatpush1.msra.mxu0 0.0
    %2841 = vmatprep.subr.mxu0 0.0
    %2842 = vmatpush1.msra.mxu0 0.0
    %2843 = vmatprep.subr.mxu0 0.0
    %2844 = vmatpush1.msra.mxu0 0.0
    %2845 = vmatprep.subr.mxu0 0.0
    %2846 = vmatpush1.msra.mxu0 0.0
    %2847 = vmatprep.subr.mxu0 0.0
    %2848 = vmatpush1.msra.mxu0 0.0
    %2849 = vmatprep.subr.mxu0 0.0
    %2850 = vmatpush1.msra.mxu0 0.0
    %2851 = vmatprep.subr.mxu0 0.0
    %2852 = vmatpush1.msra.mxu0 0.0
    %2853 = vmatprep.subr.mxu0 0.0
    %2854 = vmatpush1.msra.mxu0 0.0
    %2855 = vmatprep.subr.mxu0 0.0
    %2856 = vmatpush1.msra.mxu0 0.0
    %2857 = vmatprep.subr.mxu0 0.0
    %2858 = vmatpush1.msra.mxu0 0.0
    %2859 = vmatprep.subr.mxu0 0.0
    %2860 = vmatpush1.msra.mxu0 0.0
    %2861 = vmatprep.subr.mxu0 0.0
    %2862 = vmatpush1.msra.mxu0 0.0
    %2863 = vmatprep.mubr.f32.mxu0 0.0
    %2864 = vmatmul.mubr.f32.gmra.mrb[0].mxu0 %v2797
    %v2865 = vpop.f32.mrb[0].mxu0
    %v2866 = vadd.f32 %v2794, %v2865
    %v2867 = vpop.f32.mrb[0].mxu0
    %2868 = vdwg.mxu0
    %v2869 = vld [vmem:[%s925] sm:$0xff]
    %v2870 = vld [vmem:[%s925 + $0x8] sm:$0xff]
    %v2871 = vld [vmem:[%s925 + $0x10] sm:$0xff]
    %v2872 = vld [vmem:[%s925 + $0x18] sm:$0xff]
    %v2873 = vld [vmem:[%s925 + $0x20] sm:$0xff]
    %v2874 = vld [vmem:[%s925 + $0x28] sm:$0xff]
    %v2875 = vld [vmem:[%s925 + $0x30] sm:$0xff]
    %v2876 = vld [vmem:[%s925 + $0x38] sm:$0xff]
    %v2877 = vld [vmem:[%s925 + $0x40] sm:$0xff]
    %v2878 = vld [vmem:[%s925 + $0x48] sm:$0xff]
    %v2879 = vld [vmem:[%s925 + $0x50] sm:$0xff]
    %v2881 = vrot.slane %v2699, 2
    %v2882 = vrot.slane %v2700, 2
    %v2883 = vsel %vm210, %v2881, %v2882
    %v2884 = vsel %vm780, %v2883, 0
    %2886 = vmatprep.subr.mxu0 0.0
    %2887 = vmatpush1.msra.mxu0 %v2869
    %2888 = vmatprep.subr.mxu0 0.0
    %2889 = vmatpush1.msra.mxu0 %v2870
    %2890 = vmatprep.subr.mxu0 0.0
    %2891 = vmatpush1.msra.mxu0 %v2871
    %2892 = vmatprep.subr.mxu0 0.0
    %2893 = vmatpush1.msra.mxu0 %v2872
    %2894 = vmatprep.subr.mxu0 0.0
    %2895 = vmatpush1.msra.mxu0 %v2873
    %2896 = vmatprep.subr.mxu0 0.0
    %2897 = vmatpush1.msra.mxu0 %v2874
    %2898 = vmatprep.subr.mxu0 0.0
    %2899 = vmatpush1.msra.mxu0 %v2875
    %2900 = vmatprep.subr.mxu0 0.0
    %2901 = vmatpush1.msra.mxu0 %v2876
    %2902 = vmatprep.subr.mxu0 0.0
    %2903 = vmatpush1.msra.mxu0 %v2877
    %2904 = vmatprep.subr.mxu0 0.0
    %2905 = vmatpush1.msra.mxu0 %v2878
    %2906 = vmatprep.subr.mxu0 0.0
    %2907 = vmatpush1.msra.mxu0 %v2879
    %2908 = vmatprep.subr.mxu0 0.0
    %2909 = vmatpush1.msra.mxu0 0.0
    %2910 = vmatprep.subr.mxu0 0.0
    %2911 = vmatpush1.msra.mxu0 0.0
    %2912 = vmatprep.subr.mxu0 0.0
    %2913 = vmatpush1.msra.mxu0 0.0
    %2914 = vmatprep.subr.mxu0 0.0
    %2915 = vmatpush1.msra.mxu0 0.0
    %2916 = vmatprep.subr.mxu0 0.0
    %2917 = vmatpush1.msra.mxu0 0.0
    %2918 = vmatprep.subr.mxu0 0.0
    %2919 = vmatpush1.msra.mxu0 0.0
    %2920 = vmatprep.subr.mxu0 0.0
    %2921 = vmatpush1.msra.mxu0 0.0
    %2922 = vmatprep.subr.mxu0 0.0
    %2923 = vmatpush1.msra.mxu0 0.0
    %2924 = vmatprep.subr.mxu0 0.0
    %2925 = vmatpush1.msra.mxu0 0.0
    %2926 = vmatprep.subr.mxu0 0.0
    %2927 = vmatpush1.msra.mxu0 0.0
    %2928 = vmatprep.subr.mxu0 0.0
    %2929 = vmatpush1.msra.mxu0 0.0
    %2930 = vmatprep.subr.mxu0 0.0
    %2931 = vmatpush1.msra.mxu0 0.0
    %2932 = vmatprep.subr.mxu0 0.0
    %2933 = vmatpush1.msra.mxu0 0.0
    %2934 = vmatprep.subr.mxu0 0.0
    %2935 = vmatpush1.msra.mxu0 0.0
    %2936 = vmatprep.subr.mxu0 0.0
    %2937 = vmatpush1.msra.mxu0 0.0
    %2938 = vmatprep.subr.mxu0 0.0
    %2939 = vmatpush1.msra.mxu0 0.0
    %2940 = vmatprep.subr.mxu0 0.0
    %2941 = vmatpush1.msra.mxu0 0.0
    %2942 = vmatprep.subr.mxu0 0.0
    %2943 = vmatpush1.msra.mxu0 0.0
    %2944 = vmatprep.subr.mxu0 0.0
    %2945 = vmatpush1.msra.mxu0 0.0
    %2946 = vmatprep.subr.mxu0 0.0
    %2947 = vmatpush1.msra.mxu0 0.0
    %2948 = vmatprep.subr.mxu0 0.0
    %2949 = vmatpush1.msra.mxu0 0.0
    %2950 = vmatprep.mubr.f32.mxu0 0.0
    %2951 = vmatmul.mubr.f32.gmra.mrb[0].mxu0 %v2884
    %v2952 = vpop.f32.mrb[0].mxu0
    %v2953 = vadd.f32 0.0, %v2952
    %v2954 = vpop.f32.mrb[0].mxu0
    %2955 = vdwg.mxu0
    %v2956 = vadd.f32 %v2866, %v2953
    %v2957 = vld [vmem:[%s1014] sm:$0xff]
    %v2958 = vld [vmem:[%s1014 + $0x8] sm:$0xff]
    %v2959 = vld [vmem:[%s1014 + $0x10] sm:$0xff]
    %v2960 = vld [vmem:[%s1014 + $0x18] sm:$0xff]
    %v2961 = vld [vmem:[%s1014 + $0x20] sm:$0xff]
    %v2962 = vld [vmem:[%s1014 + $0x28] sm:$0xff]
    %v2963 = vld [vmem:[%s1014 + $0x30] sm:$0xff]
    %v2964 = vld [vmem:[%s1014 + $0x38] sm:$0xff]
    %v2965 = vld [vmem:[%s1014 + $0x40] sm:$0xff]
    %v2966 = vld [vmem:[%s1014 + $0x48] sm:$0xff]
    %v2967 = vld [vmem:[%s1014 + $0x50] sm:$0xff]
    %v2968 = vrot.slane %v2699, 3
    %v2969 = vrot.slane %v2700, 3
    %v2970 = vsel %vm1026, %v2968, %v2969
    %v2971 = vsel %vm780, %v2970, 0
    %2973 = vmatprep.subr.mxu0 0.0
    %2974 = vmatpush1.msra.mxu0 %v2957
    %2975 = vmatprep.subr.mxu0 0.0
    %2976 = vmatpush1.msra.mxu0 %v2958
    %2977 = vmatprep.subr.mxu0 0.0
    %2978 = vmatpush1.msra.mxu0 %v2959
    %2979 = vmatprep.subr.mxu0 0.0
    %2980 = vmatpush1.msra.mxu0 %v2960
    %2981 = vmatprep.subr.mxu0 0.0
    %2982 = vmatpush1.msra.mxu0 %v2961
    %2983 = vmatprep.subr.mxu0 0.0
    %2984 = vmatpush1.msra.mxu0 %v2962
    %2985 = vmatprep.subr.mxu0 0.0
    %2986 = vmatpush1.msra.mxu0 %v2963
    %2987 = vmatprep.subr.mxu0 0.0
    %2988 = vmatpush1.msra.mxu0 %v2964
    %2989 = vmatprep.subr.mxu0 0.0
    %2990 = vmatpush1.msra.mxu0 %v2965
    %2991 = vmatprep.subr.mxu0 0.0
    %2992 = vmatpush1.msra.mxu0 %v2966
    %2993 = vmatprep.subr.mxu0 0.0
    %2994 = vmatpush1.msra.mxu0 %v2967
    %2995 = vmatprep.subr.mxu0 0.0
    %2996 = vmatpush1.msra.mxu0 0.0
    %2997 = vmatprep.subr.mxu0 0.0
    %2998 = vmatpush1.msra.mxu0 0.0
    %2999 = vmatprep.subr.mxu0 0.0
    %3000 = vmatpush1.msra.mxu0 0.0
    %3001 = vmatprep.subr.mxu0 0.0
    %3002 = vmatpush1.msra.mxu0 0.0
    %3003 = vmatprep.subr.mxu0 0.0
    %3004 = vmatpush1.msra.mxu0 0.0
    %3005 = vmatprep.subr.mxu0 0.0
    %3006 = vmatpush1.msra.mxu0 0.0
    %3007 = vmatprep.subr.mxu0 0.0
    %3008 = vmatpush1.msra.mxu0 0.0
    %3009 = vmatprep.subr.mxu0 0.0
    %3010 = vmatpush1.msra.mxu0 0.0
    %3011 = vmatprep.subr.mxu0 0.0
    %3012 = vmatpush1.msra.mxu0 0.0
    %3013 = vmatprep.subr.mxu0 0.0
    %3014 = vmatpush1.msra.mxu0 0.0
    %3015 = vmatprep.subr.mxu0 0.0
    %3016 = vmatpush1.msra.mxu0 0.0
    %3017 = vmatprep.subr.mxu0 0.0
    %3018 = vmatpush1.msra.mxu0 0.0
    %3019 = vmatprep.subr.mxu0 0.0
    %3020 = vmatpush1.msra.mxu0 0.0
    %3021 = vmatprep.subr.mxu0 0.0
    %3022 = vmatpush1.msra.mxu0 0.0
    %3023 = vmatprep.subr.mxu0 0.0
    %3024 = vmatpush1.msra.mxu0 0.0
    %3025 = vmatprep.subr.mxu0 0.0
    %3026 = vmatpush1.msra.mxu0 0.0
    %3027 = vmatprep.subr.mxu0 0.0
    %3028 = vmatpush1.msra.mxu0 0.0
    %3029 = vmatprep.subr.mxu0 0.0
    %3030 = vmatpush1.msra.mxu0 0.0
    %3031 = vmatprep.subr.mxu0 0.0
    %3032 = vmatpush1.msra.mxu0 0.0
    %3033 = vmatprep.subr.mxu0 0.0
    %3034 = vmatpush1.msra.mxu0 0.0
    %3035 = vmatprep.subr.mxu0 0.0
    %3036 = vmatpush1.msra.mxu0 0.0
    %3037 = vmatprep.mubr.f32.mxu0 0.0
    %3038 = vmatmul.mubr.f32.gmra.mrb[0].mxu0 %v2971
    %v3039 = vpop.f32.mrb[0].mxu0
    %v3040 = vadd.f32 0.0, %v3039
    %v3041 = vpop.f32.mrb[0].mxu0
    %3042 = vdwg.mxu0
    %v3043 = vadd.f32 %v2956, %v3040
    %v3044 = vld [vmem:[%s1103] sm:$0xff]
    %v3045 = vld [vmem:[%s1103 + $0x8] sm:$0xff]
    %v3046 = vld [vmem:[%s1103 + $0x10] sm:$0xff]
    %v3047 = vld [vmem:[%s1103 + $0x18] sm:$0xff]
    %v3048 = vld [vmem:[%s1103 + $0x20] sm:$0xff]
    %v3049 = vld [vmem:[%s1103 + $0x28] sm:$0xff]
    %v3050 = vld [vmem:[%s1103 + $0x30] sm:$0xff]
    %v3051 = vld [vmem:[%s1103 + $0x38] sm:$0xff]
    %v3052 = vld [vmem:[%s1103 + $0x40] sm:$0xff]
    %v3053 = vld [vmem:[%s1103 + $0x48] sm:$0xff]
    %v3054 = vld [vmem:[%s1103 + $0x50] sm:$0xff]
    %v3055 = vrot.slane %v2699, 4
    %v3056 = vrot.slane %v2700, 4
    %v3057 = vsel %vm111, %v3055, %v3056
    %v3058 = vsel %vm780, %v3057, 0
    %3060 = vmatprep.subr.mxu0 0.0
    %3061 = vmatpush1.msra.mxu0 %v3044
    %3062 = vmatprep.subr.mxu0 0.0
    %3063 = vmatpush1.msra.mxu0 %v3045
    %3064 = vmatprep.subr.mxu0 0.0
    %3065 = vmatpush1.msra.mxu0 %v3046
    %3066 = vmatprep.subr.mxu0 0.0
    %3067 = vmatpush1.msra.mxu0 %v3047
    %3068 = vmatprep.subr.mxu0 0.0
    %3069 = vmatpush1.msra.mxu0 %v3048
    %3070 = vmatprep.subr.mxu0 0.0
    %3071 = vmatpush1.msra.mxu0 %v3049
    %3072 = vmatprep.subr.mxu0 0.0
    %3073 = vmatpush1.msra.mxu0 %v3050
    %3074 = vmatprep.subr.mxu0 0.0
    %3075 = vmatpush1.msra.mxu0 %v3051
    %3076 = vmatprep.subr.mxu0 0.0
    %3077 = vmatpush1.msra.mxu0 %v3052
    %3078 = vmatprep.subr.mxu0 0.0
    %3079 = vmatpush1.msra.mxu0 %v3053
    %3080 = vmatprep.subr.mxu0 0.0
    %3081 = vmatpush1.msra.mxu0 %v3054
    %3082 = vmatprep.subr.mxu0 0.0
    %3083 = vmatpush1.msra.mxu0 0.0
    %3084 = vmatprep.subr.mxu0 0.0
    %3085 = vmatpush1.msra.mxu0 0.0
    %3086 = vmatprep.subr.mxu0 0.0
    %3087 = vmatpush1.msra.mxu0 0.0
    %3088 = vmatprep.subr.mxu0 0.0
    %3089 = vmatpush1.msra.mxu0 0.0
    %3090 = vmatprep.subr.mxu0 0.0
    %3091 = vmatpush1.msra.mxu0 0.0
    %3092 = vmatprep.subr.mxu0 0.0
    %3093 = vmatpush1.msra.mxu0 0.0
    %3094 = vmatprep.subr.mxu0 0.0
    %3095 = vmatpush1.msra.mxu0 0.0
    %3096 = vmatprep.subr.mxu0 0.0
    %3097 = vmatpush1.msra.mxu0 0.0
    %3098 = vmatprep.subr.mxu0 0.0
    %3099 = vmatpush1.msra.mxu0 0.0
    %3100 = vmatprep.subr.mxu0 0.0
    %3101 = vmatpush1.msra.mxu0 0.0
    %3102 = vmatprep.subr.mxu0 0.0
    %3103 = vmatpush1.msra.mxu0 0.0
    %3104 = vmatprep.subr.mxu0 0.0
    %3105 = vmatpush1.msra.mxu0 0.0
    %3106 = vmatprep.subr.mxu0 0.0
    %3107 = vmatpush1.msra.mxu0 0.0
    %3108 = vmatprep.subr.mxu0 0.0
    %3109 = vmatpush1.msra.mxu0 0.0
    %3110 = vmatprep.subr.mxu0 0.0
    %3111 = vmatpush1.msra.mxu0 0.0
    %3112 = vmatprep.subr.mxu0 0.0
    %3113 = vmatpush1.msra.mxu0 0.0
    %3114 = vmatprep.subr.mxu0 0.0
    %3115 = vmatpush1.msra.mxu0 0.0
    %3116 = vmatprep.subr.mxu0 0.0
    %3117 = vmatpush1.msra.mxu0 0.0
    %3118 = vmatprep.subr.mxu0 0.0
    %3119 = vmatpush1.msra.mxu0 0.0
    %3120 = vmatprep.subr.mxu0 0.0
    %3121 = vmatpush1.msra.mxu0 0.0
    %3122 = vmatprep.subr.mxu0 0.0
    %3123 = vmatpush1.msra.mxu0 0.0
    %3124 = vmatprep.mubr.f32.mxu0 0.0
    %3125 = vmatmul.mubr.f32.gmra.mrb[0].mxu0 %v3058
    %v3126 = vpop.f32.mrb[0].mxu0
    %v3127 = vadd.f32 0.0, %v3126
    %v3128 = vpop.f32.mrb[0].mxu0
    %3129 = vdwg.mxu0
    %v3130 = vadd.f32 %v3043, %v3127
    %v3131 = vld [vmem:[%s7] sm:$0x7]
    %v3133 = vsel %vm1192, %v3131, 0
    %v3136 = vsel %vm1196, %v3130, 0
    %3138 = vmatprep.subr.mxu0 0.0
    %3139 = vmatpush1.msra.mxu0 %v3136
    %3140 = vmatprep.subr.mxu0 0.0
    %3141 = vmatpush1.msra.mxu0 0.0
    %3142 = vmatprep.subr.mxu0 0.0
    %3143 = vmatpush1.msra.mxu0 0.0
    %3144 = vmatprep.subr.mxu0 0.0
    %3145 = vmatpush1.msra.mxu0 0.0
    %3146 = vmatprep.subr.mxu0 0.0
    %3147 = vmatpush1.msra.mxu0 0.0
    %3148 = vmatprep.subr.mxu0 0.0
    %3149 = vmatpush1.msra.mxu0 0.0
    %3150 = vmatprep.subr.mxu0 0.0
    %3151 = vmatpush1.msra.mxu0 0.0
    %3152 = vmatprep.subr.mxu0 0.0
    %3153 = vmatpush1.msra.mxu0 0.0
    %3154 = vmatprep.subr.mxu0 0.0
    %3155 = vmatpush1.msra.mxu0 0.0
    %3156 = vmatprep.subr.mxu0 0.0
    %3157 = vmatpush1.msra.mxu0 0.0
    %3158 = vmatprep.subr.mxu0 0.0
    %3159 = vmatpush1.msra.mxu0 0.0
    %3160 = vmatprep.subr.mxu0 0.0
    %3161 = vmatpush1.msra.mxu0 0.0
    %3162 = vmatprep.subr.mxu0 0.0
    %3163 = vmatpush1.msra.mxu0 0.0
    %3164 = vmatprep.subr.mxu0 0.0
    %3165 = vmatpush1.msra.mxu0 0.0
    %3166 = vmatprep.subr.mxu0 0.0
    %3167 = vmatpush1.msra.mxu0 0.0
    %3168 = vmatprep.subr.mxu0 0.0
    %3169 = vmatpush1.msra.mxu0 0.0
    %3170 = vmatprep.subr.mxu0 0.0
    %3171 = vmatpush1.msra.mxu0 0.0
    %3172 = vmatprep.subr.mxu0 0.0
    %3173 = vmatpush1.msra.mxu0 0.0
    %3174 = vmatprep.subr.mxu0 0.0
    %3175 = vmatpush1.msra.mxu0 0.0
    %3176 = vmatprep.subr.mxu0 0.0
    %3177 = vmatpush1.msra.mxu0 0.0
    %3178 = vmatprep.subr.mxu0 0.0
    %3179 = vmatpush1.msra.mxu0 0.0
    %3180 = vmatprep.subr.mxu0 0.0
    %3181 = vmatpush1.msra.mxu0 0.0
    %3182 = vmatprep.subr.mxu0 0.0
    %3183 = vmatpush1.msra.mxu0 0.0
    %3184 = vmatprep.subr.mxu0 0.0
    %3185 = vmatpush1.msra.mxu0 0.0
    %3186 = vmatprep.subr.mxu0 0.0
    %3187 = vmatpush1.msra.mxu0 0.0
    %3188 = vmatprep.subr.mxu0 0.0
    %3189 = vmatpush1.msra.mxu0 0.0
    %3190 = vmatprep.subr.mxu0 0.0
    %3191 = vmatpush1.msra.mxu0 0.0
    %3192 = vmatprep.subr.mxu0 0.0
    %3193 = vmatpush1.msra.mxu0 0.0
    %3194 = vmatprep.subr.mxu0 0.0
    %3195 = vmatpush1.msra.mxu0 0.0
    %3196 = vmatprep.subr.mxu0 0.0
    %3197 = vmatpush1.msra.mxu0 0.0
    %3198 = vmatprep.subr.mxu0 0.0
    %3199 = vmatpush1.msra.mxu0 0.0
    %3200 = vmatprep.subr.mxu0 0.0
    %3201 = vmatpush1.msra.mxu0 0.0
    %3202 = vmatprep.mubr.f32.mxu0 0.0
    %3203 = vmatmul.mubr.f32.gmra.mrb[0].mxu0 %v3133
    %v3204 = vpop.f32.mrb[0].mxu0
    %v3205 = vadd.f32 0.0, %v3204
    %v3206 = vpop.f32.mrb[0].mxu0
    %3207 = vdwg.mxu0
    %v3208 = vld [vmem:[%s1270] sm:$0x7]
    %v3210 = vsel %vm1192, %v3208, 0
    %3212 = vmatprep.subr.mxu0 0.0
    %3213 = vmatpush1.msra.mxu0 %v3136
    %3214 = vmatprep.subr.mxu0 0.0
    %3215 = vmatpush1.msra.mxu0 0.0
    %3216 = vmatprep.subr.mxu0 0.0
    %3217 = vmatpush1.msra.mxu0 0.0
    %3218 = vmatprep.subr.mxu0 0.0
    %3219 = vmatpush1.msra.mxu0 0.0
    %3220 = vmatprep.subr.mxu0 0.0
    %3221 = vmatpush1.msra.mxu0 0.0
    %3222 = vmatprep.subr.mxu0 0.0
    %3223 = vmatpush1.msra.mxu0 0.0
    %3224 = vmatprep.subr.mxu0 0.0
    %3225 = vmatpush1.msra.mxu0 0.0
    %3226 = vmatprep.subr.mxu0 0.0
    %3227 = vmatpush1.msra.mxu0 0.0
    %3228 = vmatprep.subr.mxu0 0.0
    %3229 = vmatpush1.msra.mxu0 0.0
    %3230 = vmatprep.subr.mxu0 0.0
    %3231 = vmatpush1.msra.mxu0 0.0
    %3232 = vmatprep.subr.mxu0 0.0
    %3233 = vmatpush1.msra.mxu0 0.0
    %3234 = vmatprep.subr.mxu0 0.0
    %3235 = vmatpush1.msra.mxu0 0.0
    %3236 = vmatprep.subr.mxu0 0.0
    %3237 = vmatpush1.msra.mxu0 0.0
    %3238 = vmatprep.subr.mxu0 0.0
    %3239 = vmatpush1.msra.mxu0 0.0
    %3240 = vmatprep.subr.mxu0 0.0
    %3241 = vmatpush1.msra.mxu0 0.0
    %3242 = vmatprep.subr.mxu0 0.0
    %3243 = vmatpush1.msra.mxu0 0.0
    %3244 = vmatprep.subr.mxu0 0.0
    %3245 = vmatpush1.msra.mxu0 0.0
    %3246 = vmatprep.subr.mxu0 0.0
    %3247 = vmatpush1.msra.mxu0 0.0
    %3248 = vmatprep.subr.mxu0 0.0
    %3249 = vmatpush1.msra.mxu0 0.0
    %3250 = vmatprep.subr.mxu0 0.0
    %3251 = vmatpush1.msra.mxu0 0.0
    %3252 = vmatprep.subr.mxu0 0.0
    %3253 = vmatpush1.msra.mxu0 0.0
    %3254 = vmatprep.subr.mxu0 0.0
    %3255 = vmatpush1.msra.mxu0 0.0
    %3256 = vmatprep.subr.mxu0 0.0
    %3257 = vmatpush1.msra.mxu0 0.0
    %3258 = vmatprep.subr.mxu0 0.0
    %3259 = vmatpush1.msra.mxu0 0.0
    %3260 = vmatprep.subr.mxu0 0.0
    %3261 = vmatpush1.msra.mxu0 0.0
    %3262 = vmatprep.subr.mxu0 0.0
    %3263 = vmatpush1.msra.mxu0 0.0
    %3264 = vmatprep.subr.mxu0 0.0
    %3265 = vmatpush1.msra.mxu0 0.0
    %3266 = vmatprep.subr.mxu0 0.0
    %3267 = vmatpush1.msra.mxu0 0.0
    %3268 = vmatprep.subr.mxu0 0.0
    %3269 = vmatpush1.msra.mxu0 0.0
    %3270 = vmatprep.subr.mxu0 0.0
    %3271 = vmatpush1.msra.mxu0 0.0
    %3272 = vmatprep.subr.mxu0 0.0
    %3273 = vmatpush1.msra.mxu0 0.0
    %3274 = vmatprep.subr.mxu0 0.0
    %3275 = vmatpush1.msra.mxu0 0.0
    %3276 = vmatprep.mubr.f32.mxu0 0.0
    %3277 = vmatmul.mubr.f32.gmra.mrb[0].mxu0 %v3210
    %v3278 = vpop.f32.mrb[0].mxu0
    %v3279 = vadd.f32 0.0, %v3278
    %v3280 = vpop.f32.mrb[0].mxu0
    %3281 = vdwg.mxu0
    %v3282 = vld [vmem:[%s8] sm:$0xff]
    %v3283 = vld [vmem:[%s8 + $0x8] sm:$0xff]
    %v3284 = vld [vmem:[%s8 + $0x10] sm:$0xff]
    %v3285 = vld [vmem:[%s8 + $0x18] sm:$0xff]
    %v3286 = vld [vmem:[%s8 + $0x20] sm:$0xff]
    %v3287 = vld [vmem:[%s8 + $0x28] sm:$0xff]
    %v3288 = vld [vmem:[%s8 + $0x30] sm:$0xff]
    %v3289 = vld [vmem:[%s8 + $0x38] sm:$0xff]
    %v3290 = vld [vmem:[%s8 + $0x40] sm:$0x3f]
    %v3292 = vsel %vm1354, %v3205, 0
    %v3295 = vsel %vm210, %v3290, 0
    %3297 = vmatprep.subr.mxu0 0.0
    %3298 = vmatpush1.msra.mxu0 %v3282
    %3299 = vmatprep.subr.mxu0 0.0
    %3300 = vmatpush1.msra.mxu0 %v3283
    %3301 = vmatprep.subr.mxu0 0.0
    %3302 = vmatpush1.msra.mxu0 %v3284
    %3303 = vmatprep.subr.mxu0 0.0
    %3304 = vmatpush1.msra.mxu0 %v3285
    %3305 = vmatprep.subr.mxu0 0.0
    %3306 = vmatpush1.msra.mxu0 %v3286
    %3307 = vmatprep.subr.mxu0 0.0
    %3308 = vmatpush1.msra.mxu0 %v3287
    %3309 = vmatprep.subr.mxu0 0.0
    %3310 = vmatpush1.msra.mxu0 %v3288
    %3311 = vmatprep.subr.mxu0 0.0
    %3312 = vmatpush1.msra.mxu0 %v3289
    %3313 = vmatprep.subr.mxu0 0.0
    %3314 = vmatpush1.msra.mxu0 %v3295
    %3315 = vmatprep.subr.mxu0 0.0
    %3316 = vmatpush1.msra.mxu0 0.0
    %3317 = vmatprep.subr.mxu0 0.0
    %3318 = vmatpush1.msra.mxu0 0.0
    %3319 = vmatprep.subr.mxu0 0.0
    %3320 = vmatpush1.msra.mxu0 0.0
    %3321 = vmatprep.subr.mxu0 0.0
    %3322 = vmatpush1.msra.mxu0 0.0
    %3323 = vmatprep.subr.mxu0 0.0
    %3324 = vmatpush1.msra.mxu0 0.0
    %3325 = vmatprep.subr.mxu0 0.0
    %3326 = vmatpush1.msra.mxu0 0.0
    %3327 = vmatprep.subr.mxu0 0.0
    %3328 = vmatpush1.msra.mxu0 0.0
    %3329 = vmatprep.subr.mxu0 0.0
    %3330 = vmatpush1.msra.mxu0 0.0
    %3331 = vmatprep.subr.mxu0 0.0
    %3332 = vmatpush1.msra.mxu0 0.0
    %3333 = vmatprep.subr.mxu0 0.0
    %3334 = vmatpush1.msra.mxu0 0.0
    %3335 = vmatprep.subr.mxu0 0.0
    %3336 = vmatpush1.msra.mxu0 0.0
    %3337 = vmatprep.subr.mxu0 0.0
    %3338 = vmatpush1.msra.mxu0 0.0
    %3339 = vmatprep.subr.mxu0 0.0
    %3340 = vmatpush1.msra.mxu0 0.0
    %3341 = vmatprep.subr.mxu0 0.0
    %3342 = vmatpush1.msra.mxu0 0.0
    %3343 = vmatprep.subr.mxu0 0.0
    %3344 = vmatpush1.msra.mxu0 0.0
    %3345 = vmatprep.subr.mxu0 0.0
    %3346 = vmatpush1.msra.mxu0 0.0
    %3347 = vmatprep.subr.mxu0 0.0
    %3348 = vmatpush1.msra.mxu0 0.0
    %3349 = vmatprep.subr.mxu0 0.0
    %3350 = vmatpush1.msra.mxu0 0.0
    %3351 = vmatprep.subr.mxu0 0.0
    %3352 = vmatpush1.msra.mxu0 0.0
    %3353 = vmatprep.subr.mxu0 0.0
    %3354 = vmatpush1.msra.mxu0 0.0
    %3355 = vmatprep.subr.mxu0 0.0
    %3356 = vmatpush1.msra.mxu0 0.0
    %3357 = vmatprep.subr.mxu0 0.0
    %3358 = vmatpush1.msra.mxu0 0.0
    %3359 = vmatprep.subr.mxu0 0.0
    %3360 = vmatpush1.msra.mxu0 0.0
    %3361 = vmatprep.mubr.f32.mxu0 0.0
    %3362 = vmatmul.mubr.f32.gmra.mrb[0].mxu0 %v3292
    %v3363 = vpop.f32.mrb[0].mxu0
    %v3364 = vadd.f32 0.0, %v3363
    %v3365 = vpop.f32.mrb[0].mxu0
    %3366 = vdwg.mxu0
    %v3367 = vld [vmem:[%s1431] sm:$0xff]
    %v3368 = vld [vmem:[%s1431 + $0x8] sm:$0xff]
    %v3369 = vld [vmem:[%s1431 + $0x10] sm:$0xff]
    %v3370 = vld [vmem:[%s1431 + $0x18] sm:$0xff]
    %v3371 = vld [vmem:[%s1431 + $0x20] sm:$0xff]
    %v3372 = vld [vmem:[%s1431 + $0x28] sm:$0xff]
    %v3373 = vld [vmem:[%s1431 + $0x30] sm:$0xff]
    %v3374 = vld [vmem:[%s1431 + $0x38] sm:$0xff]
    %v3375 = vld [vmem:[%s1431 + $0x40] sm:$0x3f]
    %v3377 = vsel %vm210, %v3375, 0
    %3379 = vmatprep.subr.mxu0 0.0
    %3380 = vmatpush1.msra.mxu0 %v3367
    %3381 = vmatprep.subr.mxu0 0.0
    %3382 = vmatpush1.msra.mxu0 %v3368
    %3383 = vmatprep.subr.mxu0 0.0
    %3384 = vmatpush1.msra.mxu0 %v3369
    %3385 = vmatprep.subr.mxu0 0.0
    %3386 = vmatpush1.msra.mxu0 %v3370
    %3387 = vmatprep.subr.mxu0 0.0
    %3388 = vmatpush1.msra.mxu0 %v3371
    %3389 = vmatprep.subr.mxu0 0.0
    %3390 = vmatpush1.msra.mxu0 %v3372
    %3391 = vmatprep.subr.mxu0 0.0
    %3392 = vmatpush1.msra.mxu0 %v3373
    %3393 = vmatprep.subr.mxu0 0.0
    %3394 = vmatpush1.msra.mxu0 %v3374
    %3395 = vmatprep.subr.mxu0 0.0
    %3396 = vmatpush1.msra.mxu0 %v3377
    %3397 = vmatprep.subr.mxu0 0.0
    %3398 = vmatpush1.msra.mxu0 0.0
    %3399 = vmatprep.subr.mxu0 0.0
    %3400 = vmatpush1.msra.mxu0 0.0
    %3401 = vmatprep.subr.mxu0 0.0
    %3402 = vmatpush1.msra.mxu0 0.0
    %3403 = vmatprep.subr.mxu0 0.0
    %3404 = vmatpush1.msra.mxu0 0.0
    %3405 = vmatprep.subr.mxu0 0.0
    %3406 = vmatpush1.msra.mxu0 0.0
    %3407 = vmatprep.subr.mxu0 0.0
    %3408 = vmatpush1.msra.mxu0 0.0
    %3409 = vmatprep.subr.mxu0 0.0
    %3410 = vmatpush1.msra.mxu0 0.0
    %3411 = vmatprep.subr.mxu0 0.0
    %3412 = vmatpush1.msra.mxu0 0.0
    %3413 = vmatprep.subr.mxu0 0.0
    %3414 = vmatpush1.msra.mxu0 0.0
    %3415 = vmatprep.subr.mxu0 0.0
    %3416 = vmatpush1.msra.mxu0 0.0
    %3417 = vmatprep.subr.mxu0 0.0
    %3418 = vmatpush1.msra.mxu0 0.0
    %3419 = vmatprep.subr.mxu0 0.0
    %3420 = vmatpush1.msra.mxu0 0.0
    %3421 = vmatprep.subr.mxu0 0.0
    %3422 = vmatpush1.msra.mxu0 0.0
    %3423 = vmatprep.subr.mxu0 0.0
    %3424 = vmatpush1.msra.mxu0 0.0
    %3425 = vmatprep.subr.mxu0 0.0
    %3426 = vmatpush1.msra.mxu0 0.0
    %3427 = vmatprep.subr.mxu0 0.0
    %3428 = vmatpush1.msra.mxu0 0.0
    %3429 = vmatprep.subr.mxu0 0.0
    %3430 = vmatpush1.msra.mxu0 0.0
    %3431 = vmatprep.subr.mxu0 0.0
    %3432 = vmatpush1.msra.mxu0 0.0
    %3433 = vmatprep.subr.mxu0 0.0
    %3434 = vmatpush1.msra.mxu0 0.0
    %3435 = vmatprep.subr.mxu0 0.0
    %3436 = vmatpush1.msra.mxu0 0.0
    %3437 = vmatprep.subr.mxu0 0.0
    %3438 = vmatpush1.msra.mxu0 0.0
    %3439 = vmatprep.subr.mxu0 0.0
    %3440 = vmatpush1.msra.mxu0 0.0
    %3441 = vmatprep.subr.mxu0 0.0
    %3442 = vmatpush1.msra.mxu0 0.0
    %3443 = vmatprep.mubr.f32.mxu0 0.0
    %3444 = vmatmul.mubr.f32.gmra.mrb[0].mxu0 %v3292
    %v3445 = vpop.f32.mrb[0].mxu0
    %v3446 = vadd.f32 0.0, %v3445
    %v3447 = vpop.f32.mrb[0].mxu0
    %3448 = vdwg.mxu0
    %v3449 = vmax.f32 %v3364, %v3446
    %v3451 = vsel %vm1354, %v3279, 0
    %3453 = vmatprep.subr.mxu0 0.0
    %3454 = vmatpush1.msra.mxu0 %v3282
    %3455 = vmatprep.subr.mxu0 0.0
    %3456 = vmatpush1.msra.mxu0 %v3283
    %3457 = vmatprep.subr.mxu0 0.0
    %3458 = vmatpush1.msra.mxu0 %v3284
    %3459 = vmatprep.subr.mxu0 0.0
    %3460 = vmatpush1.msra.mxu0 %v3285
    %3461 = vmatprep.subr.mxu0 0.0
    %3462 = vmatpush1.msra.mxu0 %v3286
    %3463 = vmatprep.subr.mxu0 0.0
    %3464 = vmatpush1.msra.mxu0 %v3287
    %3465 = vmatprep.subr.mxu0 0.0
    %3466 = vmatpush1.msra.mxu0 %v3288
    %3467 = vmatprep.subr.mxu0 0.0
    %3468 = vmatpush1.msra.mxu0 %v3289
    %3469 = vmatprep.subr.mxu0 0.0
    %3470 = vmatpush1.msra.mxu0 %v3295
    %3471 = vmatprep.subr.mxu0 0.0
    %3472 = vmatpush1.msra.mxu0 0.0
    %3473 = vmatprep.subr.mxu0 0.0
    %3474 = vmatpush1.msra.mxu0 0.0
    %3475 = vmatprep.subr.mxu0 0.0
    %3476 = vmatpush1.msra.mxu0 0.0
    %3477 = vmatprep.subr.mxu0 0.0
    %3478 = vmatpush1.msra.mxu0 0.0
    %3479 = vmatprep.subr.mxu0 0.0
    %3480 = vmatpush1.msra.mxu0 0.0
    %3481 = vmatprep.subr.mxu0 0.0
    %3482 = vmatpush1.msra.mxu0 0.0
    %3483 = vmatprep.subr.mxu0 0.0
    %3484 = vmatpush1.msra.mxu0 0.0
    %3485 = vmatprep.subr.mxu0 0.0
    %3486 = vmatpush1.msra.mxu0 0.0
    %3487 = vmatprep.subr.mxu0 0.0
    %3488 = vmatpush1.msra.mxu0 0.0
    %3489 = vmatprep.subr.mxu0 0.0
    %3490 = vmatpush1.msra.mxu0 0.0
    %3491 = vmatprep.subr.mxu0 0.0
    %3492 = vmatpush1.msra.mxu0 0.0
    %3493 = vmatprep.subr.mxu0 0.0
    %3494 = vmatpush1.msra.mxu0 0.0
    %3495 = vmatprep.subr.mxu0 0.0
    %3496 = vmatpush1.msra.mxu0 0.0
    %3497 = vmatprep.subr.mxu0 0.0
    %3498 = vmatpush1.msra.mxu0 0.0
    %3499 = vmatprep.subr.mxu0 0.0
    %3500 = vmatpush1.msra.mxu0 0.0
    %3501 = vmatprep.subr.mxu0 0.0
    %3502 = vmatpush1.msra.mxu0 0.0
    %3503 = vmatprep.subr.mxu0 0.0
    %3504 = vmatpush1.msra.mxu0 0.0
    %3505 = vmatprep.subr.mxu0 0.0
    %3506 = vmatpush1.msra.mxu0 0.0
    %3507 = vmatprep.subr.mxu0 0.0
    %3508 = vmatpush1.msra.mxu0 0.0
    %3509 = vmatprep.subr.mxu0 0.0
    %3510 = vmatpush1.msra.mxu0 0.0
    %3511 = vmatprep.subr.mxu0 0.0
    %3512 = vmatpush1.msra.mxu0 0.0
    %3513 = vmatprep.subr.mxu0 0.0
    %3514 = vmatpush1.msra.mxu0 0.0
    %3515 = vmatprep.subr.mxu0 0.0
    %3516 = vmatpush1.msra.mxu0 0.0
    %3517 = vmatprep.mubr.f32.mxu0 0.0
    %3518 = vmatmul.mubr.f32.gmra.mrb[0].mxu0 %v3451
    %v3519 = vpop.f32.mrb[0].mxu0
    %v3520 = vadd.f32 0.0, %v3519
    %v3521 = vpop.f32.mrb[0].mxu0
    %3522 = vdwg.mxu0
    %3523 = vmatprep.subr.mxu0 0.0
    %3524 = vmatpush1.msra.mxu0 %v3367
    %3525 = vmatprep.subr.mxu0 0.0
    %3526 = vmatpush1.msra.mxu0 %v3368
    %3527 = vmatprep.subr.mxu0 0.0
    %3528 = vmatpush1.msra.mxu0 %v3369
    %3529 = vmatprep.subr.mxu0 0.0
    %3530 = vmatpush1.msra.mxu0 %v3370
    %3531 = vmatprep.subr.mxu0 0.0
    %3532 = vmatpush1.msra.mxu0 %v3371
    %3533 = vmatprep.subr.mxu0 0.0
    %3534 = vmatpush1.msra.mxu0 %v3372
    %3535 = vmatprep.subr.mxu0 0.0
    %3536 = vmatpush1.msra.mxu0 %v3373
    %3537 = vmatprep.subr.mxu0 0.0
    %3538 = vmatpush1.msra.mxu0 %v3374
    %3539 = vmatprep.subr.mxu0 0.0
    %3540 = vmatpush1.msra.mxu0 %v3377
    %3541 = vmatprep.subr.mxu0 0.0
    %3542 = vmatpush1.msra.mxu0 0.0
    %3543 = vmatprep.subr.mxu0 0.0
    %3544 = vmatpush1.msra.mxu0 0.0
    %3545 = vmatprep.subr.mxu0 0.0
    %3546 = vmatpush1.msra.mxu0 0.0
    %3547 = vmatprep.subr.mxu0 0.0
    %3548 = vmatpush1.msra.mxu0 0.0
    %3549 = vmatprep.subr.mxu0 0.0
    %3550 = vmatpush1.msra.mxu0 0.0
    %3551 = vmatprep.subr.mxu0 0.0
    %3552 = vmatpush1.msra.mxu0 0.0
    %3553 = vmatprep.subr.mxu0 0.0
    %3554 = vmatpush1.msra.mxu0 0.0
    %3555 = vmatprep.subr.mxu0 0.0
    %3556 = vmatpush1.msra.mxu0 0.0
    %3557 = vmatprep.subr.mxu0 0.0
    %3558 = vmatpush1.msra.mxu0 0.0
    %3559 = vmatprep.subr.mxu0 0.0
    %3560 = vmatpush1.msra.mxu0 0.0
    %3561 = vmatprep.subr.mxu0 0.0
    %3562 = vmatpush1.msra.mxu0 0.0
    %3563 = vmatprep.subr.mxu0 0.0
    %3564 = vmatpush1.msra.mxu0 0.0
    %3565 = vmatprep.subr.mxu0 0.0
    %3566 = vmatpush1.msra.mxu0 0.0
    %3567 = vmatprep.subr.mxu0 0.0
    %3568 = vmatpush1.msra.mxu0 0.0
    %3569 = vmatprep.subr.mxu0 0.0
    %3570 = vmatpush1.msra.mxu0 0.0
    %3571 = vmatprep.subr.mxu0 0.0
    %3572 = vmatpush1.msra.mxu0 0.0
    %3573 = vmatprep.subr.mxu0 0.0
    %3574 = vmatpush1.msra.mxu0 0.0
    %3575 = vmatprep.subr.mxu0 0.0
    %3576 = vmatpush1.msra.mxu0 0.0
    %3577 = vmatprep.subr.mxu0 0.0
    %3578 = vmatpush1.msra.mxu0 0.0
    %3579 = vmatprep.subr.mxu0 0.0
    %3580 = vmatpush1.msra.mxu0 0.0
    %3581 = vmatprep.subr.mxu0 0.0
    %3582 = vmatpush1.msra.mxu0 0.0
    %3583 = vmatprep.subr.mxu0 0.0
    %3584 = vmatpush1.msra.mxu0 0.0
    %3585 = vmatprep.subr.mxu0 0.0
    %3586 = vmatpush1.msra.mxu0 0.0
    %3587 = vmatprep.mubr.f32.mxu0 0.0
    %3588 = vmatmul.mubr.f32.gmra.mrb[0].mxu0 %v3451
    %v3589 = vpop.f32.mrb[0].mxu0
    %v3590 = vadd.f32 0.0, %v3589
    %v3591 = vpop.f32.mrb[0].mxu0
    %3592 = vdwg.mxu0
    %v3593 = vmax.f32 %v3520, %v3590
    %v3594 = vmax.f32 %v3449, %v3593
    %v3595 = vld [vmem:[%s6] sm:$0x1]
    %v3597 = vlaneseq
    %v3598 = vshrl.u32 %v3597, 7
    %v3599 = vsub.s32 0, %v3598
    %v3600 = vrot.slane %v3595, %v3599
    %v3602 = vadd.f32 %v3594, %v3600
    %v3603 = vmax.f32 %v3602, 0.0
    %v3604 = vld [vmem:[%s9] sm:$0xff]
    %v3605 = vld [vmem:[%s9 + $0x8] sm:$0xff]
    %v3606 = vld [vmem:[%s9 + $0x10] sm:$0xff]
    %v3607 = vld [vmem:[%s9 + $0x18] sm:$0x3f]
    %v3608 = vld [vmem:[%s1673] sm:$0xff]
    %v3609 = vld [vmem:[%s1673 + $0x8] sm:$0xff]
    %v3610 = vld [vmem:[%s1673 + $0x10] sm:$0xff]
    %v3611 = vld [vmem:[%s1673 + $0x18] sm:$0x3f]
    %v3613 = vrot.slane %v3603, 1
    %v3614 = vsel %vm1680, %v3613, 0
    %v3617 = vsel %vm210, %v3611, 0
    %3619 = vmatprep.subr.mxu0 0.0
    %3620 = vmatpush1.msra.mxu0 %v3608
    %3621 = vmatprep.subr.mxu0 0.0
    %3622 = vmatpush1.msra.mxu0 %v3609
    %3623 = vmatprep.subr.mxu0 0.0
    %3624 = vmatpush1.msra.mxu0 %v3610
    %3625 = vmatprep.subr.mxu0 0.0
    %3626 = vmatpush1.msra.mxu0 %v3617
    %3627 = vmatprep.subr.mxu0 0.0
    %3628 = vmatpush1.msra.mxu0 0.0
    %3629 = vmatprep.subr.mxu0 0.0
    %3630 = vmatpush1.msra.mxu0 0.0
    %3631 = vmatprep.subr.mxu0 0.0
    %3632 = vmatpush1.msra.mxu0 0.0
    %3633 = vmatprep.subr.mxu0 0.0
    %3634 = vmatpush1.msra.mxu0 0.0
    %3635 = vmatprep.subr.mxu0 0.0
    %3636 = vmatpush1.msra.mxu0 0.0
    %3637 = vmatprep.subr.mxu0 0.0
    %3638 = vmatpush1.msra.mxu0 0.0
    %3639 = vmatprep.subr.mxu0 0.0
    %3640 = vmatpush1.msra.mxu0 0.0
    %3641 = vmatprep.subr.mxu0 0.0
    %3642 = vmatpush1.msra.mxu0 0.0
    %3643 = vmatprep.subr.mxu0 0.0
    %3644 = vmatpush1.msra.mxu0 0.0
    %3645 = vmatprep.subr.mxu0 0.0
    %3646 = vmatpush1.msra.mxu0 0.0
    %3647 = vmatprep.subr.mxu0 0.0
    %3648 = vmatpush1.msra.mxu0 0.0
    %3649 = vmatprep.subr.mxu0 0.0
    %3650 = vmatpush1.msra.mxu0 0.0
    %3651 = vmatprep.subr.mxu0 0.0
    %3652 = vmatpush1.msra.mxu0 0.0
    %3653 = vmatprep.subr.mxu0 0.0
    %3654 = vmatpush1.msra.mxu0 0.0
    %3655 = vmatprep.subr.mxu0 0.0
    %3656 = vmatpush1.msra.mxu0 0.0
    %3657 = vmatprep.subr.mxu0 0.0
    %3658 = vmatpush1.msra.mxu0 0.0
    %3659 = vmatprep.subr.mxu0 0.0
    %3660 = vmatpush1.msra.mxu0 0.0
    %3661 = vmatprep.subr.mxu0 0.0
    %3662 = vmatpush1.msra.mxu0 0.0
    %3663 = vmatprep.subr.mxu0 0.0
    %3664 = vmatpush1.msra.mxu0 0.0
    %3665 = vmatprep.subr.mxu0 0.0
    %3666 = vmatpush1.msra.mxu0 0.0
    %3667 = vmatprep.subr.mxu0 0.0
    %3668 = vmatpush1.msra.mxu0 0.0
    %3669 = vmatprep.subr.mxu0 0.0
    %3670 = vmatpush1.msra.mxu0 0.0
    %3671 = vmatprep.subr.mxu0 0.0
    %3672 = vmatpush1.msra.mxu0 0.0
    %3673 = vmatprep.subr.mxu0 0.0
    %3674 = vmatpush1.msra.mxu0 0.0
    %3675 = vmatprep.subr.mxu0 0.0
    %3676 = vmatpush1.msra.mxu0 0.0
    %3677 = vmatprep.subr.mxu0 0.0
    %3678 = vmatpush1.msra.mxu0 0.0
    %3679 = vmatprep.subr.mxu0 0.0
    %3680 = vmatpush1.msra.mxu0 0.0
    %3681 = vmatprep.subr.mxu0 0.0
    %3682 = vmatpush1.msra.mxu0 0.0
    %3683 = vmatprep.mubr.f32.mxu0 0.0
    %3684 = vmatmul.mubr.f32.gmra.mrb[0].mxu0 %v3614
    %v3685 = vpop.f32.mrb[0].mxu0
    %v3686 = vadd.f32 0.0, %v3685
    %v3687 = vpop.f32.mrb[0].mxu0
    %3688 = vdwg.mxu0
    %v3689 = vsel %vm1680, %v3603, 0
    %v3692 = vsel %vm210, %v3607, 0
    %3694 = vmatprep.subr.mxu0 0.0
    %3695 = vmatpush1.msra.mxu0 %v3604
    %3696 = vmatprep.subr.mxu0 0.0
    %3697 = vmatpush1.msra.mxu0 %v3605
    %3698 = vmatprep.subr.mxu0 0.0
    %3699 = vmatpush1.msra.mxu0 %v3606
    %3700 = vmatprep.subr.mxu0 0.0
    %3701 = vmatpush1.msra.mxu0 %v3692
    %3702 = vmatprep.subr.mxu0 0.0
    %3703 = vmatpush1.msra.mxu0 0.0
    %3704 = vmatprep.subr.mxu0 0.0
    %3705 = vmatpush1.msra.mxu0 0.0
    %3706 = vmatprep.subr.mxu0 0.0
    %3707 = vmatpush1.msra.mxu0 0.0
    %3708 = vmatprep.subr.mxu0 0.0
    %3709 = vmatpush1.msra.mxu0 0.0
    %3710 = vmatprep.subr.mxu0 0.0
    %3711 = vmatpush1.msra.mxu0 0.0
    %3712 = vmatprep.subr.mxu0 0.0
    %3713 = vmatpush1.msra.mxu0 0.0
    %3714 = vmatprep.subr.mxu0 0.0
    %3715 = vmatpush1.msra.mxu0 0.0
    %3716 = vmatprep.subr.mxu0 0.0
    %3717 = vmatpush1.msra.mxu0 0.0
    %3718 = vmatprep.subr.mxu0 0.0
    %3719 = vmatpush1.msra.mxu0 0.0
    %3720 = vmatprep.subr.mxu0 0.0
    %3721 = vmatpush1.msra.mxu0 0.0
    %3722 = vmatprep.subr.mxu0 0.0
    %3723 = vmatpush1.msra.mxu0 0.0
    %3724 = vmatprep.subr.mxu0 0.0
    %3725 = vmatpush1.msra.mxu0 0.0
    %3726 = vmatprep.subr.mxu0 0.0
    %3727 = vmatpush1.msra.mxu0 0.0
    %3728 = vmatprep.subr.mxu0 0.0
    %3729 = vmatpush1.msra.mxu0 0.0
    %3730 = vmatprep.subr.mxu0 0.0
    %3731 = vmatpush1.msra.mxu0 0.0
    %3732 = vmatprep.subr.mxu0 0.0
    %3733 = vmatpush1.msra.mxu0 0.0
    %3734 = vmatprep.subr.mxu0 0.0
    %3735 = vmatpush1.msra.mxu0 0.0
    %3736 = vmatprep.subr.mxu0 0.0
    %3737 = vmatpush1.msra.mxu0 0.0
    %3738 = vmatprep.subr.mxu0 0.0
    %3739 = vmatpush1.msra.mxu0 0.0
    %3740 = vmatprep.subr.mxu0 0.0
    %3741 = vmatpush1.msra.mxu0 0.0
    %3742 = vmatprep.subr.mxu0 0.0
    %3743 = vmatpush1.msra.mxu0 0.0
    %3744 = vmatprep.subr.mxu0 0.0
    %3745 = vmatpush1.msra.mxu0 0.0
    %3746 = vmatprep.subr.mxu0 0.0
    %3747 = vmatpush1.msra.mxu0 0.0
    %3748 = vmatprep.subr.mxu0 0.0
    %3749 = vmatpush1.msra.mxu0 0.0
    %3750 = vmatprep.subr.mxu0 0.0
    %3751 = vmatpush1.msra.mxu0 0.0
    %3752 = vmatprep.subr.mxu0 0.0
    %3753 = vmatpush1.msra.mxu0 0.0
    %3754 = vmatprep.subr.mxu0 0.0
    %3755 = vmatpush1.msra.mxu0 0.0
    %3756 = vmatprep.subr.mxu0 0.0
    %3757 = vmatpush1.msra.mxu0 0.0
    %3758 = vmatprep.mubr.f32.mxu0 0.0
    %3759 = vmatmul.mubr.f32.gmra.mrb[0].mxu0 %v3689
    %v3760 = vpop.f32.mrb[0].mxu0
    %v3761 = vadd.f32 %v3686, %v3760
    %v3762 = vpop.f32.mrb[0].mxu0
    %3763 = vdwg.mxu0
    %v3764 = vld [vmem:[%s1831] sm:$0xff]
    %v3765 = vld [vmem:[%s1831 + $0x8] sm:$0xff]
    %v3766 = vld [vmem:[%s1831 + $0x10] sm:$0xff]
    %v3767 = vld [vmem:[%s1831 + $0x18] sm:$0x3f]
    %v3768 = vrot.slane %v3603, 2
    %v3769 = vsel %vm1680, %v3768, 0
    %v3772 = vsel %vm210, %v3767, 0
    %3774 = vmatprep.subr.mxu0 0.0
    %3775 = vmatpush1.msra.mxu0 %v3764
    %3776 = vmatprep.subr.mxu0 0.0
    %3777 = vmatpush1.msra.mxu0 %v3765
    %3778 = vmatprep.subr.mxu0 0.0
    %3779 = vmatpush1.msra.mxu0 %v3766
    %3780 = vmatprep.subr.mxu0 0.0
    %3781 = vmatpush1.msra.mxu0 %v3772
    %3782 = vmatprep.subr.mxu0 0.0
    %3783 = vmatpush1.msra.mxu0 0.0
    %3784 = vmatprep.subr.mxu0 0.0
    %3785 = vmatpush1.msra.mxu0 0.0
    %3786 = vmatprep.subr.mxu0 0.0
    %3787 = vmatpush1.msra.mxu0 0.0
    %3788 = vmatprep.subr.mxu0 0.0
    %3789 = vmatpush1.msra.mxu0 0.0
    %3790 = vmatprep.subr.mxu0 0.0
    %3791 = vmatpush1.msra.mxu0 0.0
    %3792 = vmatprep.subr.mxu0 0.0
    %3793 = vmatpush1.msra.mxu0 0.0
    %3794 = vmatprep.subr.mxu0 0.0
    %3795 = vmatpush1.msra.mxu0 0.0
    %3796 = vmatprep.subr.mxu0 0.0
    %3797 = vmatpush1.msra.mxu0 0.0
    %3798 = vmatprep.subr.mxu0 0.0
    %3799 = vmatpush1.msra.mxu0 0.0
    %3800 = vmatprep.subr.mxu0 0.0
    %3801 = vmatpush1.msra.mxu0 0.0
    %3802 = vmatprep.subr.mxu0 0.0
    %3803 = vmatpush1.msra.mxu0 0.0
    %3804 = vmatprep.subr.mxu0 0.0
    %3805 = vmatpush1.msra.mxu0 0.0
    %3806 = vmatprep.subr.mxu0 0.0
    %3807 = vmatpush1.msra.mxu0 0.0
    %3808 = vmatprep.subr.mxu0 0.0
    %3809 = vmatpush1.msra.mxu0 0.0
    %3810 = vmatprep.subr.mxu0 0.0
    %3811 = vmatpush1.msra.mxu0 0.0
    %3812 = vmatprep.subr.mxu0 0.0
    %3813 = vmatpush1.msra.mxu0 0.0
    %3814 = vmatprep.subr.mxu0 0.0
    %3815 = vmatpush1.msra.mxu0 0.0
    %3816 = vmatprep.subr.mxu0 0.0
    %3817 = vmatpush1.msra.mxu0 0.0
    %3818 = vmatprep.subr.mxu0 0.0
    %3819 = vmatpush1.msra.mxu0 0.0
    %3820 = vmatprep.subr.mxu0 0.0
    %3821 = vmatpush1.msra.mxu0 0.0
    %3822 = vmatprep.subr.mxu0 0.0
    %3823 = vmatpush1.msra.mxu0 0.0
    %3824 = vmatprep.subr.mxu0 0.0
    %3825 = vmatpush1.msra.mxu0 0.0
    %3826 = vmatprep.subr.mxu0 0.0
    %3827 = vmatpush1.msra.mxu0 0.0
    %3828 = vmatprep.subr.mxu0 0.0
    %3829 = vmatpush1.msra.mxu0 0.0
    %3830 = vmatprep.subr.mxu0 0.0
    %3831 = vmatpush1.msra.mxu0 0.0
    %3832 = vmatprep.subr.mxu0 0.0
    %3833 = vmatpush1.msra.mxu0 0.0
    %3834 = vmatprep.subr.mxu0 0.0
    %3835 = vmatpush1.msra.mxu0 0.0
    %3836 = vmatprep.subr.mxu0 0.0
    %3837 = vmatpush1.msra.mxu0 0.0
    %3838 = vmatprep.mubr.f32.mxu0 0.0
    %3839 = vmatmul.mubr.f32.gmra.mrb[0].mxu0 %v3769
    %v3840 = vpop.f32.mrb[0].mxu0
    %v3841 = vadd.f32 0.0, %v3840
    %v3842 = vpop.f32.mrb[0].mxu0
    %3843 = vdwg.mxu0
    %v3844 = vadd.f32 %v3761, %v3841
    %v3845 = vld [vmem:[%s10] sm:$0x1]
    %v3846 = vadd.f32 %v3844, %v3845
    %v3847 = vmax.f32 %v3846, 0.0
    %v3848 = vld [vmem:[%s11] sm:$0xff]
    %v3849 = vld [vmem:[%s11 + $0x8] sm:$0xff]
    %v3850 = vld [vmem:[%s11 + $0x10] sm:$0xff]
    %v3851 = vld [vmem:[%s11 + $0x18] sm:$0xff]
    %v3852 = vld [vmem:[%s12] sm:$0x1]
    %v3854 = vsel %vm1921, %v3847, 0
    %3856 = vmatprep.subr.mxu0 0.0
    %3857 = vmatpush1.msra.mxu0 %v3848
    %3858 = vmatprep.subr.mxu0 0.0
    %3859 = vmatpush1.msra.mxu0 %v3849
    %3860 = vmatprep.subr.mxu0 0.0
    %3861 = vmatpush1.msra.mxu0 %v3850
    %3862 = vmatprep.subr.mxu0 0.0
    %3863 = vmatpush1.msra.mxu0 %v3851
    %3864 = vmatprep.subr.mxu0 0.0
    %3865 = vmatpush1.msra.mxu0 0.0
    %3866 = vmatprep.subr.mxu0 0.0
    %3867 = vmatpush1.msra.mxu0 0.0
    %3868 = vmatprep.subr.mxu0 0.0
    %3869 = vmatpush1.msra.mxu0 0.0
    %3870 = vmatprep.subr.mxu0 0.0
    %3871 = vmatpush1.msra.mxu0 0.0
    %3872 = vmatprep.subr.mxu0 0.0
    %3873 = vmatpush1.msra.mxu0 0.0
    %3874 = vmatprep.subr.mxu0 0.0
    %3875 = vmatpush1.msra.mxu0 0.0
    %3876 = vmatprep.subr.mxu0 0.0
    %3877 = vmatpush1.msra.mxu0 0.0
    %3878 = vmatprep.subr.mxu0 0.0
    %3879 = vmatpush1.msra.mxu0 0.0
    %3880 = vmatprep.subr.mxu0 0.0
    %3881 = vmatpush1.msra.mxu0 0.0
    %3882 = vmatprep.subr.mxu0 0.0
    %3883 = vmatpush1.msra.mxu0 0.0
    %3884 = vmatprep.subr.mxu0 0.0
    %3885 = vmatpush1.msra.mxu0 0.0
    %3886 = vmatprep.subr.mxu0 0.0
    %3887 = vmatpush1.msra.mxu0 0.0
    %3888 = vmatprep.subr.mxu0 0.0
    %3889 = vmatpush1.msra.mxu0 0.0
    %3890 = vmatprep.subr.mxu0 0.0
    %3891 = vmatpush1.msra.mxu0 0.0
    %3892 = vmatprep.subr.mxu0 0.0
    %3893 = vmatpush1.msra.mxu0 0.0
    %3894 = vmatprep.subr.mxu0 0.0
    %3895 = vmatpush1.msra.mxu0 0.0
    %3896 = vmatprep.subr.mxu0 0.0
    %3897 = vmatpush1.msra.mxu0 0.0
    %3898 = vmatprep.subr.mxu0 0.0
    %3899 = vmatpush1.msra.mxu0 0.0
    %3900 = vmatprep.subr.mxu0 0.0
    %3901 = vmatpush1.msra.mxu0 0.0
    %3902 = vmatprep.subr.mxu0 0.0
    %3903 = vmatpush1.msra.mxu0 0.0
    %3904 = vmatprep.subr.mxu0 0.0
    %3905 = vmatpush1.msra.mxu0 0.0
    %3906 = vmatprep.subr.mxu0 0.0
    %3907 = vmatpush1.msra.mxu0 0.0
    %3908 = vmatprep.subr.mxu0 0.0
    %3909 = vmatpush1.msra.mxu0 0.0
    %3910 = vmatprep.subr.mxu0 0.0
    %3911 = vmatpush1.msra.mxu0 0.0
    %3912 = vmatprep.subr.mxu0 0.0
    %3913 = vmatpush1.msra.mxu0 0.0
    %3914 = vmatprep.subr.mxu0 0.0
    %3915 = vmatpush1.msra.mxu0 0.0
    %3916 = vmatprep.subr.mxu0 0.0
    %3917 = vmatpush1.msra.mxu0 0.0
    %3918 = vmatprep.subr.mxu0 0.0
    %3919 = vmatpush1.msra.mxu0 0.0
    %3920 = vmatprep.mubr.f32.mxu0 0.0
    %3921 = vmatmul.mubr.f32.gmra.mrb[0].mxu0 %v3854
    %v3922 = vpop.f32.mrb[0].mxu0
    %v3923 = vadd.f32 %v3852, %v3922
    %v3924 = vpop.f32.mrb[0].mxu0
    %3925 = vdwg.mxu0
    %s3926 = scalar_lea.vmem [#allocation2], 1
    %3927 = vst.msk [vmem:[%s3926] sm:$0x1] %vm1995, %v3923
    %s3928 = scalar_lea.vmem %s0, 96
    %v3929 = vld [vmem:[%s3928] sm:$0xff]
    %v3930 = vld [vmem:[%s3928 + $0x8] sm:$0xff]
    %v3931 = vld [vmem:[%s3928 + $0x10] sm:$0xff]
    %v3932 = vld [vmem:[%s3928 + $0x18] sm:$0xff]
    %v3933 = vld [vmem:[%s3928 + $0x20] sm:$0x3f]
    %v3934 = vld [vmem:[%s3928 + $0x28] sm:$0x3f]
    %v3935 = vld [vmem:[%s1] sm:$0xff]
    %v3936 = vld [vmem:[%s1 + $0x8] sm:$0xff]
    %v3937 = vld [vmem:[%s1 + $0x10] sm:$0xff]
    %v3938 = vld [vmem:[%s1 + $0x18] sm:$0xff]
    %v3939 = vld [vmem:[%s1 + $0x20] sm:$0xff]
    %v3940 = vld [vmem:[%s1 + $0x28] sm:$0xff]
    %v3941 = vld [vmem:[%s1 + $0x30] sm:$0xff]
    %v3942 = vld [vmem:[%s1 + $0x38] sm:$0xff]
    %v3943 = vld [vmem:[%s1 + $0x40] sm:$0xff]
    %v3944 = vld [vmem:[%s1 + $0x48] sm:$0xff]
    %v3945 = vld [vmem:[%s1 + $0x50] sm:$0xff]
    %v3946 = vld [vmem:[%s1 + $0x58] sm:$0xff]
    %v3947 = vld [vmem:[%s1 + $0x60] sm:$0xff]
    %v3948 = vld [vmem:[%s1 + $0x68] sm:$0xff]
    %v3949 = vld [vmem:[%s1 + $0x70] sm:$0xff]
    %v3950 = vld [vmem:[%s1 + $0x78] sm:$0xff]
    %v3951 = vld [vmem:[%s1 + $0x80] sm:$0xff]
    %v3952 = vld [vmem:[%s1 + $0x88] sm:$0xff]
    %v3953 = vld [vmem:[%s1 + $0x90] sm:$0xff]
    %v3954 = vld [vmem:[%s1 + $0x98] sm:$0xff]
    %v3955 = vld [vmem:[%s1 + $0xa0] sm:$0xff]
    %v3956 = vld [vmem:[%s1 + $0xa8] sm:$0xff]
    %v3957 = vld [vmem:[%s1 + $0xb0] sm:$0xff]
    %v3958 = vld [vmem:[%s1 + $0xb8] sm:$0xff]
    %v3959 = vld [vmem:[%s1 + $0xc0] sm:$0xff]
    %v3960 = vld [vmem:[%s1 + $0xc8] sm:$0xff]
    %v3961 = vld [vmem:[%s1 + $0xd0] sm:$0xff]
    %v3962 = vld [vmem:[%s1 + $0xd8] sm:$0xff]
    %v3963 = vld [vmem:[%s1 + $0xe0] sm:$0xff]
    %v3964 = vld [vmem:[%s1 + $0xe8] sm:$0xff]
    %v3965 = vld [vmem:[%s1 + $0xf0] sm:$0xff]
    %v3966 = vld [vmem:[%s1 + $0xf8] sm:$0xff]
    %v3967 = vld [vmem:[%s1 + $0x100] sm:$0xff]
    %v3968 = vld [vmem:[%s1 + $0x108] sm:$0xff]
    %v3969 = vld [vmem:[%s1 + $0x110] sm:$0xff]
    %v3970 = vld [vmem:[%s1 + $0x118] sm:$0xff]
    %v3971 = vld [vmem:[%s1 + $0x120] sm:$0xff]
    %v3972 = vld [vmem:[%s1 + $0x128] sm:$0xff]
    %v3973 = vld [vmem:[%s1 + $0x130] sm:$0xff]
    %v3974 = vld [vmem:[%s1 + $0x138] sm:$0xff]
    %v3975 = vld [vmem:[%s1 + $0x140] sm:$0xff]
    %v3976 = vld [vmem:[%s1 + $0x148] sm:$0xff]
    %v3977 = vld [vmem:[%s1 + $0x150] sm:$0xff]
    %v3978 = vld [vmem:[%s1 + $0x158] sm:$0xff]
    %v3979 = vld [vmem:[%s1 + $0x160] sm:$0xff]
    %v3980 = vld [vmem:[%s1 + $0x168] sm:$0xff]
    %v3981 = vld [vmem:[%s1 + $0x170] sm:$0xff]
    %v3982 = vld [vmem:[%s1 + $0x178] sm:$0xff]
    %v3983 = vld [vmem:[%s1 + $0x180] sm:$0xf]
    %v3984 = vld [vmem:[%s1 + $0x188] sm:$0xf]
    %v3986 = vsel %vm101, %v3930, 0
    %v3989 = vsel %vm101, %v3932, 0
    %v3992 = vsel %vm101, %v3934, 0
    %v3995 = vsel %vm111, %v3983, 0
    %v3998 = vsel %vm111, %v3984, 0
    %4000 = vmatprep.subr.mxu0 %v3936
    %4001 = vmatpush1.msra.mxu0 %v3935
    %4002 = vmatprep.subr.mxu0 %v3938
    %4003 = vmatpush1.msra.mxu0 %v3937
    %4004 = vmatprep.subr.mxu0 %v3940
    %4005 = vmatpush1.msra.mxu0 %v3939
    %4006 = vmatprep.subr.mxu0 %v3942
    %4007 = vmatpush1.msra.mxu0 %v3941
    %4008 = vmatprep.subr.mxu0 %v3944
    %4009 = vmatpush1.msra.mxu0 %v3943
    %4010 = vmatprep.subr.mxu0 %v3946
    %4011 = vmatpush1.msra.mxu0 %v3945
    %4012 = vmatprep.subr.mxu0 %v3948
    %4013 = vmatpush1.msra.mxu0 %v3947
    %4014 = vmatprep.subr.mxu0 %v3950
    %4015 = vmatpush1.msra.mxu0 %v3949
    %4016 = vmatprep.subr.mxu0 %v3952
    %4017 = vmatpush1.msra.mxu0 %v3951
    %4018 = vmatprep.subr.mxu0 %v3954
    %4019 = vmatpush1.msra.mxu0 %v3953
    %4020 = vmatprep.subr.mxu0 %v3956
    %4021 = vmatpush1.msra.mxu0 %v3955
    %4022 = vmatprep.subr.mxu0 %v3958
    %4023 = vmatpush1.msra.mxu0 %v3957
    %4024 = vmatprep.subr.mxu0 %v3960
    %4025 = vmatpush1.msra.mxu0 %v3959
    %4026 = vmatprep.subr.mxu0 %v3962
    %4027 = vmatpush1.msra.mxu0 %v3961
    %4028 = vmatprep.subr.mxu0 %v3964
    %4029 = vmatpush1.msra.mxu0 %v3963
    %4030 = vmatprep.subr.mxu0 %v3966
    %4031 = vmatpush1.msra.mxu0 %v3965
    %4032 = vmatprep.subr.mxu0 %v3968
    %4033 = vmatpush1.msra.mxu0 %v3967
    %4034 = vmatprep.subr.mxu0 %v3970
    %4035 = vmatpush1.msra.mxu0 %v3969
    %4036 = vmatprep.subr.mxu0 %v3972
    %4037 = vmatpush1.msra.mxu0 %v3971
    %4038 = vmatprep.subr.mxu0 %v3974
    %4039 = vmatpush1.msra.mxu0 %v3973
    %4040 = vmatprep.subr.mxu0 %v3976
    %4041 = vmatpush1.msra.mxu0 %v3975
    %4042 = vmatprep.subr.mxu0 %v3978
    %4043 = vmatpush1.msra.mxu0 %v3977
    %4044 = vmatprep.subr.mxu0 %v3980
    %4045 = vmatpush1.msra.mxu0 %v3979
    %4046 = vmatprep.subr.mxu0 %v3982
    %4047 = vmatpush1.msra.mxu0 %v3981
    %4048 = vmatprep.subr.mxu0 %v3998
    %4049 = vmatpush1.msra.mxu0 %v3995
    %4050 = vmatprep.subr.mxu0 0.0
    %4051 = vmatpush1.msra.mxu0 0.0
    %4052 = vmatprep.subr.mxu0 0.0
    %4053 = vmatpush1.msra.mxu0 0.0
    %4054 = vmatprep.subr.mxu0 0.0
    %4055 = vmatpush1.msra.mxu0 0.0
    %4056 = vmatprep.subr.mxu0 0.0
    %4057 = vmatpush1.msra.mxu0 0.0
    %4058 = vmatprep.subr.mxu0 0.0
    %4059 = vmatpush1.msra.mxu0 0.0
    %4060 = vmatprep.subr.mxu0 0.0
    %4061 = vmatpush1.msra.mxu0 0.0
    %4062 = vmatprep.subr.mxu0 0.0
    %4063 = vmatpush1.msra.mxu0 0.0
    %4064 = vmatprep.mubr.f32.mxu0 %v3986
    %4065 = vmatmul.mubr.f32.gmra.mrb[0].mxu0 %v3929
    %v4066 = vpop.f32.mrb[0].mxu0
    %v4067 = vadd.f32 0.0, %v4066
    %v4068 = vpop.f32.mrb[0].mxu0
    %v4069 = vadd.f32 0.0, %v4068
    %4070 = vmatprep.mubr.f32.mxu0 %v3989
    %4071 = vmatmul.mubr.f32.gmra.mrb[0].mxu0 %v3931
    %v4072 = vpop.f32.mrb[0].mxu0
    %v4073 = vadd.f32 0.0, %v4072
    %v4074 = vpop.f32.mrb[0].mxu0
    %v4075 = vadd.f32 0.0, %v4074
    %4076 = vmatprep.mubr.f32.mxu0 %v3992
    %4077 = vmatmul.mubr.f32.gmra.mrb[0].mxu0 %v3933
    %v4078 = vpop.f32.mrb[0].mxu0
    %v4079 = vadd.f32 0.0, %v4078
    %v4080 = vpop.f32.mrb[0].mxu0
    %v4081 = vadd.f32 0.0, %v4080
    %4082 = vdwg.mxu0
    %v4083 = vld [vmem:[%s3] sm:$0xff]
    %v4084 = vld [vmem:[%s3 + $0x8] sm:$0x7]
    %v4086 = vsel %vm203, %v4083, 0
    %v4089 = vsel %vm203, %v4084, 0
    %v4092 = vsel %vm210, %v4079, 0
    %v4095 = vsel %vm210, %v4081, 0
    %4097 = vmatprep.subr.mxu0 %v4069
    %4098 = vmatpush1.msra.mxu0 %v4067
    %4099 = vmatprep.subr.mxu0 %v4075
    %4100 = vmatpush1.msra.mxu0 %v4073
    %4101 = vmatprep.subr.mxu0 %v4095
    %4102 = vmatpush1.msra.mxu0 %v4092
    %4103 = vmatprep.subr.mxu0 0.0
    %4104 = vmatpush1.msra.mxu0 0.0
    %4105 = vmatprep.subr.mxu0 0.0
    %4106 = vmatpush1.msra.mxu0 0.0
    %4107 = vmatprep.subr.mxu0 0.0
    %4108 = vmatpush1.msra.mxu0 0.0
    %4109 = vmatprep.subr.mxu0 0.0
    %4110 = vmatpush1.msra.mxu0 0.0
    %4111 = vmatprep.subr.mxu0 0.0
    %4112 = vmatpush1.msra.mxu0 0.0
    %4113 = vmatprep.subr.mxu0 0.0
    %4114 = vmatpush1.msra.mxu0 0.0
    %4115 = vmatprep.subr.mxu0 0.0
    %4116 = vmatpush1.msra.mxu0 0.0
    %4117 = vmatprep.subr.mxu0 0.0
    %4118 = vmatpush1.msra.mxu0 0.0
    %4119 = vmatprep.subr.mxu0 0.0
    %4120 = vmatpush1.msra.mxu0 0.0
    %4121 = vmatprep.subr.mxu0 0.0
    %4122 = vmatpush1.msra.mxu0 0.0
    %4123 = vmatprep.subr.mxu0 0.0
    %4124 = vmatpush1.msra.mxu0 0.0
    %4125 = vmatprep.subr.mxu0 0.0
    %4126 = vmatpush1.msra.mxu0 0.0
    %4127 = vmatprep.subr.mxu0 0.0
    %4128 = vmatpush1.msra.mxu0 0.0
    %4129 = vmatprep.subr.mxu0 0.0
    %4130 = vmatpush1.msra.mxu0 0.0
    %4131 = vmatprep.subr.mxu0 0.0
    %4132 = vmatpush1.msra.mxu0 0.0
    %4133 = vmatprep.subr.mxu0 0.0
    %4134 = vmatpush1.msra.mxu0 0.0
    %4135 = vmatprep.subr.mxu0 0.0
    %4136 = vmatpush1.msra.mxu0 0.0
    %4137 = vmatprep.subr.mxu0 0.0
    %4138 = vmatpush1.msra.mxu0 0.0
    %4139 = vmatprep.subr.mxu0 0.0
    %4140 = vmatpush1.msra.mxu0 0.0
    %4141 = vmatprep.subr.mxu0 0.0
    %4142 = vmatpush1.msra.mxu0 0.0
    %4143 = vmatprep.subr.mxu0 0.0
    %4144 = vmatpush1.msra.mxu0 0.0
    %4145 = vmatprep.subr.mxu0 0.0
    %4146 = vmatpush1.msra.mxu0 0.0
    %4147 = vmatprep.subr.mxu0 0.0
    %4148 = vmatpush1.msra.mxu0 0.0
    %4149 = vmatprep.subr.mxu0 0.0
    %4150 = vmatpush1.msra.mxu0 0.0
    %4151 = vmatprep.subr.mxu0 0.0
    %4152 = vmatpush1.msra.mxu0 0.0
    %4153 = vmatprep.subr.mxu0 0.0
    %4154 = vmatpush1.msra.mxu0 0.0
    %4155 = vmatprep.subr.mxu0 0.0
    %4156 = vmatpush1.msra.mxu0 0.0
    %4157 = vmatprep.subr.mxu0 0.0
    %4158 = vmatpush1.msra.mxu0 0.0
    %4159 = vmatprep.subr.mxu0 0.0
    %4160 = vmatpush1.msra.mxu0 0.0
    %4161 = vmatprep.mubr.f32.mxu0 0.0
    %4162 = vmatmul.mubr.f32.gmra.mrb[0].mxu0 %v4086
    %v4163 = vpop.f32.mrb[0].mxu0
    %v4164 = vadd.f32 0.0, %v4163
    %v4165 = vpop.f32.mrb[0].mxu0
    %v4166 = vadd.f32 0.0, %v4165
    %4167 = vmatprep.mubr.f32.mxu0 0.0
    %4168 = vmatmul.mubr.f32.gmra.mrb[0].mxu0 %v4089
    %v4169 = vpop.f32.mrb[0].mxu0
    %v4170 = vadd.f32 0.0, %v4169
    %v4171 = vpop.f32.mrb[0].mxu0
    %v4172 = vadd.f32 0.0, %v4171
    %4173 = vdwg.mxu0
    %v4174 = vld [vmem:[%s294] sm:$0xff]
    %v4175 = vld [vmem:[%s294 + $0x8] sm:$0x7]
    %v4177 = vsel %vm203, %v4174, 0
    %v4180 = vsel %vm203, %v4175, 0
    %4182 = vmatprep.subr.mxu0 %v4069
    %4183 = vmatpush1.msra.mxu0 %v4067
    %4184 = vmatprep.subr.mxu0 %v4075
    %4185 = vmatpush1.msra.mxu0 %v4073
    %4186 = vmatprep.subr.mxu0 %v4095
    %4187 = vmatpush1.msra.mxu0 %v4092
    %4188 = vmatprep.subr.mxu0 0.0
    %4189 = vmatpush1.msra.mxu0 0.0
    %4190 = vmatprep.subr.mxu0 0.0
    %4191 = vmatpush1.msra.mxu0 0.0
    %4192 = vmatprep.subr.mxu0 0.0
    %4193 = vmatpush1.msra.mxu0 0.0
    %4194 = vmatprep.subr.mxu0 0.0
    %4195 = vmatpush1.msra.mxu0 0.0
    %4196 = vmatprep.subr.mxu0 0.0
    %4197 = vmatpush1.msra.mxu0 0.0
    %4198 = vmatprep.subr.mxu0 0.0
    %4199 = vmatpush1.msra.mxu0 0.0
    %4200 = vmatprep.subr.mxu0 0.0
    %4201 = vmatpush1.msra.mxu0 0.0
    %4202 = vmatprep.subr.mxu0 0.0
    %4203 = vmatpush1.msra.mxu0 0.0
    %4204 = vmatprep.subr.mxu0 0.0
    %4205 = vmatpush1.msra.mxu0 0.0
    %4206 = vmatprep.subr.mxu0 0.0
    %4207 = vmatpush1.msra.mxu0 0.0
    %4208 = vmatprep.subr.mxu0 0.0
    %4209 = vmatpush1.msra.mxu0 0.0
    %4210 = vmatprep.subr.mxu0 0.0
    %4211 = vmatpush1.msra.mxu0 0.0
    %4212 = vmatprep.subr.mxu0 0.0
    %4213 = vmatpush1.msra.mxu0 0.0
    %4214 = vmatprep.subr.mxu0 0.0
    %4215 = vmatpush1.msra.mxu0 0.0
    %4216 = vmatprep.subr.mxu0 0.0
    %4217 = vmatpush1.msra.mxu0 0.0
    %4218 = vmatprep.subr.mxu0 0.0
    %4219 = vmatpush1.msra.mxu0 0.0
    %4220 = vmatprep.subr.mxu0 0.0
    %4221 = vmatpush1.msra.mxu0 0.0
    %4222 = vmatprep.subr.mxu0 0.0
    %4223 = vmatpush1.msra.mxu0 0.0
    %4224 = vmatprep.subr.mxu0 0.0
    %4225 = vmatpush1.msra.mxu0 0.0
    %4226 = vmatprep.subr.mxu0 0.0
    %4227 = vmatpush1.msra.mxu0 0.0
    %4228 = vmatprep.subr.mxu0 0.0
    %4229 = vmatpush1.msra.mxu0 0.0
    %4230 = vmatprep.subr.mxu0 0.0
    %4231 = vmatpush1.msra.mxu0 0.0
    %4232 = vmatprep.subr.mxu0 0.0
    %4233 = vmatpush1.msra.mxu0 0.0
    %4234 = vmatprep.subr.mxu0 0.0
    %4235 = vmatpush1.msra.mxu0 0.0
    %4236 = vmatprep.subr.mxu0 0.0
    %4237 = vmatpush1.msra.mxu0 0.0
    %4238 = vmatprep.subr.mxu0 0.0
    %4239 = vmatpush1.msra.mxu0 0.0
    %4240 = vmatprep.subr.mxu0 0.0
    %4241 = vmatpush1.msra.mxu0 0.0
    %4242 = vmatprep.subr.mxu0 0.0
    %4243 = vmatpush1.msra.mxu0 0.0
    %4244 = vmatprep.subr.mxu0 0.0
    %4245 = vmatpush1.msra.mxu0 0.0
    %4246 = vmatprep.mubr.f32.mxu0 0.0
    %4247 = vmatmul.mubr.f32.gmra.mrb[0].mxu0 %v4177
    %v4248 = vpop.f32.mrb[0].mxu0
    %v4249 = vadd.f32 0.0, %v4248
    %v4250 = vpop.f32.mrb[0].mxu0
    %v4251 = vadd.f32 0.0, %v4250
    %4252 = vmatprep.mubr.f32.mxu0 0.0
    %4253 = vmatmul.mubr.f32.gmra.mrb[0].mxu0 %v4180
    %v4254 = vpop.f32.mrb[0].mxu0
    %v4255 = vadd.f32 0.0, %v4254
    %v4256 = vpop.f32.mrb[0].mxu0
    %v4257 = vadd.f32 0.0, %v4256
    %4258 = vdwg.mxu0
    %v4259 = vld [vmem:[%s4] sm:$0xff]
    %v4260 = vld [vmem:[%s4 + $0x8] sm:$0xff]
    %v4261 = vld [vmem:[%s4 + $0x10] sm:$0xff]
    %v4262 = vld [vmem:[%s4 + $0x18] sm:$0xff]
    %v4263 = vld [vmem:[%s4 + $0x20] sm:$0xff]
    %v4264 = vld [vmem:[%s4 + $0x28] sm:$0xff]
    %v4265 = vld [vmem:[%s4 + $0x30] sm:$0xff]
    %v4266 = vld [vmem:[%s4 + $0x38] sm:$0xff]
    %v4267 = vld [vmem:[%s4 + $0x40] sm:$0xff]
    %v4268 = vld [vmem:[%s4 + $0x48] sm:$0xff]
    %v4269 = vld [vmem:[%s4 + $0x50] sm:$0xff]
    %v4270 = vld [vmem:[%s4 + $0x58] sm:$0xff]
    %v4271 = vld [vmem:[%s4 + $0x60] sm:$0xff]
    %v4272 = vld [vmem:[%s4 + $0x68] sm:$0xff]
    %v4273 = vld [vmem:[%s4 + $0x70] sm:$0xff]
    %v4274 = vld [vmem:[%s4 + $0x78] sm:$0xff]
    %v4275 = vld [vmem:[%s4 + $0x80] sm:$0xff]
    %v4276 = vld [vmem:[%s4 + $0x88] sm:$0xff]
    %v4277 = vld [vmem:[%s4 + $0x90] sm:$0xff]
    %v4278 = vld [vmem:[%s4 + $0x98] sm:$0xff]
    %v4279 = vld [vmem:[%s4 + $0xa0] sm:$0xff]
    %v4280 = vld [vmem:[%s4 + $0xa8] sm:$0xff]
    %v4282 = vsel %vm402, %v4166, 0
    %v4285 = vsel %vm402, %v4172, 0
    %4287 = vmatprep.subr.mxu0 0.0
    %4288 = vmatpush1.msra.mxu0 %v4259
    %4289 = vmatprep.subr.mxu0 0.0
    %4290 = vmatpush1.msra.mxu0 %v4260
    %4291 = vmatprep.subr.mxu0 0.0
    %4292 = vmatpush1.msra.mxu0 %v4261
    %4293 = vmatprep.subr.mxu0 0.0
    %4294 = vmatpush1.msra.mxu0 %v4262
    %4295 = vmatprep.subr.mxu0 0.0
    %4296 = vmatpush1.msra.mxu0 %v4263
    %4297 = vmatprep.subr.mxu0 0.0
    %4298 = vmatpush1.msra.mxu0 %v4264
    %4299 = vmatprep.subr.mxu0 0.0
    %4300 = vmatpush1.msra.mxu0 %v4265
    %4301 = vmatprep.subr.mxu0 0.0
    %4302 = vmatpush1.msra.mxu0 %v4266
    %4303 = vmatprep.subr.mxu0 0.0
    %4304 = vmatpush1.msra.mxu0 %v4267
    %4305 = vmatprep.subr.mxu0 0.0
    %4306 = vmatpush1.msra.mxu0 %v4268
    %4307 = vmatprep.subr.mxu0 0.0
    %4308 = vmatpush1.msra.mxu0 %v4269
    %4309 = vmatprep.subr.mxu0 0.0
    %4310 = vmatpush1.msra.mxu0 %v4270
    %4311 = vmatprep.subr.mxu0 0.0
    %4312 = vmatpush1.msra.mxu0 %v4271
    %4313 = vmatprep.subr.mxu0 0.0
    %4314 = vmatpush1.msra.mxu0 %v4272
    %4315 = vmatprep.subr.mxu0 0.0
    %4316 = vmatpush1.msra.mxu0 %v4273
    %4317 = vmatprep.subr.mxu0 0.0
    %4318 = vmatpush1.msra.mxu0 %v4274
    %4319 = vmatprep.subr.mxu0 0.0
    %4320 = vmatpush1.msra.mxu0 %v4275
    %4321 = vmatprep.subr.mxu0 0.0
    %4322 = vmatpush1.msra.mxu0 %v4276
    %4323 = vmatprep.subr.mxu0 0.0
    %4324 = vmatpush1.msra.mxu0 %v4277
    %4325 = vmatprep.subr.mxu0 0.0
    %4326 = vmatpush1.msra.mxu0 %v4278
    %4327 = vmatprep.subr.mxu0 0.0
    %4328 = vmatpush1.msra.mxu0 %v4279
    %4329 = vmatprep.subr.mxu0 0.0
    %4330 = vmatpush1.msra.mxu0 %v4280
    %4331 = vmatprep.subr.mxu0 0.0
    %4332 = vmatpush1.msra.mxu0 0.0
    %4333 = vmatprep.subr.mxu0 0.0
    %4334 = vmatpush1.msra.mxu0 0.0
    %4335 = vmatprep.subr.mxu0 0.0
    %4336 = vmatpush1.msra.mxu0 0.0
    %4337 = vmatprep.subr.mxu0 0.0
    %4338 = vmatpush1.msra.mxu0 0.0
    %4339 = vmatprep.subr.mxu0 0.0
    %4340 = vmatpush1.msra.mxu0 0.0
    %4341 = vmatprep.subr.mxu0 0.0
    %4342 = vmatpush1.msra.mxu0 0.0
    %4343 = vmatprep.subr.mxu0 0.0
    %4344 = vmatpush1.msra.mxu0 0.0
    %4345 = vmatprep.subr.mxu0 0.0
    %4346 = vmatpush1.msra.mxu0 0.0
    %4347 = vmatprep.subr.mxu0 0.0
    %4348 = vmatpush1.msra.mxu0 0.0
    %4349 = vmatprep.subr.mxu0 0.0
    %4350 = vmatpush1.msra.mxu0 0.0
    %4351 = vmatprep.mubr.f32.mxu0 %v4282
    %4352 = vmatmul.mubr.f32.gmra.mrb[0].mxu0 %v4164
    %v4353 = vpop.f32.mrb[0].mxu0
    %v4354 = vadd.f32 0.0, %v4353
    %v4355 = vpop.f32.mrb[0].mxu0
    %4356 = vmatprep.mubr.f32.mxu0 %v4285
    %4357 = vmatmul.mubr.f32.gmra.mrb[0].mxu0 %v4170
    %v4358 = vpop.f32.mrb[0].mxu0
    %v4359 = vadd.f32 0.0, %v4358
    %v4360 = vpop.f32.mrb[0].mxu0
    %4361 = vdwg.mxu0
    %v4362 = vld [vmem:[%s484] sm:$0xff]
    %v4363 = vld [vmem:[%s484 + $0x8] sm:$0xff]
    %v4364 = vld [vmem:[%s484 + $0x10] sm:$0xff]
    %v4365 = vld [vmem:[%s484 + $0x18] sm:$0xff]
    %v4366 = vld [vmem:[%s484 + $0x20] sm:$0xff]
    %v4367 = vld [vmem:[%s484 + $0x28] sm:$0xff]
    %v4368 = vld [vmem:[%s484 + $0x30] sm:$0xff]
    %v4369 = vld [vmem:[%s484 + $0x38] sm:$0xff]
    %v4370 = vld [vmem:[%s484 + $0x40] sm:$0xff]
    %v4371 = vld [vmem:[%s484 + $0x48] sm:$0xff]
    %v4372 = vld [vmem:[%s484 + $0x50] sm:$0xff]
    %v4373 = vld [vmem:[%s484 + $0x58] sm:$0xff]
    %v4374 = vld [vmem:[%s484 + $0x60] sm:$0xff]
    %v4375 = vld [vmem:[%s484 + $0x68] sm:$0xff]
    %v4376 = vld [vmem:[%s484 + $0x70] sm:$0xff]
    %v4377 = vld [vmem:[%s484 + $0x78] sm:$0xff]
    %v4378 = vld [vmem:[%s484 + $0x80] sm:$0xff]
    %v4379 = vld [vmem:[%s484 + $0x88] sm:$0xff]
    %v4380 = vld [vmem:[%s484 + $0x90] sm:$0xff]
    %v4381 = vld [vmem:[%s484 + $0x98] sm:$0xff]
    %v4382 = vld [vmem:[%s484 + $0xa0] sm:$0xff]
    %v4383 = vld [vmem:[%s484 + $0xa8] sm:$0xff]
    %4384 = vmatprep.subr.mxu0 0.0
    %4385 = vmatpush1.msra.mxu0 %v4362
    %4386 = vmatprep.subr.mxu0 0.0
    %4387 = vmatpush1.msra.mxu0 %v4363
    %4388 = vmatprep.subr.mxu0 0.0
    %4389 = vmatpush1.msra.mxu0 %v4364
    %4390 = vmatprep.subr.mxu0 0.0
    %4391 = vmatpush1.msra.mxu0 %v4365
    %4392 = vmatprep.subr.mxu0 0.0
    %4393 = vmatpush1.msra.mxu0 %v4366
    %4394 = vmatprep.subr.mxu0 0.0
    %4395 = vmatpush1.msra.mxu0 %v4367
    %4396 = vmatprep.subr.mxu0 0.0
    %4397 = vmatpush1.msra.mxu0 %v4368
    %4398 = vmatprep.subr.mxu0 0.0
    %4399 = vmatpush1.msra.mxu0 %v4369
    %4400 = vmatprep.subr.mxu0 0.0
    %4401 = vmatpush1.msra.mxu0 %v4370
    %4402 = vmatprep.subr.mxu0 0.0
    %4403 = vmatpush1.msra.mxu0 %v4371
    %4404 = vmatprep.subr.mxu0 0.0
    %4405 = vmatpush1.msra.mxu0 %v4372
    %4406 = vmatprep.subr.mxu0 0.0
    %4407 = vmatpush1.msra.mxu0 %v4373
    %4408 = vmatprep.subr.mxu0 0.0
    %4409 = vmatpush1.msra.mxu0 %v4374
    %4410 = vmatprep.subr.mxu0 0.0
    %4411 = vmatpush1.msra.mxu0 %v4375
    %4412 = vmatprep.subr.mxu0 0.0
    %4413 = vmatpush1.msra.mxu0 %v4376
    %4414 = vmatprep.subr.mxu0 0.0
    %4415 = vmatpush1.msra.mxu0 %v4377
    %4416 = vmatprep.subr.mxu0 0.0
    %4417 = vmatpush1.msra.mxu0 %v4378
    %4418 = vmatprep.subr.mxu0 0.0
    %4419 = vmatpush1.msra.mxu0 %v4379
    %4420 = vmatprep.subr.mxu0 0.0
    %4421 = vmatpush1.msra.mxu0 %v4380
    %4422 = vmatprep.subr.mxu0 0.0
    %4423 = vmatpush1.msra.mxu0 %v4381
    %4424 = vmatprep.subr.mxu0 0.0
    %4425 = vmatpush1.msra.mxu0 %v4382
    %4426 = vmatprep.subr.mxu0 0.0
    %4427 = vmatpush1.msra.mxu0 %v4383
    %4428 = vmatprep.subr.mxu0 0.0
    %4429 = vmatpush1.msra.mxu0 0.0
    %4430 = vmatprep.subr.mxu0 0.0
    %4431 = vmatpush1.msra.mxu0 0.0
    %4432 = vmatprep.subr.mxu0 0.0
    %4433 = vmatpush1.msra.mxu0 0.0
    %4434 = vmatprep.subr.mxu0 0.0
    %4435 = vmatpush1.msra.mxu0 0.0
    %4436 = vmatprep.subr.mxu0 0.0
    %4437 = vmatpush1.msra.mxu0 0.0
    %4438 = vmatprep.subr.mxu0 0.0
    %4439 = vmatpush1.msra.mxu0 0.0
    %4440 = vmatprep.subr.mxu0 0.0
    %4441 = vmatpush1.msra.mxu0 0.0
    %4442 = vmatprep.subr.mxu0 0.0
    %4443 = vmatpush1.msra.mxu0 0.0
    %4444 = vmatprep.subr.mxu0 0.0
    %4445 = vmatpush1.msra.mxu0 0.0
    %4446 = vmatprep.subr.mxu0 0.0
    %4447 = vmatpush1.msra.mxu0 0.0
    %4448 = vmatprep.mubr.f32.mxu0 %v4282
    %4449 = vmatmul.mubr.f32.gmra.mrb[0].mxu0 %v4164
    %v4450 = vpop.f32.mrb[0].mxu0
    %v4451 = vadd.f32 0.0, %v4450
    %v4452 = vpop.f32.mrb[0].mxu0
    %4453 = vmatprep.mubr.f32.mxu0 %v4285
    %4454 = vmatmul.mubr.f32.gmra.mrb[0].mxu0 %v4170
    %v4455 = vpop.f32.mrb[0].mxu0
    %v4456 = vadd.f32 0.0, %v4455
    %v4457 = vpop.f32.mrb[0].mxu0
    %4458 = vdwg.mxu0
    %v4459 = vmax.f32 %v4354, %v4451
    %v4460 = vmax.f32 %v4359, %v4456
    %v4462 = vsel %vm402, %v4251, 0
    %v4465 = vsel %vm402, %v4257, 0
    %4467 = vmatprep.subr.mxu0 0.0
    %4468 = vmatpush1.msra.mxu0 %v4259
    %4469 = vmatprep.subr.mxu0 0.0
    %4470 = vmatpush1.msra.mxu0 %v4260
    %4471 = vmatprep.subr.mxu0 0.0
    %4472 = vmatpush1.msra.mxu0 %v4261
    %4473 = vmatprep.subr.mxu0 0.0
    %4474 = vmatpush1.msra.mxu0 %v4262
    %4475 = vmatprep.subr.mxu0 0.0
    %4476 = vmatpush1.msra.mxu0 %v4263
    %4477 = vmatprep.subr.mxu0 0.0
    %4478 = vmatpush1.msra.mxu0 %v4264
    %4479 = vmatprep.subr.mxu0 0.0
    %4480 = vmatpush1.msra.mxu0 %v4265
    %4481 = vmatprep.subr.mxu0 0.0
    %4482 = vmatpush1.msra.mxu0 %v4266
    %4483 = vmatprep.subr.mxu0 0.0
    %4484 = vmatpush1.msra.mxu0 %v4267
    %4485 = vmatprep.subr.mxu0 0.0
    %4486 = vmatpush1.msra.mxu0 %v4268
    %4487 = vmatprep.subr.mxu0 0.0
    %4488 = vmatpush1.msra.mxu0 %v4269
    %4489 = vmatprep.subr.mxu0 0.0
    %4490 = vmatpush1.msra.mxu0 %v4270
    %4491 = vmatprep.subr.mxu0 0.0
    %4492 = vmatpush1.msra.mxu0 %v4271
    %4493 = vmatprep.subr.mxu0 0.0
    %4494 = vmatpush1.msra.mxu0 %v4272
    %4495 = vmatprep.subr.mxu0 0.0
    %4496 = vmatpush1.msra.mxu0 %v4273
    %4497 = vmatprep.subr.mxu0 0.0
    %4498 = vmatpush1.msra.mxu0 %v4274
    %4499 = vmatprep.subr.mxu0 0.0
    %4500 = vmatpush1.msra.mxu0 %v4275
    %4501 = vmatprep.subr.mxu0 0.0
    %4502 = vmatpush1.msra.mxu0 %v4276
    %4503 = vmatprep.subr.mxu0 0.0
    %4504 = vmatpush1.msra.mxu0 %v4277
    %4505 = vmatprep.subr.mxu0 0.0
    %4506 = vmatpush1.msra.mxu0 %v4278
    %4507 = vmatprep.subr.mxu0 0.0
    %4508 = vmatpush1.msra.mxu0 %v4279
    %4509 = vmatprep.subr.mxu0 0.0
    %4510 = vmatpush1.msra.mxu0 %v4280
    %4511 = vmatprep.subr.mxu0 0.0
    %4512 = vmatpush1.msra.mxu0 0.0
    %4513 = vmatprep.subr.mxu0 0.0
    %4514 = vmatpush1.msra.mxu0 0.0
    %4515 = vmatprep.subr.mxu0 0.0
    %4516 = vmatpush1.msra.mxu0 0.0
    %4517 = vmatprep.subr.mxu0 0.0
    %4518 = vmatpush1.msra.mxu0 0.0
    %4519 = vmatprep.subr.mxu0 0.0
    %4520 = vmatpush1.msra.mxu0 0.0
    %4521 = vmatprep.subr.mxu0 0.0
    %4522 = vmatpush1.msra.mxu0 0.0
    %4523 = vmatprep.subr.mxu0 0.0
    %4524 = vmatpush1.msra.mxu0 0.0
    %4525 = vmatprep.subr.mxu0 0.0
    %4526 = vmatpush1.msra.mxu0 0.0
    %4527 = vmatprep.subr.mxu0 0.0
    %4528 = vmatpush1.msra.mxu0 0.0
    %4529 = vmatprep.subr.mxu0 0.0
    %4530 = vmatpush1.msra.mxu0 0.0
    %4531 = vmatprep.mubr.f32.mxu0 %v4462
    %4532 = vmatmul.mubr.f32.gmra.mrb[0].mxu0 %v4249
    %v4533 = vpop.f32.mrb[0].mxu0
    %v4534 = vadd.f32 0.0, %v4533
    %v4535 = vpop.f32.mrb[0].mxu0
    %4536 = vmatprep.mubr.f32.mxu0 %v4465
    %4537 = vmatmul.mubr.f32.gmra.mrb[0].mxu0 %v4255
    %v4538 = vpop.f32.mrb[0].mxu0
    %v4539 = vadd.f32 0.0, %v4538
    %v4540 = vpop.f32.mrb[0].mxu0
    %4541 = vdwg.mxu0
    %4542 = vmatprep.subr.mxu0 0.0
    %4543 = vmatpush1.msra.mxu0 %v4362
    %4544 = vmatprep.subr.mxu0 0.0
    %4545 = vmatpush1.msra.mxu0 %v4363
    %4546 = vmatprep.subr.mxu0 0.0
    %4547 = vmatpush1.msra.mxu0 %v4364
    %4548 = vmatprep.subr.mxu0 0.0
    %4549 = vmatpush1.msra.mxu0 %v4365
    %4550 = vmatprep.subr.mxu0 0.0
    %4551 = vmatpush1.msra.mxu0 %v4366
    %4552 = vmatprep.subr.mxu0 0.0
    %4553 = vmatpush1.msra.mxu0 %v4367
    %4554 = vmatprep.subr.mxu0 0.0
    %4555 = vmatpush1.msra.mxu0 %v4368
    %4556 = vmatprep.subr.mxu0 0.0
    %4557 = vmatpush1.msra.mxu0 %v4369
    %4558 = vmatprep.subr.mxu0 0.0
    %4559 = vmatpush1.msra.mxu0 %v4370
    %4560 = vmatprep.subr.mxu0 0.0
    %4561 = vmatpush1.msra.mxu0 %v4371
    %4562 = vmatprep.subr.mxu0 0.0
    %4563 = vmatpush1.msra.mxu0 %v4372
    %4564 = vmatprep.subr.mxu0 0.0
    %4565 = vmatpush1.msra.mxu0 %v4373
    %4566 = vmatprep.subr.mxu0 0.0
    %4567 = vmatpush1.msra.mxu0 %v4374
    %4568 = vmatprep.subr.mxu0 0.0
    %4569 = vmatpush1.msra.mxu0 %v4375
    %4570 = vmatprep.subr.mxu0 0.0
    %4571 = vmatpush1.msra.mxu0 %v4376
    %4572 = vmatprep.subr.mxu0 0.0
    %4573 = vmatpush1.msra.mxu0 %v4377
    %4574 = vmatprep.subr.mxu0 0.0
    %4575 = vmatpush1.msra.mxu0 %v4378
    %4576 = vmatprep.subr.mxu0 0.0
    %4577 = vmatpush1.msra.mxu0 %v4379
    %4578 = vmatprep.subr.mxu0 0.0
    %4579 = vmatpush1.msra.mxu0 %v4380
    %4580 = vmatprep.subr.mxu0 0.0
    %4581 = vmatpush1.msra.mxu0 %v4381
    %4582 = vmatprep.subr.mxu0 0.0
    %4583 = vmatpush1.msra.mxu0 %v4382
    %4584 = vmatprep.subr.mxu0 0.0
    %4585 = vmatpush1.msra.mxu0 %v4383
    %4586 = vmatprep.subr.mxu0 0.0
    %4587 = vmatpush1.msra.mxu0 0.0
    %4588 = vmatprep.subr.mxu0 0.0
    %4589 = vmatpush1.msra.mxu0 0.0
    %4590 = vmatprep.subr.mxu0 0.0
    %4591 = vmatpush1.msra.mxu0 0.0
    %4592 = vmatprep.subr.mxu0 0.0
    %4593 = vmatpush1.msra.mxu0 0.0
    %4594 = vmatprep.subr.mxu0 0.0
    %4595 = vmatpush1.msra.mxu0 0.0
    %4596 = vmatprep.subr.mxu0 0.0
    %4597 = vmatpush1.msra.mxu0 0.0
    %4598 = vmatprep.subr.mxu0 0.0
    %4599 = vmatpush1.msra.mxu0 0.0
    %4600 = vmatprep.subr.mxu0 0.0
    %4601 = vmatpush1.msra.mxu0 0.0
    %4602 = vmatprep.subr.mxu0 0.0
    %4603 = vmatpush1.msra.mxu0 0.0
    %4604 = vmatprep.subr.mxu0 0.0
    %4605 = vmatpush1.msra.mxu0 0.0
    %4606 = vmatprep.mubr.f32.mxu0 %v4462
    %4607 = vmatmul.mubr.f32.gmra.mrb[0].mxu0 %v4249
    %v4608 = vpop.f32.mrb[0].mxu0
    %v4609 = vadd.f32 0.0, %v4608
    %v4610 = vpop.f32.mrb[0].mxu0
    %4611 = vmatprep.mubr.f32.mxu0 %v4465
    %4612 = vmatmul.mubr.f32.gmra.mrb[0].mxu0 %v4255
    %v4613 = vpop.f32.mrb[0].mxu0
    %v4614 = vadd.f32 0.0, %v4613
    %v4615 = vpop.f32.mrb[0].mxu0
    %4616 = vdwg.mxu0
    %v4617 = vmax.f32 %v4534, %v4609
    %v4618 = vmax.f32 %v4539, %v4614
    %v4619 = vmax.f32 %v4459, %v4617
    %v4620 = vmax.f32 %v4460, %v4618
    %v4621 = vld [vmem:[%s2] sm:$0x1]
    %v4623 = vlaneseq
    %v4624 = vshrl.u32 %v4623, 7
    %v4625 = vsub.s32 0, %v4624
    %v4626 = vrot.slane %v4621, %v4625
    %v4628 = vadd.f32 %v4619, %v4626
    %v4629 = vadd.f32 %v4620, %v4626
    %v4630 = vmax.f32 %v4628, 0.0
    %v4631 = vmax.f32 %v4629, 0.0
    %v4632 = vld [vmem:[%s5] sm:$0xff]
    %v4633 = vld [vmem:[%s5 + $0x8] sm:$0xff]
    %v4634 = vld [vmem:[%s5 + $0x10] sm:$0xff]
    %v4635 = vld [vmem:[%s5 + $0x18] sm:$0xff]
    %v4636 = vld [vmem:[%s5 + $0x20] sm:$0xff]
    %v4637 = vld [vmem:[%s5 + $0x28] sm:$0xff]
    %v4638 = vld [vmem:[%s5 + $0x30] sm:$0xff]
    %v4639 = vld [vmem:[%s5 + $0x38] sm:$0xff]
    %v4640 = vld [vmem:[%s5 + $0x40] sm:$0xff]
    %v4641 = vld [vmem:[%s5 + $0x48] sm:$0xff]
    %v4642 = vld [vmem:[%s5 + $0x50] sm:$0xff]
    %v4643 = vld [vmem:[%s766] sm:$0xff]
    %v4644 = vld [vmem:[%s766 + $0x8] sm:$0xff]
    %v4645 = vld [vmem:[%s766 + $0x10] sm:$0xff]
    %v4646 = vld [vmem:[%s766 + $0x18] sm:$0xff]
    %v4647 = vld [vmem:[%s766 + $0x20] sm:$0xff]
    %v4648 = vld [vmem:[%s766 + $0x28] sm:$0xff]
    %v4649 = vld [vmem:[%s766 + $0x30] sm:$0xff]
    %v4650 = vld [vmem:[%s766 + $0x38] sm:$0xff]
    %v4651 = vld [vmem:[%s766 + $0x40] sm:$0xff]
    %v4652 = vld [vmem:[%s766 + $0x48] sm:$0xff]
    %v4653 = vld [vmem:[%s766 + $0x50] sm:$0xff]
    %v4655 = vrot.slane %v4630, 1
    %v4656 = vsel %vm780, %v4655, 0
    %4658 = vmatprep.subr.mxu0 0.0
    %4659 = vmatpush1.msra.mxu0 %v4643
    %4660 = vmatprep.subr.mxu0 0.0
    %4661 = vmatpush1.msra.mxu0 %v4644
    %4662 = vmatprep.subr.mxu0 0.0
    %4663 = vmatpush1.msra.mxu0 %v4645
    %4664 = vmatprep.subr.mxu0 0.0
    %4665 = vmatpush1.msra.mxu0 %v4646
    %4666 = vmatprep.subr.mxu0 0.0
    %4667 = vmatpush1.msra.mxu0 %v4647
    %4668 = vmatprep.subr.mxu0 0.0
    %4669 = vmatpush1.msra.mxu0 %v4648
    %4670 = vmatprep.subr.mxu0 0.0
    %4671 = vmatpush1.msra.mxu0 %v4649
    %4672 = vmatprep.subr.mxu0 0.0
    %4673 = vmatpush1.msra.mxu0 %v4650
    %4674 = vmatprep.subr.mxu0 0.0
    %4675 = vmatpush1.msra.mxu0 %v4651
    %4676 = vmatprep.subr.mxu0 0.0
    %4677 = vmatpush1.msra.mxu0 %v4652
    %4678 = vmatprep.subr.mxu0 0.0
    %4679 = vmatpush1.msra.mxu0 %v4653
    %4680 = vmatprep.subr.mxu0 0.0
    %4681 = vmatpush1.msra.mxu0 0.0
    %4682 = vmatprep.subr.mxu0 0.0
    %4683 = vmatpush1.msra.mxu0 0.0
    %4684 = vmatprep.subr.mxu0 0.0
    %4685 = vmatpush1.msra.mxu0 0.0
    %4686 = vmatprep.subr.mxu0 0.0
    %4687 = vmatpush1.msra.mxu0 0.0
    %4688 = vmatprep.subr.mxu0 0.0
    %4689 = vmatpush1.msra.mxu0 0.0
    %4690 = vmatprep.subr.mxu0 0.0
    %4691 = vmatpush1.msra.mxu0 0.0
    %4692 = vmatprep.subr.mxu0 0.0
    %4693 = vmatpush1.msra.mxu0 0.0
    %4694 = vmatprep.subr.mxu0 0.0
    %4695 = vmatpush1.msra.mxu0 0.0
    %4696 = vmatprep.subr.mxu0 0.0
    %4697 = vmatpush1.msra.mxu0 0.0
    %4698 = vmatprep.subr.mxu0 0.0
    %4699 = vmatpush1.msra.mxu0 0.0
    %4700 = vmatprep.subr.mxu0 0.0
    %4701 = vmatpush1.msra.mxu0 0.0
    %4702 = vmatprep.subr.mxu0 0.0
    %4703 = vmatpush1.msra.mxu0 0.0
    %4704 = vmatprep.subr.mxu0 0.0
    %4705 = vmatpush1.msra.mxu0 0.0
    %4706 = vmatprep.subr.mxu0 0.0
    %4707 = vmatpush1.msra.mxu0 0.0
    %4708 = vmatprep.subr.mxu0 0.0
    %4709 = vmatpush1.msra.mxu0 0.0
    %4710 = vmatprep.subr.mxu0 0.0
    %4711 = vmatpush1.msra.mxu0 0.0
    %4712 = vmatprep.subr.mxu0 0.0
    %4713 = vmatpush1.msra.mxu0 0.0
    %4714 = vmatprep.subr.mxu0 0.0
    %4715 = vmatpush1.msra.mxu0 0.0
    %4716 = vmatprep.subr.mxu0 0.0
    %4717 = vmatpush1.msra.mxu0 0.0
    %4718 = vmatprep.subr.mxu0 0.0
    %4719 = vmatpush1.msra.mxu0 0.0
    %4720 = vmatprep.subr.mxu0 0.0
    %4721 = vmatpush1.msra.mxu0 0.0
    %4722 = vmatprep.mubr.f32.mxu0 0.0
    %4723 = vmatmul.mubr.f32.gmra.mrb[0].mxu0 %v4656
    %v4724 = vpop.f32.mrb[0].mxu0
    %v4725 = vadd.f32 0.0, %v4724
    %v4726 = vpop.f32.mrb[0].mxu0
    %4727 = vdwg.mxu0
    %v4728 = vsel %vm780, %v4630, 0
    %4730 = vmatprep.subr.mxu0 0.0
    %4731 = vmatpush1.msra.mxu0 %v4632
    %4732 = vmatprep.subr.mxu0 0.0
    %4733 = vmatpush1.msra.mxu0 %v4633
    %4734 = vmatprep.subr.mxu0 0.0
    %4735 = vmatpush1.msra.mxu0 %v4634
    %4736 = vmatprep.subr.mxu0 0.0
    %4737 = vmatpush1.msra.mxu0 %v4635
    %4738 = vmatprep.subr.mxu0 0.0
    %4739 = vmatpush1.msra.mxu0 %v4636
    %4740 = vmatprep.subr.mxu0 0.0
    %4741 = vmatpush1.msra.mxu0 %v4637
    %4742 = vmatprep.subr.mxu0 0.0
    %4743 = vmatpush1.msra.mxu0 %v4638
    %4744 = vmatprep.subr.mxu0 0.0
    %4745 = vmatpush1.msra.mxu0 %v4639
    %4746 = vmatprep.subr.mxu0 0.0
    %4747 = vmatpush1.msra.mxu0 %v4640
    %4748 = vmatprep.subr.mxu0 0.0
    %4749 = vmatpush1.msra.mxu0 %v4641
    %4750 = vmatprep.subr.mxu0 0.0
    %4751 = vmatpush1.msra.mxu0 %v4642
    %4752 = vmatprep.subr.mxu0 0.0
    %4753 = vmatpush1.msra.mxu0 0.0
    %4754 = vmatprep.subr.mxu0 0.0
    %4755 = vmatpush1.msra.mxu0 0.0
    %4756 = vmatprep.subr.mxu0 0.0
    %4757 = vmatpush1.msra.mxu0 0.0
    %4758 = vmatprep.subr.mxu0 0.0
    %4759 = vmatpush1.msra.mxu0 0.0
    %4760 = vmatprep.subr.mxu0 0.0
    %4761 = vmatpush1.msra.mxu0 0.0
    %4762 = vmatprep.subr.mxu0 0.0
    %4763 = vmatpush1.msra.mxu0 0.0
    %4764 = vmatprep.subr.mxu0 0.0
    %4765 = vmatpush1.msra.mxu0 0.0
    %4766 = vmatprep.subr.mxu0 0.0
    %4767 = vmatpush1.msra.mxu0 0.0
    %4768 = vmatprep.subr.mxu0 0.0
    %4769 = vmatpush1.msra.mxu0 0.0
    %4770 = vmatprep.subr.mxu0 0.0
    %4771 = vmatpush1.msra.mxu0 0.0
    %4772 = vmatprep.subr.mxu0 0.0
    %4773 = vmatpush1.msra.mxu0 0.0
    %4774 = vmatprep.subr.mxu0 0.0
    %4775 = vmatpush1.msra.mxu0 0.0
    %4776 = vmatprep.subr.mxu0 0.0
    %4777 = vmatpush1.msra.mxu0 0.0
    %4778 = vmatprep.subr.mxu0 0.0
    %4779 = vmatpush1.msra.mxu0 0.0
    %4780 = vmatprep.subr.mxu0 0.0
    %4781 = vmatpush1.msra.mxu0 0.0
    %4782 = vmatprep.subr.mxu0 0.0
    %4783 = vmatpush1.msra.mxu0 0.0
    %4784 = vmatprep.subr.mxu0 0.0
    %4785 = vmatpush1.msra.mxu0 0.0
    %4786 = vmatprep.subr.mxu0 0.0
    %4787 = vmatpush1.msra.mxu0 0.0
    %4788 = vmatprep.subr.mxu0 0.0
    %4789 = vmatpush1.msra.mxu0 0.0
    %4790 = vmatprep.subr.mxu0 0.0
    %4791 = vmatpush1.msra.mxu0 0.0
    %4792 = vmatprep.subr.mxu0 0.0
    %4793 = vmatpush1.msra.mxu0 0.0
    %4794 = vmatprep.mubr.f32.mxu0 0.0
    %4795 = vmatmul.mubr.f32.gmra.mrb[0].mxu0 %v4728
    %v4796 = vpop.f32.mrb[0].mxu0
    %v4797 = vadd.f32 %v4725, %v4796
    %v4798 = vpop.f32.mrb[0].mxu0
    %4799 = vdwg.mxu0
    %v4800 = vld [vmem:[%s925] sm:$0xff]
    %v4801 = vld [vmem:[%s925 + $0x8] sm:$0xff]
    %v4802 = vld [vmem:[%s925 + $0x10] sm:$0xff]
    %v4803 = vld [vmem:[%s925 + $0x18] sm:$0xff]
    %v4804 = vld [vmem:[%s925 + $0x20] sm:$0xff]
    %v4805 = vld [vmem:[%s925 + $0x28] sm:$0xff]
    %v4806 = vld [vmem:[%s925 + $0x30] sm:$0xff]
    %v4807 = vld [vmem:[%s925 + $0x38] sm:$0xff]
    %v4808 = vld [vmem:[%s925 + $0x40] sm:$0xff]
    %v4809 = vld [vmem:[%s925 + $0x48] sm:$0xff]
    %v4810 = vld [vmem:[%s925 + $0x50] sm:$0xff]
    %v4812 = vrot.slane %v4630, 2
    %v4813 = vrot.slane %v4631, 2
    %v4814 = vsel %vm210, %v4812, %v4813
    %v4815 = vsel %vm780, %v4814, 0
    %4817 = vmatprep.subr.mxu0 0.0
    %4818 = vmatpush1.msra.mxu0 %v4800
    %4819 = vmatprep.subr.mxu0 0.0
    %4820 = vmatpush1.msra.mxu0 %v4801
    %4821 = vmatprep.subr.mxu0 0.0
    %4822 = vmatpush1.msra.mxu0 %v4802
    %4823 = vmatprep.subr.mxu0 0.0
    %4824 = vmatpush1.msra.mxu0 %v4803
    %4825 = vmatprep.subr.mxu0 0.0
    %4826 = vmatpush1.msra.mxu0 %v4804
    %4827 = vmatprep.subr.mxu0 0.0
    %4828 = vmatpush1.msra.mxu0 %v4805
    %4829 = vmatprep.subr.mxu0 0.0
    %4830 = vmatpush1.msra.mxu0 %v4806
    %4831 = vmatprep.subr.mxu0 0.0
    %4832 = vmatpush1.msra.mxu0 %v4807
    %4833 = vmatprep.subr.mxu0 0.0
    %4834 = vmatpush1.msra.mxu0 %v4808
    %4835 = vmatprep.subr.mxu0 0.0
    %4836 = vmatpush1.msra.mxu0 %v4809
    %4837 = vmatprep.subr.mxu0 0.0
    %4838 = vmatpush1.msra.mxu0 %v4810
    %4839 = vmatprep.subr.mxu0 0.0
    %4840 = vmatpush1.msra.mxu0 0.0
    %4841 = vmatprep.subr.mxu0 0.0
    %4842 = vmatpush1.msra.mxu0 0.0
    %4843 = vmatprep.subr.mxu0 0.0
    %4844 = vmatpush1.msra.mxu0 0.0
    %4845 = vmatprep.subr.mxu0 0.0
    %4846 = vmatpush1.msra.mxu0 0.0
    %4847 = vmatprep.subr.mxu0 0.0
    %4848 = vmatpush1.msra.mxu0 0.0
    %4849 = vmatprep.subr.mxu0 0.0
    %4850 = vmatpush1.msra.mxu0 0.0
    %4851 = vmatprep.subr.mxu0 0.0
    %4852 = vmatpush1.msra.mxu0 0.0
    %4853 = vmatprep.subr.mxu0 0.0
    %4854 = vmatpush1.msra.mxu0 0.0
    %4855 = vmatprep.subr.mxu0 0.0
    %4856 = vmatpush1.msra.mxu0 0.0
    %4857 = vmatprep.subr.mxu0 0.0
    %4858 = vmatpush1.msra.mxu0 0.0
    %4859 = vmatprep.subr.mxu0 0.0
    %4860 = vmatpush1.msra.mxu0 0.0
    %4861 = vmatprep.subr.mxu0 0.0
    %4862 = vmatpush1.msra.mxu0 0.0
    %4863 = vmatprep.subr.mxu0 0.0
    %4864 = vmatpush1.msra.mxu0 0.0
    %4865 = vmatprep.subr.mxu0 0.0
    %4866 = vmatpush1.msra.mxu0 0.0
    %4867 = vmatprep.subr.mxu0 0.0
    %4868 = vmatpush1.msra.mxu0 0.0
    %4869 = vmatprep.subr.mxu0 0.0
    %4870 = vmatpush1.msra.mxu0 0.0
    %4871 = vmatprep.subr.mxu0 0.0
    %4872 = vmatpush1.msra.mxu0 0.0
    %4873 = vmatprep.subr.mxu0 0.0
    %4874 = vmatpush1.msra.mxu0 0.0
    %4875 = vmatprep.subr.mxu0 0.0
    %4876 = vmatpush1.msra.mxu0 0.0
    %4877 = vmatprep.subr.mxu0 0.0
    %4878 = vmatpush1.msra.mxu0 0.0
    %4879 = vmatprep.subr.mxu0 0.0
    %4880 = vmatpush1.msra.mxu0 0.0
    %4881 = vmatprep.mubr.f32.mxu0 0.0
    %4882 = vmatmul.mubr.f32.gmra.mrb[0].mxu0 %v4815
    %v4883 = vpop.f32.mrb[0].mxu0
    %v4884 = vadd.f32 0.0, %v4883
    %v4885 = vpop.f32.mrb[0].mxu0
    %4886 = vdwg.mxu0
    %v4887 = vadd.f32 %v4797, %v4884
    %v4888 = vld [vmem:[%s1014] sm:$0xff]
    %v4889 = vld [vmem:[%s1014 + $0x8] sm:$0xff]
    %v4890 = vld [vmem:[%s1014 + $0x10] sm:$0xff]
    %v4891 = vld [vmem:[%s1014 + $0x18] sm:$0xff]
    %v4892 = vld [vmem:[%s1014 + $0x20] sm:$0xff]
    %v4893 = vld [vmem:[%s1014 + $0x28] sm:$0xff]
    %v4894 = vld [vmem:[%s1014 + $0x30] sm:$0xff]
    %v4895 = vld [vmem:[%s1014 + $0x38] sm:$0xff]
    %v4896 = vld [vmem:[%s1014 + $0x40] sm:$0xff]
    %v4897 = vld [vmem:[%s1014 + $0x48] sm:$0xff]
    %v4898 = vld [vmem:[%s1014 + $0x50] sm:$0xff]
    %v4899 = vrot.slane %v4630, 3
    %v4900 = vrot.slane %v4631, 3
    %v4901 = vsel %vm1026, %v4899, %v4900
    %v4902 = vsel %vm780, %v4901, 0
    %4904 = vmatprep.subr.mxu0 0.0
    %4905 = vmatpush1.msra.mxu0 %v4888
    %4906 = vmatprep.subr.mxu0 0.0
    %4907 = vmatpush1.msra.mxu0 %v4889
    %4908 = vmatprep.subr.mxu0 0.0
    %4909 = vmatpush1.msra.mxu0 %v4890
    %4910 = vmatprep.subr.mxu0 0.0
    %4911 = vmatpush1.msra.mxu0 %v4891
    %4912 = vmatprep.subr.mxu0 0.0
    %4913 = vmatpush1.msra.mxu0 %v4892
    %4914 = vmatprep.subr.mxu0 0.0
    %4915 = vmatpush1.msra.mxu0 %v4893
    %4916 = vmatprep.subr.mxu0 0.0
    %4917 = vmatpush1.msra.mxu0 %v4894
    %4918 = vmatprep.subr.mxu0 0.0
    %4919 = vmatpush1.msra.mxu0 %v4895
    %4920 = vmatprep.subr.mxu0 0.0
    %4921 = vmatpush1.msra.mxu0 %v4896
    %4922 = vmatprep.subr.mxu0 0.0
    %4923 = vmatpush1.msra.mxu0 %v4897
    %4924 = vmatprep.subr.mxu0 0.0
    %4925 = vmatpush1.msra.mxu0 %v4898
    %4926 = vmatprep.subr.mxu0 0.0
    %4927 = vmatpush1.msra.mxu0 0.0
    %4928 = vmatprep.subr.mxu0 0.0
    %4929 = vmatpush1.msra.mxu0 0.0
    %4930 = vmatprep.subr.mxu0 0.0
    %4931 = vmatpush1.msra.mxu0 0.0
    %4932 = vmatprep.subr.mxu0 0.0
    %4933 = vmatpush1.msra.mxu0 0.0
    %4934 = vmatprep.subr.mxu0 0.0
    %4935 = vmatpush1.msra.mxu0 0.0
    %4936 = vmatprep.subr.mxu0 0.0
    %4937 = vmatpush1.msra.mxu0 0.0
    %4938 = vmatprep.subr.mxu0 0.0
    %4939 = vmatpush1.msra.mxu0 0.0
    %4940 = vmatprep.subr.mxu0 0.0
    %4941 = vmatpush1.msra.mxu0 0.0
    %4942 = vmatprep.subr.mxu0 0.0
    %4943 = vmatpush1.msra.mxu0 0.0
    %4944 = vmatprep.subr.mxu0 0.0
    %4945 = vmatpush1.msra.mxu0 0.0
    %4946 = vmatprep.subr.mxu0 0.0
    %4947 = vmatpush1.msra.mxu0 0.0
    %4948 = vmatprep.subr.mxu0 0.0
    %4949 = vmatpush1.msra.mxu0 0.0
    %4950 = vmatprep.subr.mxu0 0.0
    %4951 = vmatpush1.msra.mxu0 0.0
    %4952 = vmatprep.subr.mxu0 0.0
    %4953 = vmatpush1.msra.mxu0 0.0
    %4954 = vmatprep.subr.mxu0 0.0
    %4955 = vmatpush1.msra.mxu0 0.0
    %4956 = vmatprep.subr.mxu0 0.0
    %4957 = vmatpush1.msra.mxu0 0.0
    %4958 = vmatprep.subr.mxu0 0.0
    %4959 = vmatpush1.msra.mxu0 0.0
    %4960 = vmatprep.subr.mxu0 0.0
    %4961 = vmatpush1.msra.mxu0 0.0
    %4962 = vmatprep.subr.mxu0 0.0
    %4963 = vmatpush1.msra.mxu0 0.0
    %4964 = vmatprep.subr.mxu0 0.0
    %4965 = vmatpush1.msra.mxu0 0.0
    %4966 = vmatprep.subr.mxu0 0.0
    %4967 = vmatpush1.msra.mxu0 0.0
    %4968 = vmatprep.mubr.f32.mxu0 0.0
    %4969 = vmatmul.mubr.f32.gmra.mrb[0].mxu0 %v4902
    %v4970 = vpop.f32.mrb[0].mxu0
    %v4971 = vadd.f32 0.0, %v4970
    %v4972 = vpop.f32.mrb[0].mxu0
    %4973 = vdwg.mxu0
    %v4974 = vadd.f32 %v4887, %v4971
    %v4975 = vld [vmem:[%s1103] sm:$0xff]
    %v4976 = vld [vmem:[%s1103 + $0x8] sm:$0xff]
    %v4977 = vld [vmem:[%s1103 + $0x10] sm:$0xff]
    %v4978 = vld [vmem:[%s1103 + $0x18] sm:$0xff]
    %v4979 = vld [vmem:[%s1103 + $0x20] sm:$0xff]
    %v4980 = vld [vmem:[%s1103 + $0x28] sm:$0xff]
    %v4981 = vld [vmem:[%s1103 + $0x30] sm:$0xff]
    %v4982 = vld [vmem:[%s1103 + $0x38] sm:$0xff]
    %v4983 = vld [vmem:[%s1103 + $0x40] sm:$0xff]
    %v4984 = vld [vmem:[%s1103 + $0x48] sm:$0xff]
    %v4985 = vld [vmem:[%s1103 + $0x50] sm:$0xff]
    %v4986 = vrot.slane %v4630, 4
    %v4987 = vrot.slane %v4631, 4
    %v4988 = vsel %vm111, %v4986, %v4987
    %v4989 = vsel %vm780, %v4988, 0
    %4991 = vmatprep.subr.mxu0 0.0
    %4992 = vmatpush1.msra.mxu0 %v4975
    %4993 = vmatprep.subr.mxu0 0.0
    %4994 = vmatpush1.msra.mxu0 %v4976
    %4995 = vmatprep.subr.mxu0 0.0
    %4996 = vmatpush1.msra.mxu0 %v4977
    %4997 = vmatprep.subr.mxu0 0.0
    %4998 = vmatpush1.msra.mxu0 %v4978
    %4999 = vmatprep.subr.mxu0 0.0
    %5000 = vmatpush1.msra.mxu0 %v4979
    %5001 = vmatprep.subr.mxu0 0.0
    %5002 = vmatpush1.msra.mxu0 %v4980
    %5003 = vmatprep.subr.mxu0 0.0
    %5004 = vmatpush1.msra.mxu0 %v4981
    %5005 = vmatprep.subr.mxu0 0.0
    %5006 = vmatpush1.msra.mxu0 %v4982
    %5007 = vmatprep.subr.mxu0 0.0
    %5008 = vmatpush1.msra.mxu0 %v4983
    %5009 = vmatprep.subr.mxu0 0.0
    %5010 = vmatpush1.msra.mxu0 %v4984
    %5011 = vmatprep.subr.mxu0 0.0
    %5012 = vmatpush1.msra.mxu0 %v4985
    %5013 = vmatprep.subr.mxu0 0.0
    %5014 = vmatpush1.msra.mxu0 0.0
    %5015 = vmatprep.subr.mxu0 0.0
    %5016 = vmatpush1.msra.mxu0 0.0
    %5017 = vmatprep.subr.mxu0 0.0
    %5018 = vmatpush1.msra.mxu0 0.0
    %5019 = vmatprep.subr.mxu0 0.0
    %5020 = vmatpush1.msra.mxu0 0.0
    %5021 = vmatprep.subr.mxu0 0.0
    %5022 = vmatpush1.msra.mxu0 0.0
    %5023 = vmatprep.subr.mxu0 0.0
    %5024 = vmatpush1.msra.mxu0 0.0
    %5025 = vmatprep.subr.mxu0 0.0
    %5026 = vmatpush1.msra.mxu0 0.0
    %5027 = vmatprep.subr.mxu0 0.0
    %5028 = vmatpush1.msra.mxu0 0.0
    %5029 = vmatprep.subr.mxu0 0.0
    %5030 = vmatpush1.msra.mxu0 0.0
    %5031 = vmatprep.subr.mxu0 0.0
    %5032 = vmatpush1.msra.mxu0 0.0
    %5033 = vmatprep.subr.mxu0 0.0
    %5034 = vmatpush1.msra.mxu0 0.0
    %5035 = vmatprep.subr.mxu0 0.0
    %5036 = vmatpush1.msra.mxu0 0.0
    %5037 = vmatprep.subr.mxu0 0.0
    %5038 = vmatpush1.msra.mxu0 0.0
    %5039 = vmatprep.subr.mxu0 0.0
    %5040 = vmatpush1.msra.mxu0 0.0
    %5041 = vmatprep.subr.mxu0 0.0
    %5042 = vmatpush1.msra.mxu0 0.0
    %5043 = vmatprep.subr.mxu0 0.0
    %5044 = vmatpush1.msra.mxu0 0.0
    %5045 = vmatprep.subr.mxu0 0.0
    %5046 = vmatpush1.msra.mxu0 0.0
    %5047 = vmatprep.subr.mxu0 0.0
    %5048 = vmatpush1.msra.mxu0 0.0
    %5049 = vmatprep.subr.mxu0 0.0
    %5050 = vmatpush1.msra.mxu0 0.0
    %5051 = vmatprep.subr.mxu0 0.0
    %5052 = vmatpush1.msra.mxu0 0.0
    %5053 = vmatprep.subr.mxu0 0.0
    %5054 = vmatpush1.msra.mxu0 0.0
    %5055 = vmatprep.mubr.f32.mxu0 0.0
    %5056 = vmatmul.mubr.f32.gmra.mrb[0].mxu0 %v4989
    %v5057 = vpop.f32.mrb[0].mxu0
    %v5058 = vadd.f32 0.0, %v5057
    %v5059 = vpop.f32.mrb[0].mxu0
    %5060 = vdwg.mxu0
    %v5061 = vadd.f32 %v4974, %v5058
    %v5062 = vld [vmem:[%s7] sm:$0x7]
    %v5064 = vsel %vm1192, %v5062, 0
    %v5067 = vsel %vm1196, %v5061, 0
    %5069 = vmatprep.subr.mxu0 0.0
    %5070 = vmatpush1.msra.mxu0 %v5067
    %5071 = vmatprep.subr.mxu0 0.0
    %5072 = vmatpush1.msra.mxu0 0.0
    %5073 = vmatprep.subr.mxu0 0.0
    %5074 = vmatpush1.msra.mxu0 0.0
    %5075 = vmatprep.subr.mxu0 0.0
    %5076 = vmatpush1.msra.mxu0 0.0
    %5077 = vmatprep.subr.mxu0 0.0
    %5078 = vmatpush1.msra.mxu0 0.0
    %5079 = vmatprep.subr.mxu0 0.0
    %5080 = vmatpush1.msra.mxu0 0.0
    %5081 = vmatprep.subr.mxu0 0.0
    %5082 = vmatpush1.msra.mxu0 0.0
    %5083 = vmatprep.subr.mxu0 0.0
    %5084 = vmatpush1.msra.mxu0 0.0
    %5085 = vmatprep.subr.mxu0 0.0
    %5086 = vmatpush1.msra.mxu0 0.0
    %5087 = vmatprep.subr.mxu0 0.0
    %5088 = vmatpush1.msra.mxu0 0.0
    %5089 = vmatprep.subr.mxu0 0.0
    %5090 = vmatpush1.msra.mxu0 0.0
    %5091 = vmatprep.subr.mxu0 0.0
    %5092 = vmatpush1.msra.mxu0 0.0
    %5093 = vmatprep.subr.mxu0 0.0
    %5094 = vmatpush1.msra.mxu0 0.0
    %5095 = vmatprep.subr.mxu0 0.0
    %5096 = vmatpush1.msra.mxu0 0.0
    %5097 = vmatprep.subr.mxu0 0.0
    %5098 = vmatpush1.msra.mxu0 0.0
    %5099 = vmatprep.subr.mxu0 0.0
    %5100 = vmatpush1.msra.mxu0 0.0
    %5101 = vmatprep.subr.mxu0 0.0
    %5102 = vmatpush1.msra.mxu0 0.0
    %5103 = vmatprep.subr.mxu0 0.0
    %5104 = vmatpush1.msra.mxu0 0.0
    %5105 = vmatprep.subr.mxu0 0.0
    %5106 = vmatpush1.msra.mxu0 0.0
    %5107 = vmatprep.subr.mxu0 0.0
    %5108 = vmatpush1.msra.mxu0 0.0
    %5109 = vmatprep.subr.mxu0 0.0
    %5110 = vmatpush1.msra.mxu0 0.0
    %5111 = vmatprep.subr.mxu0 0.0
    %5112 = vmatpush1.msra.mxu0 0.0
    %5113 = vmatprep.subr.mxu0 0.0
    %5114 = vmatpush1.msra.mxu0 0.0
    %5115 = vmatprep.subr.mxu0 0.0
    %5116 = vmatpush1.msra.mxu0 0.0
    %5117 = vmatprep.subr.mxu0 0.0
    %5118 = vmatpush1.msra.mxu0 0.0
    %5119 = vmatprep.subr.mxu0 0.0
    %5120 = vmatpush1.msra.mxu0 0.0
    %5121 = vmatprep.subr.mxu0 0.0
    %5122 = vmatpush1.msra.mxu0 0.0
    %5123 = vmatprep.subr.mxu0 0.0
    %5124 = vmatpush1.msra.mxu0 0.0
    %5125 = vmatprep.subr.mxu0 0.0
    %5126 = vmatpush1.msra.mxu0 0.0
    %5127 = vmatprep.subr.mxu0 0.0
    %5128 = vmatpush1.msra.mxu0 0.0
    %5129 = vmatprep.subr.mxu0 0.0
    %5130 = vmatpush1.msra.mxu0 0.0
    %5131 = vmatprep.subr.mxu0 0.0
    %5132 = vmatpush1.msra.mxu0 0.0
    %5133 = vmatprep.mubr.f32.mxu0 0.0
    %5134 = vmatmul.mubr.f32.gmra.mrb[0].mxu0 %v5064
    %v5135 = vpop.f32.mrb[0].mxu0
    %v5136 = vadd.f32 0.0, %v5135
    %v5137 = vpop.f32.mrb[0].mxu0
    %5138 = vdwg.mxu0
    %v5139 = vld [vmem:[%s1270] sm:$0x7]
    %v5141 = vsel %vm1192, %v5139, 0
    %5143 = vmatprep.subr.mxu0 0.0
    %5144 = vmatpush1.msra.mxu0 %v5067
    %5145 = vmatprep.subr.mxu0 0.0
    %5146 = vmatpush1.msra.mxu0 0.0
    %5147 = vmatprep.subr.mxu0 0.0
    %5148 = vmatpush1.msra.mxu0 0.0
    %5149 = vmatprep.subr.mxu0 0.0
    %5150 = vmatpush1.msra.mxu0 0.0
    %5151 = vmatprep.subr.mxu0 0.0
    %5152 = vmatpush1.msra.mxu0 0.0
    %5153 = vmatprep.subr.mxu0 0.0
    %5154 = vmatpush1.msra.mxu0 0.0
    %5155 = vmatprep.subr.mxu0 0.0
    %5156 = vmatpush1.msra.mxu0 0.0
    %5157 = vmatprep.subr.mxu0 0.0
    %5158 = vmatpush1.msra.mxu0 0.0
    %5159 = vmatprep.subr.mxu0 0.0
    %5160 = vmatpush1.msra.mxu0 0.0
    %5161 = vmatprep.subr.mxu0 0.0
    %5162 = vmatpush1.msra.mxu0 0.0
    %5163 = vmatprep.subr.mxu0 0.0
    %5164 = vmatpush1.msra.mxu0 0.0
    %5165 = vmatprep.subr.mxu0 0.0
    %5166 = vmatpush1.msra.mxu0 0.0
    %5167 = vmatprep.subr.mxu0 0.0
    %5168 = vmatpush1.msra.mxu0 0.0
    %5169 = vmatprep.subr.mxu0 0.0
    %5170 = vmatpush1.msra.mxu0 0.0
    %5171 = vmatprep.subr.mxu0 0.0
    %5172 = vmatpush1.msra.mxu0 0.0
    %5173 = vmatprep.subr.mxu0 0.0
    %5174 = vmatpush1.msra.mxu0 0.0
    %5175 = vmatprep.subr.mxu0 0.0
    %5176 = vmatpush1.msra.mxu0 0.0
    %5177 = vmatprep.subr.mxu0 0.0
    %5178 = vmatpush1.msra.mxu0 0.0
    %5179 = vmatprep.subr.mxu0 0.0
    %5180 = vmatpush1.msra.mxu0 0.0
    %5181 = vmatprep.subr.mxu0 0.0
    %5182 = vmatpush1.msra.mxu0 0.0
    %5183 = vmatprep.subr.mxu0 0.0
    %5184 = vmatpush1.msra.mxu0 0.0
    %5185 = vmatprep.subr.mxu0 0.0
    %5186 = vmatpush1.msra.mxu0 0.0
    %5187 = vmatprep.subr.mxu0 0.0
    %5188 = vmatpush1.msra.mxu0 0.0
    %5189 = vmatprep.subr.mxu0 0.0
    %5190 = vmatpush1.msra.mxu0 0.0
    %5191 = vmatprep.subr.mxu0 0.0
    %5192 = vmatpush1.msra.mxu0 0.0
    %5193 = vmatprep.subr.mxu0 0.0
    %5194 = vmatpush1.msra.mxu0 0.0
    %5195 = vmatprep.subr.mxu0 0.0
    %5196 = vmatpush1.msra.mxu0 0.0
    %5197 = vmatprep.subr.mxu0 0.0
    %5198 = vmatpush1.msra.mxu0 0.0
    %5199 = vmatprep.subr.mxu0 0.0
    %5200 = vmatpush1.msra.mxu0 0.0
    %5201 = vmatprep.subr.mxu0 0.0
    %5202 = vmatpush1.msra.mxu0 0.0
    %5203 = vmatprep.subr.mxu0 0.0
    %5204 = vmatpush1.msra.mxu0 0.0
    %5205 = vmatprep.subr.mxu0 0.0
    %5206 = vmatpush1.msra.mxu0 0.0
    %5207 = vmatprep.mubr.f32.mxu0 0.0
    %5208 = vmatmul.mubr.f32.gmra.mrb[0].mxu0 %v5141
    %v5209 = vpop.f32.mrb[0].mxu0
    %v5210 = vadd.f32 0.0, %v5209
    %v5211 = vpop.f32.mrb[0].mxu0
    %5212 = vdwg.mxu0
    %v5213 = vld [vmem:[%s8] sm:$0xff]
    %v5214 = vld [vmem:[%s8 + $0x8] sm:$0xff]
    %v5215 = vld [vmem:[%s8 + $0x10] sm:$0xff]
    %v5216 = vld [vmem:[%s8 + $0x18] sm:$0xff]
    %v5217 = vld [vmem:[%s8 + $0x20] sm:$0xff]
    %v5218 = vld [vmem:[%s8 + $0x28] sm:$0xff]
    %v5219 = vld [vmem:[%s8 + $0x30] sm:$0xff]
    %v5220 = vld [vmem:[%s8 + $0x38] sm:$0xff]
    %v5221 = vld [vmem:[%s8 + $0x40] sm:$0x3f]
    %v5223 = vsel %vm1354, %v5136, 0
    %v5226 = vsel %vm210, %v5221, 0
    %5228 = vmatprep.subr.mxu0 0.0
    %5229 = vmatpush1.msra.mxu0 %v5213
    %5230 = vmatprep.subr.mxu0 0.0
    %5231 = vmatpush1.msra.mxu0 %v5214
    %5232 = vmatprep.subr.mxu0 0.0
    %5233 = vmatpush1.msra.mxu0 %v5215
    %5234 = vmatprep.subr.mxu0 0.0
    %5235 = vmatpush1.msra.mxu0 %v5216
    %5236 = vmatprep.subr.mxu0 0.0
    %5237 = vmatpush1.msra.mxu0 %v5217
    %5238 = vmatprep.subr.mxu0 0.0
    %5239 = vmatpush1.msra.mxu0 %v5218
    %5240 = vmatprep.subr.mxu0 0.0
    %5241 = vmatpush1.msra.mxu0 %v5219
    %5242 = vmatprep.subr.mxu0 0.0
    %5243 = vmatpush1.msra.mxu0 %v5220
    %5244 = vmatprep.subr.mxu0 0.0
    %5245 = vmatpush1.msra.mxu0 %v5226
    %5246 = vmatprep.subr.mxu0 0.0
    %5247 = vmatpush1.msra.mxu0 0.0
    %5248 = vmatprep.subr.mxu0 0.0
    %5249 = vmatpush1.msra.mxu0 0.0
    %5250 = vmatprep.subr.mxu0 0.0
    %5251 = vmatpush1.msra.mxu0 0.0
    %5252 = vmatprep.subr.mxu0 0.0
    %5253 = vmatpush1.msra.mxu0 0.0
    %5254 = vmatprep.subr.mxu0 0.0
    %5255 = vmatpush1.msra.mxu0 0.0
    %5256 = vmatprep.subr.mxu0 0.0
    %5257 = vmatpush1.msra.mxu0 0.0
    %5258 = vmatprep.subr.mxu0 0.0
    %5259 = vmatpush1.msra.mxu0 0.0
    %5260 = vmatprep.subr.mxu0 0.0
    %5261 = vmatpush1.msra.mxu0 0.0
    %5262 = vmatprep.subr.mxu0 0.0
    %5263 = vmatpush1.msra.mxu0 0.0
    %5264 = vmatprep.subr.mxu0 0.0
    %5265 = vmatpush1.msra.mxu0 0.0
    %5266 = vmatprep.subr.mxu0 0.0
    %5267 = vmatpush1.msra.mxu0 0.0
    %5268 = vmatprep.subr.mxu0 0.0
    %5269 = vmatpush1.msra.mxu0 0.0
    %5270 = vmatprep.subr.mxu0 0.0
    %5271 = vmatpush1.msra.mxu0 0.0
    %5272 = vmatprep.subr.mxu0 0.0
    %5273 = vmatpush1.msra.mxu0 0.0
    %5274 = vmatprep.subr.mxu0 0.0
    %5275 = vmatpush1.msra.mxu0 0.0
    %5276 = vmatprep.subr.mxu0 0.0
    %5277 = vmatpush1.msra.mxu0 0.0
    %5278 = vmatprep.subr.mxu0 0.0
    %5279 = vmatpush1.msra.mxu0 0.0
    %5280 = vmatprep.subr.mxu0 0.0
    %5281 = vmatpush1.msra.mxu0 0.0
    %5282 = vmatprep.subr.mxu0 0.0
    %5283 = vmatpush1.msra.mxu0 0.0
    %5284 = vmatprep.subr.mxu0 0.0
    %5285 = vmatpush1.msra.mxu0 0.0
    %5286 = vmatprep.subr.mxu0 0.0
    %5287 = vmatpush1.msra.mxu0 0.0
    %5288 = vmatprep.subr.mxu0 0.0
    %5289 = vmatpush1.msra.mxu0 0.0
    %5290 = vmatprep.subr.mxu0 0.0
    %5291 = vmatpush1.msra.mxu0 0.0
    %5292 = vmatprep.mubr.f32.mxu0 0.0
    %5293 = vmatmul.mubr.f32.gmra.mrb[0].mxu0 %v5223
    %v5294 = vpop.f32.mrb[0].mxu0
    %v5295 = vadd.f32 0.0, %v5294
    %v5296 = vpop.f32.mrb[0].mxu0
    %5297 = vdwg.mxu0
    %v5298 = vld [vmem:[%s1431] sm:$0xff]
    %v5299 = vld [vmem:[%s1431 + $0x8] sm:$0xff]
    %v5300 = vld [vmem:[%s1431 + $0x10] sm:$0xff]
    %v5301 = vld [vmem:[%s1431 + $0x18] sm:$0xff]
    %v5302 = vld [vmem:[%s1431 + $0x20] sm:$0xff]
    %v5303 = vld [vmem:[%s1431 + $0x28] sm:$0xff]
    %v5304 = vld [vmem:[%s1431 + $0x30] sm:$0xff]
    %v5305 = vld [vmem:[%s1431 + $0x38] sm:$0xff]
    %v5306 = vld [vmem:[%s1431 + $0x40] sm:$0x3f]
    %v5308 = vsel %vm210, %v5306, 0
    %5310 = vmatprep.subr.mxu0 0.0
    %5311 = vmatpush1.msra.mxu0 %v5298
    %5312 = vmatprep.subr.mxu0 0.0
    %5313 = vmatpush1.msra.mxu0 %v5299
    %5314 = vmatprep.subr.mxu0 0.0
    %5315 = vmatpush1.msra.mxu0 %v5300
    %5316 = vmatprep.subr.mxu0 0.0
    %5317 = vmatpush1.msra.mxu0 %v5301
    %5318 = vmatprep.subr.mxu0 0.0
    %5319 = vmatpush1.msra.mxu0 %v5302
    %5320 = vmatprep.subr.mxu0 0.0
    %5321 = vmatpush1.msra.mxu0 %v5303
    %5322 = vmatprep.subr.mxu0 0.0
    %5323 = vmatpush1.msra.mxu0 %v5304
    %5324 = vmatprep.subr.mxu0 0.0
    %5325 = vmatpush1.msra.mxu0 %v5305
    %5326 = vmatprep.subr.mxu0 0.0
    %5327 = vmatpush1.msra.mxu0 %v5308
    %5328 = vmatprep.subr.mxu0 0.0
    %5329 = vmatpush1.msra.mxu0 0.0
    %5330 = vmatprep.subr.mxu0 0.0
    %5331 = vmatpush1.msra.mxu0 0.0
    %5332 = vmatprep.subr.mxu0 0.0
    %5333 = vmatpush1.msra.mxu0 0.0
    %5334 = vmatprep.subr.mxu0 0.0
    %5335 = vmatpush1.msra.mxu0 0.0
    %5336 = vmatprep.subr.mxu0 0.0
    %5337 = vmatpush1.msra.mxu0 0.0
    %5338 = vmatprep.subr.mxu0 0.0
    %5339 = vmatpush1.msra.mxu0 0.0
    %5340 = vmatprep.subr.mxu0 0.0
    %5341 = vmatpush1.msra.mxu0 0.0
    %5342 = vmatprep.subr.mxu0 0.0
    %5343 = vmatpush1.msra.mxu0 0.0
    %5344 = vmatprep.subr.mxu0 0.0
    %5345 = vmatpush1.msra.mxu0 0.0
    %5346 = vmatprep.subr.mxu0 0.0
    %5347 = vmatpush1.msra.mxu0 0.0
    %5348 = vmatprep.subr.mxu0 0.0
    %5349 = vmatpush1.msra.mxu0 0.0
    %5350 = vmatprep.subr.mxu0 0.0
    %5351 = vmatpush1.msra.mxu0 0.0
    %5352 = vmatprep.subr.mxu0 0.0
    %5353 = vmatpush1.msra.mxu0 0.0
    %5354 = vmatprep.subr.mxu0 0.0
    %5355 = vmatpush1.msra.mxu0 0.0
    %5356 = vmatprep.subr.mxu0 0.0
    %5357 = vmatpush1.msra.mxu0 0.0
    %5358 = vmatprep.subr.mxu0 0.0
    %5359 = vmatpush1.msra.mxu0 0.0
    %5360 = vmatprep.subr.mxu0 0.0
    %5361 = vmatpush1.msra.mxu0 0.0
    %5362 = vmatprep.subr.mxu0 0.0
    %5363 = vmatpush1.msra.mxu0 0.0
    %5364 = vmatprep.subr.mxu0 0.0
    %5365 = vmatpush1.msra.mxu0 0.0
    %5366 = vmatprep.subr.mxu0 0.0
    %5367 = vmatpush1.msra.mxu0 0.0
    %5368 = vmatprep.subr.mxu0 0.0
    %5369 = vmatpush1.msra.mxu0 0.0
    %5370 = vmatprep.subr.mxu0 0.0
    %5371 = vmatpush1.msra.mxu0 0.0
    %5372 = vmatprep.subr.mxu0 0.0
    %5373 = vmatpush1.msra.mxu0 0.0
    %5374 = vmatprep.mubr.f32.mxu0 0.0
    %5375 = vmatmul.mubr.f32.gmra.mrb[0].mxu0 %v5223
    %v5376 = vpop.f32.mrb[0].mxu0
    %v5377 = vadd.f32 0.0, %v5376
    %v5378 = vpop.f32.mrb[0].mxu0
    %5379 = vdwg.mxu0
    %v5380 = vmax.f32 %v5295, %v5377
    %v5382 = vsel %vm1354, %v5210, 0
    %5384 = vmatprep.subr.mxu0 0.0
    %5385 = vmatpush1.msra.mxu0 %v5213
    %5386 = vmatprep.subr.mxu0 0.0
    %5387 = vmatpush1.msra.mxu0 %v5214
    %5388 = vmatprep.subr.mxu0 0.0
    %5389 = vmatpush1.msra.mxu0 %v5215
    %5390 = vmatprep.subr.mxu0 0.0
    %5391 = vmatpush1.msra.mxu0 %v5216
    %5392 = vmatprep.subr.mxu0 0.0
    %5393 = vmatpush1.msra.mxu0 %v5217
    %5394 = vmatprep.subr.mxu0 0.0
    %5395 = vmatpush1.msra.mxu0 %v5218
    %5396 = vmatprep.subr.mxu0 0.0
    %5397 = vmatpush1.msra.mxu0 %v5219
    %5398 = vmatprep.subr.mxu0 0.0
    %5399 = vmatpush1.msra.mxu0 %v5220
    %5400 = vmatprep.subr.mxu0 0.0
    %5401 = vmatpush1.msra.mxu0 %v5226
    %5402 = vmatprep.subr.mxu0 0.0
    %5403 = vmatpush1.msra.mxu0 0.0
    %5404 = vmatprep.subr.mxu0 0.0
    %5405 = vmatpush1.msra.mxu0 0.0
    %5406 = vmatprep.subr.mxu0 0.0
    %5407 = vmatpush1.msra.mxu0 0.0
    %5408 = vmatprep.subr.mxu0 0.0
    %5409 = vmatpush1.msra.mxu0 0.0
    %5410 = vmatprep.subr.mxu0 0.0
    %5411 = vmatpush1.msra.mxu0 0.0
    %5412 = vmatprep.subr.mxu0 0.0
    %5413 = vmatpush1.msra.mxu0 0.0
    %5414 = vmatprep.subr.mxu0 0.0
    %5415 = vmatpush1.msra.mxu0 0.0
    %5416 = vmatprep.subr.mxu0 0.0
    %5417 = vmatpush1.msra.mxu0 0.0
    %5418 = vmatprep.subr.mxu0 0.0
    %5419 = vmatpush1.msra.mxu0 0.0
    %5420 = vmatprep.subr.mxu0 0.0
    %5421 = vmatpush1.msra.mxu0 0.0
    %5422 = vmatprep.subr.mxu0 0.0
    %5423 = vmatpush1.msra.mxu0 0.0
    %5424 = vmatprep.subr.mxu0 0.0
    %5425 = vmatpush1.msra.mxu0 0.0
    %5426 = vmatprep.subr.mxu0 0.0
    %5427 = vmatpush1.msra.mxu0 0.0
    %5428 = vmatprep.subr.mxu0 0.0
    %5429 = vmatpush1.msra.mxu0 0.0
    %5430 = vmatprep.subr.mxu0 0.0
    %5431 = vmatpush1.msra.mxu0 0.0
    %5432 = vmatprep.subr.mxu0 0.0
    %5433 = vmatpush1.msra.mxu0 0.0
    %5434 = vmatprep.subr.mxu0 0.0
    %5435 = vmatpush1.msra.mxu0 0.0
    %5436 = vmatprep.subr.mxu0 0.0
    %5437 = vmatpush1.msra.mxu0 0.0
    %5438 = vmatprep.subr.mxu0 0.0
    %5439 = vmatpush1.msra.mxu0 0.0
    %5440 = vmatprep.subr.mxu0 0.0
    %5441 = vmatpush1.msra.mxu0 0.0
    %5442 = vmatprep.subr.mxu0 0.0
    %5443 = vmatpush1.msra.mxu0 0.0
    %5444 = vmatprep.subr.mxu0 0.0
    %5445 = vmatpush1.msra.mxu0 0.0
    %5446 = vmatprep.subr.mxu0 0.0
    %5447 = vmatpush1.msra.mxu0 0.0
    %5448 = vmatprep.mubr.f32.mxu0 0.0
    %5449 = vmatmul.mubr.f32.gmra.mrb[0].mxu0 %v5382
    %v5450 = vpop.f32.mrb[0].mxu0
    %v5451 = vadd.f32 0.0, %v5450
    %v5452 = vpop.f32.mrb[0].mxu0
    %5453 = vdwg.mxu0
    %5454 = vmatprep.subr.mxu0 0.0
    %5455 = vmatpush1.msra.mxu0 %v5298
    %5456 = vmatprep.subr.mxu0 0.0
    %5457 = vmatpush1.msra.mxu0 %v5299
    %5458 = vmatprep.subr.mxu0 0.0
    %5459 = vmatpush1.msra.mxu0 %v5300
    %5460 = vmatprep.subr.mxu0 0.0
    %5461 = vmatpush1.msra.mxu0 %v5301
    %5462 = vmatprep.subr.mxu0 0.0
    %5463 = vmatpush1.msra.mxu0 %v5302
    %5464 = vmatprep.subr.mxu0 0.0
    %5465 = vmatpush1.msra.mxu0 %v5303
    %5466 = vmatprep.subr.mxu0 0.0
    %5467 = vmatpush1.msra.mxu0 %v5304
    %5468 = vmatprep.subr.mxu0 0.0
    %5469 = vmatpush1.msra.mxu0 %v5305
    %5470 = vmatprep.subr.mxu0 0.0
    %5471 = vmatpush1.msra.mxu0 %v5308
    %5472 = vmatprep.subr.mxu0 0.0
    %5473 = vmatpush1.msra.mxu0 0.0
    %5474 = vmatprep.subr.mxu0 0.0
    %5475 = vmatpush1.msra.mxu0 0.0
    %5476 = vmatprep.subr.mxu0 0.0
    %5477 = vmatpush1.msra.mxu0 0.0
    %5478 = vmatprep.subr.mxu0 0.0
    %5479 = vmatpush1.msra.mxu0 0.0
    %5480 = vmatprep.subr.mxu0 0.0
    %5481 = vmatpush1.msra.mxu0 0.0
    %5482 = vmatprep.subr.mxu0 0.0
    %5483 = vmatpush1.msra.mxu0 0.0
    %5484 = vmatprep.subr.mxu0 0.0
    %5485 = vmatpush1.msra.mxu0 0.0
    %5486 = vmatprep.subr.mxu0 0.0
    %5487 = vmatpush1.msra.mxu0 0.0
    %5488 = vmatprep.subr.mxu0 0.0
    %5489 = vmatpush1.msra.mxu0 0.0
    %5490 = vmatprep.subr.mxu0 0.0
    %5491 = vmatpush1.msra.mxu0 0.0
    %5492 = vmatprep.subr.mxu0 0.0
    %5493 = vmatpush1.msra.mxu0 0.0
    %5494 = vmatprep.subr.mxu0 0.0
    %5495 = vmatpush1.msra.mxu0 0.0
    %5496 = vmatprep.subr.mxu0 0.0
    %5497 = vmatpush1.msra.mxu0 0.0
    %5498 = vmatprep.subr.mxu0 0.0
    %5499 = vmatpush1.msra.mxu0 0.0
    %5500 = vmatprep.subr.mxu0 0.0
    %5501 = vmatpush1.msra.mxu0 0.0
    %5502 = vmatprep.subr.mxu0 0.0
    %5503 = vmatpush1.msra.mxu0 0.0
    %5504 = vmatprep.subr.mxu0 0.0
    %5505 = vmatpush1.msra.mxu0 0.0
    %5506 = vmatprep.subr.mxu0 0.0
    %5507 = vmatpush1.msra.mxu0 0.0
    %5508 = vmatprep.subr.mxu0 0.0
    %5509 = vmatpush1.msra.mxu0 0.0
    %5510 = vmatprep.subr.mxu0 0.0
    %5511 = vmatpush1.msra.mxu0 0.0
    %5512 = vmatprep.subr.mxu0 0.0
    %5513 = vmatpush1.msra.mxu0 0.0
    %5514 = vmatprep.subr.mxu0 0.0
    %5515 = vmatpush1.msra.mxu0 0.0
    %5516 = vmatprep.subr.mxu0 0.0
    %5517 = vmatpush1.msra.mxu0 0.0
    %5518 = vmatprep.mubr.f32.mxu0 0.0
    %5519 = vmatmul.mubr.f32.gmra.mrb[0].mxu0 %v5382
    %v5520 = vpop.f32.mrb[0].mxu0
    %v5521 = vadd.f32 0.0, %v5520
    %v5522 = vpop.f32.mrb[0].mxu0
    %5523 = vdwg.mxu0
    %v5524 = vmax.f32 %v5451, %v5521
    %v5525 = vmax.f32 %v5380, %v5524
    %v5526 = vld [vmem:[%s6] sm:$0x1]
    %v5528 = vlaneseq
    %v5529 = vshrl.u32 %v5528, 7
    %v5530 = vsub.s32 0, %v5529
    %v5531 = vrot.slane %v5526, %v5530
    %v5533 = vadd.f32 %v5525, %v5531
    %v5534 = vmax.f32 %v5533, 0.0
    %v5535 = vld [vmem:[%s9] sm:$0xff]
    %v5536 = vld [vmem:[%s9 + $0x8] sm:$0xff]
    %v5537 = vld [vmem:[%s9 + $0x10] sm:$0xff]
    %v5538 = vld [vmem:[%s9 + $0x18] sm:$0x3f]
    %v5539 = vld [vmem:[%s1673] sm:$0xff]
    %v5540 = vld [vmem:[%s1673 + $0x8] sm:$0xff]
    %v5541 = vld [vmem:[%s1673 + $0x10] sm:$0xff]
    %v5542 = vld [vmem:[%s1673 + $0x18] sm:$0x3f]
    %v5544 = vrot.slane %v5534, 1
    %v5545 = vsel %vm1680, %v5544, 0
    %v5548 = vsel %vm210, %v5542, 0
    %5550 = vmatprep.subr.mxu0 0.0
    %5551 = vmatpush1.msra.mxu0 %v5539
    %5552 = vmatprep.subr.mxu0 0.0
    %5553 = vmatpush1.msra.mxu0 %v5540
    %5554 = vmatprep.subr.mxu0 0.0
    %5555 = vmatpush1.msra.mxu0 %v5541
    %5556 = vmatprep.subr.mxu0 0.0
    %5557 = vmatpush1.msra.mxu0 %v5548
    %5558 = vmatprep.subr.mxu0 0.0
    %5559 = vmatpush1.msra.mxu0 0.0
    %5560 = vmatprep.subr.mxu0 0.0
    %5561 = vmatpush1.msra.mxu0 0.0
    %5562 = vmatprep.subr.mxu0 0.0
    %5563 = vmatpush1.msra.mxu0 0.0
    %5564 = vmatprep.subr.mxu0 0.0
    %5565 = vmatpush1.msra.mxu0 0.0
    %5566 = vmatprep.subr.mxu0 0.0
    %5567 = vmatpush1.msra.mxu0 0.0
    %5568 = vmatprep.subr.mxu0 0.0
    %5569 = vmatpush1.msra.mxu0 0.0
    %5570 = vmatprep.subr.mxu0 0.0
    %5571 = vmatpush1.msra.mxu0 0.0
    %5572 = vmatprep.subr.mxu0 0.0
    %5573 = vmatpush1.msra.mxu0 0.0
    %5574 = vmatprep.subr.mxu0 0.0
    %5575 = vmatpush1.msra.mxu0 0.0
    %5576 = vmatprep.subr.mxu0 0.0
    %5577 = vmatpush1.msra.mxu0 0.0
    %5578 = vmatprep.subr.mxu0 0.0
    %5579 = vmatpush1.msra.mxu0 0.0
    %5580 = vmatprep.subr.mxu0 0.0
    %5581 = vmatpush1.msra.mxu0 0.0
    %5582 = vmatprep.subr.mxu0 0.0
    %5583 = vmatpush1.msra.mxu0 0.0
    %5584 = vmatprep.subr.mxu0 0.0
    %5585 = vmatpush1.msra.mxu0 0.0
    %5586 = vmatprep.subr.mxu0 0.0
    %5587 = vmatpush1.msra.mxu0 0.0
    %5588 = vmatprep.subr.mxu0 0.0
    %5589 = vmatpush1.msra.mxu0 0.0
    %5590 = vmatprep.subr.mxu0 0.0
    %5591 = vmatpush1.msra.mxu0 0.0
    %5592 = vmatprep.subr.mxu0 0.0
    %5593 = vmatpush1.msra.mxu0 0.0
    %5594 = vmatprep.subr.mxu0 0.0
    %5595 = vmatpush1.msra.mxu0 0.0
    %5596 = vmatprep.subr.mxu0 0.0
    %5597 = vmatpush1.msra.mxu0 0.0
    %5598 = vmatprep.subr.mxu0 0.0
    %5599 = vmatpush1.msra.mxu0 0.0
    %5600 = vmatprep.subr.mxu0 0.0
    %5601 = vmatpush1.msra.mxu0 0.0
    %5602 = vmatprep.subr.mxu0 0.0
    %5603 = vmatpush1.msra.mxu0 0.0
    %5604 = vmatprep.subr.mxu0 0.0
    %5605 = vmatpush1.msra.mxu0 0.0
    %5606 = vmatprep.subr.mxu0 0.0
    %5607 = vmatpush1.msra.mxu0 0.0
    %5608 = vmatprep.subr.mxu0 0.0
    %5609 = vmatpush1.msra.mxu0 0.0
    %5610 = vmatprep.subr.mxu0 0.0
    %5611 = vmatpush1.msra.mxu0 0.0
    %5612 = vmatprep.subr.mxu0 0.0
    %5613 = vmatpush1.msra.mxu0 0.0
    %5614 = vmatprep.mubr.f32.mxu0 0.0
    %5615 = vmatmul.mubr.f32.gmra.mrb[0].mxu0 %v5545
    %v5616 = vpop.f32.mrb[0].mxu0
    %v5617 = vadd.f32 0.0, %v5616
    %v5618 = vpop.f32.mrb[0].mxu0
    %5619 = vdwg.mxu0
    %v5620 = vsel %vm1680, %v5534, 0
    %v5623 = vsel %vm210, %v5538, 0
    %5625 = vmatprep.subr.mxu0 0.0
    %5626 = vmatpush1.msra.mxu0 %v5535
    %5627 = vmatprep.subr.mxu0 0.0
    %5628 = vmatpush1.msra.mxu0 %v5536
    %5629 = vmatprep.subr.mxu0 0.0
    %5630 = vmatpush1.msra.mxu0 %v5537
    %5631 = vmatprep.subr.mxu0 0.0
    %5632 = vmatpush1.msra.mxu0 %v5623
    %5633 = vmatprep.subr.mxu0 0.0
    %5634 = vmatpush1.msra.mxu0 0.0
    %5635 = vmatprep.subr.mxu0 0.0
    %5636 = vmatpush1.msra.mxu0 0.0
    %5637 = vmatprep.subr.mxu0 0.0
    %5638 = vmatpush1.msra.mxu0 0.0
    %5639 = vmatprep.subr.mxu0 0.0
    %5640 = vmatpush1.msra.mxu0 0.0
    %5641 = vmatprep.subr.mxu0 0.0
    %5642 = vmatpush1.msra.mxu0 0.0
    %5643 = vmatprep.subr.mxu0 0.0
    %5644 = vmatpush1.msra.mxu0 0.0
    %5645 = vmatprep.subr.mxu0 0.0
    %5646 = vmatpush1.msra.mxu0 0.0
    %5647 = vmatprep.subr.mxu0 0.0
    %5648 = vmatpush1.msra.mxu0 0.0
    %5649 = vmatprep.subr.mxu0 0.0
    %5650 = vmatpush1.msra.mxu0 0.0
    %5651 = vmatprep.subr.mxu0 0.0
    %5652 = vmatpush1.msra.mxu0 0.0
    %5653 = vmatprep.subr.mxu0 0.0
    %5654 = vmatpush1.msra.mxu0 0.0
    %5655 = vmatprep.subr.mxu0 0.0
    %5656 = vmatpush1.msra.mxu0 0.0
    %5657 = vmatprep.subr.mxu0 0.0
    %5658 = vmatpush1.msra.mxu0 0.0
    %5659 = vmatprep.subr.mxu0 0.0
    %5660 = vmatpush1.msra.mxu0 0.0
    %5661 = vmatprep.subr.mxu0 0.0
    %5662 = vmatpush1.msra.mxu0 0.0
    %5663 = vmatprep.subr.mxu0 0.0
    %5664 = vmatpush1.msra.mxu0 0.0
    %5665 = vmatprep.subr.mxu0 0.0
    %5666 = vmatpush1.msra.mxu0 0.0
    %5667 = vmatprep.subr.mxu0 0.0
    %5668 = vmatpush1.msra.mxu0 0.0
    %5669 = vmatprep.subr.mxu0 0.0
    %5670 = vmatpush1.msra.mxu0 0.0
    %5671 = vmatprep.subr.mxu0 0.0
    %5672 = vmatpush1.msra.mxu0 0.0
    %5673 = vmatprep.subr.mxu0 0.0
    %5674 = vmatpush1.msra.mxu0 0.0
    %5675 = vmatprep.subr.mxu0 0.0
    %5676 = vmatpush1.msra.mxu0 0.0
    %5677 = vmatprep.subr.mxu0 0.0
    %5678 = vmatpush1.msra.mxu0 0.0
    %5679 = vmatprep.subr.mxu0 0.0
    %5680 = vmatpush1.msra.mxu0 0.0
    %5681 = vmatprep.subr.mxu0 0.0
    %5682 = vmatpush1.msra.mxu0 0.0
    %5683 = vmatprep.subr.mxu0 0.0
    %5684 = vmatpush1.msra.mxu0 0.0
    %5685 = vmatprep.subr.mxu0 0.0
    %5686 = vmatpush1.msra.mxu0 0.0
    %5687 = vmatprep.subr.mxu0 0.0
    %5688 = vmatpush1.msra.mxu0 0.0
    %5689 = vmatprep.mubr.f32.mxu0 0.0
    %5690 = vmatmul.mubr.f32.gmra.mrb[0].mxu0 %v5620
    %v5691 = vpop.f32.mrb[0].mxu0
    %v5692 = vadd.f32 %v5617, %v5691
    %v5693 = vpop.f32.mrb[0].mxu0
    %5694 = vdwg.mxu0
    %v5695 = vld [vmem:[%s1831] sm:$0xff]
    %v5696 = vld [vmem:[%s1831 + $0x8] sm:$0xff]
    %v5697 = vld [vmem:[%s1831 + $0x10] sm:$0xff]
    %v5698 = vld [vmem:[%s1831 + $0x18] sm:$0x3f]
    %v5699 = vrot.slane %v5534, 2
    %v5700 = vsel %vm1680, %v5699, 0
    %v5703 = vsel %vm210, %v5698, 0
    %5705 = vmatprep.subr.mxu0 0.0
    %5706 = vmatpush1.msra.mxu0 %v5695
    %5707 = vmatprep.subr.mxu0 0.0
    %5708 = vmatpush1.msra.mxu0 %v5696
    %5709 = vmatprep.subr.mxu0 0.0
    %5710 = vmatpush1.msra.mxu0 %v5697
    %5711 = vmatprep.subr.mxu0 0.0
    %5712 = vmatpush1.msra.mxu0 %v5703
    %5713 = vmatprep.subr.mxu0 0.0
    %5714 = vmatpush1.msra.mxu0 0.0
    %5715 = vmatprep.subr.mxu0 0.0
    %5716 = vmatpush1.msra.mxu0 0.0
    %5717 = vmatprep.subr.mxu0 0.0
    %5718 = vmatpush1.msra.mxu0 0.0
    %5719 = vmatprep.subr.mxu0 0.0
    %5720 = vmatpush1.msra.mxu0 0.0
    %5721 = vmatprep.subr.mxu0 0.0
    %5722 = vmatpush1.msra.mxu0 0.0
    %5723 = vmatprep.subr.mxu0 0.0
    %5724 = vmatpush1.msra.mxu0 0.0
    %5725 = vmatprep.subr.mxu0 0.0
    %5726 = vmatpush1.msra.mxu0 0.0
    %5727 = vmatprep.subr.mxu0 0.0
    %5728 = vmatpush1.msra.mxu0 0.0
    %5729 = vmatprep.subr.mxu0 0.0
    %5730 = vmatpush1.msra.mxu0 0.0
    %5731 = vmatprep.subr.mxu0 0.0
    %5732 = vmatpush1.msra.mxu0 0.0
    %5733 = vmatprep.subr.mxu0 0.0
    %5734 = vmatpush1.msra.mxu0 0.0
    %5735 = vmatprep.subr.mxu0 0.0
    %5736 = vmatpush1.msra.mxu0 0.0
    %5737 = vmatprep.subr.mxu0 0.0
    %5738 = vmatpush1.msra.mxu0 0.0
    %5739 = vmatprep.subr.mxu0 0.0
    %5740 = vmatpush1.msra.mxu0 0.0
    %5741 = vmatprep.subr.mxu0 0.0
    %5742 = vmatpush1.msra.mxu0 0.0
    %5743 = vmatprep.subr.mxu0 0.0
    %5744 = vmatpush1.msra.mxu0 0.0
    %5745 = vmatprep.subr.mxu0 0.0
    %5746 = vmatpush1.msra.mxu0 0.0
    %5747 = vmatprep.subr.mxu0 0.0
    %5748 = vmatpush1.msra.mxu0 0.0
    %5749 = vmatprep.subr.mxu0 0.0
    %5750 = vmatpush1.msra.mxu0 0.0
    %5751 = vmatprep.subr.mxu0 0.0
    %5752 = vmatpush1.msra.mxu0 0.0
    %5753 = vmatprep.subr.mxu0 0.0
    %5754 = vmatpush1.msra.mxu0 0.0
    %5755 = vmatprep.subr.mxu0 0.0
    %5756 = vmatpush1.msra.mxu0 0.0
    %5757 = vmatprep.subr.mxu0 0.0
    %5758 = vmatpush1.msra.mxu0 0.0
    %5759 = vmatprep.subr.mxu0 0.0
    %5760 = vmatpush1.msra.mxu0 0.0
    %5761 = vmatprep.subr.mxu0 0.0
    %5762 = vmatpush1.msra.mxu0 0.0
    %5763 = vmatprep.subr.mxu0 0.0
    %5764 = vmatpush1.msra.mxu0 0.0
    %5765 = vmatprep.subr.mxu0 0.0
    %5766 = vmatpush1.msra.mxu0 0.0
    %5767 = vmatprep.subr.mxu0 0.0
    %5768 = vmatpush1.msra.mxu0 0.0
    %5769 = vmatprep.mubr.f32.mxu0 0.0
    %5770 = vmatmul.mubr.f32.gmra.mrb[0].mxu0 %v5700
    %v5771 = vpop.f32.mrb[0].mxu0
    %v5772 = vadd.f32 0.0, %v5771
    %v5773 = vpop.f32.mrb[0].mxu0
    %5774 = vdwg.mxu0
    %v5775 = vadd.f32 %v5692, %v5772
    %v5776 = vld [vmem:[%s10] sm:$0x1]
    %v5777 = vadd.f32 %v5775, %v5776
    %v5778 = vmax.f32 %v5777, 0.0
    %v5779 = vld [vmem:[%s11] sm:$0xff]
    %v5780 = vld [vmem:[%s11 + $0x8] sm:$0xff]
    %v5781 = vld [vmem:[%s11 + $0x10] sm:$0xff]
    %v5782 = vld [vmem:[%s11 + $0x18] sm:$0xff]
    %v5783 = vld [vmem:[%s12] sm:$0x1]
    %v5785 = vsel %vm1921, %v5778, 0
    %5787 = vmatprep.subr.mxu0 0.0
    %5788 = vmatpush1.msra.mxu0 %v5779
    %5789 = vmatprep.subr.mxu0 0.0
    %5790 = vmatpush1.msra.mxu0 %v5780
    %5791 = vmatprep.subr.mxu0 0.0
    %5792 = vmatpush1.msra.mxu0 %v5781
    %5793 = vmatprep.subr.mxu0 0.0
    %5794 = vmatpush1.msra.mxu0 %v5782
    %5795 = vmatprep.subr.mxu0 0.0
    %5796 = vmatpush1.msra.mxu0 0.0
    %5797 = vmatprep.subr.mxu0 0.0
    %5798 = vmatpush1.msra.mxu0 0.0
    %5799 = vmatprep.subr.mxu0 0.0
    %5800 = vmatpush1.msra.mxu0 0.0
    %5801 = vmatprep.subr.mxu0 0.0
    %5802 = vmatpush1.msra.mxu0 0.0
    %5803 = vmatprep.subr.mxu0 0.0
    %5804 = vmatpush1.msra.mxu0 0.0
    %5805 = vmatprep.subr.mxu0 0.0
    %5806 = vmatpush1.msra.mxu0 0.0
    %5807 = vmatprep.subr.mxu0 0.0
    %5808 = vmatpush1.msra.mxu0 0.0
    %5809 = vmatprep.subr.mxu0 0.0
    %5810 = vmatpush1.msra.mxu0 0.0
    %5811 = vmatprep.subr.mxu0 0.0
    %5812 = vmatpush1.msra.mxu0 0.0
    %5813 = vmatprep.subr.mxu0 0.0
    %5814 = vmatpush1.msra.mxu0 0.0
    %5815 = vmatprep.subr.mxu0 0.0
    %5816 = vmatpush1.msra.mxu0 0.0
    %5817 = vmatprep.subr.mxu0 0.0
    %5818 = vmatpush1.msra.mxu0 0.0
    %5819 = vmatprep.subr.mxu0 0.0
    %5820 = vmatpush1.msra.mxu0 0.0
    %5821 = vmatprep.subr.mxu0 0.0
    %5822 = vmatpush1.msra.mxu0 0.0
    %5823 = vmatprep.subr.mxu0 0.0
    %5824 = vmatpush1.msra.mxu0 0.0
    %5825 = vmatprep.subr.mxu0 0.0
    %5826 = vmatpush1.msra.mxu0 0.0
    %5827 = vmatprep.subr.mxu0 0.0
    %5828 = vmatpush1.msra.mxu0 0.0
    %5829 = vmatprep.subr.mxu0 0.0
    %5830 = vmatpush1.msra.mxu0 0.0
    %5831 = vmatprep.subr.mxu0 0.0
    %5832 = vmatpush1.msra.mxu0 0.0
    %5833 = vmatprep.subr.mxu0 0.0
    %5834 = vmatpush1.msra.mxu0 0.0
    %5835 = vmatprep.subr.mxu0 0.0
    %5836 = vmatpush1.msra.mxu0 0.0
    %5837 = vmatprep.subr.mxu0 0.0
    %5838 = vmatpush1.msra.mxu0 0.0
    %5839 = vmatprep.subr.mxu0 0.0
    %5840 = vmatpush1.msra.mxu0 0.0
    %5841 = vmatprep.subr.mxu0 0.0
    %5842 = vmatpush1.msra.mxu0 0.0
    %5843 = vmatprep.subr.mxu0 0.0
    %5844 = vmatpush1.msra.mxu0 0.0
    %5845 = vmatprep.subr.mxu0 0.0
    %5846 = vmatpush1.msra.mxu0 0.0
    %5847 = vmatprep.subr.mxu0 0.0
    %5848 = vmatpush1.msra.mxu0 0.0
    %5849 = vmatprep.subr.mxu0 0.0
    %5850 = vmatpush1.msra.mxu0 0.0
    %5851 = vmatprep.mubr.f32.mxu0 0.0
    %5852 = vmatmul.mubr.f32.gmra.mrb[0].mxu0 %v5785
    %v5853 = vpop.f32.mrb[0].mxu0
    %v5854 = vadd.f32 %v5783, %v5853
    %v5855 = vpop.f32.mrb[0].mxu0
    %5856 = vdwg.mxu0
    %s5857 = scalar_lea.vmem [#allocation2], 2
    %5858 = vst.msk [vmem:[%s5857] sm:$0x1] %vm1995, %v5854
    %s5859 = scalar_lea.vmem %s0, 144
    %v5860 = vld [vmem:[%s5859] sm:$0xff]
    %v5861 = vld [vmem:[%s5859 + $0x8] sm:$0xff]
    %v5862 = vld [vmem:[%s5859 + $0x10] sm:$0xff]
    %v5863 = vld [vmem:[%s5859 + $0x18] sm:$0xff]
    %v5864 = vld [vmem:[%s5859 + $0x20] sm:$0x3f]
    %v5865 = vld [vmem:[%s5859 + $0x28] sm:$0x3f]
    %v5866 = vld [vmem:[%s1] sm:$0xff]
    %v5867 = vld [vmem:[%s1 + $0x8] sm:$0xff]
    %v5868 = vld [vmem:[%s1 + $0x10] sm:$0xff]
    %v5869 = vld [vmem:[%s1 + $0x18] sm:$0xff]
    %v5870 = vld [vmem:[%s1 + $0x20] sm:$0xff]
    %v5871 = vld [vmem:[%s1 + $0x28] sm:$0xff]
    %v5872 = vld [vmem:[%s1 + $0x30] sm:$0xff]
    %v5873 = vld [vmem:[%s1 + $0x38] sm:$0xff]
    %v5874 = vld [vmem:[%s1 + $0x40] sm:$0xff]
    %v5875 = vld [vmem:[%s1 + $0x48] sm:$0xff]
    %v5876 = vld [vmem:[%s1 + $0x50] sm:$0xff]
    %v5877 = vld [vmem:[%s1 + $0x58] sm:$0xff]
    %v5878 = vld [vmem:[%s1 + $0x60] sm:$0xff]
    %v5879 = vld [vmem:[%s1 + $0x68] sm:$0xff]
    %v5880 = vld [vmem:[%s1 + $0x70] sm:$0xff]
    %v5881 = vld [vmem:[%s1 + $0x78] sm:$0xff]
    %v5882 = vld [vmem:[%s1 + $0x80] sm:$0xff]
    %v5883 = vld [vmem:[%s1 + $0x88] sm:$0xff]
    %v5884 = vld [vmem:[%s1 + $0x90] sm:$0xff]
    %v5885 = vld [vmem:[%s1 + $0x98] sm:$0xff]
    %v5886 = vld [vmem:[%s1 + $0xa0] sm:$0xff]
    %v5887 = vld [vmem:[%s1 + $0xa8] sm:$0xff]
    %v5888 = vld [vmem:[%s1 + $0xb0] sm:$0xff]
    %v5889 = vld [vmem:[%s1 + $0xb8] sm:$0xff]
    %v5890 = vld [vmem:[%s1 + $0xc0] sm:$0xff]
    %v5891 = vld [vmem:[%s1 + $0xc8] sm:$0xff]
    %v5892 = vld [vmem:[%s1 + $0xd0] sm:$0xff]
    %v5893 = vld [vmem:[%s1 + $0xd8] sm:$0xff]
    %v5894 = vld [vmem:[%s1 + $0xe0] sm:$0xff]
    %v5895 = vld [vmem:[%s1 + $0xe8] sm:$0xff]
    %v5896 = vld [vmem:[%s1 + $0xf0] sm:$0xff]
    %v5897 = vld [vmem:[%s1 + $0xf8] sm:$0xff]
    %v5898 = vld [vmem:[%s1 + $0x100] sm:$0xff]
    %v5899 = vld [vmem:[%s1 + $0x108] sm:$0xff]
    %v5900 = vld [vmem:[%s1 + $0x110] sm:$0xff]
    %v5901 = vld [vmem:[%s1 + $0x118] sm:$0xff]
    %v5902 = vld [vmem:[%s1 + $0x120] sm:$0xff]
    %v5903 = vld [vmem:[%s1 + $0x128] sm:$0xff]
    %v5904 = vld [vmem:[%s1 + $0x130] sm:$0xff]
    %v5905 = vld [vmem:[%s1 + $0x138] sm:$0xff]
    %v5906 = vld [vmem:[%s1 + $0x140] sm:$0xff]
    %v5907 = vld [vmem:[%s1 + $0x148] sm:$0xff]
    %v5908 = vld [vmem:[%s1 + $0x150] sm:$0xff]
    %v5909 = vld [vmem:[%s1 + $0x158] sm:$0xff]
    %v5910 = vld [vmem:[%s1 + $0x160] sm:$0xff]
    %v5911 = vld [vmem:[%s1 + $0x168] sm:$0xff]
    %v5912 = vld [vmem:[%s1 + $0x170] sm:$0xff]
    %v5913 = vld [vmem:[%s1 + $0x178] sm:$0xff]
    %v5914 = vld [vmem:[%s1 + $0x180] sm:$0xf]
    %v5915 = vld [vmem:[%s1 + $0x188] sm:$0xf]
    %v5917 = vsel %vm101, %v5861, 0
    %v5920 = vsel %vm101, %v5863, 0
    %v5923 = vsel %vm101, %v5865, 0
    %v5926 = vsel %vm111, %v5914, 0
    %v5929 = vsel %vm111, %v5915, 0
    %5931 = vmatprep.subr.mxu0 %v5867
    %5932 = vmatpush1.msra.mxu0 %v5866
    %5933 = vmatprep.subr.mxu0 %v5869
    %5934 = vmatpush1.msra.mxu0 %v5868
    %5935 = vmatprep.subr.mxu0 %v5871
    %5936 = vmatpush1.msra.mxu0 %v5870
    %5937 = vmatprep.subr.mxu0 %v5873
    %5938 = vmatpush1.msra.mxu0 %v5872
    %5939 = vmatprep.subr.mxu0 %v5875
    %5940 = vmatpush1.msra.mxu0 %v5874
    %5941 = vmatprep.subr.mxu0 %v5877
    %5942 = vmatpush1.msra.mxu0 %v5876
    %5943 = vmatprep.subr.mxu0 %v5879
    %5944 = vmatpush1.msra.mxu0 %v5878
    %5945 = vmatprep.subr.mxu0 %v5881
    %5946 = vmatpush1.msra.mxu0 %v5880
    %5947 = vmatprep.subr.mxu0 %v5883
    %5948 = vmatpush1.msra.mxu0 %v5882
    %5949 = vmatprep.subr.mxu0 %v5885
    %5950 = vmatpush1.msra.mxu0 %v5884
    %5951 = vmatprep.subr.mxu0 %v5887
    %5952 = vmatpush1.msra.mxu0 %v5886
    %5953 = vmatprep.subr.mxu0 %v5889
    %5954 = vmatpush1.msra.mxu0 %v5888
    %5955 = vmatprep.subr.mxu0 %v5891
    %5956 = vmatpush1.msra.mxu0 %v5890
    %5957 = vmatprep.subr.mxu0 %v5893
    %5958 = vmatpush1.msra.mxu0 %v5892
    %5959 = vmatprep.subr.mxu0 %v5895
    %5960 = vmatpush1.msra.mxu0 %v5894
    %5961 = vmatprep.subr.mxu0 %v5897
    %5962 = vmatpush1.msra.mxu0 %v5896
    %5963 = vmatprep.subr.mxu0 %v5899
    %5964 = vmatpush1.msra.mxu0 %v5898
    %5965 = vmatprep.subr.mxu0 %v5901
    %5966 = vmatpush1.msra.mxu0 %v5900
    %5967 = vmatprep.subr.mxu0 %v5903
    %5968 = vmatpush1.msra.mxu0 %v5902
    %5969 = vmatprep.subr.mxu0 %v5905
    %5970 = vmatpush1.msra.mxu0 %v5904
    %5971 = vmatprep.subr.mxu0 %v5907
    %5972 = vmatpush1.msra.mxu0 %v5906
    %5973 = vmatprep.subr.mxu0 %v5909
    %5974 = vmatpush1.msra.mxu0 %v5908
    %5975 = vmatprep.subr.mxu0 %v5911
    %5976 = vmatpush1.msra.mxu0 %v5910
    %5977 = vmatprep.subr.mxu0 %v5913
    %5978 = vmatpush1.msra.mxu0 %v5912
    %5979 = vmatprep.subr.mxu0 %v5929
    %5980 = vmatpush1.msra.mxu0 %v5926
    %5981 = vmatprep.subr.mxu0 0.0
    %5982 = vmatpush1.msra.mxu0 0.0
    %5983 = vmatprep.subr.mxu0 0.0
    %5984 = vmatpush1.msra.mxu0 0.0
    %5985 = vmatprep.subr.mxu0 0.0
    %5986 = vmatpush1.msra.mxu0 0.0
    %5987 = vmatprep.subr.mxu0 0.0
    %5988 = vmatpush1.msra.mxu0 0.0
    %5989 = vmatprep.subr.mxu0 0.0
    %5990 = vmatpush1.msra.mxu0 0.0
    %5991 = vmatprep.subr.mxu0 0.0
    %5992 = vmatpush1.msra.mxu0 0.0
    %5993 = vmatprep.subr.mxu0 0.0
    %5994 = vmatpush1.msra.mxu0 0.0
    %5995 = vmatprep.mubr.f32.mxu0 %v5917
    %5996 = vmatmul.mubr.f32.gmra.mrb[0].mxu0 %v5860
    %v5997 = vpop.f32.mrb[0].mxu0
    %v5998 = vadd.f32 0.0, %v5997
    %v5999 = vpop.f32.mrb[0].mxu0
    %v6000 = vadd.f32 0.0, %v5999
    %6001 = vmatprep.mubr.f32.mxu0 %v5920
    %6002 = vmatmul.mubr.f32.gmra.mrb[0].mxu0 %v5862
    %v6003 = vpop.f32.mrb[0].mxu0
    %v6004 = vadd.f32 0.0, %v6003
    %v6005 = vpop.f32.mrb[0].mxu0
    %v6006 = vadd.f32 0.0, %v6005
    %6007 = vmatprep.mubr.f32.mxu0 %v5923
    %6008 = vmatmul.mubr.f32.gmra.mrb[0].mxu0 %v5864
    %v6009 = vpop.f32.mrb[0].mxu0
    %v6010 = vadd.f32 0.0, %v6009
    %v6011 = vpop.f32.mrb[0].mxu0
    %v6012 = vadd.f32 0.0, %v6011
    %6013 = vdwg.mxu0
    %v6014 = vld [vmem:[%s3] sm:$0xff]
    %v6015 = vld [vmem:[%s3 + $0x8] sm:$0x7]
    %v6017 = vsel %vm203, %v6014, 0
    %v6020 = vsel %vm203, %v6015, 0
    %v6023 = vsel %vm210, %v6010, 0
    %v6026 = vsel %vm210, %v6012, 0
    %6028 = vmatprep.subr.mxu0 %v6000
    %6029 = vmatpush1.msra.mxu0 %v5998
    %6030 = vmatprep.subr.mxu0 %v6006
    %6031 = vmatpush1.msra.mxu0 %v6004
    %6032 = vmatprep.subr.mxu0 %v6026
    %6033 = vmatpush1.msra.mxu0 %v6023
    %6034 = vmatprep.subr.mxu0 0.0
    %6035 = vmatpush1.msra.mxu0 0.0
    %6036 = vmatprep.subr.mxu0 0.0
    %6037 = vmatpush1.msra.mxu0 0.0
    %6038 = vmatprep.subr.mxu0 0.0
    %6039 = vmatpush1.msra.mxu0 0.0
    %6040 = vmatprep.subr.mxu0 0.0
    %6041 = vmatpush1.msra.mxu0 0.0
    %6042 = vmatprep.subr.mxu0 0.0
    %6043 = vmatpush1.msra.mxu0 0.0
    %6044 = vmatprep.subr.mxu0 0.0
    %6045 = vmatpush1.msra.mxu0 0.0
    %6046 = vmatprep.subr.mxu0 0.0
    %6047 = vmatpush1.msra.mxu0 0.0
    %6048 = vmatprep.subr.mxu0 0.0
    %6049 = vmatpush1.msra.mxu0 0.0
    %6050 = vmatprep.subr.mxu0 0.0
    %6051 = vmatpush1.msra.mxu0 0.0
    %6052 = vmatprep.subr.mxu0 0.0
    %6053 = vmatpush1.msra.mxu0 0.0
    %6054 = vmatprep.subr.mxu0 0.0
    %6055 = vmatpush1.msra.mxu0 0.0
    %6056 = vmatprep.subr.mxu0 0.0
    %6057 = vmatpush1.msra.mxu0 0.0
    %6058 = vmatprep.subr.mxu0 0.0
    %6059 = vmatpush1.msra.mxu0 0.0
    %6060 = vmatprep.subr.mxu0 0.0
    %6061 = vmatpush1.msra.mxu0 0.0
    %6062 = vmatprep.subr.mxu0 0.0
    %6063 = vmatpush1.msra.mxu0 0.0
    %6064 = vmatprep.subr.mxu0 0.0
    %6065 = vmatpush1.msra.mxu0 0.0
    %6066 = vmatprep.subr.mxu0 0.0
    %6067 = vmatpush1.msra.mxu0 0.0
    %6068 = vmatprep.subr.mxu0 0.0
    %6069 = vmatpush1.msra.mxu0 0.0
    %6070 = vmatprep.subr.mxu0 0.0
    %6071 = vmatpush1.msra.mxu0 0.0
    %6072 = vmatprep.subr.mxu0 0.0
    %6073 = vmatpush1.msra.mxu0 0.0
    %6074 = vmatprep.subr.mxu0 0.0
    %6075 = vmatpush1.msra.mxu0 0.0
    %6076 = vmatprep.subr.mxu0 0.0
    %6077 = vmatpush1.msra.mxu0 0.0
    %6078 = vmatprep.subr.mxu0 0.0
    %6079 = vmatpush1.msra.mxu0 0.0
    %6080 = vmatprep.subr.mxu0 0.0
    %6081 = vmatpush1.msra.mxu0 0.0
    %6082 = vmatprep.subr.mxu0 0.0
    %6083 = vmatpush1.msra.mxu0 0.0
    %6084 = vmatprep.subr.mxu0 0.0
    %6085 = vmatpush1.msra.mxu0 0.0
    %6086 = vmatprep.subr.mxu0 0.0
    %6087 = vmatpush1.msra.mxu0 0.0
    %6088 = vmatprep.subr.mxu0 0.0
    %6089 = vmatpush1.msra.mxu0 0.0
    %6090 = vmatprep.subr.mxu0 0.0
    %6091 = vmatpush1.msra.mxu0 0.0
    %6092 = vmatprep.mubr.f32.mxu0 0.0
    %6093 = vmatmul.mubr.f32.gmra.mrb[0].mxu0 %v6017
    %v6094 = vpop.f32.mrb[0].mxu0
    %v6095 = vadd.f32 0.0, %v6094
    %v6096 = vpop.f32.mrb[0].mxu0
    %v6097 = vadd.f32 0.0, %v6096
    %6098 = vmatprep.mubr.f32.mxu0 0.0
    %6099 = vmatmul.mubr.f32.gmra.mrb[0].mxu0 %v6020
    %v6100 = vpop.f32.mrb[0].mxu0
    %v6101 = vadd.f32 0.0, %v6100
    %v6102 = vpop.f32.mrb[0].mxu0
    %v6103 = vadd.f32 0.0, %v6102
    %6104 = vdwg.mxu0
    %v6105 = vld [vmem:[%s294] sm:$0xff]
    %v6106 = vld [vmem:[%s294 + $0x8] sm:$0x7]
    %v6108 = vsel %vm203, %v6105, 0
    %v6111 = vsel %vm203, %v6106, 0
    %6113 = vmatprep.subr.mxu0 %v6000
    %6114 = vmatpush1.msra.mxu0 %v5998
    %6115 = vmatprep.subr.mxu0 %v6006
    %6116 = vmatpush1.msra.mxu0 %v6004
    %6117 = vmatprep.subr.mxu0 %v6026
    %6118 = vmatpush1.msra.mxu0 %v6023
    %6119 = vmatprep.subr.mxu0 0.0
    %6120 = vmatpush1.msra.mxu0 0.0
    %6121 = vmatprep.subr.mxu0 0.0
    %6122 = vmatpush1.msra.mxu0 0.0
    %6123 = vmatprep.subr.mxu0 0.0
    %6124 = vmatpush1.msra.mxu0 0.0
    %6125 = vmatprep.subr.mxu0 0.0
    %6126 = vmatpush1.msra.mxu0 0.0
    %6127 = vmatprep.subr.mxu0 0.0
    %6128 = vmatpush1.msra.mxu0 0.0
    %6129 = vmatprep.subr.mxu0 0.0
    %6130 = vmatpush1.msra.mxu0 0.0
    %6131 = vmatprep.subr.mxu0 0.0
    %6132 = vmatpush1.msra.mxu0 0.0
    %6133 = vmatprep.subr.mxu0 0.0
    %6134 = vmatpush1.msra.mxu0 0.0
    %6135 = vmatprep.subr.mxu0 0.0
    %6136 = vmatpush1.msra.mxu0 0.0
    %6137 = vmatprep.subr.mxu0 0.0
    %6138 = vmatpush1.msra.mxu0 0.0
    %6139 = vmatprep.subr.mxu0 0.0
    %6140 = vmatpush1.msra.mxu0 0.0
    %6141 = vmatprep.subr.mxu0 0.0
    %6142 = vmatpush1.msra.mxu0 0.0
    %6143 = vmatprep.subr.mxu0 0.0
    %6144 = vmatpush1.msra.mxu0 0.0
    %6145 = vmatprep.subr.mxu0 0.0
    %6146 = vmatpush1.msra.mxu0 0.0
    %6147 = vmatprep.subr.mxu0 0.0
    %6148 = vmatpush1.msra.mxu0 0.0
    %6149 = vmatprep.subr.mxu0 0.0
    %6150 = vmatpush1.msra.mxu0 0.0
    %6151 = vmatprep.subr.mxu0 0.0
    %6152 = vmatpush1.msra.mxu0 0.0
    %6153 = vmatprep.subr.mxu0 0.0
    %6154 = vmatpush1.msra.mxu0 0.0
    %6155 = vmatprep.subr.mxu0 0.0
    %6156 = vmatpush1.msra.mxu0 0.0
    %6157 = vmatprep.subr.mxu0 0.0
    %6158 = vmatpush1.msra.mxu0 0.0
    %6159 = vmatprep.subr.mxu0 0.0
    %6160 = vmatpush1.msra.mxu0 0.0
    %6161 = vmatprep.subr.mxu0 0.0
    %6162 = vmatpush1.msra.mxu0 0.0
    %6163 = vmatprep.subr.mxu0 0.0
    %6164 = vmatpush1.msra.mxu0 0.0
    %6165 = vmatprep.subr.mxu0 0.0
    %6166 = vmatpush1.msra.mxu0 0.0
    %6167 = vmatprep.subr.mxu0 0.0
    %6168 = vmatpush1.msra.mxu0 0.0
    %6169 = vmatprep.subr.mxu0 0.0
    %6170 = vmatpush1.msra.mxu0 0.0
    %6171 = vmatprep.subr.mxu0 0.0
    %6172 = vmatpush1.msra.mxu0 0.0
    %6173 = vmatprep.subr.mxu0 0.0
    %6174 = vmatpush1.msra.mxu0 0.0
    %6175 = vmatprep.subr.mxu0 0.0
    %6176 = vmatpush1.msra.mxu0 0.0
    %6177 = vmatprep.mubr.f32.mxu0 0.0
    %6178 = vmatmul.mubr.f32.gmra.mrb[0].mxu0 %v6108
    %v6179 = vpop.f32.mrb[0].mxu0
    %v6180 = vadd.f32 0.0, %v6179
    %v6181 = vpop.f32.mrb[0].mxu0
    %v6182 = vadd.f32 0.0, %v6181
    %6183 = vmatprep.mubr.f32.mxu0 0.0
    %6184 = vmatmul.mubr.f32.gmra.mrb[0].mxu0 %v6111
    %v6185 = vpop.f32.mrb[0].mxu0
    %v6186 = vadd.f32 0.0, %v6185
    %v6187 = vpop.f32.mrb[0].mxu0
    %v6188 = vadd.f32 0.0, %v6187
    %6189 = vdwg.mxu0
    %v6190 = vld [vmem:[%s4] sm:$0xff]
    %v6191 = vld [vmem:[%s4 + $0x8] sm:$0xff]
    %v6192 = vld [vmem:[%s4 + $0x10] sm:$0xff]
    %v6193 = vld [vmem:[%s4 + $0x18] sm:$0xff]
    %v6194 = vld [vmem:[%s4 + $0x20] sm:$0xff]
    %v6195 = vld [vmem:[%s4 + $0x28] sm:$0xff]
    %v6196 = vld [vmem:[%s4 + $0x30] sm:$0xff]
    %v6197 = vld [vmem:[%s4 + $0x38] sm:$0xff]
    %v6198 = vld [vmem:[%s4 + $0x40] sm:$0xff]
    %v6199 = vld [vmem:[%s4 + $0x48] sm:$0xff]
    %v6200 = vld [vmem:[%s4 + $0x50] sm:$0xff]
    %v6201 = vld [vmem:[%s4 + $0x58] sm:$0xff]
    %v6202 = vld [vmem:[%s4 + $0x60] sm:$0xff]
    %v6203 = vld [vmem:[%s4 + $0x68] sm:$0xff]
    %v6204 = vld [vmem:[%s4 + $0x70] sm:$0xff]
    %v6205 = vld [vmem:[%s4 + $0x78] sm:$0xff]
    %v6206 = vld [vmem:[%s4 + $0x80] sm:$0xff]
    %v6207 = vld [vmem:[%s4 + $0x88] sm:$0xff]
    %v6208 = vld [vmem:[%s4 + $0x90] sm:$0xff]
    %v6209 = vld [vmem:[%s4 + $0x98] sm:$0xff]
    %v6210 = vld [vmem:[%s4 + $0xa0] sm:$0xff]
    %v6211 = vld [vmem:[%s4 + $0xa8] sm:$0xff]
    %v6213 = vsel %vm402, %v6097, 0
    %v6216 = vsel %vm402, %v6103, 0
    %6218 = vmatprep.subr.mxu0 0.0
    %6219 = vmatpush1.msra.mxu0 %v6190
    %6220 = vmatprep.subr.mxu0 0.0
    %6221 = vmatpush1.msra.mxu0 %v6191
    %6222 = vmatprep.subr.mxu0 0.0
    %6223 = vmatpush1.msra.mxu0 %v6192
    %6224 = vmatprep.subr.mxu0 0.0
    %6225 = vmatpush1.msra.mxu0 %v6193
    %6226 = vmatprep.subr.mxu0 0.0
    %6227 = vmatpush1.msra.mxu0 %v6194
    %6228 = vmatprep.subr.mxu0 0.0
    %6229 = vmatpush1.msra.mxu0 %v6195
    %6230 = vmatprep.subr.mxu0 0.0
    %6231 = vmatpush1.msra.mxu0 %v6196
    %6232 = vmatprep.subr.mxu0 0.0
    %6233 = vmatpush1.msra.mxu0 %v6197
    %6234 = vmatprep.subr.mxu0 0.0
    %6235 = vmatpush1.msra.mxu0 %v6198
    %6236 = vmatprep.subr.mxu0 0.0
    %6237 = vmatpush1.msra.mxu0 %v6199
    %6238 = vmatprep.subr.mxu0 0.0
    %6239 = vmatpush1.msra.mxu0 %v6200
    %6240 = vmatprep.subr.mxu0 0.0
    %6241 = vmatpush1.msra.mxu0 %v6201
    %6242 = vmatprep.subr.mxu0 0.0
    %6243 = vmatpush1.msra.mxu0 %v6202
    %6244 = vmatprep.subr.mxu0 0.0
    %6245 = vmatpush1.msra.mxu0 %v6203
    %6246 = vmatprep.subr.mxu0 0.0
    %6247 = vmatpush1.msra.mxu0 %v6204
    %6248 = vmatprep.subr.mxu0 0.0
    %6249 = vmatpush1.msra.mxu0 %v6205
    %6250 = vmatprep.subr.mxu0 0.0
    %6251 = vmatpush1.msra.mxu0 %v6206
    %6252 = vmatprep.subr.mxu0 0.0
    %6253 = vmatpush1.msra.mxu0 %v6207
    %6254 = vmatprep.subr.mxu0 0.0
    %6255 = vmatpush1.msra.mxu0 %v6208
    %6256 = vmatprep.subr.mxu0 0.0
    %6257 = vmatpush1.msra.mxu0 %v6209
    %6258 = vmatprep.subr.mxu0 0.0
    %6259 = vmatpush1.msra.mxu0 %v6210
    %6260 = vmatprep.subr.mxu0 0.0
    %6261 = vmatpush1.msra.mxu0 %v6211
    %6262 = vmatprep.subr.mxu0 0.0
    %6263 = vmatpush1.msra.mxu0 0.0
    %6264 = vmatprep.subr.mxu0 0.0
    %6265 = vmatpush1.msra.mxu0 0.0
    %6266 = vmatprep.subr.mxu0 0.0
    %6267 = vmatpush1.msra.mxu0 0.0
    %6268 = vmatprep.subr.mxu0 0.0
    %6269 = vmatpush1.msra.mxu0 0.0
    %6270 = vmatprep.subr.mxu0 0.0
    %6271 = vmatpush1.msra.mxu0 0.0
    %6272 = vmatprep.subr.mxu0 0.0
    %6273 = vmatpush1.msra.mxu0 0.0
    %6274 = vmatprep.subr.mxu0 0.0
    %6275 = vmatpush1.msra.mxu0 0.0
    %6276 = vmatprep.subr.mxu0 0.0
    %6277 = vmatpush1.msra.mxu0 0.0
    %6278 = vmatprep.subr.mxu0 0.0
    %6279 = vmatpush1.msra.mxu0 0.0
    %6280 = vmatprep.subr.mxu0 0.0
    %6281 = vmatpush1.msra.mxu0 0.0
    %6282 = vmatprep.mubr.f32.mxu0 %v6213
    %6283 = vmatmul.mubr.f32.gmra.mrb[0].mxu0 %v6095
    %v6284 = vpop.f32.mrb[0].mxu0
    %v6285 = vadd.f32 0.0, %v6284
    %v6286 = vpop.f32.mrb[0].mxu0
    %6287 = vmatprep.mubr.f32.mxu0 %v6216
    %6288 = vmatmul.mubr.f32.gmra.mrb[0].mxu0 %v6101
    %v6289 = vpop.f32.mrb[0].mxu0
    %v6290 = vadd.f32 0.0, %v6289
    %v6291 = vpop.f32.mrb[0].mxu0
    %6292 = vdwg.mxu0
    %v6293 = vld [vmem:[%s484] sm:$0xff]
    %v6294 = vld [vmem:[%s484 + $0x8] sm:$0xff]
    %v6295 = vld [vmem:[%s484 + $0x10] sm:$0xff]
    %v6296 = vld [vmem:[%s484 + $0x18] sm:$0xff]
    %v6297 = vld [vmem:[%s484 + $0x20] sm:$0xff]
    %v6298 = vld [vmem:[%s484 + $0x28] sm:$0xff]
    %v6299 = vld [vmem:[%s484 + $0x30] sm:$0xff]
    %v6300 = vld [vmem:[%s484 + $0x38] sm:$0xff]
    %v6301 = vld [vmem:[%s484 + $0x40] sm:$0xff]
    %v6302 = vld [vmem:[%s484 + $0x48] sm:$0xff]
    %v6303 = vld [vmem:[%s484 + $0x50] sm:$0xff]
    %v6304 = vld [vmem:[%s484 + $0x58] sm:$0xff]
    %v6305 = vld [vmem:[%s484 + $0x60] sm:$0xff]
    %v6306 = vld [vmem:[%s484 + $0x68] sm:$0xff]
    %v6307 = vld [vmem:[%s484 + $0x70] sm:$0xff]
    %v6308 = vld [vmem:[%s484 + $0x78] sm:$0xff]
    %v6309 = vld [vmem:[%s484 + $0x80] sm:$0xff]
    %v6310 = vld [vmem:[%s484 + $0x88] sm:$0xff]
    %v6311 = vld [vmem:[%s484 + $0x90] sm:$0xff]
    %v6312 = vld [vmem:[%s484 + $0x98] sm:$0xff]
    %v6313 = vld [vmem:[%s484 + $0xa0] sm:$0xff]
    %v6314 = vld [vmem:[%s484 + $0xa8] sm:$0xff]
    %6315 = vmatprep.subr.mxu0 0.0
    %6316 = vmatpush1.msra.mxu0 %v6293
    %6317 = vmatprep.subr.mxu0 0.0
    %6318 = vmatpush1.msra.mxu0 %v6294
    %6319 = vmatprep.subr.mxu0 0.0
    %6320 = vmatpush1.msra.mxu0 %v6295
    %6321 = vmatprep.subr.mxu0 0.0
    %6322 = vmatpush1.msra.mxu0 %v6296
    %6323 = vmatprep.subr.mxu0 0.0
    %6324 = vmatpush1.msra.mxu0 %v6297
    %6325 = vmatprep.subr.mxu0 0.0
    %6326 = vmatpush1.msra.mxu0 %v6298
    %6327 = vmatprep.subr.mxu0 0.0
    %6328 = vmatpush1.msra.mxu0 %v6299
    %6329 = vmatprep.subr.mxu0 0.0
    %6330 = vmatpush1.msra.mxu0 %v6300
    %6331 = vmatprep.subr.mxu0 0.0
    %6332 = vmatpush1.msra.mxu0 %v6301
    %6333 = vmatprep.subr.mxu0 0.0
    %6334 = vmatpush1.msra.mxu0 %v6302
    %6335 = vmatprep.subr.mxu0 0.0
    %6336 = vmatpush1.msra.mxu0 %v6303
    %6337 = vmatprep.subr.mxu0 0.0
    %6338 = vmatpush1.msra.mxu0 %v6304
    %6339 = vmatprep.subr.mxu0 0.0
    %6340 = vmatpush1.msra.mxu0 %v6305
    %6341 = vmatprep.subr.mxu0 0.0
    %6342 = vmatpush1.msra.mxu0 %v6306
    %6343 = vmatprep.subr.mxu0 0.0
    %6344 = vmatpush1.msra.mxu0 %v6307
    %6345 = vmatprep.subr.mxu0 0.0
    %6346 = vmatpush1.msra.mxu0 %v6308
    %6347 = vmatprep.subr.mxu0 0.0
    %6348 = vmatpush1.msra.mxu0 %v6309
    %6349 = vmatprep.subr.mxu0 0.0
    %6350 = vmatpush1.msra.mxu0 %v6310
    %6351 = vmatprep.subr.mxu0 0.0
    %6352 = vmatpush1.msra.mxu0 %v6311
    %6353 = vmatprep.subr.mxu0 0.0
    %6354 = vmatpush1.msra.mxu0 %v6312
    %6355 = vmatprep.subr.mxu0 0.0
    %6356 = vmatpush1.msra.mxu0 %v6313
    %6357 = vmatprep.subr.mxu0 0.0
    %6358 = vmatpush1.msra.mxu0 %v6314
    %6359 = vmatprep.subr.mxu0 0.0
    %6360 = vmatpush1.msra.mxu0 0.0
    %6361 = vmatprep.subr.mxu0 0.0
    %6362 = vmatpush1.msra.mxu0 0.0
    %6363 = vmatprep.subr.mxu0 0.0
    %6364 = vmatpush1.msra.mxu0 0.0
    %6365 = vmatprep.subr.mxu0 0.0
    %6366 = vmatpush1.msra.mxu0 0.0
    %6367 = vmatprep.subr.mxu0 0.0
    %6368 = vmatpush1.msra.mxu0 0.0
    %6369 = vmatprep.subr.mxu0 0.0
    %6370 = vmatpush1.msra.mxu0 0.0
    %6371 = vmatprep.subr.mxu0 0.0
    %6372 = vmatpush1.msra.mxu0 0.0
    %6373 = vmatprep.subr.mxu0 0.0
    %6374 = vmatpush1.msra.mxu0 0.0
    %6375 = vmatprep.subr.mxu0 0.0
    %6376 = vmatpush1.msra.mxu0 0.0
    %6377 = vmatprep.subr.mxu0 0.0
    %6378 = vmatpush1.msra.mxu0 0.0
    %6379 = vmatprep.mubr.f32.mxu0 %v6213
    %6380 = vmatmul.mubr.f32.gmra.mrb[0].mxu0 %v6095
    %v6381 = vpop.f32.mrb[0].mxu0
    %v6382 = vadd.f32 0.0, %v6381
    %v6383 = vpop.f32.mrb[0].mxu0
    %6384 = vmatprep.mubr.f32.mxu0 %v6216
    %6385 = vmatmul.mubr.f32.gmra.mrb[0].mxu0 %v6101
    %v6386 = vpop.f32.mrb[0].mxu0
    %v6387 = vadd.f32 0.0, %v6386
    %v6388 = vpop.f32.mrb[0].mxu0
    %6389 = vdwg.mxu0
    %v6390 = vmax.f32 %v6285, %v6382
    %v6391 = vmax.f32 %v6290, %v6387
    %v6393 = vsel %vm402, %v6182, 0
    %v6396 = vsel %vm402, %v6188, 0
    %6398 = vmatprep.subr.mxu0 0.0
    %6399 = vmatpush1.msra.mxu0 %v6190
    %6400 = vmatprep.subr.mxu0 0.0
    %6401 = vmatpush1.msra.mxu0 %v6191
    %6402 = vmatprep.subr.mxu0 0.0
    %6403 = vmatpush1.msra.mxu0 %v6192
    %6404 = vmatprep.subr.mxu0 0.0
    %6405 = vmatpush1.msra.mxu0 %v6193
    %6406 = vmatprep.subr.mxu0 0.0
    %6407 = vmatpush1.msra.mxu0 %v6194
    %6408 = vmatprep.subr.mxu0 0.0
    %6409 = vmatpush1.msra.mxu0 %v6195
    %6410 = vmatprep.subr.mxu0 0.0
    %6411 = vmatpush1.msra.mxu0 %v6196
    %6412 = vmatprep.subr.mxu0 0.0
    %6413 = vmatpush1.msra.mxu0 %v6197
    %6414 = vmatprep.subr.mxu0 0.0
    %6415 = vmatpush1.msra.mxu0 %v6198
    %6416 = vmatprep.subr.mxu0 0.0
    %6417 = vmatpush1.msra.mxu0 %v6199
    %6418 = vmatprep.subr.mxu0 0.0
    %6419 = vmatpush1.msra.mxu0 %v6200
    %6420 = vmatprep.subr.mxu0 0.0
    %6421 = vmatpush1.msra.mxu0 %v6201
    %6422 = vmatprep.subr.mxu0 0.0
    %6423 = vmatpush1.msra.mxu0 %v6202
    %6424 = vmatprep.subr.mxu0 0.0
    %6425 = vmatpush1.msra.mxu0 %v6203
    %6426 = vmatprep.subr.mxu0 0.0
    %6427 = vmatpush1.msra.mxu0 %v6204
    %6428 = vmatprep.subr.mxu0 0.0
    %6429 = vmatpush1.msra.mxu0 %v6205
    %6430 = vmatprep.subr.mxu0 0.0
    %6431 = vmatpush1.msra.mxu0 %v6206
    %6432 = vmatprep.subr.mxu0 0.0
    %6433 = vmatpush1.msra.mxu0 %v6207
    %6434 = vmatprep.subr.mxu0 0.0
    %6435 = vmatpush1.msra.mxu0 %v6208
    %6436 = vmatprep.subr.mxu0 0.0
    %6437 = vmatpush1.msra.mxu0 %v6209
    %6438 = vmatprep.subr.mxu0 0.0
    %6439 = vmatpush1.msra.mxu0 %v6210
    %6440 = vmatprep.subr.mxu0 0.0
    %6441 = vmatpush1.msra.mxu0 %v6211
    %6442 = vmatprep.subr.mxu0 0.0
    %6443 = vmatpush1.msra.mxu0 0.0
    %6444 = vmatprep.subr.mxu0 0.0
    %6445 = vmatpush1.msra.mxu0 0.0
    %6446 = vmatprep.subr.mxu0 0.0
    %6447 = vmatpush1.msra.mxu0 0.0
    %6448 = vmatprep.subr.mxu0 0.0
    %6449 = vmatpush1.msra.mxu0 0.0
    %6450 = vmatprep.subr.mxu0 0.0
    %6451 = vmatpush1.msra.mxu0 0.0
    %6452 = vmatprep.subr.mxu0 0.0
    %6453 = vmatpush1.msra.mxu0 0.0
    %6454 = vmatprep.subr.mxu0 0.0
    %6455 = vmatpush1.msra.mxu0 0.0
    %6456 = vmatprep.subr.mxu0 0.0
    %6457 = vmatpush1.msra.mxu0 0.0
    %6458 = vmatprep.subr.mxu0 0.0
    %6459 = vmatpush1.msra.mxu0 0.0
    %6460 = vmatprep.subr.mxu0 0.0
    %6461 = vmatpush1.msra.mxu0 0.0
    %6462 = vmatprep.mubr.f32.mxu0 %v6393
    %6463 = vmatmul.mubr.f32.gmra.mrb[0].mxu0 %v6180
    %v6464 = vpop.f32.mrb[0].mxu0
    %v6465 = vadd.f32 0.0, %v6464
    %v6466 = vpop.f32.mrb[0].mxu0
    %6467 = vmatprep.mubr.f32.mxu0 %v6396
    %6468 = vmatmul.mubr.f32.gmra.mrb[0].mxu0 %v6186
    %v6469 = vpop.f32.mrb[0].mxu0
    %v6470 = vadd.f32 0.0, %v6469
    %v6471 = vpop.f32.mrb[0].mxu0
    %6472 = vdwg.mxu0
    %6473 = vmatprep.subr.mxu0 0.0
    %6474 = vmatpush1.msra.mxu0 %v6293
    %6475 = vmatprep.subr.mxu0 0.0
    %6476 = vmatpush1.msra.mxu0 %v6294
    %6477 = vmatprep.subr.mxu0 0.0
    %6478 = vmatpush1.msra.mxu0 %v6295
    %6479 = vmatprep.subr.mxu0 0.0
    %6480 = vmatpush1.msra.mxu0 %v6296
    %6481 = vmatprep.subr.mxu0 0.0
    %6482 = vmatpush1.msra.mxu0 %v6297
    %6483 = vmatprep.subr.mxu0 0.0
    %6484 = vmatpush1.msra.mxu0 %v6298
    %6485 = vmatprep.subr.mxu0 0.0
    %6486 = vmatpush1.msra.mxu0 %v6299
    %6487 = vmatprep.subr.mxu0 0.0
    %6488 = vmatpush1.msra.mxu0 %v6300
    %6489 = vmatprep.subr.mxu0 0.0
    %6490 = vmatpush1.msra.mxu0 %v6301
    %6491 = vmatprep.subr.mxu0 0.0
    %6492 = vmatpush1.msra.mxu0 %v6302
    %6493 = vmatprep.subr.mxu0 0.0
    %6494 = vmatpush1.msra.mxu0 %v6303
    %6495 = vmatprep.subr.mxu0 0.0
    %6496 = vmatpush1.msra.mxu0 %v6304
    %6497 = vmatprep.subr.mxu0 0.0
    %6498 = vmatpush1.msra.mxu0 %v6305
    %6499 = vmatprep.subr.mxu0 0.0
    %6500 = vmatpush1.msra.mxu0 %v6306
    %6501 = vmatprep.subr.mxu0 0.0
    %6502 = vmatpush1.msra.mxu0 %v6307
    %6503 = vmatprep.subr.mxu0 0.0
    %6504 = vmatpush1.msra.mxu0 %v6308
    %6505 = vmatprep.subr.mxu0 0.0
    %6506 = vmatpush1.msra.mxu0 %v6309
    %6507 = vmatprep.subr.mxu0 0.0
    %6508 = vmatpush1.msra.mxu0 %v6310
    %6509 = vmatprep.subr.mxu0 0.0
    %6510 = vmatpush1.msra.mxu0 %v6311
    %6511 = vmatprep.subr.mxu0 0.0
    %6512 = vmatpush1.msra.mxu0 %v6312
    %6513 = vmatprep.subr.mxu0 0.0
    %6514 = vmatpush1.msra.mxu0 %v6313
    %6515 = vmatprep.subr.mxu0 0.0
    %6516 = vmatpush1.msra.mxu0 %v6314
    %6517 = vmatprep.subr.mxu0 0.0
    %6518 = vmatpush1.msra.mxu0 0.0
    %6519 = vmatprep.subr.mxu0 0.0
    %6520 = vmatpush1.msra.mxu0 0.0
    %6521 = vmatprep.subr.mxu0 0.0
    %6522 = vmatpush1.msra.mxu0 0.0
    %6523 = vmatprep.subr.mxu0 0.0
    %6524 = vmatpush1.msra.mxu0 0.0
    %6525 = vmatprep.subr.mxu0 0.0
    %6526 = vmatpush1.msra.mxu0 0.0
    %6527 = vmatprep.subr.mxu0 0.0
    %6528 = vmatpush1.msra.mxu0 0.0
    %6529 = vmatprep.subr.mxu0 0.0
    %6530 = vmatpush1.msra.mxu0 0.0
    %6531 = vmatprep.subr.mxu0 0.0
    %6532 = vmatpush1.msra.mxu0 0.0
    %6533 = vmatprep.subr.mxu0 0.0
    %6534 = vmatpush1.msra.mxu0 0.0
    %6535 = vmatprep.subr.mxu0 0.0
    %6536 = vmatpush1.msra.mxu0 0.0
    %6537 = vmatprep.mubr.f32.mxu0 %v6393
    %6538 = vmatmul.mubr.f32.gmra.mrb[0].mxu0 %v6180
    %v6539 = vpop.f32.mrb[0].mxu0
    %v6540 = vadd.f32 0.0, %v6539
    %v6541 = vpop.f32.mrb[0].mxu0
    %6542 = vmatprep.mubr.f32.mxu0 %v6396
    %6543 = vmatmul.mubr.f32.gmra.mrb[0].mxu0 %v6186
    %v6544 = vpop.f32.mrb[0].mxu0
    %v6545 = vadd.f32 0.0, %v6544
    %v6546 = vpop.f32.mrb[0].mxu0
    %6547 = vdwg.mxu0
    %v6548 = vmax.f32 %v6465, %v6540
    %v6549 = vmax.f32 %v6470, %v6545
    %v6550 = vmax.f32 %v6390, %v6548
    %v6551 = vmax.f32 %v6391, %v6549
    %v6552 = vld [vmem:[%s2] sm:$0x1]
    %v6554 = vlaneseq
    %v6555 = vshrl.u32 %v6554, 7
    %v6556 = vsub.s32 0, %v6555
    %v6557 = vrot.slane %v6552, %v6556
    %v6559 = vadd.f32 %v6550, %v6557
    %v6560 = vadd.f32 %v6551, %v6557
    %v6561 = vmax.f32 %v6559, 0.0
    %v6562 = vmax.f32 %v6560, 0.0
    %v6563 = vld [vmem:[%s5] sm:$0xff]
    %v6564 = vld [vmem:[%s5 + $0x8] sm:$0xff]
    %v6565 = vld [vmem:[%s5 + $0x10] sm:$0xff]
    %v6566 = vld [vmem:[%s5 + $0x18] sm:$0xff]
    %v6567 = vld [vmem:[%s5 + $0x20] sm:$0xff]
    %v6568 = vld [vmem:[%s5 + $0x28] sm:$0xff]
    %v6569 = vld [vmem:[%s5 + $0x30] sm:$0xff]
    %v6570 = vld [vmem:[%s5 + $0x38] sm:$0xff]
    %v6571 = vld [vmem:[%s5 + $0x40] sm:$0xff]
    %v6572 = vld [vmem:[%s5 + $0x48] sm:$0xff]
    %v6573 = vld [vmem:[%s5 + $0x50] sm:$0xff]
    %v6574 = vld [vmem:[%s766] sm:$0xff]
    %v6575 = vld [vmem:[%s766 + $0x8] sm:$0xff]
    %v6576 = vld [vmem:[%s766 + $0x10] sm:$0xff]
    %v6577 = vld [vmem:[%s766 + $0x18] sm:$0xff]
    %v6578 = vld [vmem:[%s766 + $0x20] sm:$0xff]
    %v6579 = vld [vmem:[%s766 + $0x28] sm:$0xff]
    %v6580 = vld [vmem:[%s766 + $0x30] sm:$0xff]
    %v6581 = vld [vmem:[%s766 + $0x38] sm:$0xff]
    %v6582 = vld [vmem:[%s766 + $0x40] sm:$0xff]
    %v6583 = vld [vmem:[%s766 + $0x48] sm:$0xff]
    %v6584 = vld [vmem:[%s766 + $0x50] sm:$0xff]
    %v6586 = vrot.slane %v6561, 1
    %v6587 = vsel %vm780, %v6586, 0
    %6589 = vmatprep.subr.mxu0 0.0
    %6590 = vmatpush1.msra.mxu0 %v6574
    %6591 = vmatprep.subr.mxu0 0.0
    %6592 = vmatpush1.msra.mxu0 %v6575
    %6593 = vmatprep.subr.mxu0 0.0
    %6594 = vmatpush1.msra.mxu0 %v6576
    %6595 = vmatprep.subr.mxu0 0.0
    %6596 = vmatpush1.msra.mxu0 %v6577
    %6597 = vmatprep.subr.mxu0 0.0
    %6598 = vmatpush1.msra.mxu0 %v6578
    %6599 = vmatprep.subr.mxu0 0.0
    %6600 = vmatpush1.msra.mxu0 %v6579
    %6601 = vmatprep.subr.mxu0 0.0
    %6602 = vmatpush1.msra.mxu0 %v6580
    %6603 = vmatprep.subr.mxu0 0.0
    %6604 = vmatpush1.msra.mxu0 %v6581
    %6605 = vmatprep.subr.mxu0 0.0
    %6606 = vmatpush1.msra.mxu0 %v6582
    %6607 = vmatprep.subr.mxu0 0.0
    %6608 = vmatpush1.msra.mxu0 %v6583
    %6609 = vmatprep.subr.mxu0 0.0
    %6610 = vmatpush1.msra.mxu0 %v6584
    %6611 = vmatprep.subr.mxu0 0.0
    %6612 = vmatpush1.msra.mxu0 0.0
    %6613 = vmatprep.subr.mxu0 0.0
    %6614 = vmatpush1.msra.mxu0 0.0
    %6615 = vmatprep.subr.mxu0 0.0
    %6616 = vmatpush1.msra.mxu0 0.0
    %6617 = vmatprep.subr.mxu0 0.0
    %6618 = vmatpush1.msra.mxu0 0.0
    %6619 = vmatprep.subr.mxu0 0.0
    %6620 = vmatpush1.msra.mxu0 0.0
    %6621 = vmatprep.subr.mxu0 0.0
    %6622 = vmatpush1.msra.mxu0 0.0
    %6623 = vmatprep.subr.mxu0 0.0
    %6624 = vmatpush1.msra.mxu0 0.0
    %6625 = vmatprep.subr.mxu0 0.0
    %6626 = vmatpush1.msra.mxu0 0.0
    %6627 = vmatprep.subr.mxu0 0.0
    %6628 = vmatpush1.msra.mxu0 0.0
    %6629 = vmatprep.subr.mxu0 0.0
    %6630 = vmatpush1.msra.mxu0 0.0
    %6631 = vmatprep.subr.mxu0 0.0
    %6632 = vmatpush1.msra.mxu0 0.0
    %6633 = vmatprep.subr.mxu0 0.0
    %6634 = vmatpush1.msra.mxu0 0.0
    %6635 = vmatprep.subr.mxu0 0.0
    %6636 = vmatpush1.msra.mxu0 0.0
    %6637 = vmatprep.subr.mxu0 0.0
    %6638 = vmatpush1.msra.mxu0 0.0
    %6639 = vmatprep.subr.mxu0 0.0
    %6640 = vmatpush1.msra.mxu0 0.0
    %6641 = vmatprep.subr.mxu0 0.0
    %6642 = vmatpush1.msra.mxu0 0.0
    %6643 = vmatprep.subr.mxu0 0.0
    %6644 = vmatpush1.msra.mxu0 0.0
    %6645 = vmatprep.subr.mxu0 0.0
    %6646 = vmatpush1.msra.mxu0 0.0
    %6647 = vmatprep.subr.mxu0 0.0
    %6648 = vmatpush1.msra.mxu0 0.0
    %6649 = vmatprep.subr.mxu0 0.0
    %6650 = vmatpush1.msra.mxu0 0.0
    %6651 = vmatprep.subr.mxu0 0.0
    %6652 = vmatpush1.msra.mxu0 0.0
    %6653 = vmatprep.mubr.f32.mxu0 0.0
    %6654 = vmatmul.mubr.f32.gmra.mrb[0].mxu0 %v6587
    %v6655 = vpop.f32.mrb[0].mxu0
    %v6656 = vadd.f32 0.0, %v6655
    %v6657 = vpop.f32.mrb[0].mxu0
    %6658 = vdwg.mxu0
    %v6659 = vsel %vm780, %v6561, 0
    %6661 = vmatprep.subr.mxu0 0.0
    %6662 = vmatpush1.msra.mxu0 %v6563
    %6663 = vmatprep.subr.mxu0 0.0
    %6664 = vmatpush1.msra.mxu0 %v6564
    %6665 = vmatprep.subr.mxu0 0.0
    %6666 = vmatpush1.msra.mxu0 %v6565
    %6667 = vmatprep.subr.mxu0 0.0
    %6668 = vmatpush1.msra.mxu0 %v6566
    %6669 = vmatprep.subr.mxu0 0.0
    %6670 = vmatpush1.msra.mxu0 %v6567
    %6671 = vmatprep.subr.mxu0 0.0
    %6672 = vmatpush1.msra.mxu0 %v6568
    %6673 = vmatprep.subr.mxu0 0.0
    %6674 = vmatpush1.msra.mxu0 %v6569
    %6675 = vmatprep.subr.mxu0 0.0
    %6676 = vmatpush1.msra.mxu0 %v6570
    %6677 = vmatprep.subr.mxu0 0.0
    %6678 = vmatpush1.msra.mxu0 %v6571
    %6679 = vmatprep.subr.mxu0 0.0
    %6680 = vmatpush1.msra.mxu0 %v6572
    %6681 = vmatprep.subr.mxu0 0.0
    %6682 = vmatpush1.msra.mxu0 %v6573
    %6683 = vmatprep.subr.mxu0 0.0
    %6684 = vmatpush1.msra.mxu0 0.0
    %6685 = vmatprep.subr.mxu0 0.0
    %6686 = vmatpush1.msra.mxu0 0.0
    %6687 = vmatprep.subr.mxu0 0.0
    %6688 = vmatpush1.msra.mxu0 0.0
    %6689 = vmatprep.subr.mxu0 0.0
    %6690 = vmatpush1.msra.mxu0 0.0
    %6691 = vmatprep.subr.mxu0 0.0
    %6692 = vmatpush1.msra.mxu0 0.0
    %6693 = vmatprep.subr.mxu0 0.0
    %6694 = vmatpush1.msra.mxu0 0.0
    %6695 = vmatprep.subr.mxu0 0.0
    %6696 = vmatpush1.msra.mxu0 0.0
    %6697 = vmatprep.subr.mxu0 0.0
    %6698 = vmatpush1.msra.mxu0 0.0
    %6699 = vmatprep.subr.mxu0 0.0
    %6700 = vmatpush1.msra.mxu0 0.0
    %6701 = vmatprep.subr.mxu0 0.0
    %6702 = vmatpush1.msra.mxu0 0.0
    %6703 = vmatprep.subr.mxu0 0.0
    %6704 = vmatpush1.msra.mxu0 0.0
    %6705 = vmatprep.subr.mxu0 0.0
    %6706 = vmatpush1.msra.mxu0 0.0
    %6707 = vmatprep.subr.mxu0 0.0
    %6708 = vmatpush1.msra.mxu0 0.0
    %6709 = vmatprep.subr.mxu0 0.0
    %6710 = vmatpush1.msra.mxu0 0.0
    %6711 = vmatprep.subr.mxu0 0.0
    %6712 = vmatpush1.msra.mxu0 0.0
    %6713 = vmatprep.subr.mxu0 0.0
    %6714 = vmatpush1.msra.mxu0 0.0
    %6715 = vmatprep.subr.mxu0 0.0
    %6716 = vmatpush1.msra.mxu0 0.0
    %6717 = vmatprep.subr.mxu0 0.0
    %6718 = vmatpush1.msra.mxu0 0.0
    %6719 = vmatprep.subr.mxu0 0.0
    %6720 = vmatpush1.msra.mxu0 0.0
    %6721 = vmatprep.subr.mxu0 0.0
    %6722 = vmatpush1.msra.mxu0 0.0
    %6723 = vmatprep.subr.mxu0 0.0
    %6724 = vmatpush1.msra.mxu0 0.0
    %6725 = vmatprep.mubr.f32.mxu0 0.0
    %6726 = vmatmul.mubr.f32.gmra.mrb[0].mxu0 %v6659
    %v6727 = vpop.f32.mrb[0].mxu0
    %v6728 = vadd.f32 %v6656, %v6727
    %v6729 = vpop.f32.mrb[0].mxu0
    %6730 = vdwg.mxu0
    %v6731 = vld [vmem:[%s925] sm:$0xff]
    %v6732 = vld [vmem:[%s925 + $0x8] sm:$0xff]
    %v6733 = vld [vmem:[%s925 + $0x10] sm:$0xff]
    %v6734 = vld [vmem:[%s925 + $0x18] sm:$0xff]
    %v6735 = vld [vmem:[%s925 + $0x20] sm:$0xff]
    %v6736 = vld [vmem:[%s925 + $0x28] sm:$0xff]
    %v6737 = vld [vmem:[%s925 + $0x30] sm:$0xff]
    %v6738 = vld [vmem:[%s925 + $0x38] sm:$0xff]
    %v6739 = vld [vmem:[%s925 + $0x40] sm:$0xff]
    %v6740 = vld [vmem:[%s925 + $0x48] sm:$0xff]
    %v6741 = vld [vmem:[%s925 + $0x50] sm:$0xff]
    %v6743 = vrot.slane %v6561, 2
    %v6744 = vrot.slane %v6562, 2
    %v6745 = vsel %vm210, %v6743, %v6744
    %v6746 = vsel %vm780, %v6745, 0
    %6748 = vmatprep.subr.mxu0 0.0
    %6749 = vmatpush1.msra.mxu0 %v6731
    %6750 = vmatprep.subr.mxu0 0.0
    %6751 = vmatpush1.msra.mxu0 %v6732
    %6752 = vmatprep.subr.mxu0 0.0
    %6753 = vmatpush1.msra.mxu0 %v6733
    %6754 = vmatprep.subr.mxu0 0.0
    %6755 = vmatpush1.msra.mxu0 %v6734
    %6756 = vmatprep.subr.mxu0 0.0
    %6757 = vmatpush1.msra.mxu0 %v6735
    %6758 = vmatprep.subr.mxu0 0.0
    %6759 = vmatpush1.msra.mxu0 %v6736
    %6760 = vmatprep.subr.mxu0 0.0
    %6761 = vmatpush1.msra.mxu0 %v6737
    %6762 = vmatprep.subr.mxu0 0.0
    %6763 = vmatpush1.msra.mxu0 %v6738
    %6764 = vmatprep.subr.mxu0 0.0
    %6765 = vmatpush1.msra.mxu0 %v6739
    %6766 = vmatprep.subr.mxu0 0.0
    %6767 = vmatpush1.msra.mxu0 %v6740
    %6768 = vmatprep.subr.mxu0 0.0
    %6769 = vmatpush1.msra.mxu0 %v6741
    %6770 = vmatprep.subr.mxu0 0.0
    %6771 = vmatpush1.msra.mxu0 0.0
    %6772 = vmatprep.subr.mxu0 0.0
    %6773 = vmatpush1.msra.mxu0 0.0
    %6774 = vmatprep.subr.mxu0 0.0
    %6775 = vmatpush1.msra.mxu0 0.0
    %6776 = vmatprep.subr.mxu0 0.0
    %6777 = vmatpush1.msra.mxu0 0.0
    %6778 = vmatprep.subr.mxu0 0.0
    %6779 = vmatpush1.msra.mxu0 0.0
    %6780 = vmatprep.subr.mxu0 0.0
    %6781 = vmatpush1.msra.mxu0 0.0
    %6782 = vmatprep.subr.mxu0 0.0
    %6783 = vmatpush1.msra.mxu0 0.0
    %6784 = vmatprep.subr.mxu0 0.0
    %6785 = vmatpush1.msra.mxu0 0.0
    %6786 = vmatprep.subr.mxu0 0.0
    %6787 = vmatpush1.msra.mxu0 0.0
    %6788 = vmatprep.subr.mxu0 0.0
    %6789 = vmatpush1.msra.mxu0 0.0
    %6790 = vmatprep.subr.mxu0 0.0
    %6791 = vmatpush1.msra.mxu0 0.0
    %6792 = vmatprep.subr.mxu0 0.0
    %6793 = vmatpush1.msra.mxu0 0.0
    %6794 = vmatprep.subr.mxu0 0.0
    %6795 = vmatpush1.msra.mxu0 0.0
    %6796 = vmatprep.subr.mxu0 0.0
    %6797 = vmatpush1.msra.mxu0 0.0
    %6798 = vmatprep.subr.mxu0 0.0
    %6799 = vmatpush1.msra.mxu0 0.0
    %6800 = vmatprep.subr.mxu0 0.0
    %6801 = vmatpush1.msra.mxu0 0.0
    %6802 = vmatprep.subr.mxu0 0.0
    %6803 = vmatpush1.msra.mxu0 0.0
    %6804 = vmatprep.subr.mxu0 0.0
    %6805 = vmatpush1.msra.mxu0 0.0
    %6806 = vmatprep.subr.mxu0 0.0
    %6807 = vmatpush1.msra.mxu0 0.0
    %6808 = vmatprep.subr.mxu0 0.0
    %6809 = vmatpush1.msra.mxu0 0.0
    %6810 = vmatprep.subr.mxu0 0.0
    %6811 = vmatpush1.msra.mxu0 0.0
    %6812 = vmatprep.mubr.f32.mxu0 0.0
    %6813 = vmatmul.mubr.f32.gmra.mrb[0].mxu0 %v6746
    %v6814 = vpop.f32.mrb[0].mxu0
    %v6815 = vadd.f32 0.0, %v6814
    %v6816 = vpop.f32.mrb[0].mxu0
    %6817 = vdwg.mxu0
    %v6818 = vadd.f32 %v6728, %v6815
    %v6819 = vld [vmem:[%s1014] sm:$0xff]
    %v6820 = vld [vmem:[%s1014 + $0x8] sm:$0xff]
    %v6821 = vld [vmem:[%s1014 + $0x10] sm:$0xff]
    %v6822 = vld [vmem:[%s1014 + $0x18] sm:$0xff]
    %v6823 = vld [vmem:[%s1014 + $0x20] sm:$0xff]
    %v6824 = vld [vmem:[%s1014 + $0x28] sm:$0xff]
    %v6825 = vld [vmem:[%s1014 + $0x30] sm:$0xff]
    %v6826 = vld [vmem:[%s1014 + $0x38] sm:$0xff]
    %v6827 = vld [vmem:[%s1014 + $0x40] sm:$0xff]
    %v6828 = vld [vmem:[%s1014 + $0x48] sm:$0xff]
    %v6829 = vld [vmem:[%s1014 + $0x50] sm:$0xff]
    %v6830 = vrot.slane %v6561, 3
    %v6831 = vrot.slane %v6562, 3
    %v6832 = vsel %vm1026, %v6830, %v6831
    %v6833 = vsel %vm780, %v6832, 0
    %6835 = vmatprep.subr.mxu0 0.0
    %6836 = vmatpush1.msra.mxu0 %v6819
    %6837 = vmatprep.subr.mxu0 0.0
    %6838 = vmatpush1.msra.mxu0 %v6820
    %6839 = vmatprep.subr.mxu0 0.0
    %6840 = vmatpush1.msra.mxu0 %v6821
    %6841 = vmatprep.subr.mxu0 0.0
    %6842 = vmatpush1.msra.mxu0 %v6822
    %6843 = vmatprep.subr.mxu0 0.0
    %6844 = vmatpush1.msra.mxu0 %v6823
    %6845 = vmatprep.subr.mxu0 0.0
    %6846 = vmatpush1.msra.mxu0 %v6824
    %6847 = vmatprep.subr.mxu0 0.0
    %6848 = vmatpush1.msra.mxu0 %v6825
    %6849 = vmatprep.subr.mxu0 0.0
    %6850 = vmatpush1.msra.mxu0 %v6826
    %6851 = vmatprep.subr.mxu0 0.0
    %6852 = vmatpush1.msra.mxu0 %v6827
    %6853 = vmatprep.subr.mxu0 0.0
    %6854 = vmatpush1.msra.mxu0 %v6828
    %6855 = vmatprep.subr.mxu0 0.0
    %6856 = vmatpush1.msra.mxu0 %v6829
    %6857 = vmatprep.subr.mxu0 0.0
    %6858 = vmatpush1.msra.mxu0 0.0
    %6859 = vmatprep.subr.mxu0 0.0
    %6860 = vmatpush1.msra.mxu0 0.0
    %6861 = vmatprep.subr.mxu0 0.0
    %6862 = vmatpush1.msra.mxu0 0.0
    %6863 = vmatprep.subr.mxu0 0.0
    %6864 = vmatpush1.msra.mxu0 0.0
    %6865 = vmatprep.subr.mxu0 0.0
    %6866 = vmatpush1.msra.mxu0 0.0
    %6867 = vmatprep.subr.mxu0 0.0
    %6868 = vmatpush1.msra.mxu0 0.0
    %6869 = vmatprep.subr.mxu0 0.0
    %6870 = vmatpush1.msra.mxu0 0.0
    %6871 = vmatprep.subr.mxu0 0.0
    %6872 = vmatpush1.msra.mxu0 0.0
    %6873 = vmatprep.subr.mxu0 0.0
    %6874 = vmatpush1.msra.mxu0 0.0
    %6875 = vmatprep.subr.mxu0 0.0
    %6876 = vmatpush1.msra.mxu0 0.0
    %6877 = vmatprep.subr.mxu0 0.0
    %6878 = vmatpush1.msra.mxu0 0.0
    %6879 = vmatprep.subr.mxu0 0.0
    %6880 = vmatpush1.msra.mxu0 0.0
    %6881 = vmatprep.subr.mxu0 0.0
    %6882 = vmatpush1.msra.mxu0 0.0
    %6883 = vmatprep.subr.mxu0 0.0
    %6884 = vmatpush1.msra.mxu0 0.0
    %6885 = vmatprep.subr.mxu0 0.0
    %6886 = vmatpush1.msra.mxu0 0.0
    %6887 = vmatprep.subr.mxu0 0.0
    %6888 = vmatpush1.msra.mxu0 0.0
    %6889 = vmatprep.subr.mxu0 0.0
    %6890 = vmatpush1.msra.mxu0 0.0
    %6891 = vmatprep.subr.mxu0 0.0
    %6892 = vmatpush1.msra.mxu0 0.0
    %6893 = vmatprep.subr.mxu0 0.0
    %6894 = vmatpush1.msra.mxu0 0.0
    %6895 = vmatprep.subr.mxu0 0.0
    %6896 = vmatpush1.msra.mxu0 0.0
    %6897 = vmatprep.subr.mxu0 0.0
    %6898 = vmatpush1.msra.mxu0 0.0
    %6899 = vmatprep.mubr.f32.mxu0 0.0
    %6900 = vmatmul.mubr.f32.gmra.mrb[0].mxu0 %v6833
    %v6901 = vpop.f32.mrb[0].mxu0
    %v6902 = vadd.f32 0.0, %v6901
    %v6903 = vpop.f32.mrb[0].mxu0
    %6904 = vdwg.mxu0
    %v6905 = vadd.f32 %v6818, %v6902
    %v6906 = vld [vmem:[%s1103] sm:$0xff]
    %v6907 = vld [vmem:[%s1103 + $0x8] sm:$0xff]
    %v6908 = vld [vmem:[%s1103 + $0x10] sm:$0xff]
    %v6909 = vld [vmem:[%s1103 + $0x18] sm:$0xff]
    %v6910 = vld [vmem:[%s1103 + $0x20] sm:$0xff]
    %v6911 = vld [vmem:[%s1103 + $0x28] sm:$0xff]
    %v6912 = vld [vmem:[%s1103 + $0x30] sm:$0xff]
    %v6913 = vld [vmem:[%s1103 + $0x38] sm:$0xff]
    %v6914 = vld [vmem:[%s1103 + $0x40] sm:$0xff]
    %v6915 = vld [vmem:[%s1103 + $0x48] sm:$0xff]
    %v6916 = vld [vmem:[%s1103 + $0x50] sm:$0xff]
    %v6917 = vrot.slane %v6561, 4
    %v6918 = vrot.slane %v6562, 4
    %v6919 = vsel %vm111, %v6917, %v6918
    %v6920 = vsel %vm780, %v6919, 0
    %6922 = vmatprep.subr.mxu0 0.0
    %6923 = vmatpush1.msra.mxu0 %v6906
    %6924 = vmatprep.subr.mxu0 0.0
    %6925 = vmatpush1.msra.mxu0 %v6907
    %6926 = vmatprep.subr.mxu0 0.0
    %6927 = vmatpush1.msra.mxu0 %v6908
    %6928 = vmatprep.subr.mxu0 0.0
    %6929 = vmatpush1.msra.mxu0 %v6909
    %6930 = vmatprep.subr.mxu0 0.0
    %6931 = vmatpush1.msra.mxu0 %v6910
    %6932 = vmatprep.subr.mxu0 0.0
    %6933 = vmatpush1.msra.mxu0 %v6911
    %6934 = vmatprep.subr.mxu0 0.0
    %6935 = vmatpush1.msra.mxu0 %v6912
    %6936 = vmatprep.subr.mxu0 0.0
    %6937 = vmatpush1.msra.mxu0 %v6913
    %6938 = vmatprep.subr.mxu0 0.0
    %6939 = vmatpush1.msra.mxu0 %v6914
    %6940 = vmatprep.subr.mxu0 0.0
    %6941 = vmatpush1.msra.mxu0 %v6915
    %6942 = vmatprep.subr.mxu0 0.0
    %6943 = vmatpush1.msra.mxu0 %v6916
    %6944 = vmatprep.subr.mxu0 0.0
    %6945 = vmatpush1.msra.mxu0 0.0
    %6946 = vmatprep.subr.mxu0 0.0
    %6947 = vmatpush1.msra.mxu0 0.0
    %6948 = vmatprep.subr.mxu0 0.0
    %6949 = vmatpush1.msra.mxu0 0.0
    %6950 = vmatprep.subr.mxu0 0.0
    %6951 = vmatpush1.msra.mxu0 0.0
    %6952 = vmatprep.subr.mxu0 0.0
    %6953 = vmatpush1.msra.mxu0 0.0
    %6954 = vmatprep.subr.mxu0 0.0
    %6955 = vmatpush1.msra.mxu0 0.0
    %6956 = vmatprep.subr.mxu0 0.0
    %6957 = vmatpush1.msra.mxu0 0.0
    %6958 = vmatprep.subr.mxu0 0.0
    %6959 = vmatpush1.msra.mxu0 0.0
    %6960 = vmatprep.subr.mxu0 0.0
    %6961 = vmatpush1.msra.mxu0 0.0
    %6962 = vmatprep.subr.mxu0 0.0
    %6963 = vmatpush1.msra.mxu0 0.0
    %6964 = vmatprep.subr.mxu0 0.0
    %6965 = vmatpush1.msra.mxu0 0.0
    %6966 = vmatprep.subr.mxu0 0.0
    %6967 = vmatpush1.msra.mxu0 0.0
    %6968 = vmatprep.subr.mxu0 0.0
    %6969 = vmatpush1.msra.mxu0 0.0
    %6970 = vmatprep.subr.mxu0 0.0
    %6971 = vmatpush1.msra.mxu0 0.0
    %6972 = vmatprep.subr.mxu0 0.0
    %6973 = vmatpush1.msra.mxu0 0.0
    %6974 = vmatprep.subr.mxu0 0.0
    %6975 = vmatpush1.msra.mxu0 0.0
    %6976 = vmatprep.subr.mxu0 0.0
    %6977 = vmatpush1.msra.mxu0 0.0
    %6978 = vmatprep.subr.mxu0 0.0
    %6979 = vmatpush1.msra.mxu0 0.0
    %6980 = vmatprep.subr.mxu0 0.0
    %6981 = vmatpush1.msra.mxu0 0.0
    %6982 = vmatprep.subr.mxu0 0.0
    %6983 = vmatpush1.msra.mxu0 0.0
    %6984 = vmatprep.subr.mxu0 0.0
    %6985 = vmatpush1.msra.mxu0 0.0
    %6986 = vmatprep.mubr.f32.mxu0 0.0
    %6987 = vmatmul.mubr.f32.gmra.mrb[0].mxu0 %v6920
    %v6988 = vpop.f32.mrb[0].mxu0
    %v6989 = vadd.f32 0.0, %v6988
    %v6990 = vpop.f32.mrb[0].mxu0
    %6991 = vdwg.mxu0
    %v6992 = vadd.f32 %v6905, %v6989
    %v6993 = vld [vmem:[%s7] sm:$0x7]
    %v6995 = vsel %vm1192, %v6993, 0
    %v6998 = vsel %vm1196, %v6992, 0
    %7000 = vmatprep.subr.mxu0 0.0
    %7001 = vmatpush1.msra.mxu0 %v6998
    %7002 = vmatprep.subr.mxu0 0.0
    %7003 = vmatpush1.msra.mxu0 0.0
    %7004 = vmatprep.subr.mxu0 0.0
    %7005 = vmatpush1.msra.mxu0 0.0
    %7006 = vmatprep.subr.mxu0 0.0
    %7007 = vmatpush1.msra.mxu0 0.0
    %7008 = vmatprep.subr.mxu0 0.0
    %7009 = vmatpush1.msra.mxu0 0.0
    %7010 = vmatprep.subr.mxu0 0.0
    %7011 = vmatpush1.msra.mxu0 0.0
    %7012 = vmatprep.subr.mxu0 0.0
    %7013 = vmatpush1.msra.mxu0 0.0
    %7014 = vmatprep.subr.mxu0 0.0
    %7015 = vmatpush1.msra.mxu0 0.0
    %7016 = vmatprep.subr.mxu0 0.0
    %7017 = vmatpush1.msra.mxu0 0.0
    %7018 = vmatprep.subr.mxu0 0.0
    %7019 = vmatpush1.msra.mxu0 0.0
    %7020 = vmatprep.subr.mxu0 0.0
    %7021 = vmatpush1.msra.mxu0 0.0
    %7022 = vmatprep.subr.mxu0 0.0
    %7023 = vmatpush1.msra.mxu0 0.0
    %7024 = vmatprep.subr.mxu0 0.0
    %7025 = vmatpush1.msra.mxu0 0.0
    %7026 = vmatprep.subr.mxu0 0.0
    %7027 = vmatpush1.msra.mxu0 0.0
    %7028 = vmatprep.subr.mxu0 0.0
    %7029 = vmatpush1.msra.mxu0 0.0
    %7030 = vmatprep.subr.mxu0 0.0
    %7031 = vmatpush1.msra.mxu0 0.0
    %7032 = vmatprep.subr.mxu0 0.0
    %7033 = vmatpush1.msra.mxu0 0.0
    %7034 = vmatprep.subr.mxu0 0.0
    %7035 = vmatpush1.msra.mxu0 0.0
    %7036 = vmatprep.subr.mxu0 0.0
    %7037 = vmatpush1.msra.mxu0 0.0
    %7038 = vmatprep.subr.mxu0 0.0
    %7039 = vmatpush1.msra.mxu0 0.0
    %7040 = vmatprep.subr.mxu0 0.0
    %7041 = vmatpush1.msra.mxu0 0.0
    %7042 = vmatprep.subr.mxu0 0.0
    %7043 = vmatpush1.msra.mxu0 0.0
    %7044 = vmatprep.subr.mxu0 0.0
    %7045 = vmatpush1.msra.mxu0 0.0
    %7046 = vmatprep.subr.mxu0 0.0
    %7047 = vmatpush1.msra.mxu0 0.0
    %7048 = vmatprep.subr.mxu0 0.0
    %7049 = vmatpush1.msra.mxu0 0.0
    %7050 = vmatprep.subr.mxu0 0.0
    %7051 = vmatpush1.msra.mxu0 0.0
    %7052 = vmatprep.subr.mxu0 0.0
    %7053 = vmatpush1.msra.mxu0 0.0
    %7054 = vmatprep.subr.mxu0 0.0
    %7055 = vmatpush1.msra.mxu0 0.0
    %7056 = vmatprep.subr.mxu0 0.0
    %7057 = vmatpush1.msra.mxu0 0.0
    %7058 = vmatprep.subr.mxu0 0.0
    %7059 = vmatpush1.msra.mxu0 0.0
    %7060 = vmatprep.subr.mxu0 0.0
    %7061 = vmatpush1.msra.mxu0 0.0
    %7062 = vmatprep.subr.mxu0 0.0
    %7063 = vmatpush1.msra.mxu0 0.0
    %7064 = vmatprep.mubr.f32.mxu0 0.0
    %7065 = vmatmul.mubr.f32.gmra.mrb[0].mxu0 %v6995
    %v7066 = vpop.f32.mrb[0].mxu0
    %v7067 = vadd.f32 0.0, %v7066
    %v7068 = vpop.f32.mrb[0].mxu0
    %7069 = vdwg.mxu0
    %v7070 = vld [vmem:[%s1270] sm:$0x7]
    %v7072 = vsel %vm1192, %v7070, 0
    %7074 = vmatprep.subr.mxu0 0.0
    %7075 = vmatpush1.msra.mxu0 %v6998
    %7076 = vmatprep.subr.mxu0 0.0
    %7077 = vmatpush1.msra.mxu0 0.0
    %7078 = vmatprep.subr.mxu0 0.0
    %7079 = vmatpush1.msra.mxu0 0.0
    %7080 = vmatprep.subr.mxu0 0.0
    %7081 = vmatpush1.msra.mxu0 0.0
    %7082 = vmatprep.subr.mxu0 0.0
    %7083 = vmatpush1.msra.mxu0 0.0
    %7084 = vmatprep.subr.mxu0 0.0
    %7085 = vmatpush1.msra.mxu0 0.0
    %7086 = vmatprep.subr.mxu0 0.0
    %7087 = vmatpush1.msra.mxu0 0.0
    %7088 = vmatprep.subr.mxu0 0.0
    %7089 = vmatpush1.msra.mxu0 0.0
    %7090 = vmatprep.subr.mxu0 0.0
    %7091 = vmatpush1.msra.mxu0 0.0
    %7092 = vmatprep.subr.mxu0 0.0
    %7093 = vmatpush1.msra.mxu0 0.0
    %7094 = vmatprep.subr.mxu0 0.0
    %7095 = vmatpush1.msra.mxu0 0.0
    %7096 = vmatprep.subr.mxu0 0.0
    %7097 = vmatpush1.msra.mxu0 0.0
    %7098 = vmatprep.subr.mxu0 0.0
    %7099 = vmatpush1.msra.mxu0 0.0
    %7100 = vmatprep.subr.mxu0 0.0
    %7101 = vmatpush1.msra.mxu0 0.0
    %7102 = vmatprep.subr.mxu0 0.0
    %7103 = vmatpush1.msra.mxu0 0.0
    %7104 = vmatprep.subr.mxu0 0.0
    %7105 = vmatpush1.msra.mxu0 0.0
    %7106 = vmatprep.subr.mxu0 0.0
    %7107 = vmatpush1.msra.mxu0 0.0
    %7108 = vmatprep.subr.mxu0 0.0
    %7109 = vmatpush1.msra.mxu0 0.0
    %7110 = vmatprep.subr.mxu0 0.0
    %7111 = vmatpush1.msra.mxu0 0.0
    %7112 = vmatprep.subr.mxu0 0.0
    %7113 = vmatpush1.msra.mxu0 0.0
    %7114 = vmatprep.subr.mxu0 0.0
    %7115 = vmatpush1.msra.mxu0 0.0
    %7116 = vmatprep.subr.mxu0 0.0
    %7117 = vmatpush1.msra.mxu0 0.0
    %7118 = vmatprep.subr.mxu0 0.0
    %7119 = vmatpush1.msra.mxu0 0.0
    %7120 = vmatprep.subr.mxu0 0.0
    %7121 = vmatpush1.msra.mxu0 0.0
    %7122 = vmatprep.subr.mxu0 0.0
    %7123 = vmatpush1.msra.mxu0 0.0
    %7124 = vmatprep.subr.mxu0 0.0
    %7125 = vmatpush1.msra.mxu0 0.0
    %7126 = vmatprep.subr.mxu0 0.0
    %7127 = vmatpush1.msra.mxu0 0.0
    %7128 = vmatprep.subr.mxu0 0.0
    %7129 = vmatpush1.msra.mxu0 0.0
    %7130 = vmatprep.subr.mxu0 0.0
    %7131 = vmatpush1.msra.mxu0 0.0
    %7132 = vmatprep.subr.mxu0 0.0
    %7133 = vmatpush1.msra.mxu0 0.0
    %7134 = vmatprep.subr.mxu0 0.0
    %7135 = vmatpush1.msra.mxu0 0.0
    %7136 = vmatprep.subr.mxu0 0.0
    %7137 = vmatpush1.msra.mxu0 0.0
    %7138 = vmatprep.mubr.f32.mxu0 0.0
    %7139 = vmatmul.mubr.f32.gmra.mrb[0].mxu0 %v7072
    %v7140 = vpop.f32.mrb[0].mxu0
    %v7141 = vadd.f32 0.0, %v7140
    %v7142 = vpop.f32.mrb[0].mxu0
    %7143 = vdwg.mxu0
    %v7144 = vld [vmem:[%s8] sm:$0xff]
    %v7145 = vld [vmem:[%s8 + $0x8] sm:$0xff]
    %v7146 = vld [vmem:[%s8 + $0x10] sm:$0xff]
    %v7147 = vld [vmem:[%s8 + $0x18] sm:$0xff]
    %v7148 = vld [vmem:[%s8 + $0x20] sm:$0xff]
    %v7149 = vld [vmem:[%s8 + $0x28] sm:$0xff]
    %v7150 = vld [vmem:[%s8 + $0x30] sm:$0xff]
    %v7151 = vld [vmem:[%s8 + $0x38] sm:$0xff]
    %v7152 = vld [vmem:[%s8 + $0x40] sm:$0x3f]
    %v7154 = vsel %vm1354, %v7067, 0
    %v7157 = vsel %vm210, %v7152, 0
    %7159 = vmatprep.subr.mxu0 0.0
    %7160 = vmatpush1.msra.mxu0 %v7144
    %7161 = vmatprep.subr.mxu0 0.0
    %7162 = vmatpush1.msra.mxu0 %v7145
    %7163 = vmatprep.subr.mxu0 0.0
    %7164 = vmatpush1.msra.mxu0 %v7146
    %7165 = vmatprep.subr.mxu0 0.0
    %7166 = vmatpush1.msra.mxu0 %v7147
    %7167 = vmatprep.subr.mxu0 0.0
    %7168 = vmatpush1.msra.mxu0 %v7148
    %7169 = vmatprep.subr.mxu0 0.0
    %7170 = vmatpush1.msra.mxu0 %v7149
    %7171 = vmatprep.subr.mxu0 0.0
    %7172 = vmatpush1.msra.mxu0 %v7150
    %7173 = vmatprep.subr.mxu0 0.0
    %7174 = vmatpush1.msra.mxu0 %v7151
    %7175 = vmatprep.subr.mxu0 0.0
    %7176 = vmatpush1.msra.mxu0 %v7157
    %7177 = vmatprep.subr.mxu0 0.0
    %7178 = vmatpush1.msra.mxu0 0.0
    %7179 = vmatprep.subr.mxu0 0.0
    %7180 = vmatpush1.msra.mxu0 0.0
    %7181 = vmatprep.subr.mxu0 0.0
    %7182 = vmatpush1.msra.mxu0 0.0
    %7183 = vmatprep.subr.mxu0 0.0
    %7184 = vmatpush1.msra.mxu0 0.0
    %7185 = vmatprep.subr.mxu0 0.0
    %7186 = vmatpush1.msra.mxu0 0.0
    %7187 = vmatprep.subr.mxu0 0.0
    %7188 = vmatpush1.msra.mxu0 0.0
    %7189 = vmatprep.subr.mxu0 0.0
    %7190 = vmatpush1.msra.mxu0 0.0
    %7191 = vmatprep.subr.mxu0 0.0
    %7192 = vmatpush1.msra.mxu0 0.0
    %7193 = vmatprep.subr.mxu0 0.0
    %7194 = vmatpush1.msra.mxu0 0.0
    %7195 = vmatprep.subr.mxu0 0.0
    %7196 = vmatpush1.msra.mxu0 0.0
    %7197 = vmatprep.subr.mxu0 0.0
    %7198 = vmatpush1.msra.mxu0 0.0
    %7199 = vmatprep.subr.mxu0 0.0
    %7200 = vmatpush1.msra.mxu0 0.0
    %7201 = vmatprep.subr.mxu0 0.0
    %7202 = vmatpush1.msra.mxu0 0.0
    %7203 = vmatprep.subr.mxu0 0.0
    %7204 = vmatpush1.msra.mxu0 0.0
    %7205 = vmatprep.subr.mxu0 0.0
    %7206 = vmatpush1.msra.mxu0 0.0
    %7207 = vmatprep.subr.mxu0 0.0
    %7208 = vmatpush1.msra.mxu0 0.0
    %7209 = vmatprep.subr.mxu0 0.0
    %7210 = vmatpush1.msra.mxu0 0.0
    %7211 = vmatprep.subr.mxu0 0.0
    %7212 = vmatpush1.msra.mxu0 0.0
    %7213 = vmatprep.subr.mxu0 0.0
    %7214 = vmatpush1.msra.mxu0 0.0
    %7215 = vmatprep.subr.mxu0 0.0
    %7216 = vmatpush1.msra.mxu0 0.0
    %7217 = vmatprep.subr.mxu0 0.0
    %7218 = vmatpush1.msra.mxu0 0.0
    %7219 = vmatprep.subr.mxu0 0.0
    %7220 = vmatpush1.msra.mxu0 0.0
    %7221 = vmatprep.subr.mxu0 0.0
    %7222 = vmatpush1.msra.mxu0 0.0
    %7223 = vmatprep.mubr.f32.mxu0 0.0
    %7224 = vmatmul.mubr.f32.gmra.mrb[0].mxu0 %v7154
    %v7225 = vpop.f32.mrb[0].mxu0
    %v7226 = vadd.f32 0.0, %v7225
    %v7227 = vpop.f32.mrb[0].mxu0
    %7228 = vdwg.mxu0
    %v7229 = vld [vmem:[%s1431] sm:$0xff]
    %v7230 = vld [vmem:[%s1431 + $0x8] sm:$0xff]
    %v7231 = vld [vmem:[%s1431 + $0x10] sm:$0xff]
    %v7232 = vld [vmem:[%s1431 + $0x18] sm:$0xff]
    %v7233 = vld [vmem:[%s1431 + $0x20] sm:$0xff]
    %v7234 = vld [vmem:[%s1431 + $0x28] sm:$0xff]
    %v7235 = vld [vmem:[%s1431 + $0x30] sm:$0xff]
    %v7236 = vld [vmem:[%s1431 + $0x38] sm:$0xff]
    %v7237 = vld [vmem:[%s1431 + $0x40] sm:$0x3f]
    %v7239 = vsel %vm210, %v7237, 0
    %7241 = vmatprep.subr.mxu0 0.0
    %7242 = vmatpush1.msra.mxu0 %v7229
    %7243 = vmatprep.subr.mxu0 0.0
    %7244 = vmatpush1.msra.mxu0 %v7230
    %7245 = vmatprep.subr.mxu0 0.0
    %7246 = vmatpush1.msra.mxu0 %v7231
    %7247 = vmatprep.subr.mxu0 0.0
    %7248 = vmatpush1.msra.mxu0 %v7232
    %7249 = vmatprep.subr.mxu0 0.0
    %7250 = vmatpush1.msra.mxu0 %v7233
    %7251 = vmatprep.subr.mxu0 0.0
    %7252 = vmatpush1.msra.mxu0 %v7234
    %7253 = vmatprep.subr.mxu0 0.0
    %7254 = vmatpush1.msra.mxu0 %v7235
    %7255 = vmatprep.subr.mxu0 0.0
    %7256 = vmatpush1.msra.mxu0 %v7236
    %7257 = vmatprep.subr.mxu0 0.0
    %7258 = vmatpush1.msra.mxu0 %v7239
    %7259 = vmatprep.subr.mxu0 0.0
    %7260 = vmatpush1.msra.mxu0 0.0
    %7261 = vmatprep.subr.mxu0 0.0
    %7262 = vmatpush1.msra.mxu0 0.0
    %7263 = vmatprep.subr.mxu0 0.0
    %7264 = vmatpush1.msra.mxu0 0.0
    %7265 = vmatprep.subr.mxu0 0.0
    %7266 = vmatpush1.msra.mxu0 0.0
    %7267 = vmatprep.subr.mxu0 0.0
    %7268 = vmatpush1.msra.mxu0 0.0
    %7269 = vmatprep.subr.mxu0 0.0
    %7270 = vmatpush1.msra.mxu0 0.0
    %7271 = vmatprep.subr.mxu0 0.0
    %7272 = vmatpush1.msra.mxu0 0.0
    %7273 = vmatprep.subr.mxu0 0.0
    %7274 = vmatpush1.msra.mxu0 0.0
    %7275 = vmatprep.subr.mxu0 0.0
    %7276 = vmatpush1.msra.mxu0 0.0
    %7277 = vmatprep.subr.mxu0 0.0
    %7278 = vmatpush1.msra.mxu0 0.0
    %7279 = vmatprep.subr.mxu0 0.0
    %7280 = vmatpush1.msra.mxu0 0.0
    %7281 = vmatprep.subr.mxu0 0.0
    %7282 = vmatpush1.msra.mxu0 0.0
    %7283 = vmatprep.subr.mxu0 0.0
    %7284 = vmatpush1.msra.mxu0 0.0
    %7285 = vmatprep.subr.mxu0 0.0
    %7286 = vmatpush1.msra.mxu0 0.0
    %7287 = vmatprep.subr.mxu0 0.0
    %7288 = vmatpush1.msra.mxu0 0.0
    %7289 = vmatprep.subr.mxu0 0.0
    %7290 = vmatpush1.msra.mxu0 0.0
    %7291 = vmatprep.subr.mxu0 0.0
    %7292 = vmatpush1.msra.mxu0 0.0
    %7293 = vmatprep.subr.mxu0 0.0
    %7294 = vmatpush1.msra.mxu0 0.0
    %7295 = vmatprep.subr.mxu0 0.0
    %7296 = vmatpush1.msra.mxu0 0.0
    %7297 = vmatprep.subr.mxu0 0.0
    %7298 = vmatpush1.msra.mxu0 0.0
    %7299 = vmatprep.subr.mxu0 0.0
    %7300 = vmatpush1.msra.mxu0 0.0
    %7301 = vmatprep.subr.mxu0 0.0
    %7302 = vmatpush1.msra.mxu0 0.0
    %7303 = vmatprep.subr.mxu0 0.0
    %7304 = vmatpush1.msra.mxu0 0.0
    %7305 = vmatprep.mubr.f32.mxu0 0.0
    %7306 = vmatmul.mubr.f32.gmra.mrb[0].mxu0 %v7154
    %v7307 = vpop.f32.mrb[0].mxu0
    %v7308 = vadd.f32 0.0, %v7307
    %v7309 = vpop.f32.mrb[0].mxu0
    %7310 = vdwg.mxu0
    %v7311 = vmax.f32 %v7226, %v7308
    %v7313 = vsel %vm1354, %v7141, 0
    %7315 = vmatprep.subr.mxu0 0.0
    %7316 = vmatpush1.msra.mxu0 %v7144
    %7317 = vmatprep.subr.mxu0 0.0
    %7318 = vmatpush1.msra.mxu0 %v7145
    %7319 = vmatprep.subr.mxu0 0.0
    %7320 = vmatpush1.msra.mxu0 %v7146
    %7321 = vmatprep.subr.mxu0 0.0
    %7322 = vmatpush1.msra.mxu0 %v7147
    %7323 = vmatprep.subr.mxu0 0.0
    %7324 = vmatpush1.msra.mxu0 %v7148
    %7325 = vmatprep.subr.mxu0 0.0
    %7326 = vmatpush1.msra.mxu0 %v7149
    %7327 = vmatprep.subr.mxu0 0.0
    %7328 = vmatpush1.msra.mxu0 %v7150
    %7329 = vmatprep.subr.mxu0 0.0
    %7330 = vmatpush1.msra.mxu0 %v7151
    %7331 = vmatprep.subr.mxu0 0.0
    %7332 = vmatpush1.msra.mxu0 %v7157
    %7333 = vmatprep.subr.mxu0 0.0
    %7334 = vmatpush1.msra.mxu0 0.0
    %7335 = vmatprep.subr.mxu0 0.0
    %7336 = vmatpush1.msra.mxu0 0.0
    %7337 = vmatprep.subr.mxu0 0.0
    %7338 = vmatpush1.msra.mxu0 0.0
    %7339 = vmatprep.subr.mxu0 0.0
    %7340 = vmatpush1.msra.mxu0 0.0
    %7341 = vmatprep.subr.mxu0 0.0
    %7342 = vmatpush1.msra.mxu0 0.0
    %7343 = vmatprep.subr.mxu0 0.0
    %7344 = vmatpush1.msra.mxu0 0.0
    %7345 = vmatprep.subr.mxu0 0.0
    %7346 = vmatpush1.msra.mxu0 0.0
    %7347 = vmatprep.subr.mxu0 0.0
    %7348 = vmatpush1.msra.mxu0 0.0
    %7349 = vmatprep.subr.mxu0 0.0
    %7350 = vmatpush1.msra.mxu0 0.0
    %7351 = vmatprep.subr.mxu0 0.0
    %7352 = vmatpush1.msra.mxu0 0.0
    %7353 = vmatprep.subr.mxu0 0.0
    %7354 = vmatpush1.msra.mxu0 0.0
    %7355 = vmatprep.subr.mxu0 0.0
    %7356 = vmatpush1.msra.mxu0 0.0
    %7357 = vmatprep.subr.mxu0 0.0
    %7358 = vmatpush1.msra.mxu0 0.0
    %7359 = vmatprep.subr.mxu0 0.0
    %7360 = vmatpush1.msra.mxu0 0.0
    %7361 = vmatprep.subr.mxu0 0.0
    %7362 = vmatpush1.msra.mxu0 0.0
    %7363 = vmatprep.subr.mxu0 0.0
    %7364 = vmatpush1.msra.mxu0 0.0
    %7365 = vmatprep.subr.mxu0 0.0
    %7366 = vmatpush1.msra.mxu0 0.0
    %7367 = vmatprep.subr.mxu0 0.0
    %7368 = vmatpush1.msra.mxu0 0.0
    %7369 = vmatprep.subr.mxu0 0.0
    %7370 = vmatpush1.msra.mxu0 0.0
    %7371 = vmatprep.subr.mxu0 0.0
    %7372 = vmatpush1.msra.mxu0 0.0
    %7373 = vmatprep.subr.mxu0 0.0
    %7374 = vmatpush1.msra.mxu0 0.0
    %7375 = vmatprep.subr.mxu0 0.0
    %7376 = vmatpush1.msra.mxu0 0.0
    %7377 = vmatprep.subr.mxu0 0.0
    %7378 = vmatpush1.msra.mxu0 0.0
    %7379 = vmatprep.mubr.f32.mxu0 0.0
    %7380 = vmatmul.mubr.f32.gmra.mrb[0].mxu0 %v7313
    %v7381 = vpop.f32.mrb[0].mxu0
    %v7382 = vadd.f32 0.0, %v7381
    %v7383 = vpop.f32.mrb[0].mxu0
    %7384 = vdwg.mxu0
    %7385 = vmatprep.subr.mxu0 0.0
    %7386 = vmatpush1.msra.mxu0 %v7229
    %7387 = vmatprep.subr.mxu0 0.0
    %7388 = vmatpush1.msra.mxu0 %v7230
    %7389 = vmatprep.subr.mxu0 0.0
    %7390 = vmatpush1.msra.mxu0 %v7231
    %7391 = vmatprep.subr.mxu0 0.0
    %7392 = vmatpush1.msra.mxu0 %v7232
    %7393 = vmatprep.subr.mxu0 0.0
    %7394 = vmatpush1.msra.mxu0 %v7233
    %7395 = vmatprep.subr.mxu0 0.0
    %7396 = vmatpush1.msra.mxu0 %v7234
    %7397 = vmatprep.subr.mxu0 0.0
    %7398 = vmatpush1.msra.mxu0 %v7235
    %7399 = vmatprep.subr.mxu0 0.0
    %7400 = vmatpush1.msra.mxu0 %v7236
    %7401 = vmatprep.subr.mxu0 0.0
    %7402 = vmatpush1.msra.mxu0 %v7239
    %7403 = vmatprep.subr.mxu0 0.0
    %7404 = vmatpush1.msra.mxu0 0.0
    %7405 = vmatprep.subr.mxu0 0.0
    %7406 = vmatpush1.msra.mxu0 0.0
    %7407 = vmatprep.subr.mxu0 0.0
    %7408 = vmatpush1.msra.mxu0 0.0
    %7409 = vmatprep.subr.mxu0 0.0
    %7410 = vmatpush1.msra.mxu0 0.0
    %7411 = vmatprep.subr.mxu0 0.0
    %7412 = vmatpush1.msra.mxu0 0.0
    %7413 = vmatprep.subr.mxu0 0.0
    %7414 = vmatpush1.msra.mxu0 0.0
    %7415 = vmatprep.subr.mxu0 0.0
    %7416 = vmatpush1.msra.mxu0 0.0
    %7417 = vmatprep.subr.mxu0 0.0
    %7418 = vmatpush1.msra.mxu0 0.0
    %7419 = vmatprep.subr.mxu0 0.0
    %7420 = vmatpush1.msra.mxu0 0.0
    %7421 = vmatprep.subr.mxu0 0.0
    %7422 = vmatpush1.msra.mxu0 0.0
    %7423 = vmatprep.subr.mxu0 0.0
    %7424 = vmatpush1.msra.mxu0 0.0
    %7425 = vmatprep.subr.mxu0 0.0
    %7426 = vmatpush1.msra.mxu0 0.0
    %7427 = vmatprep.subr.mxu0 0.0
    %7428 = vmatpush1.msra.mxu0 0.0
    %7429 = vmatprep.subr.mxu0 0.0
    %7430 = vmatpush1.msra.mxu0 0.0
    %7431 = vmatprep.subr.mxu0 0.0
    %7432 = vmatpush1.msra.mxu0 0.0
    %7433 = vmatprep.subr.mxu0 0.0
    %7434 = vmatpush1.msra.mxu0 0.0
    %7435 = vmatprep.subr.mxu0 0.0
    %7436 = vmatpush1.msra.mxu0 0.0
    %7437 = vmatprep.subr.mxu0 0.0
    %7438 = vmatpush1.msra.mxu0 0.0
    %7439 = vmatprep.subr.mxu0 0.0
    %7440 = vmatpush1.msra.mxu0 0.0
    %7441 = vmatprep.subr.mxu0 0.0
    %7442 = vmatpush1.msra.mxu0 0.0
    %7443 = vmatprep.subr.mxu0 0.0
    %7444 = vmatpush1.msra.mxu0 0.0
    %7445 = vmatprep.subr.mxu0 0.0
    %7446 = vmatpush1.msra.mxu0 0.0
    %7447 = vmatprep.subr.mxu0 0.0
    %7448 = vmatpush1.msra.mxu0 0.0
    %7449 = vmatprep.mubr.f32.mxu0 0.0
    %7450 = vmatmul.mubr.f32.gmra.mrb[0].mxu0 %v7313
    %v7451 = vpop.f32.mrb[0].mxu0
    %v7452 = vadd.f32 0.0, %v7451
    %v7453 = vpop.f32.mrb[0].mxu0
    %7454 = vdwg.mxu0
    %v7455 = vmax.f32 %v7382, %v7452
    %v7456 = vmax.f32 %v7311, %v7455
    %v7457 = vld [vmem:[%s6] sm:$0x1]
    %v7459 = vlaneseq
    %v7460 = vshrl.u32 %v7459, 7
    %v7461 = vsub.s32 0, %v7460
    %v7462 = vrot.slane %v7457, %v7461
    %v7464 = vadd.f32 %v7456, %v7462
    %v7465 = vmax.f32 %v7464, 0.0
    %v7466 = vld [vmem:[%s9] sm:$0xff]
    %v7467 = vld [vmem:[%s9 + $0x8] sm:$0xff]
    %v7468 = vld [vmem:[%s9 + $0x10] sm:$0xff]
    %v7469 = vld [vmem:[%s9 + $0x18] sm:$0x3f]
    %v7470 = vld [vmem:[%s1673] sm:$0xff]
    %v7471 = vld [vmem:[%s1673 + $0x8] sm:$0xff]
    %v7472 = vld [vmem:[%s1673 + $0x10] sm:$0xff]
    %v7473 = vld [vmem:[%s1673 + $0x18] sm:$0x3f]
    %v7475 = vrot.slane %v7465, 1
    %v7476 = vsel %vm1680, %v7475, 0
    %v7479 = vsel %vm210, %v7473, 0
    %7481 = vmatprep.subr.mxu0 0.0
    %7482 = vmatpush1.msra.mxu0 %v7470
    %7483 = vmatprep.subr.mxu0 0.0
    %7484 = vmatpush1.msra.mxu0 %v7471
    %7485 = vmatprep.subr.mxu0 0.0
    %7486 = vmatpush1.msra.mxu0 %v7472
    %7487 = vmatprep.subr.mxu0 0.0
    %7488 = vmatpush1.msra.mxu0 %v7479
    %7489 = vmatprep.subr.mxu0 0.0
    %7490 = vmatpush1.msra.mxu0 0.0
    %7491 = vmatprep.subr.mxu0 0.0
    %7492 = vmatpush1.msra.mxu0 0.0
    %7493 = vmatprep.subr.mxu0 0.0
    %7494 = vmatpush1.msra.mxu0 0.0
    %7495 = vmatprep.subr.mxu0 0.0
    %7496 = vmatpush1.msra.mxu0 0.0
    %7497 = vmatprep.subr.mxu0 0.0
    %7498 = vmatpush1.msra.mxu0 0.0
    %7499 = vmatprep.subr.mxu0 0.0
    %7500 = vmatpush1.msra.mxu0 0.0
    %7501 = vmatprep.subr.mxu0 0.0
    %7502 = vmatpush1.msra.mxu0 0.0
    %7503 = vmatprep.subr.mxu0 0.0
    %7504 = vmatpush1.msra.mxu0 0.0
    %7505 = vmatprep.subr.mxu0 0.0
    %7506 = vmatpush1.msra.mxu0 0.0
    %7507 = vmatprep.subr.mxu0 0.0
    %7508 = vmatpush1.msra.mxu0 0.0
    %7509 = vmatprep.subr.mxu0 0.0
    %7510 = vmatpush1.msra.mxu0 0.0
    %7511 = vmatprep.subr.mxu0 0.0
    %7512 = vmatpush1.msra.mxu0 0.0
    %7513 = vmatprep.subr.mxu0 0.0
    %7514 = vmatpush1.msra.mxu0 0.0
    %7515 = vmatprep.subr.mxu0 0.0
    %7516 = vmatpush1.msra.mxu0 0.0
    %7517 = vmatprep.subr.mxu0 0.0
    %7518 = vmatpush1.msra.mxu0 0.0
    %7519 = vmatprep.subr.mxu0 0.0
    %7520 = vmatpush1.msra.mxu0 0.0
    %7521 = vmatprep.subr.mxu0 0.0
    %7522 = vmatpush1.msra.mxu0 0.0
    %7523 = vmatprep.subr.mxu0 0.0
    %7524 = vmatpush1.msra.mxu0 0.0
    %7525 = vmatprep.subr.mxu0 0.0
    %7526 = vmatpush1.msra.mxu0 0.0
    %7527 = vmatprep.subr.mxu0 0.0
    %7528 = vmatpush1.msra.mxu0 0.0
    %7529 = vmatprep.subr.mxu0 0.0
    %7530 = vmatpush1.msra.mxu0 0.0
    %7531 = vmatprep.subr.mxu0 0.0
    %7532 = vmatpush1.msra.mxu0 0.0
    %7533 = vmatprep.subr.mxu0 0.0
    %7534 = vmatpush1.msra.mxu0 0.0
    %7535 = vmatprep.subr.mxu0 0.0
    %7536 = vmatpush1.msra.mxu0 0.0
    %7537 = vmatprep.subr.mxu0 0.0
    %7538 = vmatpush1.msra.mxu0 0.0
    %7539 = vmatprep.subr.mxu0 0.0
    %7540 = vmatpush1.msra.mxu0 0.0
    %7541 = vmatprep.subr.mxu0 0.0
    %7542 = vmatpush1.msra.mxu0 0.0
    %7543 = vmatprep.subr.mxu0 0.0
    %7544 = vmatpush1.msra.mxu0 0.0
    %7545 = vmatprep.mubr.f32.mxu0 0.0
    %7546 = vmatmul.mubr.f32.gmra.mrb[0].mxu0 %v7476
    %v7547 = vpop.f32.mrb[0].mxu0
    %v7548 = vadd.f32 0.0, %v7547
    %v7549 = vpop.f32.mrb[0].mxu0
    %7550 = vdwg.mxu0
    %v7551 = vsel %vm1680, %v7465, 0
    %v7554 = vsel %vm210, %v7469, 0
    %7556 = vmatprep.subr.mxu0 0.0
    %7557 = vmatpush1.msra.mxu0 %v7466
    %7558 = vmatprep.subr.mxu0 0.0
    %7559 = vmatpush1.msra.mxu0 %v7467
    %7560 = vmatprep.subr.mxu0 0.0
    %7561 = vmatpush1.msra.mxu0 %v7468
    %7562 = vmatprep.subr.mxu0 0.0
    %7563 = vmatpush1.msra.mxu0 %v7554
    %7564 = vmatprep.subr.mxu0 0.0
    %7565 = vmatpush1.msra.mxu0 0.0
    %7566 = vmatprep.subr.mxu0 0.0
    %7567 = vmatpush1.msra.mxu0 0.0
    %7568 = vmatprep.subr.mxu0 0.0
    %7569 = vmatpush1.msra.mxu0 0.0
    %7570 = vmatprep.subr.mxu0 0.0
    %7571 = vmatpush1.msra.mxu0 0.0
    %7572 = vmatprep.subr.mxu0 0.0
    %7573 = vmatpush1.msra.mxu0 0.0
    %7574 = vmatprep.subr.mxu0 0.0
    %7575 = vmatpush1.msra.mxu0 0.0
    %7576 = vmatprep.subr.mxu0 0.0
    %7577 = vmatpush1.msra.mxu0 0.0
    %7578 = vmatprep.subr.mxu0 0.0
    %7579 = vmatpush1.msra.mxu0 0.0
    %7580 = vmatprep.subr.mxu0 0.0
    %7581 = vmatpush1.msra.mxu0 0.0
    %7582 = vmatprep.subr.mxu0 0.0
    %7583 = vmatpush1.msra.mxu0 0.0
    %7584 = vmatprep.subr.mxu0 0.0
    %7585 = vmatpush1.msra.mxu0 0.0
    %7586 = vmatprep.subr.mxu0 0.0
    %7587 = vmatpush1.msra.mxu0 0.0
    %7588 = vmatprep.subr.mxu0 0.0
    %7589 = vmatpush1.msra.mxu0 0.0
    %7590 = vmatprep.subr.mxu0 0.0
    %7591 = vmatpush1.msra.mxu0 0.0
    %7592 = vmatprep.subr.mxu0 0.0
    %7593 = vmatpush1.msra.mxu0 0.0
    %7594 = vmatprep.subr.mxu0 0.0
    %7595 = vmatpush1.msra.mxu0 0.0
    %7596 = vmatprep.subr.mxu0 0.0
    %7597 = vmatpush1.msra.mxu0 0.0
    %7598 = vmatprep.subr.mxu0 0.0
    %7599 = vmatpush1.msra.mxu0 0.0
    %7600 = vmatprep.subr.mxu0 0.0
    %7601 = vmatpush1.msra.mxu0 0.0
    %7602 = vmatprep.subr.mxu0 0.0
    %7603 = vmatpush1.msra.mxu0 0.0
    %7604 = vmatprep.subr.mxu0 0.0
    %7605 = vmatpush1.msra.mxu0 0.0
    %7606 = vmatprep.subr.mxu0 0.0
    %7607 = vmatpush1.msra.mxu0 0.0
    %7608 = vmatprep.subr.mxu0 0.0
    %7609 = vmatpush1.msra.mxu0 0.0
    %7610 = vmatprep.subr.mxu0 0.0
    %7611 = vmatpush1.msra.mxu0 0.0
    %7612 = vmatprep.subr.mxu0 0.0
    %7613 = vmatpush1.msra.mxu0 0.0
    %7614 = vmatprep.subr.mxu0 0.0
    %7615 = vmatpush1.msra.mxu0 0.0
    %7616 = vmatprep.subr.mxu0 0.0
    %7617 = vmatpush1.msra.mxu0 0.0
    %7618 = vmatprep.subr.mxu0 0.0
    %7619 = vmatpush1.msra.mxu0 0.0
    %7620 = vmatprep.mubr.f32.mxu0 0.0
    %7621 = vmatmul.mubr.f32.gmra.mrb[0].mxu0 %v7551
    %v7622 = vpop.f32.mrb[0].mxu0
    %v7623 = vadd.f32 %v7548, %v7622
    %v7624 = vpop.f32.mrb[0].mxu0
    %7625 = vdwg.mxu0
    %v7626 = vld [vmem:[%s1831] sm:$0xff]
    %v7627 = vld [vmem:[%s1831 + $0x8] sm:$0xff]
    %v7628 = vld [vmem:[%s1831 + $0x10] sm:$0xff]
    %v7629 = vld [vmem:[%s1831 + $0x18] sm:$0x3f]
    %v7630 = vrot.slane %v7465, 2
    %v7631 = vsel %vm1680, %v7630, 0
    %v7634 = vsel %vm210, %v7629, 0
    %7636 = vmatprep.subr.mxu0 0.0
    %7637 = vmatpush1.msra.mxu0 %v7626
    %7638 = vmatprep.subr.mxu0 0.0
    %7639 = vmatpush1.msra.mxu0 %v7627
    %7640 = vmatprep.subr.mxu0 0.0
    %7641 = vmatpush1.msra.mxu0 %v7628
    %7642 = vmatprep.subr.mxu0 0.0
    %7643 = vmatpush1.msra.mxu0 %v7634
    %7644 = vmatprep.subr.mxu0 0.0
    %7645 = vmatpush1.msra.mxu0 0.0
    %7646 = vmatprep.subr.mxu0 0.0
    %7647 = vmatpush1.msra.mxu0 0.0
    %7648 = vmatprep.subr.mxu0 0.0
    %7649 = vmatpush1.msra.mxu0 0.0
    %7650 = vmatprep.subr.mxu0 0.0
    %7651 = vmatpush1.msra.mxu0 0.0
    %7652 = vmatprep.subr.mxu0 0.0
    %7653 = vmatpush1.msra.mxu0 0.0
    %7654 = vmatprep.subr.mxu0 0.0
    %7655 = vmatpush1.msra.mxu0 0.0
    %7656 = vmatprep.subr.mxu0 0.0
    %7657 = vmatpush1.msra.mxu0 0.0
    %7658 = vmatprep.subr.mxu0 0.0
    %7659 = vmatpush1.msra.mxu0 0.0
    %7660 = vmatprep.subr.mxu0 0.0
    %7661 = vmatpush1.msra.mxu0 0.0
    %7662 = vmatprep.subr.mxu0 0.0
    %7663 = vmatpush1.msra.mxu0 0.0
    %7664 = vmatprep.subr.mxu0 0.0
    %7665 = vmatpush1.msra.mxu0 0.0
    %7666 = vmatprep.subr.mxu0 0.0
    %7667 = vmatpush1.msra.mxu0 0.0
    %7668 = vmatprep.subr.mxu0 0.0
    %7669 = vmatpush1.msra.mxu0 0.0
    %7670 = vmatprep.subr.mxu0 0.0
    %7671 = vmatpush1.msra.mxu0 0.0
    %7672 = vmatprep.subr.mxu0 0.0
    %7673 = vmatpush1.msra.mxu0 0.0
    %7674 = vmatprep.subr.mxu0 0.0
    %7675 = vmatpush1.msra.mxu0 0.0
    %7676 = vmatprep.subr.mxu0 0.0
    %7677 = vmatpush1.msra.mxu0 0.0
    %7678 = vmatprep.subr.mxu0 0.0
    %7679 = vmatpush1.msra.mxu0 0.0
    %7680 = vmatprep.subr.mxu0 0.0
    %7681 = vmatpush1.msra.mxu0 0.0
    %7682 = vmatprep.subr.mxu0 0.0
    %7683 = vmatpush1.msra.mxu0 0.0
    %7684 = vmatprep.subr.mxu0 0.0
    %7685 = vmatpush1.msra.mxu0 0.0
    %7686 = vmatprep.subr.mxu0 0.0
    %7687 = vmatpush1.msra.mxu0 0.0
    %7688 = vmatprep.subr.mxu0 0.0
    %7689 = vmatpush1.msra.mxu0 0.0
    %7690 = vmatprep.subr.mxu0 0.0
    %7691 = vmatpush1.msra.mxu0 0.0
    %7692 = vmatprep.subr.mxu0 0.0
    %7693 = vmatpush1.msra.mxu0 0.0
    %7694 = vmatprep.subr.mxu0 0.0
    %7695 = vmatpush1.msra.mxu0 0.0
    %7696 = vmatprep.subr.mxu0 0.0
    %7697 = vmatpush1.msra.mxu0 0.0
    %7698 = vmatprep.subr.mxu0 0.0
    %7699 = vmatpush1.msra.mxu0 0.0
    %7700 = vmatprep.mubr.f32.mxu0 0.0
    %7701 = vmatmul.mubr.f32.gmra.mrb[0].mxu0 %v7631
    %v7702 = vpop.f32.mrb[0].mxu0
    %v7703 = vadd.f32 0.0, %v7702
    %v7704 = vpop.f32.mrb[0].mxu0
    %7705 = vdwg.mxu0
    %v7706 = vadd.f32 %v7623, %v7703
    %v7707 = vld [vmem:[%s10] sm:$0x1]
    %v7708 = vadd.f32 %v7706, %v7707
    %v7709 = vmax.f32 %v7708, 0.0
    %v7710 = vld [vmem:[%s11] sm:$0xff]
    %v7711 = vld [vmem:[%s11 + $0x8] sm:$0xff]
    %v7712 = vld [vmem:[%s11 + $0x10] sm:$0xff]
    %v7713 = vld [vmem:[%s11 + $0x18] sm:$0xff]
    %v7714 = vld [vmem:[%s12] sm:$0x1]
    %v7716 = vsel %vm1921, %v7709, 0
    %7718 = vmatprep.subr.mxu0 0.0
    %7719 = vmatpush1.msra.mxu0 %v7710
    %7720 = vmatprep.subr.mxu0 0.0
    %7721 = vmatpush1.msra.mxu0 %v7711
    %7722 = vmatprep.subr.mxu0 0.0
    %7723 = vmatpush1.msra.mxu0 %v7712
    %7724 = vmatprep.subr.mxu0 0.0
    %7725 = vmatpush1.msra.mxu0 %v7713
    %7726 = vmatprep.subr.mxu0 0.0
    %7727 = vmatpush1.msra.mxu0 0.0
    %7728 = vmatprep.subr.mxu0 0.0
    %7729 = vmatpush1.msra.mxu0 0.0
    %7730 = vmatprep.subr.mxu0 0.0
    %7731 = vmatpush1.msra.mxu0 0.0
    %7732 = vmatprep.subr.mxu0 0.0
    %7733 = vmatpush1.msra.mxu0 0.0
    %7734 = vmatprep.subr.mxu0 0.0
    %7735 = vmatpush1.msra.mxu0 0.0
    %7736 = vmatprep.subr.mxu0 0.0
    %7737 = vmatpush1.msra.mxu0 0.0
    %7738 = vmatprep.subr.mxu0 0.0
    %7739 = vmatpush1.msra.mxu0 0.0
    %7740 = vmatprep.subr.mxu0 0.0
    %7741 = vmatpush1.msra.mxu0 0.0
    %7742 = vmatprep.subr.mxu0 0.0
    %7743 = vmatpush1.msra.mxu0 0.0
    %7744 = vmatprep.subr.mxu0 0.0
    %7745 = vmatpush1.msra.mxu0 0.0
    %7746 = vmatprep.subr.mxu0 0.0
    %7747 = vmatpush1.msra.mxu0 0.0
    %7748 = vmatprep.subr.mxu0 0.0
    %7749 = vmatpush1.msra.mxu0 0.0
    %7750 = vmatprep.subr.mxu0 0.0
    %7751 = vmatpush1.msra.mxu0 0.0
    %7752 = vmatprep.subr.mxu0 0.0
    %7753 = vmatpush1.msra.mxu0 0.0
    %7754 = vmatprep.subr.mxu0 0.0
    %7755 = vmatpush1.msra.mxu0 0.0
    %7756 = vmatprep.subr.mxu0 0.0
    %7757 = vmatpush1.msra.mxu0 0.0
    %7758 = vmatprep.subr.mxu0 0.0
    %7759 = vmatpush1.msra.mxu0 0.0
    %7760 = vmatprep.subr.mxu0 0.0
    %7761 = vmatpush1.msra.mxu0 0.0
    %7762 = vmatprep.subr.mxu0 0.0
    %7763 = vmatpush1.msra.mxu0 0.0
    %7764 = vmatprep.subr.mxu0 0.0
    %7765 = vmatpush1.msra.mxu0 0.0
    %7766 = vmatprep.subr.mxu0 0.0
    %7767 = vmatpush1.msra.mxu0 0.0
    %7768 = vmatprep.subr.mxu0 0.0
    %7769 = vmatpush1.msra.mxu0 0.0
    %7770 = vmatprep.subr.mxu0 0.0
    %7771 = vmatpush1.msra.mxu0 0.0
    %7772 = vmatprep.subr.mxu0 0.0
    %7773 = vmatpush1.msra.mxu0 0.0
    %7774 = vmatprep.subr.mxu0 0.0
    %7775 = vmatpush1.msra.mxu0 0.0
    %7776 = vmatprep.subr.mxu0 0.0
    %7777 = vmatpush1.msra.mxu0 0.0
    %7778 = vmatprep.subr.mxu0 0.0
    %7779 = vmatpush1.msra.mxu0 0.0
    %7780 = vmatprep.subr.mxu0 0.0
    %7781 = vmatpush1.msra.mxu0 0.0
    %7782 = vmatprep.mubr.f32.mxu0 0.0
    %7783 = vmatmul.mubr.f32.gmra.mrb[0].mxu0 %v7716
    %v7784 = vpop.f32.mrb[0].mxu0
    %v7785 = vadd.f32 %v7714, %v7784
    %v7786 = vpop.f32.mrb[0].mxu0
    %7787 = vdwg.mxu0
    %s7788 = scalar_lea.vmem [#allocation2], 3
    %7789 = vst.msk [vmem:[%s7788] sm:$0x1] %vm1995, %v7785
    // Predicated region
    $region54: #{tpu_custom_call.1} parent=1 // pred_check
      _
    $region55: #{tpu_custom_call.1} parent=1 // pred_check_branch
      %7791 = sbr.rel (0) target = $region57
    $region56: #{tpu_custom_call.1} parent=1 // pred_region
      %s7793 = ssub.s32 64, 64
      %7794 = vsyncadd [#allocation3], %s7793
      %s7795 = sshll.u32 [#allocation2], 4
      %s7796 = int_to_ptr.vmem [resolvable:$true] %s7795
      %7801 = dma.vmem_to_hbm [thread:$0]  %s7796, 64, %s13, [#allocation3], 16, 16, 1
    $region57: #{tpu_custom_call.1} parent=1 // pred_fallthru
      _
    // Predicated region
    $region58: #{tpu_custom_call.1} parent=1 // pred_check
      _
    $region59: #{tpu_custom_call.1} parent=1 // pred_check_branch
      %7803 = sbr.rel (0) target = $region61
    $region60: #{tpu_custom_call.1} parent=1 // pred_region
      %7804 = dma.done [#allocation3], 64
    $region61: #{tpu_custom_call.1} parent=1 // pred_fallthru
      _
    %7805 = vsyncpa [#allocation3], 1

</llo_original>
